<compile_context>
chip_gen: v6e
topology: v6e:2x2x1
jax: 0.10.0
libtpu: 0.0.40
codegen_flags: <defaults>
</compile_context>

<pallas_src>
import functools

import jax
import jax.numpy as jnp
import numpy as np
from jax.experimental import pallas as pl
from jax.experimental.pallas import tpu as pltpu


# ----------------------------------------------------------------------------
# Pallas matmul kernel: bf16 operands, f32 MXU accumulation, optional fused
# bias + activation epilogue (used by the 1x1-latent block1 layer).
# ----------------------------------------------------------------------------
def _apply_act(y, activation):
    if activation == "leaky_relu":
        return jnp.where(y > 0, y, 0.2 * y)
    if activation == "tanh":
        return jnp.tanh(y)
    return y


def _make_matmul_kernel(activation, with_bias):
    if with_bias:
        def kernel(x_ref, w_ref, b_ref, o_ref):
            acc = jnp.dot(x_ref[...], w_ref[...],
                          preferred_element_type=jnp.float32)
            o_ref[...] = _apply_act(acc + b_ref[...], activation).astype(o_ref.dtype)
    else:
        def kernel(x_ref, w_ref, o_ref):
            acc = jnp.dot(x_ref[...], w_ref[...],
                          preferred_element_type=jnp.float32)
            o_ref[...] = _apply_act(acc, activation).astype(o_ref.dtype)
    return kernel


def _pick_tile(dim, limit, multiple):
    """Largest divisor of `dim` that is <= limit and a multiple of `multiple`.
    Falls back to the full dim (always a legal block shape)."""
    if dim <= limit:
        return dim
    best = None
    d = multiple
    while d <= limit:
        if dim % d == 0:
            best = d
        d += multiple
    return best if best is not None else dim


def matmul_pallas(x, w, bias=None, activation="none"):
    """act((x @ w) + bias); x: (M, K), w: (K, Np) with Np % 128 == 0.

    Operands are cast to bf16 for the MXU; output is f32 (M, Np)."""
    M, K = x.shape
    K2, Np = w.shape
    assert K == K2 and Np % 128 == 0, (x.shape, w.shape)

    tm = _pick_tile(M, 1024, 8)       # full-M up to 1024 rows
    tn = _pick_tile(Np, 512, 128)     # lane-dense, MXU-wide N tiles
    # Avoid long strings of trivially small N-steps on tiny-M layers while
    # keeping >= 2 total grid steps (both v7x TensorCores stay busy).
    if M // tm == 1 and Np // tn > 8 and Np % (2 * tn) == 0:
        tn *= 2
    grid = (M // tm, Np // tn)

    in_specs = [
        pl.BlockSpec((tm, K), lambda i, j: (i, 0)),
        pl.BlockSpec((K, tn), lambda i, j: (0, j)),
    ]
    args = [x.astype(jnp.bfloat16), w.astype(jnp.bfloat16)]
    if bias is not None:
        in_specs.append(pl.BlockSpec((1, tn), lambda i, j: (0, j)))
        args.append(bias.reshape(1, Np).astype(jnp.float32))

    return pl.pallas_call(
        _make_matmul_kernel(activation, bias is not None),
        out_shape=jax.ShapeDtypeStruct((M, Np), jnp.float32),
        grid_spec=pltpu.PrefetchScalarGridSpec(
            num_scalar_prefetch=0,
            grid=grid,
            in_specs=in_specs,
            out_specs=pl.BlockSpec((tm, tn), lambda i, j: (i, j)),
        ),
        compiler_params=pltpu.CompilerParams(
            dimension_semantics=("parallel", "parallel")),
    )(*args)


# ----------------------------------------------------------------------------
# col2im overlap-add for ConvTranspose2d(k=4, s=2, p=1) in XLA (small tensors)
# ----------------------------------------------------------------------------
def _col2im_stride2(y6):
    """y6: (N, H, W, 4, 4, C) = contribution of input pixel (i, j), kernel tap
    (ky, kx) to output pixel (2i + ky - 1, 2j + kx - 1).
    Returns (N, H, 2, W, 2, C) with out[n, i, ry, j, rx, c] = output pixel
    (2i + ry, 2j + rx)."""
    n, h, w = y6.shape[:3]
    # Rows (ky): even output rows <- ky=1 (same i) + ky=3 (i-1);
    #            odd  output rows <- ky=2 (same i) + ky=0 (i+1).
    r0 = y6[:, :, :, 1] + jnp.pad(
        y6[:, :, :, 3], ((0, 0), (1, 0), (0, 0), (0, 0), (0, 0)))[:, :h]
    r1 = y6[:, :, :, 2] + jnp.pad(
        y6[:, :, :, 0], ((0, 0), (0, 1), (0, 0), (0, 0), (0, 0)))[:, 1:]
    r = jnp.stack([r0, r1], axis=2)                       # (N, H, 2, W, 4, C)
    # Columns (kx): same combination along W.
    c0 = r[:, :, :, :, 1] + jnp.pad(
        r[:, :, :, :, 3], ((0, 0), (0, 0), (0, 0), (1, 0), (0, 0)))[:, :, :, :w]
    c1 = r[:, :, :, :, 2] + jnp.pad(
        r[:, :, :, :, 0], ((0, 0), (0, 0), (0, 0), (0, 1), (0, 0)))[:, :, :, 1:]
    return jnp.stack([c0, c1], axis=4)                    # (N, H, 2, W, 2, C)


def upsample_tap(x, p, activation, to_nchw=False):
    """ConvTranspose2d(k=4, s=2, p=1) with BN scale folded into the weights,
    plus bias + activation.  x: (N, H, W, Cin) NHWC."""
    n, h, w, cin = x.shape
    cout, ntap = p["cout"], p["ntap"]
    y = matmul_pallas(x.reshape(n * h * w, cin), p["W"])   # (M, Npad) f32
    if y.shape[1] != ntap:
        y = y[:, :ntap]                                    # drop zero lane padding
    o = _col2im_stride2(y.reshape(n, h, w, 4, 4, cout))
    o = _apply_act(o + p["b"], activation)
    if to_nchw:   # merge interleave + NCHW transpose into one pass
        return o.transpose(0, 5, 1, 2, 3, 4).reshape(n, cout, 2 * h, 2 * w)
    return o.reshape(n, 2 * h, 2 * w, cout)


# ----------------------------------------------------------------------------
# One-time parameter preparation (outside the jitted forward)
# ----------------------------------------------------------------------------
def _bn_fold(p, eps=1e-5):
    scale = p["gamma"] * jax.lax.rsqrt(p["var"] + eps)
    bias = p["beta"] - p["mean"] * scale
    return scale, bias


def _tap_weight(W, scale):
    """(Cin, Cout, 4, 4) -> bf16 (Cin, 16*Cout) with columns ordered
    (ky, kx, co), BN scale folded in, lane dim zero-padded to 128-multiple."""
    cin, cout = W.shape[0], W.shape[1]
    wm = (W * scale[None, :, None, None]).transpose(0, 2, 3, 1).reshape(cin, 16 * cout)
    ntap = 16 * cout
    npad = ((ntap + 127) // 128) * 128
    if npad != ntap:
        wm = jnp.pad(wm, ((0, 0), (0, npad - ntap)))
    return wm.astype(jnp.bfloat16), ntap


def prepare_params(params):
    prepped = {}
    p = params["block1"]
    scale, bias = _bn_fold(p)
    wm, _ = _tap_weight(p["W"], scale)
    prepped["block1"] = dict(W=wm, b=jnp.tile(bias, 16).astype(jnp.float32),
                             cout=p["W"].shape[1])
    for name in ("block2", "block3", "block4", "block5"):
        p = params[name]
        scale, bias = _bn_fold(p)
        wm, ntap = _tap_weight(p["W"], scale)
        prepped[name] = dict(W=wm, b=bias.astype(jnp.float32),
                             ntap=ntap, cout=p["W"].shape[1])
    p = params["out"]
    cout = p["W"].shape[1]
    wm, ntap = _tap_weight(p["W"], jnp.ones((cout,), jnp.float32))
    prepped["out"] = dict(W=wm, b=p["b"].astype(jnp.float32), ntap=ntap, cout=cout)
    return prepped


# ----------------------------------------------------------------------------
# Full generator forward (Pallas matmuls + XLA col2im/epilogue glue)
# ----------------------------------------------------------------------------
def generator_forward(x, prepped):
    # x: (N, latent_dim, 1, 1) NCHW, like PyTorch.
    n, latent = x.shape[0], x.shape[1]
    z = x.reshape(n, latent)

    # block1: ConvTranspose2d(latent, 512, 4, s=1, p=0) on a 1x1 input is a
    # pure matmul; folded-BN bias + LeakyReLU fused in-kernel; columns are
    # ordered (ky, kx, co) so the reshape lands directly in NHWC.
    p = prepped["block1"]
    y = matmul_pallas(z, p["W"], bias=p["b"], activation="leaky_relu")
    y = y.reshape(n, 4, 4, p["cout"])                      # (N, 4, 4, 512)

    for name in ("block2", "block3", "block4", "block5"):
        y = upsample_tap(y, prepped[name], "leaky_relu")
        # TODO(synk): Dropout(0.2) is identity in eval mode.

    # Output layer: ConvTranspose2d(32, 3, 4, s=2, p=1) + bias + tanh, NCHW out.
    return upsample_tap(y, prepped["out"], "tanh", to_nchw=True)


# ----------------------------------------------------------------------------
# Pure-JAX reference (lax conv) for validation
# ----------------------------------------------------------------------------
def _convtranspose2d_ref(x, W, b, stride, padding):
    k = W.shape[2]
    rhs = jnp.flip(W, (2, 3)).transpose(1, 0, 2, 3)  # (Cout, Cin, kH, kW)
    pad = k - 1 - padding
    y = jax.lax.conv_general_dilated(
        x, rhs, window_strides=(1, 1), padding=[(pad, pad), (pad, pad)],
        lhs_dilation=(stride, stride),
        dimension_numbers=("NCHW", "OIHW", "NCHW"),
        precision=jax.lax.Precision.HIGHEST)
    if b is not None:
        y = y + b[None, :, None, None]
    return y


def reference_forward(x, params):
    def bn(y, p, eps=1e-5):
        c = (None, slice(None), None, None)
        return ((y - p["mean"][c]) * jax.lax.rsqrt(p["var"][c] + eps)
                * p["gamma"][c] + p["beta"][c])

    def lrelu(y):
        return jnp.where(y > 0, y, 0.2 * y)

    p = params["block1"]
    y = lrelu(bn(_convtranspose2d_ref(x, p["W"], None, 1, 0), p))
    for name in ("block2", "block3", "block4", "block5"):
        p = params[name]
        y = lrelu(bn(_convtranspose2d_ref(y, p["W"], None, 2, 1), p))
    p = params["out"]
    return jnp.tanh(_convtranspose2d_ref(y, p["W"], p["b"], 2, 1))


# ----------------------------------------------------------------------------
# Deterministic parameter init
# ----------------------------------------------------------------------------
def init_params(key, latent_dim):
    chans = [latent_dim, 512, 256, 128, 64, 32]
    names = ["block1", "block2", "block3", "block4", "block5"]
    keys = jax.random.split(key, len(names) + 1)
    params = {}
    for i, name in enumerate(names):
        cin, cout = chans[i], chans[i + 1]
        k1, k2, k3, k4, k5 = jax.random.split(keys[i], 5)
        params[name] = dict(
            W=0.05 * jax.random.normal(k1, (cin, cout, 4, 4), jnp.float32),
            gamma=1.0 + 0.1 * jax.random.normal(k2, (cout,), jnp.float32),
            beta=0.1 * jax.random.normal(k3, (cout,), jnp.float32),
            mean=0.1 * jax.random.normal(k4, (cout,), jnp.float32),
            var=jax.random.uniform(k5, (cout,), jnp.float32, 0.5, 1.5),
        )
    k1, k2 = jax.random.split(keys[-1], 2)
    params["out"] = dict(
        W=0.05 * jax.random.normal(k1, (32, 3, 4, 4), jnp.float32),
        b=0.1 * jax.random.normal(k2, (3,), jnp.float32),
    )
    return params


if __name__ == "__main__":
    key = jax.random.PRNGKey(0)
    latent_dim = 32
    batch = 2
    pkey, xkey = jax.random.split(key)
    params = init_params(pkey, latent_dim)
    x = jax.random.normal(xkey, (batch, latent_dim, 1, 1), jnp.float32)

    prepped = prepare_params(params)   # one-time weight folding / bf16 cast
    fwd = jax.jit(functools.partial(generator_forward, prepped=prepped))
    out = jax.block_until_ready(fwd(x))
    assert out.shape == (batch, 3, 128, 128), out.shape

    ref = jax.block_until_ready(reference_forward(x, params))
    # bf16 MXU operands (f32 accumulation) vs a HIGHEST-precision f32 reference:
    # tolerance loosened accordingly.
    np.testing.assert_allclose(np.asarray(out), np.asarray(ref),
                               atol=3e-2, rtol=3e-2)
    print("KERNEL_OK")
</pallas_src>

<mosaic_0001>
module attributes {stable_mosaic.version = 11 : i64} {
  func.func @kernel(%arg0: i32, %arg1: i32, %arg2: memref<32x512xbf16, #tpu.memory_space<vmem>>, %arg3: memref<512x512xbf16, #tpu.memory_space<vmem>>, %arg4: memref<32x512xf32, #tpu.memory_space<vmem>>) attributes {dimension_semantics = [#tpu.dimension_semantics<parallel>, #tpu.dimension_semantics<parallel>], iteration_bounds = array<i64: 1, 8>, scalar_prefetch = 0 : i64, scratch_operands = 0 : i64, tpu.core_type = #tpu.core_type<tc>, window_params = [{transform_indices = @transform_0, window_bounds = array<i64: 32, 512>}, {transform_indices = @transform_1, window_bounds = array<i64: 512, 512>}, {transform_indices = @transform_2, window_bounds = array<i64: 32, 512>}]} {
    %c0 = arith.constant 0 : index
    %c0_0 = arith.constant 0 : index
    %0 = vector.load %arg2[%c0, %c0_0] : memref<32x512xbf16, #tpu.memory_space<vmem>>, vector<32x512xbf16>
    %c0_1 = arith.constant 0 : index
    %c0_2 = arith.constant 0 : index
    %1 = vector.load %arg3[%c0_1, %c0_2] : memref<512x512xbf16, #tpu.memory_space<vmem>>, vector<512x512xbf16>
    %cst = arith.constant dense<0.000000e+00> : vector<32x512xf32>
    %2 = tpu.matmul %0, %1, %cst {dimension_numbers = #tpu.dot_dimension_numbers<[1], [0], [0], [1], [0, 0, 1, 1], [], []>} : vector<32x512xbf16>, vector<512x512xbf16>, vector<32x512xf32> -> vector<32x512xf32>
    %c0_3 = arith.constant 0 : index
    %c0_4 = arith.constant 0 : index
    %3 = vector.load %arg4[%c0_3, %c0_4] : memref<32x512xf32, #tpu.memory_space<vmem>>, vector<32x512xf32>
    tpu.vector_store %arg4[%c0_3, %c0_4], %2 {strides = array<i32>} : memref<32x512xf32, #tpu.memory_space<vmem>>, vector<32x512xf32>,
    return
  }
  func.func @transform_0(%arg0: i32, %arg1: i32) -> (i32, i32) {
    %c0_i32 = arith.constant 0 : i32
    %c0_i32_0 = arith.constant 0 : i32
    return %arg0, %c0_i32 : i32, i32
  }
  func.func @transform_1(%arg0: i32, %arg1: i32) -> (i32, i32) {
    %c0_i32 = arith.constant 0 : i32
    %c0_i32_0 = arith.constant 0 : i32
    return %c0_i32, %arg1 : i32, i32
  }
  func.func @transform_2(%arg0: i32, %arg1: i32) -> (i32, i32) {
    %c0_i32 = arith.constant 0 : i32
    return %arg0, %arg1 : i32, i32
  }
}

module attributes {stable_mosaic.version = 11 : i64} {
  func.func @kernel(%arg0: i32, %arg1: i32, %arg2: memref<2x32xbf16, #tpu.memory_space<vmem>>, %arg3: memref<32x1024xbf16, #tpu.memory_space<vmem>>, %arg4: memref<1x1024xf32, #tpu.memory_space<vmem>>, %arg5: memref<2x1024xf32, #tpu.memory_space<vmem>>) attributes {dimension_semantics = [#tpu.dimension_semantics<parallel>, #tpu.dimension_semantics<parallel>], iteration_bounds = array<i64: 1, 8>, scalar_prefetch = 0 : i64, scratch_operands = 0 : i64, tpu.core_type = #tpu.core_type<tc>, window_params = [{transform_indices = @transform_0, window_bounds = array<i64: 2, 32>}, {transform_indices = @transform_1, window_bounds = array<i64: 32, 1024>}, {transform_indices = @transform_2, window_bounds = array<i64: 1, 1024>}, {transform_indices = @transform_3, window_bounds = array<i64: 2, 1024>}]} {
    %c0 = arith.constant 0 : index
    %c0_0 = arith.constant 0 : index
    %0 = vector.load %arg2[%c0, %c0_0] : memref<2x32xbf16, #tpu.memory_space<vmem>>, vector<2x32xbf16>
    %c0_1 = arith.constant 0 : index
    %c0_2 = arith.constant 0 : index
    %1 = vector.load %arg3[%c0_1, %c0_2] : memref<32x1024xbf16, #tpu.memory_space<vmem>>, vector<32x1024xbf16>
    %cst = arith.constant dense<0.000000e+00> : vector<2x1024xf32>
    %2 = tpu.matmul %0, %1, %cst {dimension_numbers = #tpu.dot_dimension_numbers<[1], [0], [0], [1], [0, 0, 1, 1], [], []>} : vector<2x32xbf16>, vector<32x1024xbf16>, vector<2x1024xf32> -> vector<2x1024xf32>
    %c0_3 = arith.constant 0 : index
    %c0_4 = arith.constant 0 : index
    %3 = vector.load %arg4[%c0_3, %c0_4] : memref<1x1024xf32, #tpu.memory_space<vmem>>, vector<1x1024xf32>
    %4 = vector.broadcast %3 : vector<1x1024xf32> to vector<2x1024xf32>
    %5 = arith.addf %2, %4 : vector<2x1024xf32>
    %cst_5 = arith.constant 0.000000e+00 : f32
    %6 = vector.broadcast %cst_5 : f32 to vector<2x1024xf32>
    %7 = arith.cmpf ogt, %5, %6 : vector<2x1024xf32>
    %cst_6 = arith.constant 2.000000e-01 : f32
    %8 = vector.broadcast %cst_6 : f32 to vector<2x1024xf32>
    %9 = arith.mulf %8, %5 : vector<2x1024xf32>
    %10 = arith.select %7, %5, %9 : vector<2x1024xi1>, vector<2x1024xf32>
    %c0_7 = arith.constant 0 : index
    %c0_8 = arith.constant 0 : index
    %11 = vector.load %arg5[%c0_7, %c0_8] : memref<2x1024xf32, #tpu.memory_space<vmem>>, vector<2x1024xf32>
    tpu.vector_store %arg5[%c0_7, %c0_8], %10 {strides = array<i32>} : memref<2x1024xf32, #tpu.memory_space<vmem>>, vector<2x1024xf32>,
    return
  }
  func.func @transform_0(%arg0: i32, %arg1: i32) -> (i32, i32) {
    %c0_i32 = arith.constant 0 : i32
    %c0_i32_0 = arith.constant 0 : i32
    return %arg0, %c0_i32 : i32, i32
  }
  func.func @transform_1(%arg0: i32, %arg1: i32) -> (i32, i32) {
    %c0_i32 = arith.constant 0 : i32
    %c0_i32_0 = arith.constant 0 : i32
    return %c0_i32, %arg1 : i32, i32
  }
  func.func @transform_2(%arg0: i32, %arg1: i32) -> (i32, i32) {
    %c0_i32 = arith.constant 0 : i32
    %c0_i32_0 = arith.constant 0 : i32
    return %c0_i32, %arg1 : i32, i32
  }
  func.func @transform_3(%arg0: i32, %arg1: i32) -> (i32, i32) {
    %c0_i32 = arith.constant 0 : i32
    return %arg0, %arg1 : i32, i32
  }
}

module attributes {stable_mosaic.version = 11 : i64} {
  func.func @kernel(%arg0: i32, %arg1: i32, %arg2: memref<128x256xbf16, #tpu.memory_space<vmem>>, %arg3: memref<256x512xbf16, #tpu.memory_space<vmem>>, %arg4: memref<128x512xf32, #tpu.memory_space<vmem>>) attributes {dimension_semantics = [#tpu.dimension_semantics<parallel>, #tpu.dimension_semantics<parallel>], iteration_bounds = array<i64: 1, 4>, scalar_prefetch = 0 : i64, scratch_operands = 0 : i64, tpu.core_type = #tpu.core_type<tc>, window_params = [{transform_indices = @transform_0, window_bounds = array<i64: 128, 256>}, {transform_indices = @transform_1, window_bounds = array<i64: 256, 512>}, {transform_indices = @transform_2, window_bounds = array<i64: 128, 512>}]} {
    %c0 = arith.constant 0 : index
    %c0_0 = arith.constant 0 : index
    %0 = vector.load %arg2[%c0, %c0_0] : memref<128x256xbf16, #tpu.memory_space<vmem>>, vector<128x256xbf16>
    %c0_1 = arith.constant 0 : index
    %c0_2 = arith.constant 0 : index
    %1 = vector.load %arg3[%c0_1, %c0_2] : memref<256x512xbf16, #tpu.memory_space<vmem>>, vector<256x512xbf16>
    %cst = arith.constant dense<0.000000e+00> : vector<128x512xf32>
    %2 = tpu.matmul %0, %1, %cst {dimension_numbers = #tpu.dot_dimension_numbers<[1], [0], [0], [1], [0, 0, 1, 1], [], []>} : vector<128x256xbf16>, vector<256x512xbf16>, vector<128x512xf32> -> vector<128x512xf32>
    %c0_3 = arith.constant 0 : index
    %c0_4 = arith.constant 0 : index
    %3 = vector.load %arg4[%c0_3, %c0_4] : memref<128x512xf32, #tpu.memory_space<vmem>>, vector<128x512xf32>
    tpu.vector_store %arg4[%c0_3, %c0_4], %2 {strides = array<i32>} : memref<128x512xf32, #tpu.memory_space<vmem>>, vector<128x512xf32>,
    return
  }
  func.func @transform_0(%arg0: i32, %arg1: i32) -> (i32, i32) {
    %c0_i32 = arith.constant 0 : i32
    %c0_i32_0 = arith.constant 0 : i32
    return %arg0, %c0_i32 : i32, i32
  }
  func.func @transform_1(%arg0: i32, %arg1: i32) -> (i32, i32) {
    %c0_i32 = arith.constant 0 : i32
    %c0_i32_0 = arith.constant 0 : i32
    return %c0_i32, %arg1 : i32, i32
  }
  func.func @transform_2(%arg0: i32, %arg1: i32) -> (i32, i32) {
    %c0_i32 = arith.constant 0 : i32
    return %arg0, %arg1 : i32, i32
  }
}

module attributes {stable_mosaic.version = 11 : i64} {
  func.func @kernel(%arg0: i32, %arg1: i32, %arg2: memref<512x128xbf16, #tpu.memory_space<vmem>>, %arg3: memref<128x512xbf16, #tpu.memory_space<vmem>>, %arg4: memref<512x512xf32, #tpu.memory_space<vmem>>) attributes {dimension_semantics = [#tpu.dimension_semantics<parallel>, #tpu.dimension_semantics<parallel>], iteration_bounds = array<i64: 1, 2>, scalar_prefetch = 0 : i64, scratch_operands = 0 : i64, tpu.core_type = #tpu.core_type<tc>, window_params = [{transform_indices = @transform_0, window_bounds = array<i64: 512, 128>}, {transform_indices = @transform_1, window_bounds = array<i64: 128, 512>}, {transform_indices = @transform_2, window_bounds = array<i64: 512, 512>}]} {
    %c0 = arith.constant 0 : index
    %c0_0 = arith.constant 0 : index
    %0 = vector.load %arg2[%c0, %c0_0] : memref<512x128xbf16, #tpu.memory_space<vmem>>, vector<512x128xbf16>
    %c0_1 = arith.constant 0 : index
    %c0_2 = arith.constant 0 : index
    %1 = vector.load %arg3[%c0_1, %c0_2] : memref<128x512xbf16, #tpu.memory_space<vmem>>, vector<128x512xbf16>
    %cst = arith.constant dense<0.000000e+00> : vector<512x512xf32>
    %2 = tpu.matmul %0, %1, %cst {dimension_numbers = #tpu.dot_dimension_numbers<[1], [0], [0], [1], [0, 0, 1, 1], [], []>} : vector<512x128xbf16>, vector<128x512xbf16>, vector<512x512xf32> -> vector<512x512xf32>
    %c0_3 = arith.constant 0 : index
    %c0_4 = arith.constant 0 : index
    %3 = vector.load %arg4[%c0_3, %c0_4] : memref<512x512xf32, #tpu.memory_space<vmem>>, vector<512x512xf32>
    tpu.vector_store %arg4[%c0_3, %c0_4], %2 {strides = array<i32>} : memref<512x512xf32, #tpu.memory_space<vmem>>, vector<512x512xf32>,
    return
  }
  func.func @transform_0(%arg0: i32, %arg1: i32) -> (i32, i32) {
    %c0_i32 = arith.constant 0 : i32
    %c0_i32_0 = arith.constant 0 : i32
    return %arg0, %c0_i32 : i32, i32
  }
  func.func @transform_1(%arg0: i32, %arg1: i32) -> (i32, i32) {
    %c0_i32 = arith.constant 0 : i32
    %c0_i32_0 = arith.constant 0 : i32
    return %c0_i32, %arg1 : i32, i32
  }
  func.func @transform_2(%arg0: i32, %arg1: i32) -> (i32, i32) {
    %c0_i32 = arith.constant 0 : i32
    return %arg0, %arg1 : i32, i32
  }
}

module attributes {stable_mosaic.version = 11 : i64} {
  func.func @kernel(%arg0: i32, %arg1: i32, %arg2: memref<1024x64xbf16, #tpu.memory_space<vmem>>, %arg3: memref<64x512xbf16, #tpu.memory_space<vmem>>, %arg4: memref<1024x512xf32, #tpu.memory_space<vmem>>) attributes {dimension_semantics = [#tpu.dimension_semantics<parallel>, #tpu.dimension_semantics<parallel>], iteration_bounds = array<i64: 2, 1>, scalar_prefetch = 0 : i64, scratch_operands = 0 : i64, tpu.core_type = #tpu.core_type<tc>, window_params = [{transform_indices = @transform_0, window_bounds = array<i64: 1024, 64>}, {transform_indices = @transform_1, window_bounds = array<i64: 64, 512>}, {transform_indices = @transform_2, window_bounds = array<i64: 1024, 512>}]} {
    %c0 = arith.constant 0 : index
    %c0_0 = arith.constant 0 : index
    %0 = vector.load %arg2[%c0, %c0_0] : memref<1024x64xbf16, #tpu.memory_space<vmem>>, vector<1024x64xbf16>
    %c0_1 = arith.constant 0 : index
    %c0_2 = arith.constant 0 : index
    %1 = vector.load %arg3[%c0_1, %c0_2] : memref<64x512xbf16, #tpu.memory_space<vmem>>, vector<64x512xbf16>
    %cst = arith.constant dense<0.000000e+00> : vector<1024x512xf32>
    %2 = tpu.matmul %0, %1, %cst {dimension_numbers = #tpu.dot_dimension_numbers<[1], [0], [0], [1], [0, 0, 1, 1], [], []>} : vector<1024x64xbf16>, vector<64x512xbf16>, vector<1024x512xf32> -> vector<1024x512xf32>
    %c0_3 = arith.constant 0 : index
    %c0_4 = arith.constant 0 : index
    %3 = vector.load %arg4[%c0_3, %c0_4] : memref<1024x512xf32, #tpu.memory_space<vmem>>, vector<1024x512xf32>
    tpu.vector_store %arg4[%c0_3, %c0_4], %2 {strides = array<i32>} : memref<1024x512xf32, #tpu.memory_space<vmem>>, vector<1024x512xf32>,
    return
  }
  func.func @transform_0(%arg0: i32, %arg1: i32) -> (i32, i32) {
    %c0_i32 = arith.constant 0 : i32
    %c0_i32_0 = arith.constant 0 : i32
    return %arg0, %c0_i32 : i32, i32
  }
  func.func @transform_1(%arg0: i32, %arg1: i32) -> (i32, i32) {
    %c0_i32 = arith.constant 0 : i32
    %c0_i32_0 = arith.constant 0 : i32
    return %c0_i32, %arg1 : i32, i32
  }
  func.func @transform_2(%arg0: i32, %arg1: i32) -> (i32, i32) {
    %c0_i32 = arith.constant 0 : i32
    return %arg0, %arg1 : i32, i32
  }
}

module attributes {stable_mosaic.version = 11 : i64} {
  func.func @kernel(%arg0: i32, %arg1: i32, %arg2: memref<1024x32xbf16, #tpu.memory_space<vmem>>, %arg3: memref<32x128xbf16, #tpu.memory_space<vmem>>, %arg4: memref<1024x128xf32, #tpu.memory_space<vmem>>) attributes {dimension_semantics = [#tpu.dimension_semantics<parallel>, #tpu.dimension_semantics<parallel>], iteration_bounds = array<i64: 8, 1>, scalar_prefetch = 0 : i64, scratch_operands = 0 : i64, tpu.core_type = #tpu.core_type<tc>, window_params = [{transform_indices = @transform_0, window_bounds = array<i64: 1024, 32>}, {transform_indices = @transform_1, window_bounds = array<i64: 32, 128>}, {transform_indices = @transform_2, window_bounds = array<i64: 1024, 128>}]} {
    %c0 = arith.constant 0 : index
    %c0_0 = arith.constant 0 : index
    %0 = vector.load %arg2[%c0, %c0_0] : memref<1024x32xbf16, #tpu.memory_space<vmem>>, vector<1024x32xbf16>
    %c0_1 = arith.constant 0 : index
    %c0_2 = arith.constant 0 : index
    %1 = vector.load %arg3[%c0_1, %c0_2] : memref<32x128xbf16, #tpu.memory_space<vmem>>, vector<32x128xbf16>
    %cst = arith.constant dense<0.000000e+00> : vector<1024x128xf32>
    %2 = tpu.matmul %0, %1, %cst {dimension_numbers = #tpu.dot_dimension_numbers<[1], [0], [0], [1], [0, 0, 1, 1], [], []>} : vector<1024x32xbf16>, vector<32x128xbf16>, vector<1024x128xf32> -> vector<1024x128xf32>
    %c0_3 = arith.constant 0 : index
    %c0_4 = arith.constant 0 : index
    %3 = vector.load %arg4[%c0_3, %c0_4] : memref<1024x128xf32, #tpu.memory_space<vmem>>, vector<1024x128xf32>
    tpu.vector_store %arg4[%c0_3, %c0_4], %2 {strides = array<i32>} : memref<1024x128xf32, #tpu.memory_space<vmem>>, vector<1024x128xf32>,
    return
  }
  func.func @transform_0(%arg0: i32, %arg1: i32) -> (i32, i32) {
    %c0_i32 = arith.constant 0 : i32
    %c0_i32_0 = arith.constant 0 : i32
    return %arg0, %c0_i32 : i32, i32
  }
  func.func @transform_1(%arg0: i32, %arg1: i32) -> (i32, i32) {
    %c0_i32 = arith.constant 0 : i32
    %c0_i32_0 = arith.constant 0 : i32
    return %c0_i32, %arg1 : i32, i32
  }
  func.func @transform_2(%arg0: i32, %arg1: i32) -> (i32, i32) {
    %c0_i32 = arith.constant 0 : i32
    return %arg0, %arg1 : i32, i32
  }
}

</mosaic_0001>

<llo_original>
// kernel: generator_forward.6
$region0: #{generator_forward.6}
  #allocation0 [shape = 'u32[]', space=smem, size = 0x4, offset = 0x4, fixed_abs, tag = 'smem constant byte address 0x4 - core index']
  #allocation1 [shape = 'u32[144,128]{1,0:T(1,128)}', space=vmem, size = 0x12000, scoped, tag = 'internal scratch']
  %s0 = inlined_call_operand.vmem [shape: bf16[2,32], index: 0, kind: input, shape index: {}]
  %s1 = inlined_call_operand.hbm [shape: bf16[32,8192], index: 1, kind: input, shape index: {}]
  %s2 = inlined_call_operand.hbm [shape: f32[1,8192], index: 2, kind: input, shape index: {}]
  %s3 = inlined_call_operand.vmem [shape: f32[2,8192], index: 3, kind: output, shape index: {}]
  %s4 = sld [smem:[#allocation0]]
  $region53: #{generator_forward.6} parent=0
    _
  %s6 = ssub.s32 1, %s4
  %s7 = scalar_select 0, %s6, %s4
  $region1: #{generator_forward.6} parent=0
    #allocation2 [shape = 'u8[131072]{0}', space=vmem, size = 0x20000, scoped, tag = 'input window, operand 1']
    #allocation3 [shape = 's32[2]{0}', space=sflag, size = 0x8, scoped, tag = 'scoped memory for generator_forward.6']
    #allocation4 [shape = 'u8[8192]{0}', space=vmem, size = 0x2000, scoped, tag = 'input window, operand 2']
    #allocation5 [shape = 's32[2]{0}', space=sflag, size = 0x8, scoped, tag = 'scoped memory for generator_forward.6']
    %8 = vsyncpa [#allocation3], 0
    %s9 = scalar_lea.sflag [#allocation3], 1
    %10 = vsyncpa %s9, 0
    %11 = vsyncpa [#allocation5], 0
    %s12 = scalar_lea.sflag [#allocation5], 1
    %13 = vsyncpa %s12, 0
    loop: start=0, step=1, limit=10
    $region2: #{generator_forward.6} parent=1 // loop_pre_header
      _
    $region3: #{generator_forward.6} parent=1 // loop_header
      %s15 = sphi 0, %s19
      %p16 = scmp.ge.s32.totalorder %s15, 10
      %s22 = sphi 0, %s34
      %s23 = sphi 0, %s30
      %s24 = sphi 0, %s22
      %s25 = sphi 0, %s23
      %s26 = sphi 0, %s24
      %s27 = sphi 0, %s25
      %s37 = sphi 0, %s39
      %s40 = sphi 0, %s37
      %s41 = sphi 0, %s40
      %s57 = sphi 0, %s41
      %s63 = sphi 0, %s65
      %s66 = sphi 0, %s63
      %s67 = sphi 0, %s66
      %s83 = sphi 0, %s67
      %s89 = sphi 0, %s91
      %s92 = sphi 0, %s89
      %s93 = sphi 0, %s92
      %s109 = sphi 0, %s93
      %s117 = sphi 0, %s119
      %s120 = sphi 0, %s117
      %s121 = sphi 0, %s120
      %s137 = sphi 0, %s121
    $region4: #{generator_forward.6} parent=1 // loop_header_branch
      %18 = sbr.rel (%p16) target = $region8
    $region5: #{generator_forward.6} parent=1 // loop_body
      %s20 = ssub.s32 %s15, 1
      %s21 = ssub.s32 %s15, 2
      %s28 = sadd.s32 1, %s23
      %p29 = scmp.ge.s32.totalorder %s28, 8
      %s30 = scalar_select %p29, 0, %s28
      %s31 = sadd.s32 1, %s22
      %s32 = scalar_select %p29, %s31, %s22
      %p33 = scmp.ge.s32.totalorder %s32, 1
      %s34 = scalar_select %p33, 0, %s32
      %s35 = ssub.s32 %s22, %s34
      %p36 = scmp.eq.s32.totalorder %s35, 0
      %s38 = sadd.s32 %s37, 1
      %s39 = scalar_select %p36, %s37, %s38
      %p42 = pneg %p36
      %p43 = scmp.eq.s32.totalorder %s15, 7
      %p44 = por %p42, %p43
      %p45 = scmp.ne.s32.totalorder %s37, %s40
      %p46 = scmp.eq.s32.totalorder %s15, 0
      %p47 = por %p45, %p46
      %p48 = scmp.ne.s32.totalorder %s37, %s40
      %p49 = scmp.eq.s32.totalorder %s20, 7
      %p50 = por %p48, %p49
      %p51 = scmp.ne.s32.totalorder %s40, %s41
      %p52 = scmp.eq.s32.totalorder %s20, 0
      %p53 = por %p51, %p52
      %p54 = scmp.ne.s32.totalorder %s40, %s41
      %p55 = scmp.eq.s32.totalorder %s21, 7
      %p56 = por %p54, %p55
      %p58 = scmp.ne.s32.totalorder %s41, %s57
      %p59 = scmp.eq.s32.totalorder %s21, 0
      %p60 = por %p58, %p59
      %s61 = ssub.s32 %s23, %s30
      %p62 = scmp.eq.s32.totalorder %s61, 0
      %s64 = sadd.s32 %s63, 1
      %s65 = scalar_select %p62, %s63, %s64
      %p68 = pneg %p62
      %p69 = scmp.eq.s32.totalorder %s15, 7
      %p70 = por %p68, %p69
      %p71 = scmp.ne.s32.totalorder %s63, %s66
      %p72 = scmp.eq.s32.totalorder %s15, 0
      %p73 = por %p71, %p72
      %p74 = scmp.ne.s32.totalorder %s63, %s66
      %p75 = scmp.eq.s32.totalorder %s20, 7
      %p76 = por %p74, %p75
      %p77 = scmp.ne.s32.totalorder %s66, %s67
      %p78 = scmp.eq.s32.totalorder %s20, 0
      %p79 = por %p77, %p78
      %p80 = scmp.ne.s32.totalorder %s66, %s67
      %p81 = scmp.eq.s32.totalorder %s21, 7
      %p82 = por %p80, %p81
      %p84 = scmp.ne.s32.totalorder %s67, %s83
      %p85 = scmp.eq.s32.totalorder %s21, 0
      %p86 = por %p84, %p85
      %s87 = ssub.s32 %s23, %s30
      %p88 = scmp.eq.s32.totalorder %s87, 0
      %s90 = sadd.s32 %s89, 1
      %s91 = scalar_select %p88, %s89, %s90
      %p94 = pneg %p88
      %p95 = scmp.eq.s32.totalorder %s15, 7
      %p96 = por %p94, %p95
      %p97 = scmp.ne.s32.totalorder %s89, %s92
      %p98 = scmp.eq.s32.totalorder %s15, 0
      %p99 = por %p97, %p98
      %p100 = scmp.ne.s32.totalorder %s89, %s92
      %p101 = scmp.eq.s32.totalorder %s20, 7
      %p102 = por %p100, %p101
      %p103 = scmp.ne.s32.totalorder %s92, %s93
      %p104 = scmp.eq.s32.totalorder %s20, 0
      %p105 = por %p103, %p104
      %p106 = scmp.ne.s32.totalorder %s92, %s93
      %p107 = scmp.eq.s32.totalorder %s21, 7
      %p108 = por %p106, %p107
      %p110 = scmp.ne.s32.totalorder %s93, %s109
      %p111 = scmp.eq.s32.totalorder %s21, 0
      %p112 = por %p110, %p111
      %s113 = ssub.s32 %s22, %s34
      %s114 = ssub.s32 %s23, %s30
      %s115 = sor.u32 %s113, %s114
      %p116 = scmp.eq.s32.totalorder %s115, 0
      %s118 = sadd.s32 %s117, 1
      %s119 = scalar_select %p116, %s117, %s118
      %p122 = pneg %p116
      %p123 = scmp.eq.s32.totalorder %s15, 7
      %p124 = por %p122, %p123
      %p125 = scmp.ne.s32.totalorder %s117, %s120
      %p126 = scmp.eq.s32.totalorder %s15, 0
      %p127 = por %p125, %p126
      %p128 = scmp.ne.s32.totalorder %s117, %s120
      %p129 = scmp.eq.s32.totalorder %s20, 7
      %p130 = por %p128, %p129
      %p131 = scmp.ne.s32.totalorder %s120, %s121
      %p132 = scmp.eq.s32.totalorder %s20, 0
      %p133 = por %p131, %p132
      %p134 = scmp.ne.s32.totalorder %s120, %s121
      %p135 = scmp.eq.s32.totalorder %s21, 7
      %p136 = por %p134, %p135
      %p138 = scmp.ne.s32.totalorder %s121, %s137
      %p139 = scmp.eq.s32.totalorder %s21, 0
      %p140 = por %p138, %p139
      %p141 = scmp.le.s32.totalorder 1, %s15
      %p142 = scmp.lt.s32.totalorder %s15, 9
      %p143 = pnand %p141, %p142
      %p144 = pneg %p143
      // Predicated region
      $region9: #{generator_forward.6} parent=5 // pred_check
        _
      $region10: #{generator_forward.6} parent=5 // pred_check_branch
        %146 = sbr.rel (%p143) target = $region12
      $region11: #{generator_forward.6} parent=5 // pred_region
        %s147 = ssub.s32 %s15, 1
        // Predicated region
        $region13: #{generator_forward.6} parent=11 // pred_check
          %p148 = pneg %p53
        $region14: #{generator_forward.6} parent=11 // pred_check_branch
          %150 = sbr.rel (%p148) target = $region16
        $region15: #{generator_forward.6} parent=11 // pred_region
          %p151 = scmp.lt.s32.totalorder %s24, 0
          %s152 = scalar_select %p151, %s24, 0
          %s153 = scalar_lea.vmem %s0, %s152
        $region16: #{generator_forward.6} parent=11 // pred_fallthru
          _
      $region12: #{generator_forward.6} parent=5 // pred_fallthru
        _
      %p154 = scmp.lt.s32.totalorder %s15, 8
      // Predicated region
      $region17: #{generator_forward.6} parent=5 // pred_check
        %p155 = pneg %p154
      $region18: #{generator_forward.6} parent=5 // pred_check_branch
        %157 = sbr.rel (%p155) target = $region20
      $region19: #{generator_forward.6} parent=5 // pred_region
        // Predicated region
        $region21: #{generator_forward.6} parent=19 // pred_check
          %p158 = pneg %p73
        $region22: #{generator_forward.6} parent=19 // pred_check_branch
          %160 = sbr.rel (%p158) target = $region24
        $region23: #{generator_forward.6} parent=19 // pred_region
          %s161 = sand.u32 %s63, 1
          %s162 = scalar_lea.sflag [#allocation3], %s161
          %s163 = sand.u32 %s63, 1
          %s164 = smul.addr %s163, 128
          %s165 = scalar_lea.vmem [#allocation2], %s164
          %s166 = smul.u32 8, %s23
          %s168 = ssub.s32 2048, 2048
          %169 = vsyncadd %s162, %s168
          %s170 = smul.addr %s166, 64
          %s171 = scalar_lea.hbm %s1, %s170
          %s172 = sshll.u32 %s165, 4
          %s173 = int_to_ptr.vmem [resolvable:$true] %s172
          %178 = dma.hbm_to_vmem [thread:$0]  %s171, 2048, %s173, %s162, 4096, 512, 32
        $region24: #{generator_forward.6} parent=19 // pred_fallthru
          _
        // Predicated region
        $region25: #{generator_forward.6} parent=19 // pred_check
          %p179 = pneg %p99
        $region26: #{generator_forward.6} parent=19 // pred_check_branch
          %181 = sbr.rel (%p179) target = $region28
        $region27: #{generator_forward.6} parent=19 // pred_region
          %s182 = sand.u32 %s89, 1
          %s183 = scalar_lea.sflag [#allocation5], %s182
          %s184 = sand.u32 %s89, 1
          %s185 = smul.addr %s184, 8
          %s186 = scalar_lea.vmem [#allocation4], %s185
          %s187 = smul.u32 8, %s23
          %s189 = ssub.s32 128, 128
          %190 = vsyncadd %s183, %s189
          %s191 = smul.addr %s187, 16
          %s192 = scalar_lea.hbm %s2, %s191
          %s194 = sshll.u32 %s186, 4
          %s195 = int_to_ptr.vmem [resolvable:$true] %s194
          %197 = dma.hbm_to_vmem [thread:$0]  %s192, 128, %s195, %s183
        $region28: #{generator_forward.6} parent=19 // pred_fallthru
          _
      $region20: #{generator_forward.6} parent=5 // pred_fallthru
        _
      %p198 = scmp.le.s32.totalorder 1, %s15
      %p199 = scmp.lt.s32.totalorder %s15, 9
      %p200 = pnand %p198, %p199
      %p201 = pneg %p200
      // Predicated region
      $region29: #{generator_forward.6} parent=5 // pred_check
        _
      $region30: #{generator_forward.6} parent=5 // pred_check_branch
        %203 = sbr.rel (%p200) target = $region32
      $region31: #{generator_forward.6} parent=5 // pred_region
        %s204 = ssub.s32 %s15, 1
        %s205 = sand.u32 %s66, 1
        %s206 = scalar_lea.sflag [#allocation3], %s205
        %s207 = sand.u32 %s66, 1
        %s208 = smul.addr %s207, 128
        %s209 = scalar_lea.vmem [#allocation2], %s208
        // Predicated region
        $region33: #{generator_forward.6} parent=31 // pred_check
          %p210 = pneg %p79
        $region34: #{generator_forward.6} parent=31 // pred_check_branch
          %212 = sbr.rel (%p210) target = $region36
        $region35: #{generator_forward.6} parent=31 // pred_region
          %213 = dma.done %s206, 2048
        $region36: #{generator_forward.6} parent=31 // pred_fallthru
          _
        %s214 = sand.u32 %s92, 1
        %s215 = scalar_lea.sflag [#allocation5], %s214
        %s216 = sand.u32 %s92, 1
        %s217 = smul.addr %s216, 8
        %s218 = scalar_lea.vmem [#allocation4], %s217
        // Predicated region
        $region37: #{generator_forward.6} parent=31 // pred_check
          %p219 = pneg %p105
        $region38: #{generator_forward.6} parent=31 // pred_check_branch
          %221 = sbr.rel (%p219) target = $region40
        $region39: #{generator_forward.6} parent=31 // pred_region
          %222 = dma.done %s215, 128
        $region40: #{generator_forward.6} parent=31 // pred_fallthru
          _
        %p223 = scmp.lt.s32.totalorder %s24, 0
        %s224 = scalar_select %p223, %s24, 0
        %s225 = scalar_lea.vmem %s0, %s224
        %p226 = pneg %p53
        %p227 = pneg %p50
        %s228 = sand.u32 %s66, 1
        %s229 = scalar_lea.sflag [#allocation3], %s228
        %s230 = sand.u32 %s66, 1
        %s231 = smul.addr %s230, 128
        %s232 = scalar_lea.vmem [#allocation2], %s231
        %p233 = pneg %p79
        %p234 = pneg %p76
        %s235 = sand.u32 %s92, 1
        %s236 = scalar_lea.sflag [#allocation5], %s235
        %s237 = sand.u32 %s92, 1
        %s238 = smul.addr %s237, 8
        %s239 = scalar_lea.vmem [#allocation4], %s238
        %p240 = pneg %p105
        %p241 = pneg %p102
        %p242 = pneg %p133
        %p243 = pneg %p130
        %s244 = smul.u32 8, %s25
        %p245 = scmp.lt.s32.totalorder %s24, 0
        %s246 = scalar_select %p245, %s24, 0
        %p247 = scmp.lt.s32.totalorder %s244, 63
        %s248 = scalar_select %p247, %s244, 63
        %s249 = smul.addr %s246, 64
        %s250 = sadd.s32 %s248, %s249
        %s251 = smul.addr %s250, 2
        %s252 = scalar_lea.vmem %s3, %s251
        %p253 = scmp.lt.s32.totalorder %s24, 0
        %s254 = scalar_select %p253, %s24, 0
        %s255 = scalar_lea.vmem %s0, %s254
        %s256 = smul.u32 8, %s25
        %s257 = smul.u32 8, %s25
        %s258 = smul.u32 8, %s25
        %p259 = scmp.lt.s32.totalorder %s24, 0
        %s260 = scalar_select %p259, %s24, 0
        %p261 = scmp.lt.s32.totalorder %s258, 63
        %s262 = scalar_select %p261, %s258, 63
        %s263 = smul.addr %s260, 64
        %s264 = sadd.s32 %s262, %s263
        %s265 = smul.addr %s264, 2
        %s266 = scalar_lea.vmem %s3, %s265
        %s267 = smul.u32 8, %s25
        %v269 = vld [vmem:[%s255] sm:$0x1]
        %v270 = vld [vmem:[%s209] sm:$0xff]
        %v271 = vld [vmem:[%s209 + $0x8] sm:$0xff]
        %v272 = vld [vmem:[%s209 + $0x10] sm:$0xff]
        %v273 = vld [vmem:[%s209 + $0x18] sm:$0xff]
        %v274 = vld [vmem:[%s209 + $0x20] sm:$0xff]
        %v275 = vld [vmem:[%s209 + $0x28] sm:$0xff]
        %v276 = vld [vmem:[%s209 + $0x30] sm:$0xff]
        %v277 = vld [vmem:[%s209 + $0x38] sm:$0xff]
        %v278 = vld [vmem:[%s209 + $0x40] sm:$0xff]
        %v279 = vld [vmem:[%s209 + $0x48] sm:$0xff]
        %v280 = vld [vmem:[%s209 + $0x50] sm:$0xff]
        %v281 = vld [vmem:[%s209 + $0x58] sm:$0xff]
        %v282 = vld [vmem:[%s209 + $0x60] sm:$0xff]
        %v283 = vld [vmem:[%s209 + $0x68] sm:$0xff]
        %v284 = vld [vmem:[%s209 + $0x70] sm:$0xff]
        %v285 = vld [vmem:[%s209 + $0x78] sm:$0xff]
        %v286 = vld [vmem:[%s218] sm:$0xff]
        %v288 = vlaneseq
        %v289 = vshrl.u32 %v288, 7
        %v290 = vsub.s32 0, %v289
        %v291 = vrot.slane %v286, %v290
        %v292 = vlaneseq
        %v293 = vshrl.u32 %v292, 7
        %v294 = vsub.s32 1, %v293
        %v295 = vrot.slane %v286, %v294
        %v296 = vlaneseq
        %v297 = vshrl.u32 %v296, 7
        %v298 = vsub.s32 2, %v297
        %v299 = vrot.slane %v286, %v298
        %v300 = vlaneseq
        %v301 = vshrl.u32 %v300, 7
        %v302 = vsub.s32 3, %v301
        %v303 = vrot.slane %v286, %v302
        %v304 = vlaneseq
        %v305 = vshrl.u32 %v304, 7
        %v306 = vsub.s32 4, %v305
        %v307 = vrot.slane %v286, %v306
        %v308 = vlaneseq
        %v309 = vshrl.u32 %v308, 7
        %v310 = vsub.s32 5, %v309
        %v311 = vrot.slane %v286, %v310
        %v312 = vlaneseq
        %v313 = vshrl.u32 %v312, 7
        %v314 = vsub.s32 6, %v313
        %v315 = vrot.slane %v286, %v314
        %v316 = vlaneseq
        %v317 = vshrl.u32 %v316, 7
        %v318 = vsub.s32 7, %v317
        %v319 = vrot.slane %v286, %v318
        %v344 = vunpack.c.l.b16 %v270
        %v345 = vunpack.c.h.b16 %v270
        %v346 = vunpack.c.l.b16 %v271
        %v347 = vunpack.c.h.b16 %v271
        %v348 = vunpack.c.l.b16 %v272
        %v349 = vunpack.c.h.b16 %v272
        %v350 = vunpack.c.l.b16 %v273
        %v351 = vunpack.c.h.b16 %v273
        %v352 = vunpack.c.l.b16 %v274
        %v353 = vunpack.c.h.b16 %v274
        %v354 = vunpack.c.l.b16 %v275
        %v355 = vunpack.c.h.b16 %v275
        %v356 = vunpack.c.l.b16 %v276
        %v357 = vunpack.c.h.b16 %v276
        %v358 = vunpack.c.l.b16 %v277
        %v359 = vunpack.c.h.b16 %v277
        %v360 = vunpack.c.l.b16 %v278
        %v361 = vunpack.c.h.b16 %v278
        %v362 = vunpack.c.l.b16 %v279
        %v363 = vunpack.c.h.b16 %v279
        %v364 = vunpack.c.l.b16 %v280
        %v365 = vunpack.c.h.b16 %v280
        %v366 = vunpack.c.l.b16 %v281
        %v367 = vunpack.c.h.b16 %v281
        %v368 = vunpack.c.l.b16 %v282
        %v369 = vunpack.c.h.b16 %v282
        %v370 = vunpack.c.l.b16 %v283
        %v371 = vunpack.c.h.b16 %v283
        %v372 = vunpack.c.l.b16 %v284
        %v373 = vunpack.c.h.b16 %v284
        %v374 = vunpack.c.l.b16 %v285
        %v375 = vunpack.c.h.b16 %v285
        %v376 = vpack.c.b16 %v352, %v344
        %v377 = vpack.c.b16 %v353, %v345
        %v378 = vpack.c.b16 %v354, %v346
        %v379 = vpack.c.b16 %v355, %v347
        %v380 = vpack.c.b16 %v356, %v348
        %v381 = vpack.c.b16 %v357, %v349
        %v382 = vpack.c.b16 %v358, %v350
        %v383 = vpack.c.b16 %v359, %v351
        %v384 = vpack.c.b16 %v368, %v360
        %v385 = vpack.c.b16 %v369, %v361
        %v386 = vpack.c.b16 %v370, %v362
        %v387 = vpack.c.b16 %v371, %v363
        %v388 = vpack.c.b16 %v372, %v364
        %v389 = vpack.c.b16 %v373, %v365
        %v390 = vpack.c.b16 %v374, %v366
        %v391 = vpack.c.b16 %v375, %v367
        %vm408 = vcmask 261120
        %v410 = vsel %vm408, %v269, 0
        %412 = vmatprep.subr.bf16.mxu0 0
        %413 = vmatpush1.bf16.msra.mxu0 0
        %414 = vmatprep.subr.bf16.mxu0 0
        %415 = vmatpush1.bf16.msra.mxu0 0
        %416 = vmatprep.subr.bf16.mxu0 0
        %417 = vmatpush1.bf16.msra.mxu0 0
        %418 = vmatprep.subr.bf16.mxu0 0
        %419 = vmatpush1.bf16.msra.mxu0 0
        %420 = vmatprep.subr.bf16.mxu0 0
        %421 = vmatpush1.bf16.msra.mxu0 0
        %422 = vmatprep.subr.bf16.mxu0 0
        %423 = vmatpush1.bf16.msra.mxu0 0
        %424 = vmatprep.subr.bf16.mxu0 %v385
        %425 = vmatpush1.bf16.msra.mxu0 %v384
        %426 = vmatprep.subr.bf16.mxu0 %v377
        %427 = vmatpush1.bf16.msra.mxu0 %v376
        %428 = vmatprep.subr.bf16.mxu0 0
        %429 = vmatpush2.bf16.msra.mxu0 0
        %430 = vmatprep.subr.bf16.mxu0 0
        %431 = vmatpush2.bf16.msra.mxu0 0
        %432 = vmatprep.subr.bf16.mxu0 0
        %433 = vmatpush2.bf16.msra.mxu0 0
        %434 = vmatprep.subr.bf16.mxu0 0
        %435 = vmatpush2.bf16.msra.mxu0 0
        %436 = vmatprep.subr.bf16.mxu0 0
        %437 = vmatpush2.bf16.msra.mxu0 0
        %438 = vmatprep.subr.bf16.mxu0 0
        %439 = vmatpush2.bf16.msra.mxu0 0
        %440 = vmatprep.subr.bf16.mxu0 0
        %441 = vmatpush2.bf16.msra.mxu0 0
        %442 = vmatprep.subr.bf16.mxu0 0
        %443 = vmatpush2.bf16.msra.mxu0 0
        %444 = vmatprep.mubr.bf16.mxu0 0
        %445 = vmatmul.mubr.bf16.gmra.mxu0 %v410
        %v446 = vpop.f32.mrf.mxu0
        %v447 = vadd.f32 %v291, %v446
        %v448 = vpop.f32.mrf.mxu0
        %v449 = vadd.f32 %v295, %v448
        %v450 = vpop.f32.mrf.mxu0
        %v451 = vpop.f32.mrf.mxu0
        %452 = vdwg.mxu0
        %453 = vmatprep.subr.bf16.mxu0 0
        %454 = vmatpush1.bf16.msra.mxu0 0
        %455 = vmatprep.subr.bf16.mxu0 0
        %456 = vmatpush1.bf16.msra.mxu0 0
        %457 = vmatprep.subr.bf16.mxu0 0
        %458 = vmatpush1.bf16.msra.mxu0 0
        %459 = vmatprep.subr.bf16.mxu0 0
        %460 = vmatpush1.bf16.msra.mxu0 0
        %461 = vmatprep.subr.bf16.mxu0 0
        %462 = vmatpush1.bf16.msra.mxu0 0
        %463 = vmatprep.subr.bf16.mxu0 0
        %464 = vmatpush1.bf16.msra.mxu0 0
        %465 = vmatprep.subr.bf16.mxu0 %v387
        %466 = vmatpush1.bf16.msra.mxu0 %v386
        %467 = vmatprep.subr.bf16.mxu0 %v379
        %468 = vmatpush1.bf16.msra.mxu0 %v378
        %469 = vmatprep.subr.bf16.mxu0 0
        %470 = vmatpush2.bf16.msra.mxu0 0
        %471 = vmatprep.subr.bf16.mxu0 0
        %472 = vmatpush2.bf16.msra.mxu0 0
        %473 = vmatprep.subr.bf16.mxu0 0
        %474 = vmatpush2.bf16.msra.mxu0 0
        %475 = vmatprep.subr.bf16.mxu0 0
        %476 = vmatpush2.bf16.msra.mxu0 0
        %477 = vmatprep.subr.bf16.mxu0 0
        %478 = vmatpush2.bf16.msra.mxu0 0
        %479 = vmatprep.subr.bf16.mxu0 0
        %480 = vmatpush2.bf16.msra.mxu0 0
        %481 = vmatprep.subr.bf16.mxu0 0
        %482 = vmatpush2.bf16.msra.mxu0 0
        %483 = vmatprep.subr.bf16.mxu0 0
        %484 = vmatpush2.bf16.msra.mxu0 0
        %485 = vmatprep.mubr.bf16.mxu0 0
        %486 = vmatmul.mubr.bf16.gmra.mxu0 %v410
        %v487 = vpop.f32.mrf.mxu0
        %v488 = vadd.f32 %v299, %v487
        %v489 = vpop.f32.mrf.mxu0
        %v490 = vadd.f32 %v303, %v489
        %v491 = vpop.f32.mrf.mxu0
        %v492 = vpop.f32.mrf.mxu0
        %493 = vdwg.mxu0
        %494 = vmatprep.subr.bf16.mxu0 0
        %495 = vmatpush1.bf16.msra.mxu0 0
        %496 = vmatprep.subr.bf16.mxu0 0
        %497 = vmatpush1.bf16.msra.mxu0 0
        %498 = vmatprep.subr.bf16.mxu0 0
        %499 = vmatpush1.bf16.msra.mxu0 0
        %500 = vmatprep.subr.bf16.mxu0 0
        %501 = vmatpush1.bf16.msra.mxu0 0
        %502 = vmatprep.subr.bf16.mxu0 0
        %503 = vmatpush1.bf16.msra.mxu0 0
        %504 = vmatprep.subr.bf16.mxu0 0
        %505 = vmatpush1.bf16.msra.mxu0 0
        %506 = vmatprep.subr.bf16.mxu0 %v389
        %507 = vmatpush1.bf16.msra.mxu0 %v388
        %508 = vmatprep.subr.bf16.mxu0 %v381
        %509 = vmatpush1.bf16.msra.mxu0 %v380
        %510 = vmatprep.subr.bf16.mxu0 0
        %511 = vmatpush2.bf16.msra.mxu0 0
        %512 = vmatprep.subr.bf16.mxu0 0
        %513 = vmatpush2.bf16.msra.mxu0 0
        %514 = vmatprep.subr.bf16.mxu0 0
        %515 = vmatpush2.bf16.msra.mxu0 0
        %516 = vmatprep.subr.bf16.mxu0 0
        %517 = vmatpush2.bf16.msra.mxu0 0
        %518 = vmatprep.subr.bf16.mxu0 0
        %519 = vmatpush2.bf16.msra.mxu0 0
        %520 = vmatprep.subr.bf16.mxu0 0
        %521 = vmatpush2.bf16.msra.mxu0 0
        %522 = vmatprep.subr.bf16.mxu0 0
        %523 = vmatpush2.bf16.msra.mxu0 0
        %524 = vmatprep.subr.bf16.mxu0 0
        %525 = vmatpush2.bf16.msra.mxu0 0
        %526 = vmatprep.mubr.bf16.mxu0 0
        %527 = vmatmul.mubr.bf16.gmra.mxu0 %v410
        %v528 = vpop.f32.mrf.mxu0
        %v529 = vadd.f32 %v307, %v528
        %v530 = vpop.f32.mrf.mxu0
        %v531 = vadd.f32 %v311, %v530
        %v532 = vpop.f32.mrf.mxu0
        %v533 = vpop.f32.mrf.mxu0
        %534 = vdwg.mxu0
        %535 = vmatprep.subr.bf16.mxu0 0
        %536 = vmatpush1.bf16.msra.mxu0 0
        %537 = vmatprep.subr.bf16.mxu0 0
        %538 = vmatpush1.bf16.msra.mxu0 0
        %539 = vmatprep.subr.bf16.mxu0 0
        %540 = vmatpush1.bf16.msra.mxu0 0
        %541 = vmatprep.subr.bf16.mxu0 0
        %542 = vmatpush1.bf16.msra.mxu0 0
        %543 = vmatprep.subr.bf16.mxu0 0
        %544 = vmatpush1.bf16.msra.mxu0 0
        %545 = vmatprep.subr.bf16.mxu0 0
        %546 = vmatpush1.bf16.msra.mxu0 0
        %547 = vmatprep.subr.bf16.mxu0 %v391
        %548 = vmatpush1.bf16.msra.mxu0 %v390
        %549 = vmatprep.subr.bf16.mxu0 %v383
        %550 = vmatpush1.bf16.msra.mxu0 %v382
        %551 = vmatprep.subr.bf16.mxu0 0
        %552 = vmatpush2.bf16.msra.mxu0 0
        %553 = vmatprep.subr.bf16.mxu0 0
        %554 = vmatpush2.bf16.msra.mxu0 0
        %555 = vmatprep.subr.bf16.mxu0 0
        %556 = vmatpush2.bf16.msra.mxu0 0
        %557 = vmatprep.subr.bf16.mxu0 0
        %558 = vmatpush2.bf16.msra.mxu0 0
        %559 = vmatprep.subr.bf16.mxu0 0
        %560 = vmatpush2.bf16.msra.mxu0 0
        %561 = vmatprep.subr.bf16.mxu0 0
        %562 = vmatpush2.bf16.msra.mxu0 0
        %563 = vmatprep.subr.bf16.mxu0 0
        %564 = vmatpush2.bf16.msra.mxu0 0
        %565 = vmatprep.subr.bf16.mxu0 0
        %566 = vmatpush2.bf16.msra.mxu0 0
        %567 = vmatprep.mubr.bf16.mxu0 0
        %568 = vmatmul.mubr.bf16.gmra.mxu0 %v410
        %v569 = vpop.f32.mrf.mxu0
        %v570 = vadd.f32 %v315, %v569
        %v571 = vpop.f32.mrf.mxu0
        %v572 = vadd.f32 %v319, %v571
        %v573 = vpop.f32.mrf.mxu0
        %v574 = vpop.f32.mrf.mxu0
        %575 = vdwg.mxu0
        %vm576 = vcmp.gt.f32.partialorder %v447, 0.0
        %vm577 = vcmp.gt.f32.partialorder %v449, 0.0
        %vm578 = vcmp.gt.f32.partialorder %v488, 0.0
        %vm579 = vcmp.gt.f32.partialorder %v490, 0.0
        %vm580 = vcmp.gt.f32.partialorder %v529, 0.0
        %vm581 = vcmp.gt.f32.partialorder %v531, 0.0
        %vm582 = vcmp.gt.f32.partialorder %v570, 0.0
        %vm583 = vcmp.gt.f32.partialorder %v572, 0.0
        %v584 = vmul.f32 %v447, 0.2
        %v585 = vmul.f32 %v449, 0.2
        %v586 = vmul.f32 %v488, 0.2
        %v587 = vmul.f32 %v490, 0.2
        %v588 = vmul.f32 %v529, 0.2
        %v589 = vmul.f32 %v531, 0.2
        %v590 = vmul.f32 %v570, 0.2
        %v591 = vmul.f32 %v572, 0.2
        %v592 = vsel %vm576, %v447, %v584
        %v593 = vsel %vm577, %v449, %v585
        %v594 = vsel %vm578, %v488, %v586
        %v595 = vsel %vm579, %v490, %v587
        %v596 = vsel %vm580, %v529, %v588
        %v597 = vsel %vm581, %v531, %v589
        %v598 = vsel %vm582, %v570, %v590
        %v599 = vsel %vm583, %v572, %v591
        %v608 = vcombine.low %v592, %v593
        %v609 = vcombine.low %v594, %v595
        %v611 = vunpack.c.l.s4 1983009808
        %v612 = vunpack.c.0.s8 %v611
        %v613 = vlaneseq
        %v614 = vshrl.u32 %v613, 7
        %v615 = vsub.s32 %v612, %v614
        %v616 = vrot.slane %v608, %v615
        %v618 = vunpack.c.l.s4 1983009808
        %v619 = vunpack.c.0.s8 %v618
        %v620 = vlaneseq
        %v621 = vshrl.u32 %v620, 7
        %v622 = vsub.s32 %v619, %v621
        %v623 = vrot.slane %v609, %v622
        %v624 = vcombine.low %v616, %v623
        %v625 = vcombine.low %v596, %v597
        %v626 = vcombine.low %v598, %v599
        %v628 = vunpack.c.l.s4 1983009808
        %v629 = vunpack.c.0.s8 %v628
        %v630 = vlaneseq
        %v631 = vshrl.u32 %v630, 7
        %v632 = vsub.s32 %v629, %v631
        %v633 = vrot.slane %v625, %v632
        %v635 = vunpack.c.l.s4 1983009808
        %v636 = vunpack.c.0.s8 %v635
        %v637 = vlaneseq
        %v638 = vshrl.u32 %v637, 7
        %v639 = vsub.s32 %v636, %v638
        %v640 = vrot.slane %v626, %v639
        %v641 = vcombine.low %v633, %v640
        %644 = vst [vmem:[%s266] sm:$0xff] %v624
        %645 = vst [vmem:[%s266 + $0x8] sm:$0xff] %v641
        %s646 = smul.u32 8, %s25
        %p647 = scmp.lt.s32.totalorder %s24, 0
        %s648 = scalar_select %p647, %s24, 0
        %p649 = scmp.lt.s32.totalorder %s646, 63
        %s650 = scalar_select %p649, %s646, 63
        %s651 = smul.addr %s648, 64
        %s652 = sadd.s32 %s650, %s651
        %s653 = smul.addr %s652, 2
        %s654 = scalar_lea.vmem %s3, %s653
        // Predicated region
        $region41: #{generator_forward.6} parent=31 // pred_check
          %p655 = pneg %p130
        $region42: #{generator_forward.6} parent=31 // pred_check_branch
          %657 = sbr.rel (%p655) target = $region44
        $region43: #{generator_forward.6} parent=31 // pred_region
          %s658 = smul.u32 8, %s25
        $region44: #{generator_forward.6} parent=31 // pred_fallthru
          _
      $region32: #{generator_forward.6} parent=5 // pred_fallthru
        _
      %p659 = scmp.le.s32.totalorder 2, %s15
      // Predicated region
      $region45: #{generator_forward.6} parent=5 // pred_check
        %p660 = pneg %p659
      $region46: #{generator_forward.6} parent=5 // pred_check_branch
        %662 = sbr.rel (%p660) target = $region48
      $region47: #{generator_forward.6} parent=5 // pred_region
        %s663 = ssub.s32 %s15, 2
        // Predicated region
        $region49: #{generator_forward.6} parent=47 // pred_check
          %p664 = pneg %p136
        $region50: #{generator_forward.6} parent=47 // pred_check_branch
          %666 = sbr.rel (%p664) target = $region52
        $region51: #{generator_forward.6} parent=47 // pred_region
          %s667 = smul.u32 8, %s27
          %p668 = scmp.lt.s32.totalorder %s26, 0
          %s669 = scalar_select %p668, %s26, 0
          %p670 = scmp.lt.s32.totalorder %s667, 63
          %s671 = scalar_select %p670, %s667, 63
          %s672 = smul.addr %s669, 64
          %s673 = sadd.s32 %s671, %s672
          %s674 = smul.addr %s673, 2
          %s675 = scalar_lea.vmem %s3, %s674
        $region52: #{generator_forward.6} parent=47 // pred_fallthru
          _
      $region48: #{generator_forward.6} parent=5 // pred_fallthru
        _
    $region6: #{generator_forward.6} parent=1 // loop_footer
      %s19 = sadd.s32 1, %s15
    $region7: #{generator_forward.6} parent=1 // loop_footer_branch
      %14 = sbr.rel target = $region3
    $region8: #{generator_forward.6} parent=1 // loop_exit
      _
    %676 = vsyncpa [#allocation3], 1
    %s677 = scalar_lea.sflag [#allocation3], 1
    %678 = vsyncpa %s677, 1
    %679 = vsyncpa [#allocation5], 1
    %s680 = scalar_lea.sflag [#allocation5], 1
    %681 = vsyncpa %s680, 1

// kernel: generator_forward.7
$region0: #{generator_forward.7}
  #allocation0 [shape = 'u32[]', space=smem, size = 0x4, offset = 0x4, fixed_abs, tag = 'smem constant byte address 0x4 - core index']
  #allocation1 [shape = 'u32[144,128]{1,0:T(1,128)}', space=vmem, size = 0x12000, scoped, tag = 'internal scratch']
  %s0 = inlined_call_operand.vmem [shape: bf16[32,512], index: 0, kind: input, shape index: {}]
  %s1 = inlined_call_operand.hbm [shape: bf16[512,4096], index: 1, kind: input, shape index: {}]
  %s2 = inlined_call_operand.vmem [shape: f32[32,4096], index: 2, kind: output, shape index: {}]
  %s3 = sld [smem:[#allocation0]]
  $region64: #{generator_forward.7} parent=0
    _
  %s5 = ssub.s32 1, %s3
  %s6 = scalar_select 0, %s5, %s3
  $region1: #{generator_forward.7} parent=0
    #allocation2 [shape = 'u8[1048576]{0}', space=vmem, size = 0x100000, scoped, tag = 'input window, operand 1']
    #allocation3 [shape = 's32[2]{0}', space=sflag, size = 0x8, scoped, tag = 'scoped memory for generator_forward.7']
    #allocation4 [shape = 'u8[131072]{0}', space=vmem, size = 0x20000, scoped, tag = 'output window, operand 0']
    %7 = vsyncpa [#allocation3], 0
    %s8 = scalar_lea.sflag [#allocation3], 1
    %9 = vsyncpa %s8, 0
    loop: start=0, step=1, limit=10
    $region2: #{generator_forward.7} parent=1 // loop_pre_header
      _
    $region3: #{generator_forward.7} parent=1 // loop_header
      %s11 = sphi 0, %s15
      %p12 = scmp.ge.s32.totalorder %s11, 10
      %s18 = sphi 0, %s30
      %s19 = sphi 0, %s26
      %s20 = sphi 0, %s18
      %s21 = sphi 0, %s19
      %s22 = sphi 0, %s20
      %s23 = sphi 0, %s21
      %s33 = sphi 0, %s35
      %s36 = sphi 0, %s33
      %s37 = sphi 0, %s36
      %s53 = sphi 0, %s37
      %s59 = sphi 0, %s61
      %s62 = sphi 0, %s59
      %s63 = sphi 0, %s62
      %s79 = sphi 0, %s63
      %s87 = sphi 0, %s89
      %s90 = sphi 0, %s87
      %s91 = sphi 0, %s90
      %s107 = sphi 0, %s91
    $region4: #{generator_forward.7} parent=1 // loop_header_branch
      %14 = sbr.rel (%p12) target = $region8
    $region5: #{generator_forward.7} parent=1 // loop_body
      %s16 = ssub.s32 %s11, 1
      %s17 = ssub.s32 %s11, 2
      %s24 = sadd.s32 1, %s19
      %p25 = scmp.ge.s32.totalorder %s24, 8
      %s26 = scalar_select %p25, 0, %s24
      %s27 = sadd.s32 1, %s18
      %s28 = scalar_select %p25, %s27, %s18
      %p29 = scmp.ge.s32.totalorder %s28, 1
      %s30 = scalar_select %p29, 0, %s28
      %s31 = ssub.s32 %s18, %s30
      %p32 = scmp.eq.s32.totalorder %s31, 0
      %s34 = sadd.s32 %s33, 1
      %s35 = scalar_select %p32, %s33, %s34
      %p38 = pneg %p32
      %p39 = scmp.eq.s32.totalorder %s11, 7
      %p40 = por %p38, %p39
      %p41 = scmp.ne.s32.totalorder %s33, %s36
      %p42 = scmp.eq.s32.totalorder %s11, 0
      %p43 = por %p41, %p42
      %p44 = scmp.ne.s32.totalorder %s33, %s36
      %p45 = scmp.eq.s32.totalorder %s16, 7
      %p46 = por %p44, %p45
      %p47 = scmp.ne.s32.totalorder %s36, %s37
      %p48 = scmp.eq.s32.totalorder %s16, 0
      %p49 = por %p47, %p48
      %p50 = scmp.ne.s32.totalorder %s36, %s37
      %p51 = scmp.eq.s32.totalorder %s17, 7
      %p52 = por %p50, %p51
      %p54 = scmp.ne.s32.totalorder %s37, %s53
      %p55 = scmp.eq.s32.totalorder %s17, 0
      %p56 = por %p54, %p55
      %s57 = ssub.s32 %s19, %s26
      %p58 = scmp.eq.s32.totalorder %s57, 0
      %s60 = sadd.s32 %s59, 1
      %s61 = scalar_select %p58, %s59, %s60
      %p64 = pneg %p58
      %p65 = scmp.eq.s32.totalorder %s11, 7
      %p66 = por %p64, %p65
      %p67 = scmp.ne.s32.totalorder %s59, %s62
      %p68 = scmp.eq.s32.totalorder %s11, 0
      %p69 = por %p67, %p68
      %p70 = scmp.ne.s32.totalorder %s59, %s62
      %p71 = scmp.eq.s32.totalorder %s16, 7
      %p72 = por %p70, %p71
      %p73 = scmp.ne.s32.totalorder %s62, %s63
      %p74 = scmp.eq.s32.totalorder %s16, 0
      %p75 = por %p73, %p74
      %p76 = scmp.ne.s32.totalorder %s62, %s63
      %p77 = scmp.eq.s32.totalorder %s17, 7
      %p78 = por %p76, %p77
      %p80 = scmp.ne.s32.totalorder %s63, %s79
      %p81 = scmp.eq.s32.totalorder %s17, 0
      %p82 = por %p80, %p81
      %s83 = ssub.s32 %s18, %s30
      %s84 = ssub.s32 %s19, %s26
      %s85 = sor.u32 %s83, %s84
      %p86 = scmp.eq.s32.totalorder %s85, 0
      %s88 = sadd.s32 %s87, 1
      %s89 = scalar_select %p86, %s87, %s88
      %p92 = pneg %p86
      %p93 = scmp.eq.s32.totalorder %s11, 7
      %p94 = por %p92, %p93
      %p95 = scmp.ne.s32.totalorder %s87, %s90
      %p96 = scmp.eq.s32.totalorder %s11, 0
      %p97 = por %p95, %p96
      %p98 = scmp.ne.s32.totalorder %s87, %s90
      %p99 = scmp.eq.s32.totalorder %s16, 7
      %p100 = por %p98, %p99
      %p101 = scmp.ne.s32.totalorder %s90, %s91
      %p102 = scmp.eq.s32.totalorder %s16, 0
      %p103 = por %p101, %p102
      %p104 = scmp.ne.s32.totalorder %s90, %s91
      %p105 = scmp.eq.s32.totalorder %s17, 7
      %p106 = por %p104, %p105
      %p108 = scmp.ne.s32.totalorder %s91, %s107
      %p109 = scmp.eq.s32.totalorder %s17, 0
      %p110 = por %p108, %p109
      %p111 = scmp.le.s32.totalorder 1, %s11
      %p112 = scmp.lt.s32.totalorder %s11, 9
      %p113 = pnand %p111, %p112
      %p114 = pneg %p113
      // Predicated region
      $region9: #{generator_forward.7} parent=5 // pred_check
        _
      $region10: #{generator_forward.7} parent=5 // pred_check_branch
        %116 = sbr.rel (%p113) target = $region12
      $region11: #{generator_forward.7} parent=5 // pred_region
        %s117 = ssub.s32 %s11, 1
        // Predicated region
        $region13: #{generator_forward.7} parent=11 // pred_check
          %p118 = pneg %p49
        $region14: #{generator_forward.7} parent=11 // pred_check_branch
          %120 = sbr.rel (%p118) target = $region16
        $region15: #{generator_forward.7} parent=11 // pred_region
          %s121 = smul.u32 4, %s20
          %p122 = scmp.lt.s32.totalorder %s121, 3
          %s123 = scalar_select %p122, %s121, 3
          %s124 = smul.addr %s123, 4
          %s125 = smul.addr %s124, 4
          %s126 = scalar_lea.vmem %s0, %s125
          %s127 = smul.u32 4, %s20
        $region16: #{generator_forward.7} parent=11 // pred_fallthru
          _
      $region12: #{generator_forward.7} parent=5 // pred_fallthru
        _
      %p128 = scmp.lt.s32.totalorder %s11, 8
      // Predicated region
      $region17: #{generator_forward.7} parent=5 // pred_check
        %p129 = pneg %p128
      $region18: #{generator_forward.7} parent=5 // pred_check_branch
        %131 = sbr.rel (%p129) target = $region20
      $region19: #{generator_forward.7} parent=5 // pred_region
        // Predicated region
        $region21: #{generator_forward.7} parent=19 // pred_check
          %p132 = pneg %p69
        $region22: #{generator_forward.7} parent=19 // pred_check_branch
          %134 = sbr.rel (%p132) target = $region24
        $region23: #{generator_forward.7} parent=19 // pred_region
          %s135 = sand.u32 %s59, 1
          %s136 = scalar_lea.sflag [#allocation3], %s135
          %s137 = sand.u32 %s59, 1
          %s138 = smul.addr %s137, 1024
          %s139 = scalar_lea.vmem [#allocation2], %s138
          %s140 = smul.u32 4, %s19
          %s142 = ssub.s32 16384, 16384
          %143 = vsyncadd %s136, %s142
          %s144 = smul.addr %s140, 64
          %s145 = scalar_lea.hbm %s1, %s144
          %s146 = sshll.u32 %s139, 4
          %s147 = int_to_ptr.vmem [resolvable:$true] %s146
          %152 = dma.hbm_to_vmem [thread:$0]  %s145, 16384, %s147, %s136, 2048, 256, 16
        $region24: #{generator_forward.7} parent=19 // pred_fallthru
          _
      $region20: #{generator_forward.7} parent=5 // pred_fallthru
        _
      %p153 = scmp.le.s32.totalorder 1, %s11
      %p154 = scmp.lt.s32.totalorder %s11, 9
      %p155 = pnand %p153, %p154
      %p156 = pneg %p155
      // Predicated region
      $region25: #{generator_forward.7} parent=5 // pred_check
        _
      $region26: #{generator_forward.7} parent=5 // pred_check_branch
        %158 = sbr.rel (%p155) target = $region28
      $region27: #{generator_forward.7} parent=5 // pred_region
        %s159 = ssub.s32 %s11, 1
        %s160 = sand.u32 %s62, 1
        %s161 = scalar_lea.sflag [#allocation3], %s160
        %s162 = sand.u32 %s62, 1
        %s163 = smul.addr %s162, 1024
        %s164 = scalar_lea.vmem [#allocation2], %s163
        // Predicated region
        $region29: #{generator_forward.7} parent=27 // pred_check
          %p165 = pneg %p75
        $region30: #{generator_forward.7} parent=27 // pred_check_branch
          %167 = sbr.rel (%p165) target = $region32
        $region31: #{generator_forward.7} parent=27 // pred_region
          %168 = dma.done %s161, 16384
        $region32: #{generator_forward.7} parent=27 // pred_fallthru
          _
        %s169 = smul.u32 4, %s20
        %p170 = scmp.lt.s32.totalorder %s169, 3
        %s171 = scalar_select %p170, %s169, 3
        %s172 = smul.addr %s171, 4
        %s173 = smul.addr %s172, 4
        %s174 = scalar_lea.vmem %s0, %s173
        %p175 = pneg %p49
        %p176 = pneg %p46
        %s177 = sand.u32 %s62, 1
        %s178 = scalar_lea.sflag [#allocation3], %s177
        %s179 = sand.u32 %s62, 1
        %s180 = smul.addr %s179, 1024
        %s181 = scalar_lea.vmem [#allocation2], %s180
        %p182 = pneg %p75
        %p183 = pneg %p72
        %p184 = pneg %p103
        %p185 = pneg %p100
        %s186 = sand.u32 %s90, 1
        %s187 = sand.u32 %s90, 1
        %s188 = smul.addr %s187, 128
        %s189 = scalar_lea.vmem [#allocation4], %s188
        %s190 = smul.u32 4, %s20
        %p191 = scmp.lt.s32.totalorder %s190, 3
        %s192 = scalar_select %p191, %s190, 3
        %s193 = smul.addr %s192, 4
        %s194 = smul.addr %s193, 4
        %s195 = scalar_lea.vmem %s0, %s194
        %s196 = smul.u32 4, %s20
        %s197 = smul.u32 4, %s21
        %s198 = smul.u32 4, %s20
        %s199 = smul.u32 4, %s21
        %v200 = vld [vmem:[%s195] sm:$0xff]
        %v201 = vld [vmem:[%s195 + $0x8] sm:$0xff]
        %v202 = vld [vmem:[%s195 + $0x10] sm:$0xff]
        %v203 = vld [vmem:[%s195 + $0x18] sm:$0xff]
        %v204 = vld [vmem:[%s195 + $0x20] sm:$0xff]
        %v205 = vld [vmem:[%s195 + $0x28] sm:$0xff]
        %v206 = vld [vmem:[%s195 + $0x30] sm:$0xff]
        %v207 = vld [vmem:[%s195 + $0x38] sm:$0xff]
        %v208 = vld [vmem:[%s164] sm:$0xff]
        %v209 = vld [vmem:[%s164 + $0x8] sm:$0xff]
        %v210 = vld [vmem:[%s164 + $0x10] sm:$0xff]
        %v211 = vld [vmem:[%s164 + $0x18] sm:$0xff]
        %v212 = vld [vmem:[%s164 + $0x20] sm:$0xff]
        %v213 = vld [vmem:[%s164 + $0x28] sm:$0xff]
        %v214 = vld [vmem:[%s164 + $0x30] sm:$0xff]
        %v215 = vld [vmem:[%s164 + $0x38] sm:$0xff]
        %v216 = vld [vmem:[%s164 + $0x40] sm:$0xff]
        %v217 = vld [vmem:[%s164 + $0x48] sm:$0xff]
        %v218 = vld [vmem:[%s164 + $0x50] sm:$0xff]
        %v219 = vld [vmem:[%s164 + $0x58] sm:$0xff]
        %v220 = vld [vmem:[%s164 + $0x60] sm:$0xff]
        %v221 = vld [vmem:[%s164 + $0x68] sm:$0xff]
        %v222 = vld [vmem:[%s164 + $0x70] sm:$0xff]
        %v223 = vld [vmem:[%s164 + $0x78] sm:$0xff]
        %v224 = vld [vmem:[%s164 + $0x80] sm:$0xff]
        %v225 = vld [vmem:[%s164 + $0x88] sm:$0xff]
        %v226 = vld [vmem:[%s164 + $0x90] sm:$0xff]
        %v227 = vld [vmem:[%s164 + $0x98] sm:$0xff]
        %v228 = vld [vmem:[%s164 + $0xa0] sm:$0xff]
        %v229 = vld [vmem:[%s164 + $0xa8] sm:$0xff]
        %v230 = vld [vmem:[%s164 + $0xb0] sm:$0xff]
        %v231 = vld [vmem:[%s164 + $0xb8] sm:$0xff]
        %v232 = vld [vmem:[%s164 + $0xc0] sm:$0xff]
        %v233 = vld [vmem:[%s164 + $0xc8] sm:$0xff]
        %v234 = vld [vmem:[%s164 + $0xd0] sm:$0xff]
        %v235 = vld [vmem:[%s164 + $0xd8] sm:$0xff]
        %v236 = vld [vmem:[%s164 + $0xe0] sm:$0xff]
        %v237 = vld [vmem:[%s164 + $0xe8] sm:$0xff]
        %v238 = vld [vmem:[%s164 + $0xf0] sm:$0xff]
        %v239 = vld [vmem:[%s164 + $0xf8] sm:$0xff]
        %v240 = vld [vmem:[%s164 + $0x100] sm:$0xff]
        %v241 = vld [vmem:[%s164 + $0x108] sm:$0xff]
        %v242 = vld [vmem:[%s164 + $0x110] sm:$0xff]
        %v243 = vld [vmem:[%s164 + $0x118] sm:$0xff]
        %v244 = vld [vmem:[%s164 + $0x120] sm:$0xff]
        %v245 = vld [vmem:[%s164 + $0x128] sm:$0xff]
        %v246 = vld [vmem:[%s164 + $0x130] sm:$0xff]
        %v247 = vld [vmem:[%s164 + $0x138] sm:$0xff]
        %v248 = vld [vmem:[%s164 + $0x140] sm:$0xff]
        %v249 = vld [vmem:[%s164 + $0x148] sm:$0xff]
        %v250 = vld [vmem:[%s164 + $0x150] sm:$0xff]
        %v251 = vld [vmem:[%s164 + $0x158] sm:$0xff]
        %v252 = vld [vmem:[%s164 + $0x160] sm:$0xff]
        %v253 = vld [vmem:[%s164 + $0x168] sm:$0xff]
        %v254 = vld [vmem:[%s164 + $0x170] sm:$0xff]
        %v255 = vld [vmem:[%s164 + $0x178] sm:$0xff]
        %v256 = vld [vmem:[%s164 + $0x180] sm:$0xff]
        %v257 = vld [vmem:[%s164 + $0x188] sm:$0xff]
        %v258 = vld [vmem:[%s164 + $0x190] sm:$0xff]
        %v259 = vld [vmem:[%s164 + $0x198] sm:$0xff]
        %v260 = vld [vmem:[%s164 + $0x1a0] sm:$0xff]
        %v261 = vld [vmem:[%s164 + $0x1a8] sm:$0xff]
        %v262 = vld [vmem:[%s164 + $0x1b0] sm:$0xff]
        %v263 = vld [vmem:[%s164 + $0x1b8] sm:$0xff]
        %v264 = vld [vmem:[%s164 + $0x1c0] sm:$0xff]
        %v265 = vld [vmem:[%s164 + $0x1c8] sm:$0xff]
        %v266 = vld [vmem:[%s164 + $0x1d0] sm:$0xff]
        %v267 = vld [vmem:[%s164 + $0x1d8] sm:$0xff]
        %v268 = vld [vmem:[%s164 + $0x1e0] sm:$0xff]
        %v269 = vld [vmem:[%s164 + $0x1e8] sm:$0xff]
        %v270 = vld [vmem:[%s164 + $0x1f0] sm:$0xff]
        %v271 = vld [vmem:[%s164 + $0x1f8] sm:$0xff]
        %v272 = vld [vmem:[%s164 + $0x200] sm:$0xff]
        %v273 = vld [vmem:[%s164 + $0x208] sm:$0xff]
        %v274 = vld [vmem:[%s164 + $0x210] sm:$0xff]
        %v275 = vld [vmem:[%s164 + $0x218] sm:$0xff]
        %v276 = vld [vmem:[%s164 + $0x220] sm:$0xff]
        %v277 = vld [vmem:[%s164 + $0x228] sm:$0xff]
        %v278 = vld [vmem:[%s164 + $0x230] sm:$0xff]
        %v279 = vld [vmem:[%s164 + $0x238] sm:$0xff]
        %v280 = vld [vmem:[%s164 + $0x240] sm:$0xff]
        %v281 = vld [vmem:[%s164 + $0x248] sm:$0xff]
        %v282 = vld [vmem:[%s164 + $0x250] sm:$0xff]
        %v283 = vld [vmem:[%s164 + $0x258] sm:$0xff]
        %v284 = vld [vmem:[%s164 + $0x260] sm:$0xff]
        %v285 = vld [vmem:[%s164 + $0x268] sm:$0xff]
        %v286 = vld [vmem:[%s164 + $0x270] sm:$0xff]
        %v287 = vld [vmem:[%s164 + $0x278] sm:$0xff]
        %v288 = vld [vmem:[%s164 + $0x280] sm:$0xff]
        %v289 = vld [vmem:[%s164 + $0x288] sm:$0xff]
        %v290 = vld [vmem:[%s164 + $0x290] sm:$0xff]
        %v291 = vld [vmem:[%s164 + $0x298] sm:$0xff]
        %v292 = vld [vmem:[%s164 + $0x2a0] sm:$0xff]
        %v293 = vld [vmem:[%s164 + $0x2a8] sm:$0xff]
        %v294 = vld [vmem:[%s164 + $0x2b0] sm:$0xff]
        %v295 = vld [vmem:[%s164 + $0x2b8] sm:$0xff]
        %v296 = vld [vmem:[%s164 + $0x2c0] sm:$0xff]
        %v297 = vld [vmem:[%s164 + $0x2c8] sm:$0xff]
        %v298 = vld [vmem:[%s164 + $0x2d0] sm:$0xff]
        %v299 = vld [vmem:[%s164 + $0x2d8] sm:$0xff]
        %v300 = vld [vmem:[%s164 + $0x2e0] sm:$0xff]
        %v301 = vld [vmem:[%s164 + $0x2e8] sm:$0xff]
        %v302 = vld [vmem:[%s164 + $0x2f0] sm:$0xff]
        %v303 = vld [vmem:[%s164 + $0x2f8] sm:$0xff]
        %v304 = vld [vmem:[%s164 + $0x300] sm:$0xff]
        %v305 = vld [vmem:[%s164 + $0x308] sm:$0xff]
        %v306 = vld [vmem:[%s164 + $0x310] sm:$0xff]
        %v307 = vld [vmem:[%s164 + $0x318] sm:$0xff]
        %v308 = vld [vmem:[%s164 + $0x320] sm:$0xff]
        %v309 = vld [vmem:[%s164 + $0x328] sm:$0xff]
        %v310 = vld [vmem:[%s164 + $0x330] sm:$0xff]
        %v311 = vld [vmem:[%s164 + $0x338] sm:$0xff]
        %v312 = vld [vmem:[%s164 + $0x340] sm:$0xff]
        %v313 = vld [vmem:[%s164 + $0x348] sm:$0xff]
        %v314 = vld [vmem:[%s164 + $0x350] sm:$0xff]
        %v315 = vld [vmem:[%s164 + $0x358] sm:$0xff]
        %v316 = vld [vmem:[%s164 + $0x360] sm:$0xff]
        %v317 = vld [vmem:[%s164 + $0x368] sm:$0xff]
        %v318 = vld [vmem:[%s164 + $0x370] sm:$0xff]
        %v319 = vld [vmem:[%s164 + $0x378] sm:$0xff]
        %v320 = vld [vmem:[%s164 + $0x380] sm:$0xff]
        %v321 = vld [vmem:[%s164 + $0x388] sm:$0xff]
        %v322 = vld [vmem:[%s164 + $0x390] sm:$0xff]
        %v323 = vld [vmem:[%s164 + $0x398] sm:$0xff]
        %v324 = vld [vmem:[%s164 + $0x3a0] sm:$0xff]
        %v325 = vld [vmem:[%s164 + $0x3a8] sm:$0xff]
        %v326 = vld [vmem:[%s164 + $0x3b0] sm:$0xff]
        %v327 = vld [vmem:[%s164 + $0x3b8] sm:$0xff]
        %v328 = vld [vmem:[%s164 + $0x3c0] sm:$0xff]
        %v329 = vld [vmem:[%s164 + $0x3c8] sm:$0xff]
        %v330 = vld [vmem:[%s164 + $0x3d0] sm:$0xff]
        %v331 = vld [vmem:[%s164 + $0x3d8] sm:$0xff]
        %v332 = vld [vmem:[%s164 + $0x3e0] sm:$0xff]
        %v333 = vld [vmem:[%s164 + $0x3e8] sm:$0xff]
        %v334 = vld [vmem:[%s164 + $0x3f0] sm:$0xff]
        %v335 = vld [vmem:[%s164 + $0x3f8] sm:$0xff]
        %v344 = vunpack.c.l.b16 %v200
        %v345 = vunpack.c.h.b16 %v200
        %v346 = vunpack.c.l.b16 %v201
        %v347 = vunpack.c.h.b16 %v201
        %v348 = vunpack.c.l.b16 %v202
        %v349 = vunpack.c.h.b16 %v202
        %v350 = vunpack.c.l.b16 %v203
        %v351 = vunpack.c.h.b16 %v203
        %v352 = vunpack.c.l.b16 %v204
        %v353 = vunpack.c.h.b16 %v204
        %v354 = vunpack.c.l.b16 %v205
        %v355 = vunpack.c.h.b16 %v205
        %v356 = vunpack.c.l.b16 %v206
        %v357 = vunpack.c.h.b16 %v206
        %v358 = vunpack.c.l.b16 %v207
        %v359 = vunpack.c.h.b16 %v207
        %v360 = vpack.c.b16 %v348, %v344
        %v361 = vpack.c.b16 %v349, %v345
        %v362 = vpack.c.b16 %v350, %v346
        %v363 = vpack.c.b16 %v351, %v347
        %v364 = vpack.c.b16 %v356, %v352
        %v365 = vpack.c.b16 %v357, %v353
        %v366 = vpack.c.b16 %v358, %v354
        %v367 = vpack.c.b16 %v359, %v355
        %v504 = vunpack.c.l.b16 %v208
        %v505 = vunpack.c.h.b16 %v208
        %v506 = vunpack.c.l.b16 %v209
        %v507 = vunpack.c.h.b16 %v209
        %v508 = vunpack.c.l.b16 %v210
        %v509 = vunpack.c.h.b16 %v210
        %v510 = vunpack.c.l.b16 %v211
        %v511 = vunpack.c.h.b16 %v211
        %v512 = vunpack.c.l.b16 %v212
        %v513 = vunpack.c.h.b16 %v212
        %v514 = vunpack.c.l.b16 %v213
        %v515 = vunpack.c.h.b16 %v213
        %v516 = vunpack.c.l.b16 %v214
        %v517 = vunpack.c.h.b16 %v214
        %v518 = vunpack.c.l.b16 %v215
        %v519 = vunpack.c.h.b16 %v215
        %v520 = vunpack.c.l.b16 %v216
        %v521 = vunpack.c.h.b16 %v216
        %v522 = vunpack.c.l.b16 %v217
        %v523 = vunpack.c.h.b16 %v217
        %v524 = vunpack.c.l.b16 %v218
        %v525 = vunpack.c.h.b16 %v218
        %v526 = vunpack.c.l.b16 %v219
        %v527 = vunpack.c.h.b16 %v219
        %v528 = vunpack.c.l.b16 %v220
        %v529 = vunpack.c.h.b16 %v220
        %v530 = vunpack.c.l.b16 %v221
        %v531 = vunpack.c.h.b16 %v221
        %v532 = vunpack.c.l.b16 %v222
        %v533 = vunpack.c.h.b16 %v222
        %v534 = vunpack.c.l.b16 %v223
        %v535 = vunpack.c.h.b16 %v223
        %v536 = vunpack.c.l.b16 %v224
        %v537 = vunpack.c.h.b16 %v224
        %v538 = vunpack.c.l.b16 %v225
        %v539 = vunpack.c.h.b16 %v225
        %v540 = vunpack.c.l.b16 %v226
        %v541 = vunpack.c.h.b16 %v226
        %v542 = vunpack.c.l.b16 %v227
        %v543 = vunpack.c.h.b16 %v227
        %v544 = vunpack.c.l.b16 %v228
        %v545 = vunpack.c.h.b16 %v228
        %v546 = vunpack.c.l.b16 %v229
        %v547 = vunpack.c.h.b16 %v229
        %v548 = vunpack.c.l.b16 %v230
        %v549 = vunpack.c.h.b16 %v230
        %v550 = vunpack.c.l.b16 %v231
        %v551 = vunpack.c.h.b16 %v231
        %v552 = vunpack.c.l.b16 %v232
        %v553 = vunpack.c.h.b16 %v232
        %v554 = vunpack.c.l.b16 %v233
        %v555 = vunpack.c.h.b16 %v233
        %v556 = vunpack.c.l.b16 %v234
        %v557 = vunpack.c.h.b16 %v234
        %v558 = vunpack.c.l.b16 %v235
        %v559 = vunpack.c.h.b16 %v235
        %v560 = vunpack.c.l.b16 %v236
        %v561 = vunpack.c.h.b16 %v236
        %v562 = vunpack.c.l.b16 %v237
        %v563 = vunpack.c.h.b16 %v237
        %v564 = vunpack.c.l.b16 %v238
        %v565 = vunpack.c.h.b16 %v238
        %v566 = vunpack.c.l.b16 %v239
        %v567 = vunpack.c.h.b16 %v239
        %v568 = vunpack.c.l.b16 %v240
        %v569 = vunpack.c.h.b16 %v240
        %v570 = vunpack.c.l.b16 %v241
        %v571 = vunpack.c.h.b16 %v241
        %v572 = vunpack.c.l.b16 %v242
        %v573 = vunpack.c.h.b16 %v242
        %v574 = vunpack.c.l.b16 %v243
        %v575 = vunpack.c.h.b16 %v243
        %v576 = vunpack.c.l.b16 %v244
        %v577 = vunpack.c.h.b16 %v244
        %v578 = vunpack.c.l.b16 %v245
        %v579 = vunpack.c.h.b16 %v245
        %v580 = vunpack.c.l.b16 %v246
        %v581 = vunpack.c.h.b16 %v246
        %v582 = vunpack.c.l.b16 %v247
        %v583 = vunpack.c.h.b16 %v247
        %v584 = vunpack.c.l.b16 %v248
        %v585 = vunpack.c.h.b16 %v248
        %v586 = vunpack.c.l.b16 %v249
        %v587 = vunpack.c.h.b16 %v249
        %v588 = vunpack.c.l.b16 %v250
        %v589 = vunpack.c.h.b16 %v250
        %v590 = vunpack.c.l.b16 %v251
        %v591 = vunpack.c.h.b16 %v251
        %v592 = vunpack.c.l.b16 %v252
        %v593 = vunpack.c.h.b16 %v252
        %v594 = vunpack.c.l.b16 %v253
        %v595 = vunpack.c.h.b16 %v253
        %v596 = vunpack.c.l.b16 %v254
        %v597 = vunpack.c.h.b16 %v254
        %v598 = vunpack.c.l.b16 %v255
        %v599 = vunpack.c.h.b16 %v255
        %v600 = vunpack.c.l.b16 %v256
        %v601 = vunpack.c.h.b16 %v256
        %v602 = vunpack.c.l.b16 %v257
        %v603 = vunpack.c.h.b16 %v257
        %v604 = vunpack.c.l.b16 %v258
        %v605 = vunpack.c.h.b16 %v258
        %v606 = vunpack.c.l.b16 %v259
        %v607 = vunpack.c.h.b16 %v259
        %v608 = vunpack.c.l.b16 %v260
        %v609 = vunpack.c.h.b16 %v260
        %v610 = vunpack.c.l.b16 %v261
        %v611 = vunpack.c.h.b16 %v261
        %v612 = vunpack.c.l.b16 %v262
        %v613 = vunpack.c.h.b16 %v262
        %v614 = vunpack.c.l.b16 %v263
        %v615 = vunpack.c.h.b16 %v263
        %v616 = vunpack.c.l.b16 %v264
        %v617 = vunpack.c.h.b16 %v264
        %v618 = vunpack.c.l.b16 %v265
        %v619 = vunpack.c.h.b16 %v265
        %v620 = vunpack.c.l.b16 %v266
        %v621 = vunpack.c.h.b16 %v266
        %v622 = vunpack.c.l.b16 %v267
        %v623 = vunpack.c.h.b16 %v267
        %v624 = vunpack.c.l.b16 %v268
        %v625 = vunpack.c.h.b16 %v268
        %v626 = vunpack.c.l.b16 %v269
        %v627 = vunpack.c.h.b16 %v269
        %v628 = vunpack.c.l.b16 %v270
        %v629 = vunpack.c.h.b16 %v270
        %v630 = vunpack.c.l.b16 %v271
        %v631 = vunpack.c.h.b16 %v271
        %v632 = vunpack.c.l.b16 %v272
        %v633 = vunpack.c.h.b16 %v272
        %v634 = vunpack.c.l.b16 %v273
        %v635 = vunpack.c.h.b16 %v273
        %v636 = vunpack.c.l.b16 %v274
        %v637 = vunpack.c.h.b16 %v274
        %v638 = vunpack.c.l.b16 %v275
        %v639 = vunpack.c.h.b16 %v275
        %v640 = vunpack.c.l.b16 %v276
        %v641 = vunpack.c.h.b16 %v276
        %v642 = vunpack.c.l.b16 %v277
        %v643 = vunpack.c.h.b16 %v277
        %v644 = vunpack.c.l.b16 %v278
        %v645 = vunpack.c.h.b16 %v278
        %v646 = vunpack.c.l.b16 %v279
        %v647 = vunpack.c.h.b16 %v279
        %v648 = vunpack.c.l.b16 %v280
        %v649 = vunpack.c.h.b16 %v280
        %v650 = vunpack.c.l.b16 %v281
        %v651 = vunpack.c.h.b16 %v281
        %v652 = vunpack.c.l.b16 %v282
        %v653 = vunpack.c.h.b16 %v282
        %v654 = vunpack.c.l.b16 %v283
        %v655 = vunpack.c.h.b16 %v283
        %v656 = vunpack.c.l.b16 %v284
        %v657 = vunpack.c.h.b16 %v284
        %v658 = vunpack.c.l.b16 %v285
        %v659 = vunpack.c.h.b16 %v285
        %v660 = vunpack.c.l.b16 %v286
        %v661 = vunpack.c.h.b16 %v286
        %v662 = vunpack.c.l.b16 %v287
        %v663 = vunpack.c.h.b16 %v287
        %v664 = vunpack.c.l.b16 %v288
        %v665 = vunpack.c.h.b16 %v288
        %v666 = vunpack.c.l.b16 %v289
        %v667 = vunpack.c.h.b16 %v289
        %v668 = vunpack.c.l.b16 %v290
        %v669 = vunpack.c.h.b16 %v290
        %v670 = vunpack.c.l.b16 %v291
        %v671 = vunpack.c.h.b16 %v291
        %v672 = vunpack.c.l.b16 %v292
        %v673 = vunpack.c.h.b16 %v292
        %v674 = vunpack.c.l.b16 %v293
        %v675 = vunpack.c.h.b16 %v293
        %v676 = vunpack.c.l.b16 %v294
        %v677 = vunpack.c.h.b16 %v294
        %v678 = vunpack.c.l.b16 %v295
        %v679 = vunpack.c.h.b16 %v295
        %v680 = vunpack.c.l.b16 %v296
        %v681 = vunpack.c.h.b16 %v296
        %v682 = vunpack.c.l.b16 %v297
        %v683 = vunpack.c.h.b16 %v297
        %v684 = vunpack.c.l.b16 %v298
        %v685 = vunpack.c.h.b16 %v298
        %v686 = vunpack.c.l.b16 %v299
        %v687 = vunpack.c.h.b16 %v299
        %v688 = vunpack.c.l.b16 %v300
        %v689 = vunpack.c.h.b16 %v300
        %v690 = vunpack.c.l.b16 %v301
        %v691 = vunpack.c.h.b16 %v301
        %v692 = vunpack.c.l.b16 %v302
        %v693 = vunpack.c.h.b16 %v302
        %v694 = vunpack.c.l.b16 %v303
        %v695 = vunpack.c.h.b16 %v303
        %v696 = vunpack.c.l.b16 %v304
        %v697 = vunpack.c.h.b16 %v304
        %v698 = vunpack.c.l.b16 %v305
        %v699 = vunpack.c.h.b16 %v305
        %v700 = vunpack.c.l.b16 %v306
        %v701 = vunpack.c.h.b16 %v306
        %v702 = vunpack.c.l.b16 %v307
        %v703 = vunpack.c.h.b16 %v307
        %v704 = vunpack.c.l.b16 %v308
        %v705 = vunpack.c.h.b16 %v308
        %v706 = vunpack.c.l.b16 %v309
        %v707 = vunpack.c.h.b16 %v309
        %v708 = vunpack.c.l.b16 %v310
        %v709 = vunpack.c.h.b16 %v310
        %v710 = vunpack.c.l.b16 %v311
        %v711 = vunpack.c.h.b16 %v311
        %v712 = vunpack.c.l.b16 %v312
        %v713 = vunpack.c.h.b16 %v312
        %v714 = vunpack.c.l.b16 %v313
        %v715 = vunpack.c.h.b16 %v313
        %v716 = vunpack.c.l.b16 %v314
        %v717 = vunpack.c.h.b16 %v314
        %v718 = vunpack.c.l.b16 %v315
        %v719 = vunpack.c.h.b16 %v315
        %v720 = vunpack.c.l.b16 %v316
        %v721 = vunpack.c.h.b16 %v316
        %v722 = vunpack.c.l.b16 %v317
        %v723 = vunpack.c.h.b16 %v317
        %v724 = vunpack.c.l.b16 %v318
        %v725 = vunpack.c.h.b16 %v318
        %v726 = vunpack.c.l.b16 %v319
        %v727 = vunpack.c.h.b16 %v319
        %v728 = vunpack.c.l.b16 %v320
        %v729 = vunpack.c.h.b16 %v320
        %v730 = vunpack.c.l.b16 %v321
        %v731 = vunpack.c.h.b16 %v321
        %v732 = vunpack.c.l.b16 %v322
        %v733 = vunpack.c.h.b16 %v322
        %v734 = vunpack.c.l.b16 %v323
        %v735 = vunpack.c.h.b16 %v323
        %v736 = vunpack.c.l.b16 %v324
        %v737 = vunpack.c.h.b16 %v324
        %v738 = vunpack.c.l.b16 %v325
        %v739 = vunpack.c.h.b16 %v325
        %v740 = vunpack.c.l.b16 %v326
        %v741 = vunpack.c.h.b16 %v326
        %v742 = vunpack.c.l.b16 %v327
        %v743 = vunpack.c.h.b16 %v327
        %v744 = vunpack.c.l.b16 %v328
        %v745 = vunpack.c.h.b16 %v328
        %v746 = vunpack.c.l.b16 %v329
        %v747 = vunpack.c.h.b16 %v329
        %v748 = vunpack.c.l.b16 %v330
        %v749 = vunpack.c.h.b16 %v330
        %v750 = vunpack.c.l.b16 %v331
        %v751 = vunpack.c.h.b16 %v331
        %v752 = vunpack.c.l.b16 %v332
        %v753 = vunpack.c.h.b16 %v332
        %v754 = vunpack.c.l.b16 %v333
        %v755 = vunpack.c.h.b16 %v333
        %v756 = vunpack.c.l.b16 %v334
        %v757 = vunpack.c.h.b16 %v334
        %v758 = vunpack.c.l.b16 %v335
        %v759 = vunpack.c.h.b16 %v335
        %v760 = vpack.c.b16 %v508, %v504
        %v761 = vpack.c.b16 %v509, %v505
        %v762 = vpack.c.b16 %v510, %v506
        %v763 = vpack.c.b16 %v511, %v507
        %v764 = vpack.c.b16 %v516, %v512
        %v765 = vpack.c.b16 %v517, %v513
        %v766 = vpack.c.b16 %v518, %v514
        %v767 = vpack.c.b16 %v519, %v515
        %v768 = vpack.c.b16 %v524, %v520
        %v769 = vpack.c.b16 %v525, %v521
        %v770 = vpack.c.b16 %v526, %v522
        %v771 = vpack.c.b16 %v527, %v523
        %v772 = vpack.c.b16 %v532, %v528
        %v773 = vpack.c.b16 %v533, %v529
        %v774 = vpack.c.b16 %v534, %v530
        %v775 = vpack.c.b16 %v535, %v531
        %v776 = vpack.c.b16 %v540, %v536
        %v777 = vpack.c.b16 %v541, %v537
        %v778 = vpack.c.b16 %v542, %v538
        %v779 = vpack.c.b16 %v543, %v539
        %v780 = vpack.c.b16 %v548, %v544
        %v781 = vpack.c.b16 %v549, %v545
        %v782 = vpack.c.b16 %v550, %v546
        %v783 = vpack.c.b16 %v551, %v547
        %v784 = vpack.c.b16 %v556, %v552
        %v785 = vpack.c.b16 %v557, %v553
        %v786 = vpack.c.b16 %v558, %v554
        %v787 = vpack.c.b16 %v559, %v555
        %v788 = vpack.c.b16 %v564, %v560
        %v789 = vpack.c.b16 %v565, %v561
        %v790 = vpack.c.b16 %v566, %v562
        %v791 = vpack.c.b16 %v567, %v563
        %v792 = vpack.c.b16 %v572, %v568
        %v793 = vpack.c.b16 %v573, %v569
        %v794 = vpack.c.b16 %v574, %v570
        %v795 = vpack.c.b16 %v575, %v571
        %v796 = vpack.c.b16 %v580, %v576
        %v797 = vpack.c.b16 %v581, %v577
        %v798 = vpack.c.b16 %v582, %v578
        %v799 = vpack.c.b16 %v583, %v579
        %v800 = vpack.c.b16 %v588, %v584
        %v801 = vpack.c.b16 %v589, %v585
        %v802 = vpack.c.b16 %v590, %v586
        %v803 = vpack.c.b16 %v591, %v587
        %v804 = vpack.c.b16 %v596, %v592
        %v805 = vpack.c.b16 %v597, %v593
        %v806 = vpack.c.b16 %v598, %v594
        %v807 = vpack.c.b16 %v599, %v595
        %v808 = vpack.c.b16 %v604, %v600
        %v809 = vpack.c.b16 %v605, %v601
        %v810 = vpack.c.b16 %v606, %v602
        %v811 = vpack.c.b16 %v607, %v603
        %v812 = vpack.c.b16 %v612, %v608
        %v813 = vpack.c.b16 %v613, %v609
        %v814 = vpack.c.b16 %v614, %v610
        %v815 = vpack.c.b16 %v615, %v611
        %v816 = vpack.c.b16 %v620, %v616
        %v817 = vpack.c.b16 %v621, %v617
        %v818 = vpack.c.b16 %v622, %v618
        %v819 = vpack.c.b16 %v623, %v619
        %v820 = vpack.c.b16 %v628, %v624
        %v821 = vpack.c.b16 %v629, %v625
        %v822 = vpack.c.b16 %v630, %v626
        %v823 = vpack.c.b16 %v631, %v627
        %v824 = vpack.c.b16 %v636, %v632
        %v825 = vpack.c.b16 %v637, %v633
        %v826 = vpack.c.b16 %v638, %v634
        %v827 = vpack.c.b16 %v639, %v635
        %v828 = vpack.c.b16 %v644, %v640
        %v829 = vpack.c.b16 %v645, %v641
        %v830 = vpack.c.b16 %v646, %v642
        %v831 = vpack.c.b16 %v647, %v643
        %v832 = vpack.c.b16 %v652, %v648
        %v833 = vpack.c.b16 %v653, %v649
        %v834 = vpack.c.b16 %v654, %v650
        %v835 = vpack.c.b16 %v655, %v651
        %v836 = vpack.c.b16 %v660, %v656
        %v837 = vpack.c.b16 %v661, %v657
        %v838 = vpack.c.b16 %v662, %v658
        %v839 = vpack.c.b16 %v663, %v659
        %v840 = vpack.c.b16 %v668, %v664
        %v841 = vpack.c.b16 %v669, %v665
        %v842 = vpack.c.b16 %v670, %v666
        %v843 = vpack.c.b16 %v671, %v667
        %v844 = vpack.c.b16 %v676, %v672
        %v845 = vpack.c.b16 %v677, %v673
        %v846 = vpack.c.b16 %v678, %v674
        %v847 = vpack.c.b16 %v679, %v675
        %v848 = vpack.c.b16 %v684, %v680
        %v849 = vpack.c.b16 %v685, %v681
        %v850 = vpack.c.b16 %v686, %v682
        %v851 = vpack.c.b16 %v687, %v683
        %v852 = vpack.c.b16 %v692, %v688
        %v853 = vpack.c.b16 %v693, %v689
        %v854 = vpack.c.b16 %v694, %v690
        %v855 = vpack.c.b16 %v695, %v691
        %v856 = vpack.c.b16 %v700, %v696
        %v857 = vpack.c.b16 %v701, %v697
        %v858 = vpack.c.b16 %v702, %v698
        %v859 = vpack.c.b16 %v703, %v699
        %v860 = vpack.c.b16 %v708, %v704
        %v861 = vpack.c.b16 %v709, %v705
        %v862 = vpack.c.b16 %v710, %v706
        %v863 = vpack.c.b16 %v711, %v707
        %v864 = vpack.c.b16 %v716, %v712
        %v865 = vpack.c.b16 %v717, %v713
        %v866 = vpack.c.b16 %v718, %v714
        %v867 = vpack.c.b16 %v719, %v715
        %v868 = vpack.c.b16 %v724, %v720
        %v869 = vpack.c.b16 %v725, %v721
        %v870 = vpack.c.b16 %v726, %v722
        %v871 = vpack.c.b16 %v727, %v723
        %v872 = vpack.c.b16 %v732, %v728
        %v873 = vpack.c.b16 %v733, %v729
        %v874 = vpack.c.b16 %v734, %v730
        %v875 = vpack.c.b16 %v735, %v731
        %v876 = vpack.c.b16 %v740, %v736
        %v877 = vpack.c.b16 %v741, %v737
        %v878 = vpack.c.b16 %v742, %v738
        %v879 = vpack.c.b16 %v743, %v739
        %v880 = vpack.c.b16 %v748, %v744
        %v881 = vpack.c.b16 %v749, %v745
        %v882 = vpack.c.b16 %v750, %v746
        %v883 = vpack.c.b16 %v751, %v747
        %v884 = vpack.c.b16 %v756, %v752
        %v885 = vpack.c.b16 %v757, %v753
        %v886 = vpack.c.b16 %v758, %v754
        %v887 = vpack.c.b16 %v759, %v755
        %1016 = vmatprep.subr.bf16.mxu0 %v789
        %1017 = vmatpush1.bf16.msra.mxu0 %v788
        %1018 = vmatprep.subr.bf16.mxu0 %v785
        %1019 = vmatpush1.bf16.msra.mxu0 %v784
        %1020 = vmatprep.subr.bf16.mxu0 %v781
        %1021 = vmatpush1.bf16.msra.mxu0 %v780
        %1022 = vmatprep.subr.bf16.mxu0 %v777
        %1023 = vmatpush1.bf16.msra.mxu0 %v776
        %1024 = vmatprep.subr.bf16.mxu0 %v773
        %1025 = vmatpush1.bf16.msra.mxu0 %v772
        %1026 = vmatprep.subr.bf16.mxu0 %v769
        %1027 = vmatpush1.bf16.msra.mxu0 %v768
        %1028 = vmatprep.subr.bf16.mxu0 %v765
        %1029 = vmatpush1.bf16.msra.mxu0 %v764
        %1030 = vmatprep.subr.bf16.mxu0 %v761
        %1031 = vmatpush1.bf16.msra.mxu0 %v760
        %1032 = vmatprep.subr.bf16.mxu0 %v821
        %1033 = vmatpush2.bf16.msra.mxu0 %v820
        %1034 = vmatprep.subr.bf16.mxu0 %v817
        %1035 = vmatpush2.bf16.msra.mxu0 %v816
        %1036 = vmatprep.subr.bf16.mxu0 %v813
        %1037 = vmatpush2.bf16.msra.mxu0 %v812
        %1038 = vmatprep.subr.bf16.mxu0 %v809
        %1039 = vmatpush2.bf16.msra.mxu0 %v808
        %1040 = vmatprep.subr.bf16.mxu0 %v805
        %1041 = vmatpush2.bf16.msra.mxu0 %v804
        %1042 = vmatprep.subr.bf16.mxu0 %v801
        %1043 = vmatpush2.bf16.msra.mxu0 %v800
        %1044 = vmatprep.subr.bf16.mxu0 %v797
        %1045 = vmatpush2.bf16.msra.mxu0 %v796
        %1046 = vmatprep.subr.bf16.mxu0 %v793
        %1047 = vmatpush2.bf16.msra.mxu0 %v792
        %1048 = vmatprep.mubr.bf16.mxu0 %v361
        %1049 = vmatmul.mubr.bf16.gmra.mxu0 %v360
        %v1050 = vpop.f32.mrf.mxu0
        %v1051 = vadd.f32 0.0, %v1050
        %v1052 = vpop.f32.mrf.mxu0
        %v1053 = vadd.f32 0.0, %v1052
        %v1054 = vpop.f32.mrf.mxu0
        %v1055 = vadd.f32 0.0, %v1054
        %v1056 = vpop.f32.mrf.mxu0
        %v1057 = vadd.f32 0.0, %v1056
        %1058 = vmatprep.mubr.bf16.mxu0 %v365
        %1059 = vmatmul.mubr.bf16.gmra.mxu0 %v364
        %v1060 = vpop.f32.mrf.mxu0
        %v1061 = vadd.f32 0.0, %v1060
        %v1062 = vpop.f32.mrf.mxu0
        %v1063 = vadd.f32 0.0, %v1062
        %v1064 = vpop.f32.mrf.mxu0
        %v1065 = vadd.f32 0.0, %v1064
        %v1066 = vpop.f32.mrf.mxu0
        %v1067 = vadd.f32 0.0, %v1066
        %1068 = vdwg.mxu0
        %1069 = vmatprep.subr.bf16.mxu0 %v853
        %1070 = vmatpush1.bf16.msra.mxu0 %v852
        %1071 = vmatprep.subr.bf16.mxu0 %v849
        %1072 = vmatpush1.bf16.msra.mxu0 %v848
        %1073 = vmatprep.subr.bf16.mxu0 %v845
        %1074 = vmatpush1.bf16.msra.mxu0 %v844
        %1075 = vmatprep.subr.bf16.mxu0 %v841
        %1076 = vmatpush1.bf16.msra.mxu0 %v840
        %1077 = vmatprep.subr.bf16.mxu0 %v837
        %1078 = vmatpush1.bf16.msra.mxu0 %v836
        %1079 = vmatprep.subr.bf16.mxu0 %v833
        %1080 = vmatpush1.bf16.msra.mxu0 %v832
        %1081 = vmatprep.subr.bf16.mxu0 %v829
        %1082 = vmatpush1.bf16.msra.mxu0 %v828
        %1083 = vmatprep.subr.bf16.mxu0 %v825
        %1084 = vmatpush1.bf16.msra.mxu0 %v824
        %1085 = vmatprep.subr.bf16.mxu0 %v885
        %1086 = vmatpush2.bf16.msra.mxu0 %v884
        %1087 = vmatprep.subr.bf16.mxu0 %v881
        %1088 = vmatpush2.bf16.msra.mxu0 %v880
        %1089 = vmatprep.subr.bf16.mxu0 %v877
        %1090 = vmatpush2.bf16.msra.mxu0 %v876
        %1091 = vmatprep.subr.bf16.mxu0 %v873
        %1092 = vmatpush2.bf16.msra.mxu0 %v872
        %1093 = vmatprep.subr.bf16.mxu0 %v869
        %1094 = vmatpush2.bf16.msra.mxu0 %v868
        %1095 = vmatprep.subr.bf16.mxu0 %v865
        %1096 = vmatpush2.bf16.msra.mxu0 %v864
        %1097 = vmatprep.subr.bf16.mxu0 %v861
        %1098 = vmatpush2.bf16.msra.mxu0 %v860
        %1099 = vmatprep.subr.bf16.mxu0 %v857
        %1100 = vmatpush2.bf16.msra.mxu0 %v856
        %1101 = vmatprep.mubr.bf16.mxu0 %v363
        %1102 = vmatmul.mubr.bf16.gmra.mxu0 %v362
        %v1103 = vpop.f32.mrf.mxu0
        %v1104 = vadd.f32 %v1051, %v1103
        %v1105 = vpop.f32.mrf.mxu0
        %v1106 = vadd.f32 %v1053, %v1105
        %v1107 = vpop.f32.mrf.mxu0
        %v1108 = vadd.f32 %v1055, %v1107
        %v1109 = vpop.f32.mrf.mxu0
        %v1110 = vadd.f32 %v1057, %v1109
        %1111 = vmatprep.mubr.bf16.mxu0 %v367
        %1112 = vmatmul.mubr.bf16.gmra.mxu0 %v366
        %v1113 = vpop.f32.mrf.mxu0
        %v1114 = vadd.f32 %v1061, %v1113
        %v1115 = vpop.f32.mrf.mxu0
        %v1116 = vadd.f32 %v1063, %v1115
        %v1117 = vpop.f32.mrf.mxu0
        %v1118 = vadd.f32 %v1065, %v1117
        %v1119 = vpop.f32.mrf.mxu0
        %v1120 = vadd.f32 %v1067, %v1119
        %1121 = vdwg.mxu0
        %1122 = vmatprep.subr.bf16.mxu0 %v791
        %1123 = vmatpush1.bf16.msra.mxu0 %v790
        %1124 = vmatprep.subr.bf16.mxu0 %v787
        %1125 = vmatpush1.bf16.msra.mxu0 %v786
        %1126 = vmatprep.subr.bf16.mxu0 %v783
        %1127 = vmatpush1.bf16.msra.mxu0 %v782
        %1128 = vmatprep.subr.bf16.mxu0 %v779
        %1129 = vmatpush1.bf16.msra.mxu0 %v778
        %1130 = vmatprep.subr.bf16.mxu0 %v775
        %1131 = vmatpush1.bf16.msra.mxu0 %v774
        %1132 = vmatprep.subr.bf16.mxu0 %v771
        %1133 = vmatpush1.bf16.msra.mxu0 %v770
        %1134 = vmatprep.subr.bf16.mxu0 %v767
        %1135 = vmatpush1.bf16.msra.mxu0 %v766
        %1136 = vmatprep.subr.bf16.mxu0 %v763
        %1137 = vmatpush1.bf16.msra.mxu0 %v762
        %1138 = vmatprep.subr.bf16.mxu0 %v823
        %1139 = vmatpush2.bf16.msra.mxu0 %v822
        %1140 = vmatprep.subr.bf16.mxu0 %v819
        %1141 = vmatpush2.bf16.msra.mxu0 %v818
        %1142 = vmatprep.subr.bf16.mxu0 %v815
        %1143 = vmatpush2.bf16.msra.mxu0 %v814
        %1144 = vmatprep.subr.bf16.mxu0 %v811
        %1145 = vmatpush2.bf16.msra.mxu0 %v810
        %1146 = vmatprep.subr.bf16.mxu0 %v807
        %1147 = vmatpush2.bf16.msra.mxu0 %v806
        %1148 = vmatprep.subr.bf16.mxu0 %v803
        %1149 = vmatpush2.bf16.msra.mxu0 %v802
        %1150 = vmatprep.subr.bf16.mxu0 %v799
        %1151 = vmatpush2.bf16.msra.mxu0 %v798
        %1152 = vmatprep.subr.bf16.mxu0 %v795
        %1153 = vmatpush2.bf16.msra.mxu0 %v794
        %1154 = vmatprep.mubr.bf16.mxu0 %v361
        %1155 = vmatmul.mubr.bf16.gmra.mxu0 %v360
        %v1156 = vpop.f32.mrf.mxu0
        %v1157 = vadd.f32 0.0, %v1156
        %v1158 = vpop.f32.mrf.mxu0
        %v1159 = vadd.f32 0.0, %v1158
        %v1160 = vpop.f32.mrf.mxu0
        %v1161 = vadd.f32 0.0, %v1160
        %v1162 = vpop.f32.mrf.mxu0
        %v1163 = vadd.f32 0.0, %v1162
        %1164 = vmatprep.mubr.bf16.mxu0 %v365
        %1165 = vmatmul.mubr.bf16.gmra.mxu0 %v364
        %v1166 = vpop.f32.mrf.mxu0
        %v1167 = vadd.f32 0.0, %v1166
        %v1168 = vpop.f32.mrf.mxu0
        %v1169 = vadd.f32 0.0, %v1168
        %v1170 = vpop.f32.mrf.mxu0
        %v1171 = vadd.f32 0.0, %v1170
        %v1172 = vpop.f32.mrf.mxu0
        %v1173 = vadd.f32 0.0, %v1172
        %1174 = vdwg.mxu0
        %1175 = vmatprep.subr.bf16.mxu0 %v855
        %1176 = vmatpush1.bf16.msra.mxu0 %v854
        %1177 = vmatprep.subr.bf16.mxu0 %v851
        %1178 = vmatpush1.bf16.msra.mxu0 %v850
        %1179 = vmatprep.subr.bf16.mxu0 %v847
        %1180 = vmatpush1.bf16.msra.mxu0 %v846
        %1181 = vmatprep.subr.bf16.mxu0 %v843
        %1182 = vmatpush1.bf16.msra.mxu0 %v842
        %1183 = vmatprep.subr.bf16.mxu0 %v839
        %1184 = vmatpush1.bf16.msra.mxu0 %v838
        %1185 = vmatprep.subr.bf16.mxu0 %v835
        %1186 = vmatpush1.bf16.msra.mxu0 %v834
        %1187 = vmatprep.subr.bf16.mxu0 %v831
        %1188 = vmatpush1.bf16.msra.mxu0 %v830
        %1189 = vmatprep.subr.bf16.mxu0 %v827
        %1190 = vmatpush1.bf16.msra.mxu0 %v826
        %1191 = vmatprep.subr.bf16.mxu0 %v887
        %1192 = vmatpush2.bf16.msra.mxu0 %v886
        %1193 = vmatprep.subr.bf16.mxu0 %v883
        %1194 = vmatpush2.bf16.msra.mxu0 %v882
        %1195 = vmatprep.subr.bf16.mxu0 %v879
        %1196 = vmatpush2.bf16.msra.mxu0 %v878
        %1197 = vmatprep.subr.bf16.mxu0 %v875
        %1198 = vmatpush2.bf16.msra.mxu0 %v874
        %1199 = vmatprep.subr.bf16.mxu0 %v871
        %1200 = vmatpush2.bf16.msra.mxu0 %v870
        %1201 = vmatprep.subr.bf16.mxu0 %v867
        %1202 = vmatpush2.bf16.msra.mxu0 %v866
        %1203 = vmatprep.subr.bf16.mxu0 %v863
        %1204 = vmatpush2.bf16.msra.mxu0 %v862
        %1205 = vmatprep.subr.bf16.mxu0 %v859
        %1206 = vmatpush2.bf16.msra.mxu0 %v858
        %1207 = vmatprep.mubr.bf16.mxu0 %v363
        %1208 = vmatmul.mubr.bf16.gmra.mxu0 %v362
        %v1209 = vpop.f32.mrf.mxu0
        %v1210 = vadd.f32 %v1157, %v1209
        %v1211 = vpop.f32.mrf.mxu0
        %v1212 = vadd.f32 %v1159, %v1211
        %v1213 = vpop.f32.mrf.mxu0
        %v1214 = vadd.f32 %v1161, %v1213
        %v1215 = vpop.f32.mrf.mxu0
        %v1216 = vadd.f32 %v1163, %v1215
        %1217 = vmatprep.mubr.bf16.mxu0 %v367
        %1218 = vmatmul.mubr.bf16.gmra.mxu0 %v366
        %v1219 = vpop.f32.mrf.mxu0
        %v1220 = vadd.f32 %v1167, %v1219
        %v1221 = vpop.f32.mrf.mxu0
        %v1222 = vadd.f32 %v1169, %v1221
        %v1223 = vpop.f32.mrf.mxu0
        %v1224 = vadd.f32 %v1171, %v1223
        %v1225 = vpop.f32.mrf.mxu0
        %v1226 = vadd.f32 %v1173, %v1225
        %1227 = vdwg.mxu0
        %1228 = vst [vmem:[%s189] sm:$0xff] %v1104
        %1229 = vst [vmem:[%s189 + $0x8] sm:$0xff] %v1106
        %1230 = vst [vmem:[%s189 + $0x10] sm:$0xff] %v1210
        %1231 = vst [vmem:[%s189 + $0x18] sm:$0xff] %v1212
        %1232 = vst [vmem:[%s189 + $0x20] sm:$0xff] %v1108
        %1233 = vst [vmem:[%s189 + $0x28] sm:$0xff] %v1110
        %1234 = vst [vmem:[%s189 + $0x30] sm:$0xff] %v1214
        %1235 = vst [vmem:[%s189 + $0x38] sm:$0xff] %v1216
        %1236 = vst [vmem:[%s189 + $0x40] sm:$0xff] %v1114
        %1237 = vst [vmem:[%s189 + $0x48] sm:$0xff] %v1116
        %1238 = vst [vmem:[%s189 + $0x50] sm:$0xff] %v1220
        %1239 = vst [vmem:[%s189 + $0x58] sm:$0xff] %v1222
        %1240 = vst [vmem:[%s189 + $0x60] sm:$0xff] %v1118
        %1241 = vst [vmem:[%s189 + $0x68] sm:$0xff] %v1120
        %1242 = vst [vmem:[%s189 + $0x70] sm:$0xff] %v1224
        %1243 = vst [vmem:[%s189 + $0x78] sm:$0xff] %v1226
        %s1244 = sand.u32 %s90, 1
        %s1245 = sand.u32 %s90, 1
        %s1246 = smul.addr %s1245, 128
        %s1247 = scalar_lea.vmem [#allocation4], %s1246
        // Predicated region
        $region33: #{generator_forward.7} parent=27 // pred_check
          %p1248 = pneg %p100
        $region34: #{generator_forward.7} parent=27 // pred_check_branch
          %1250 = sbr.rel (%p1248) target = $region36
        $region35: #{generator_forward.7} parent=27 // pred_region
          %s1251 = smul.u32 4, %s20
          %s1252 = smul.u32 4, %s21
          %s1253 = smul.addr %s1251, 32
          %s1254 = sadd.s32 %s1252, %s1253
          %s1255 = smul.addr %s1254, 8
          %s1256 = scalar_lea.vmem %s2, %s1255
          // Predicated region
          $region37: #{generator_forward.7} parent=35 // pred_check
            _
          $region38: #{generator_forward.7} parent=35 // pred_check_branch
            %1258 = sbr.rel (0) target = $region40
          $region39: #{generator_forward.7} parent=35 // pred_region
            // Predicated region
            $region41: #{generator_forward.7} parent=39 // pred_check
              _
            $region42: #{generator_forward.7} parent=39 // pred_check_branch
              %1260 = sbr.rel (0) target = $region44
            $region43: #{generator_forward.7} parent=39 // pred_region
              loop: start=0, step=1, limit=1
              $region45: #{generator_forward.7} parent=43 // loop_pre_header
                _
              $region46: #{generator_forward.7} parent=43 // loop_header
                %s1262 = sphi 0, %s1266
                %p1263 = scmp.ge.s32.totalorder %s1262, 1
                %s1267 = sphi %s1247, %s1247
                %s1268 = sphi %s1256, %s1256
              $region47: #{generator_forward.7} parent=43 // loop_header_branch
                %1265 = sbr.rel (%p1263) target = $region51
              $region48: #{generator_forward.7} parent=43 // loop_body
                %v1269 = vld [vmem:[%s1267] sm:$0xff]
                %1270 = vst [vmem:[%s1268] sm:$0xff] %v1269
                %v1271 = vld [vmem:[%s1267 + $0x8] sm:$0xff]
                %1272 = vst [vmem:[%s1268 + $0x8] sm:$0xff] %v1271
                %v1273 = vld [vmem:[%s1267 + $0x10] sm:$0xff]
                %1274 = vst [vmem:[%s1268 + $0x10] sm:$0xff] %v1273
                %v1275 = vld [vmem:[%s1267 + $0x18] sm:$0xff]
                %1276 = vst [vmem:[%s1268 + $0x18] sm:$0xff] %v1275
                %v1277 = vld [vmem:[%s1267 + $0x20] sm:$0xff]
                %1278 = vst [vmem:[%s1268 + $0x100] sm:$0xff] %v1277
                %v1279 = vld [vmem:[%s1267 + $0x28] sm:$0xff]
                %1280 = vst [vmem:[%s1268 + $0x108] sm:$0xff] %v1279
                %v1281 = vld [vmem:[%s1267 + $0x30] sm:$0xff]
                %1282 = vst [vmem:[%s1268 + $0x110] sm:$0xff] %v1281
                %v1283 = vld [vmem:[%s1267 + $0x38] sm:$0xff]
                %1284 = vst [vmem:[%s1268 + $0x118] sm:$0xff] %v1283
                %v1285 = vld [vmem:[%s1267 + $0x40] sm:$0xff]
                %1286 = vst [vmem:[%s1268 + $0x200] sm:$0xff] %v1285
                %v1287 = vld [vmem:[%s1267 + $0x48] sm:$0xff]
                %1288 = vst [vmem:[%s1268 + $0x208] sm:$0xff] %v1287
                %v1289 = vld [vmem:[%s1267 + $0x50] sm:$0xff]
                %1290 = vst [vmem:[%s1268 + $0x210] sm:$0xff] %v1289
                %v1291 = vld [vmem:[%s1267 + $0x58] sm:$0xff]
                %1292 = vst [vmem:[%s1268 + $0x218] sm:$0xff] %v1291
                %v1293 = vld [vmem:[%s1267 + $0x60] sm:$0xff]
                %1294 = vst [vmem:[%s1268 + $0x300] sm:$0xff] %v1293
                %v1295 = vld [vmem:[%s1267 + $0x68] sm:$0xff]
                %1296 = vst [vmem:[%s1268 + $0x308] sm:$0xff] %v1295
                %v1297 = vld [vmem:[%s1267 + $0x70] sm:$0xff]
                %1298 = vst [vmem:[%s1268 + $0x310] sm:$0xff] %v1297
                %v1299 = vld [vmem:[%s1267 + $0x78] sm:$0xff]
                %1300 = vst [vmem:[%s1268 + $0x318] sm:$0xff] %v1299
              $region49: #{generator_forward.7} parent=43 // loop_footer
                %s1266 = sadd.s32 1, %s1262
              $region50: #{generator_forward.7} parent=43 // loop_footer_branch
                %1261 = sbr.rel target = $region46
              $region51: #{generator_forward.7} parent=43 // loop_exit
                _
            $region44: #{generator_forward.7} parent=39 // pred_fallthru
              _
            // Predicated region
            $region52: #{generator_forward.7} parent=39 // pred_check
              _
            $region53: #{generator_forward.7} parent=39 // pred_check_branch
              %1302 = sbr.rel target = $region55
            $region54: #{generator_forward.7} parent=39 // pred_region
              _
            $region55: #{generator_forward.7} parent=39 // pred_fallthru
              _
          $region40: #{generator_forward.7} parent=35 // pred_fallthru
            _
          %1303 = vnop
        $region36: #{generator_forward.7} parent=27 // pred_fallthru
          _
      $region28: #{generator_forward.7} parent=5 // pred_fallthru
        _
      %p1304 = scmp.le.s32.totalorder 2, %s11
      // Predicated region
      $region56: #{generator_forward.7} parent=5 // pred_check
        %p1305 = pneg %p1304
      $region57: #{generator_forward.7} parent=5 // pred_check_branch
        %1307 = sbr.rel (%p1305) target = $region59
      $region58: #{generator_forward.7} parent=5 // pred_region
        %s1308 = ssub.s32 %s11, 2
        // Predicated region
        $region60: #{generator_forward.7} parent=58 // pred_check
          %p1309 = pneg %p106
        $region61: #{generator_forward.7} parent=58 // pred_check_branch
          %1311 = sbr.rel (%p1309) target = $region63
        $region62: #{generator_forward.7} parent=58 // pred_region
          %s1312 = sand.u32 %s91, 1
          %s1313 = sand.u32 %s91, 1
          %s1314 = smul.addr %s1313, 128
          %s1315 = scalar_lea.vmem [#allocation4], %s1314
        $region63: #{generator_forward.7} parent=58 // pred_fallthru
          _
      $region59: #{generator_forward.7} parent=5 // pred_fallthru
        _
    $region6: #{generator_forward.7} parent=1 // loop_footer
      %s15 = sadd.s32 1, %s11
    $region7: #{generator_forward.7} parent=1 // loop_footer_branch
      %10 = sbr.rel target = $region3
    $region8: #{generator_forward.7} parent=1 // loop_exit
      _
    %1316 = vsyncpa [#allocation3], 1
    %s1317 = scalar_lea.sflag [#allocation3], 1
    %1318 = vsyncpa %s1317, 1

// kernel: generator_forward.8
$region0: #{generator_forward.8}
  #allocation0 [shape = 'u32[]', space=smem, size = 0x4, offset = 0x4, fixed_abs, tag = 'smem constant byte address 0x4 - core index']
  #allocation1 [shape = 'u32[144,128]{1,0:T(1,128)}', space=vmem, size = 0x12000, scoped, tag = 'internal scratch']
  %s0 = inlined_call_operand.vmem [shape: bf16[128,256], index: 0, kind: input, shape index: {}]
  %s1 = inlined_call_operand.vmem [shape: bf16[256,2048], index: 1, kind: input, shape index: {}]
  %s2 = inlined_call_operand.vmem [shape: f32[128,2048], index: 2, kind: output, shape index: {}]
  %s3 = sld [smem:[#allocation0]]
  $region83: #{generator_forward.8} parent=0
    _
  %s5 = ssub.s32 1, %s3
  %s6 = scalar_select 0, %s5, %s3
  $region1: #{generator_forward.8} parent=0
    #allocation2 [shape = 'u8[524288]{0}', space=vmem, size = 0x80000, scoped, tag = 'input window, operand 1']
    #allocation3 [shape = 'u8[524288]{0}', space=vmem, size = 0x80000, scoped, tag = 'output window, operand 0']
    loop: start=0, step=1, limit=6
    $region2: #{generator_forward.8} parent=1 // loop_pre_header
      _
    $region3: #{generator_forward.8} parent=1 // loop_header
      %s8 = sphi 0, %s12
      %p9 = scmp.ge.s32.totalorder %s8, 6
      %s15 = sphi 0, %s27
      %s16 = sphi 0, %s23
      %s17 = sphi 0, %s15
      %s18 = sphi 0, %s16
      %s19 = sphi 0, %s17
      %s20 = sphi 0, %s18
      %s30 = sphi 0, %s32
      %s33 = sphi 0, %s30
      %s34 = sphi 0, %s33
      %s50 = sphi 0, %s34
      %s56 = sphi 0, %s58
      %s59 = sphi 0, %s56
      %s60 = sphi 0, %s59
      %s76 = sphi 0, %s60
      %s84 = sphi 0, %s86
      %s87 = sphi 0, %s84
      %s88 = sphi 0, %s87
      %s104 = sphi 0, %s88
    $region4: #{generator_forward.8} parent=1 // loop_header_branch
      %11 = sbr.rel (%p9) target = $region8
    $region5: #{generator_forward.8} parent=1 // loop_body
      %s13 = ssub.s32 %s8, 1
      %s14 = ssub.s32 %s8, 2
      %s21 = sadd.s32 1, %s16
      %p22 = scmp.ge.s32.totalorder %s21, 4
      %s23 = scalar_select %p22, 0, %s21
      %s24 = sadd.s32 1, %s15
      %s25 = scalar_select %p22, %s24, %s15
      %p26 = scmp.ge.s32.totalorder %s25, 1
      %s27 = scalar_select %p26, 0, %s25
      %s28 = ssub.s32 %s15, %s27
      %p29 = scmp.eq.s32.totalorder %s28, 0
      %s31 = sadd.s32 %s30, 1
      %s32 = scalar_select %p29, %s30, %s31
      %p35 = pneg %p29
      %p36 = scmp.eq.s32.totalorder %s8, 3
      %p37 = por %p35, %p36
      %p38 = scmp.ne.s32.totalorder %s30, %s33
      %p39 = scmp.eq.s32.totalorder %s8, 0
      %p40 = por %p38, %p39
      %p41 = scmp.ne.s32.totalorder %s30, %s33
      %p42 = scmp.eq.s32.totalorder %s13, 3
      %p43 = por %p41, %p42
      %p44 = scmp.ne.s32.totalorder %s33, %s34
      %p45 = scmp.eq.s32.totalorder %s13, 0
      %p46 = por %p44, %p45
      %p47 = scmp.ne.s32.totalorder %s33, %s34
      %p48 = scmp.eq.s32.totalorder %s14, 3
      %p49 = por %p47, %p48
      %p51 = scmp.ne.s32.totalorder %s34, %s50
      %p52 = scmp.eq.s32.totalorder %s14, 0
      %p53 = por %p51, %p52
      %s54 = ssub.s32 %s16, %s23
      %p55 = scmp.eq.s32.totalorder %s54, 0
      %s57 = sadd.s32 %s56, 1
      %s58 = scalar_select %p55, %s56, %s57
      %p61 = pneg %p55
      %p62 = scmp.eq.s32.totalorder %s8, 3
      %p63 = por %p61, %p62
      %p64 = scmp.ne.s32.totalorder %s56, %s59
      %p65 = scmp.eq.s32.totalorder %s8, 0
      %p66 = por %p64, %p65
      %p67 = scmp.ne.s32.totalorder %s56, %s59
      %p68 = scmp.eq.s32.totalorder %s13, 3
      %p69 = por %p67, %p68
      %p70 = scmp.ne.s32.totalorder %s59, %s60
      %p71 = scmp.eq.s32.totalorder %s13, 0
      %p72 = por %p70, %p71
      %p73 = scmp.ne.s32.totalorder %s59, %s60
      %p74 = scmp.eq.s32.totalorder %s14, 3
      %p75 = por %p73, %p74
      %p77 = scmp.ne.s32.totalorder %s60, %s76
      %p78 = scmp.eq.s32.totalorder %s14, 0
      %p79 = por %p77, %p78
      %s80 = ssub.s32 %s15, %s27
      %s81 = ssub.s32 %s16, %s23
      %s82 = sor.u32 %s80, %s81
      %p83 = scmp.eq.s32.totalorder %s82, 0
      %s85 = sadd.s32 %s84, 1
      %s86 = scalar_select %p83, %s84, %s85
      %p89 = pneg %p83
      %p90 = scmp.eq.s32.totalorder %s8, 3
      %p91 = por %p89, %p90
      %p92 = scmp.ne.s32.totalorder %s84, %s87
      %p93 = scmp.eq.s32.totalorder %s8, 0
      %p94 = por %p92, %p93
      %p95 = scmp.ne.s32.totalorder %s84, %s87
      %p96 = scmp.eq.s32.totalorder %s13, 3
      %p97 = por %p95, %p96
      %p98 = scmp.ne.s32.totalorder %s87, %s88
      %p99 = scmp.eq.s32.totalorder %s13, 0
      %p100 = por %p98, %p99
      %p101 = scmp.ne.s32.totalorder %s87, %s88
      %p102 = scmp.eq.s32.totalorder %s14, 3
      %p103 = por %p101, %p102
      %p105 = scmp.ne.s32.totalorder %s88, %s104
      %p106 = scmp.eq.s32.totalorder %s14, 0
      %p107 = por %p105, %p106
      %p108 = scmp.le.s32.totalorder 1, %s8
      %p109 = scmp.lt.s32.totalorder %s8, 5
      %p110 = pnand %p108, %p109
      %p111 = pneg %p110
      // Predicated region
      $region9: #{generator_forward.8} parent=5 // pred_check
        _
      $region10: #{generator_forward.8} parent=5 // pred_check_branch
        %113 = sbr.rel (%p110) target = $region12
      $region11: #{generator_forward.8} parent=5 // pred_region
        %s114 = ssub.s32 %s8, 1
        // Predicated region
        $region13: #{generator_forward.8} parent=11 // pred_check
          %p115 = pneg %p46
        $region14: #{generator_forward.8} parent=11 // pred_check_branch
          %117 = sbr.rel (%p115) target = $region16
        $region15: #{generator_forward.8} parent=11 // pred_region
          %s118 = smul.u32 16, %s17
          %p119 = scmp.lt.s32.totalorder %s118, 15
          %s120 = scalar_select %p119, %s118, 15
          %s121 = smul.addr %s120, 2
          %s122 = smul.addr %s121, 4
          %s123 = scalar_lea.vmem %s0, %s122
          %s124 = smul.u32 16, %s17
        $region16: #{generator_forward.8} parent=11 // pred_fallthru
          _
      $region12: #{generator_forward.8} parent=5 // pred_fallthru
        _
      %p125 = scmp.lt.s32.totalorder %s8, 4
      // Predicated region
      $region17: #{generator_forward.8} parent=5 // pred_check
        %p126 = pneg %p125
      $region18: #{generator_forward.8} parent=5 // pred_check_branch
        %128 = sbr.rel (%p126) target = $region20
      $region19: #{generator_forward.8} parent=5 // pred_region
        // Predicated region
        $region21: #{generator_forward.8} parent=19 // pred_check
          %p129 = pneg %p66
        $region22: #{generator_forward.8} parent=19 // pred_check_branch
          %131 = sbr.rel (%p129) target = $region24
        $region23: #{generator_forward.8} parent=19 // pred_region
          %s132 = sand.u32 %s56, 1
          %s133 = sand.u32 %s56, 1
          %s134 = smul.addr %s133, 512
          %s135 = scalar_lea.vmem [#allocation2], %s134
          %s136 = smul.u32 4, %s16
          %s137 = smul.addr %s136, 4
          %s138 = scalar_lea.vmem %s1, %s137
          // Predicated region
          $region25: #{generator_forward.8} parent=23 // pred_check
            _
          $region26: #{generator_forward.8} parent=23 // pred_check_branch
            %140 = sbr.rel (0) target = $region28
          $region27: #{generator_forward.8} parent=23 // pred_region
            // Predicated region
            $region29: #{generator_forward.8} parent=27 // pred_check
              _
            $region30: #{generator_forward.8} parent=27 // pred_check_branch
              %142 = sbr.rel (0) target = $region32
            $region31: #{generator_forward.8} parent=27 // pred_region
              loop: start=0, step=1, limit=1
              $region33: #{generator_forward.8} parent=31 // loop_pre_header
                _
              $region34: #{generator_forward.8} parent=31 // loop_header
                %s144 = sphi 0, %s148
                %p145 = scmp.ge.s32.totalorder %s144, 1
                %s149 = sphi %s138, %s138
                %s150 = sphi %s135, %s135
              $region35: #{generator_forward.8} parent=31 // loop_header_branch
                %147 = sbr.rel (%p145) target = $region39
              $region36: #{generator_forward.8} parent=31 // loop_body
                %v151 = vld [vmem:[%s149] sm:$0xff]
                %152 = vst [vmem:[%s150] sm:$0xff] %v151
                %v153 = vld [vmem:[%s149 + $0x8] sm:$0xff]
                %154 = vst [vmem:[%s150 + $0x8] sm:$0xff] %v153
                %v155 = vld [vmem:[%s149 + $0x40] sm:$0xff]
                %156 = vst [vmem:[%s150 + $0x10] sm:$0xff] %v155
                %v157 = vld [vmem:[%s149 + $0x48] sm:$0xff]
                %158 = vst [vmem:[%s150 + $0x18] sm:$0xff] %v157
                %v159 = vld [vmem:[%s149 + $0x80] sm:$0xff]
                %160 = vst [vmem:[%s150 + $0x20] sm:$0xff] %v159
                %v161 = vld [vmem:[%s149 + $0x88] sm:$0xff]
                %162 = vst [vmem:[%s150 + $0x28] sm:$0xff] %v161
                %v163 = vld [vmem:[%s149 + $0xc0] sm:$0xff]
                %164 = vst [vmem:[%s150 + $0x30] sm:$0xff] %v163
                %v165 = vld [vmem:[%s149 + $0xc8] sm:$0xff]
                %166 = vst [vmem:[%s150 + $0x38] sm:$0xff] %v165
                %v167 = vld [vmem:[%s149 + $0x100] sm:$0xff]
                %168 = vst [vmem:[%s150 + $0x40] sm:$0xff] %v167
                %v169 = vld [vmem:[%s149 + $0x108] sm:$0xff]
                %170 = vst [vmem:[%s150 + $0x48] sm:$0xff] %v169
                %v171 = vld [vmem:[%s149 + $0x140] sm:$0xff]
                %172 = vst [vmem:[%s150 + $0x50] sm:$0xff] %v171
                %v173 = vld [vmem:[%s149 + $0x148] sm:$0xff]
                %174 = vst [vmem:[%s150 + $0x58] sm:$0xff] %v173
                %v175 = vld [vmem:[%s149 + $0x180] sm:$0xff]
                %176 = vst [vmem:[%s150 + $0x60] sm:$0xff] %v175
                %v177 = vld [vmem:[%s149 + $0x188] sm:$0xff]
                %178 = vst [vmem:[%s150 + $0x68] sm:$0xff] %v177
                %v179 = vld [vmem:[%s149 + $0x1c0] sm:$0xff]
                %180 = vst [vmem:[%s150 + $0x70] sm:$0xff] %v179
                %v181 = vld [vmem:[%s149 + $0x1c8] sm:$0xff]
                %182 = vst [vmem:[%s150 + $0x78] sm:$0xff] %v181
                %v183 = vld [vmem:[%s149 + $0x200] sm:$0xff]
                %184 = vst [vmem:[%s150 + $0x80] sm:$0xff] %v183
                %v185 = vld [vmem:[%s149 + $0x208] sm:$0xff]
                %186 = vst [vmem:[%s150 + $0x88] sm:$0xff] %v185
                %v187 = vld [vmem:[%s149 + $0x240] sm:$0xff]
                %188 = vst [vmem:[%s150 + $0x90] sm:$0xff] %v187
                %v189 = vld [vmem:[%s149 + $0x248] sm:$0xff]
                %190 = vst [vmem:[%s150 + $0x98] sm:$0xff] %v189
                %v191 = vld [vmem:[%s149 + $0x280] sm:$0xff]
                %192 = vst [vmem:[%s150 + $0xa0] sm:$0xff] %v191
                %v193 = vld [vmem:[%s149 + $0x288] sm:$0xff]
                %194 = vst [vmem:[%s150 + $0xa8] sm:$0xff] %v193
                %v195 = vld [vmem:[%s149 + $0x2c0] sm:$0xff]
                %196 = vst [vmem:[%s150 + $0xb0] sm:$0xff] %v195
                %v197 = vld [vmem:[%s149 + $0x2c8] sm:$0xff]
                %198 = vst [vmem:[%s150 + $0xb8] sm:$0xff] %v197
                %v199 = vld [vmem:[%s149 + $0x300] sm:$0xff]
                %200 = vst [vmem:[%s150 + $0xc0] sm:$0xff] %v199
                %v201 = vld [vmem:[%s149 + $0x308] sm:$0xff]
                %202 = vst [vmem:[%s150 + $0xc8] sm:$0xff] %v201
                %v203 = vld [vmem:[%s149 + $0x340] sm:$0xff]
                %204 = vst [vmem:[%s150 + $0xd0] sm:$0xff] %v203
                %v205 = vld [vmem:[%s149 + $0x348] sm:$0xff]
                %206 = vst [vmem:[%s150 + $0xd8] sm:$0xff] %v205
                %v207 = vld [vmem:[%s149 + $0x380] sm:$0xff]
                %208 = vst [vmem:[%s150 + $0xe0] sm:$0xff] %v207
                %v209 = vld [vmem:[%s149 + $0x388] sm:$0xff]
                %210 = vst [vmem:[%s150 + $0xe8] sm:$0xff] %v209
                %v211 = vld [vmem:[%s149 + $0x3c0] sm:$0xff]
                %212 = vst [vmem:[%s150 + $0xf0] sm:$0xff] %v211
                %v213 = vld [vmem:[%s149 + $0x3c8] sm:$0xff]
                %214 = vst [vmem:[%s150 + $0xf8] sm:$0xff] %v213
                %v215 = vld [vmem:[%s149 + $0x400] sm:$0xff]
                %216 = vst [vmem:[%s150 + $0x100] sm:$0xff] %v215
                %v217 = vld [vmem:[%s149 + $0x408] sm:$0xff]
                %218 = vst [vmem:[%s150 + $0x108] sm:$0xff] %v217
                %v219 = vld [vmem:[%s149 + $0x440] sm:$0xff]
                %220 = vst [vmem:[%s150 + $0x110] sm:$0xff] %v219
                %v221 = vld [vmem:[%s149 + $0x448] sm:$0xff]
                %222 = vst [vmem:[%s150 + $0x118] sm:$0xff] %v221
                %v223 = vld [vmem:[%s149 + $0x480] sm:$0xff]
                %224 = vst [vmem:[%s150 + $0x120] sm:$0xff] %v223
                %v225 = vld [vmem:[%s149 + $0x488] sm:$0xff]
                %226 = vst [vmem:[%s150 + $0x128] sm:$0xff] %v225
                %v227 = vld [vmem:[%s149 + $0x4c0] sm:$0xff]
                %228 = vst [vmem:[%s150 + $0x130] sm:$0xff] %v227
                %v229 = vld [vmem:[%s149 + $0x4c8] sm:$0xff]
                %230 = vst [vmem:[%s150 + $0x138] sm:$0xff] %v229
                %v231 = vld [vmem:[%s149 + $0x500] sm:$0xff]
                %232 = vst [vmem:[%s150 + $0x140] sm:$0xff] %v231
                %v233 = vld [vmem:[%s149 + $0x508] sm:$0xff]
                %234 = vst [vmem:[%s150 + $0x148] sm:$0xff] %v233
                %v235 = vld [vmem:[%s149 + $0x540] sm:$0xff]
                %236 = vst [vmem:[%s150 + $0x150] sm:$0xff] %v235
                %v237 = vld [vmem:[%s149 + $0x548] sm:$0xff]
                %238 = vst [vmem:[%s150 + $0x158] sm:$0xff] %v237
                %v239 = vld [vmem:[%s149 + $0x580] sm:$0xff]
                %240 = vst [vmem:[%s150 + $0x160] sm:$0xff] %v239
                %v241 = vld [vmem:[%s149 + $0x588] sm:$0xff]
                %242 = vst [vmem:[%s150 + $0x168] sm:$0xff] %v241
                %v243 = vld [vmem:[%s149 + $0x5c0] sm:$0xff]
                %244 = vst [vmem:[%s150 + $0x170] sm:$0xff] %v243
                %v245 = vld [vmem:[%s149 + $0x5c8] sm:$0xff]
                %246 = vst [vmem:[%s150 + $0x178] sm:$0xff] %v245
                %v247 = vld [vmem:[%s149 + $0x600] sm:$0xff]
                %248 = vst [vmem:[%s150 + $0x180] sm:$0xff] %v247
                %v249 = vld [vmem:[%s149 + $0x608] sm:$0xff]
                %250 = vst [vmem:[%s150 + $0x188] sm:$0xff] %v249
                %v251 = vld [vmem:[%s149 + $0x640] sm:$0xff]
                %252 = vst [vmem:[%s150 + $0x190] sm:$0xff] %v251
                %v253 = vld [vmem:[%s149 + $0x648] sm:$0xff]
                %254 = vst [vmem:[%s150 + $0x198] sm:$0xff] %v253
                %v255 = vld [vmem:[%s149 + $0x680] sm:$0xff]
                %256 = vst [vmem:[%s150 + $0x1a0] sm:$0xff] %v255
                %v257 = vld [vmem:[%s149 + $0x688] sm:$0xff]
                %258 = vst [vmem:[%s150 + $0x1a8] sm:$0xff] %v257
                %v259 = vld [vmem:[%s149 + $0x6c0] sm:$0xff]
                %260 = vst [vmem:[%s150 + $0x1b0] sm:$0xff] %v259
                %v261 = vld [vmem:[%s149 + $0x6c8] sm:$0xff]
                %262 = vst [vmem:[%s150 + $0x1b8] sm:$0xff] %v261
                %v263 = vld [vmem:[%s149 + $0x700] sm:$0xff]
                %264 = vst [vmem:[%s150 + $0x1c0] sm:$0xff] %v263
                %v265 = vld [vmem:[%s149 + $0x708] sm:$0xff]
                %266 = vst [vmem:[%s150 + $0x1c8] sm:$0xff] %v265
                %v267 = vld [vmem:[%s149 + $0x740] sm:$0xff]
                %268 = vst [vmem:[%s150 + $0x1d0] sm:$0xff] %v267
                %v269 = vld [vmem:[%s149 + $0x748] sm:$0xff]
                %270 = vst [vmem:[%s150 + $0x1d8] sm:$0xff] %v269
                %v271 = vld [vmem:[%s149 + $0x780] sm:$0xff]
                %272 = vst [vmem:[%s150 + $0x1e0] sm:$0xff] %v271
                %v273 = vld [vmem:[%s149 + $0x788] sm:$0xff]
                %274 = vst [vmem:[%s150 + $0x1e8] sm:$0xff] %v273
                %v275 = vld [vmem:[%s149 + $0x7c0] sm:$0xff]
                %276 = vst [vmem:[%s150 + $0x1f0] sm:$0xff] %v275
                %v277 = vld [vmem:[%s149 + $0x7c8] sm:$0xff]
                %278 = vst [vmem:[%s150 + $0x1f8] sm:$0xff] %v277
              $region37: #{generator_forward.8} parent=31 // loop_footer
                %s148 = sadd.s32 1, %s144
              $region38: #{generator_forward.8} parent=31 // loop_footer_branch
                %143 = sbr.rel target = $region34
              $region39: #{generator_forward.8} parent=31 // loop_exit
                _
            $region32: #{generator_forward.8} parent=27 // pred_fallthru
              _
            // Predicated region
            $region40: #{generator_forward.8} parent=27 // pred_check
              _
            $region41: #{generator_forward.8} parent=27 // pred_check_branch
              %280 = sbr.rel target = $region43
            $region42: #{generator_forward.8} parent=27 // pred_region
              _
            $region43: #{generator_forward.8} parent=27 // pred_fallthru
              _
          $region28: #{generator_forward.8} parent=23 // pred_fallthru
            _
          %281 = vnop
        $region24: #{generator_forward.8} parent=19 // pred_fallthru
          _
      $region20: #{generator_forward.8} parent=5 // pred_fallthru
        _
      %p282 = scmp.le.s32.totalorder 1, %s8
      %p283 = scmp.lt.s32.totalorder %s8, 5
      %p284 = pnand %p282, %p283
      %p285 = pneg %p284
      // Predicated region
      $region44: #{generator_forward.8} parent=5 // pred_check
        _
      $region45: #{generator_forward.8} parent=5 // pred_check_branch
        %287 = sbr.rel (%p284) target = $region47
      $region46: #{generator_forward.8} parent=5 // pred_region
        %s288 = ssub.s32 %s8, 1
        %s289 = sand.u32 %s59, 1
        %s290 = sand.u32 %s59, 1
        %s291 = smul.addr %s290, 512
        %s292 = scalar_lea.vmem [#allocation2], %s291
        // Predicated region
        $region48: #{generator_forward.8} parent=46 // pred_check
          %p293 = pneg %p72
        $region49: #{generator_forward.8} parent=46 // pred_check_branch
          %295 = sbr.rel (%p293) target = $region51
        $region50: #{generator_forward.8} parent=46 // pred_region
          _
        $region51: #{generator_forward.8} parent=46 // pred_fallthru
          _
        %s296 = smul.u32 16, %s17
        %p297 = scmp.lt.s32.totalorder %s296, 15
        %s298 = scalar_select %p297, %s296, 15
        %s299 = smul.addr %s298, 2
        %s300 = smul.addr %s299, 4
        %s301 = scalar_lea.vmem %s0, %s300
        %p302 = pneg %p46
        %p303 = pneg %p43
        %s304 = sand.u32 %s59, 1
        %s305 = sand.u32 %s59, 1
        %s306 = smul.addr %s305, 512
        %s307 = scalar_lea.vmem [#allocation2], %s306
        %p308 = pneg %p72
        %p309 = pneg %p69
        %p310 = pneg %p100
        %p311 = pneg %p97
        %s312 = sand.u32 %s87, 1
        %s313 = sand.u32 %s87, 1
        %s314 = smul.addr %s313, 512
        %s315 = scalar_lea.vmem [#allocation3], %s314
        %s316 = smul.u32 16, %s17
        %p317 = scmp.lt.s32.totalorder %s316, 15
        %s318 = scalar_select %p317, %s316, 15
        %s319 = smul.addr %s318, 2
        %s320 = smul.addr %s319, 4
        %s321 = scalar_lea.vmem %s0, %s320
        %s322 = smul.u32 16, %s17
        %s323 = smul.u32 4, %s18
        %s324 = smul.u32 16, %s17
        %s325 = smul.u32 4, %s18
        %v326 = vld [vmem:[%s321] sm:$0xff]
        %v327 = vld [vmem:[%s321 + $0x8] sm:$0xff]
        %v328 = vld [vmem:[%s321 + $0x10] sm:$0xff]
        %v329 = vld [vmem:[%s321 + $0x18] sm:$0xff]
        %v330 = vld [vmem:[%s321 + $0x20] sm:$0xff]
        %v331 = vld [vmem:[%s321 + $0x28] sm:$0xff]
        %v332 = vld [vmem:[%s321 + $0x30] sm:$0xff]
        %v333 = vld [vmem:[%s321 + $0x38] sm:$0xff]
        %v334 = vld [vmem:[%s321 + $0x40] sm:$0xff]
        %v335 = vld [vmem:[%s321 + $0x48] sm:$0xff]
        %v336 = vld [vmem:[%s321 + $0x50] sm:$0xff]
        %v337 = vld [vmem:[%s321 + $0x58] sm:$0xff]
        %v338 = vld [vmem:[%s321 + $0x60] sm:$0xff]
        %v339 = vld [vmem:[%s321 + $0x68] sm:$0xff]
        %v340 = vld [vmem:[%s321 + $0x70] sm:$0xff]
        %v341 = vld [vmem:[%s321 + $0x78] sm:$0xff]
        %v342 = vld [vmem:[%s292] sm:$0xff]
        %v343 = vld [vmem:[%s292 + $0x8] sm:$0xff]
        %v344 = vld [vmem:[%s292 + $0x10] sm:$0xff]
        %v345 = vld [vmem:[%s292 + $0x18] sm:$0xff]
        %v346 = vld [vmem:[%s292 + $0x20] sm:$0xff]
        %v347 = vld [vmem:[%s292 + $0x28] sm:$0xff]
        %v348 = vld [vmem:[%s292 + $0x30] sm:$0xff]
        %v349 = vld [vmem:[%s292 + $0x38] sm:$0xff]
        %v350 = vld [vmem:[%s292 + $0x40] sm:$0xff]
        %v351 = vld [vmem:[%s292 + $0x48] sm:$0xff]
        %v352 = vld [vmem:[%s292 + $0x50] sm:$0xff]
        %v353 = vld [vmem:[%s292 + $0x58] sm:$0xff]
        %v354 = vld [vmem:[%s292 + $0x60] sm:$0xff]
        %v355 = vld [vmem:[%s292 + $0x68] sm:$0xff]
        %v356 = vld [vmem:[%s292 + $0x70] sm:$0xff]
        %v357 = vld [vmem:[%s292 + $0x78] sm:$0xff]
        %v358 = vld [vmem:[%s292 + $0x80] sm:$0xff]
        %v359 = vld [vmem:[%s292 + $0x88] sm:$0xff]
        %v360 = vld [vmem:[%s292 + $0x90] sm:$0xff]
        %v361 = vld [vmem:[%s292 + $0x98] sm:$0xff]
        %v362 = vld [vmem:[%s292 + $0xa0] sm:$0xff]
        %v363 = vld [vmem:[%s292 + $0xa8] sm:$0xff]
        %v364 = vld [vmem:[%s292 + $0xb0] sm:$0xff]
        %v365 = vld [vmem:[%s292 + $0xb8] sm:$0xff]
        %v366 = vld [vmem:[%s292 + $0xc0] sm:$0xff]
        %v367 = vld [vmem:[%s292 + $0xc8] sm:$0xff]
        %v368 = vld [vmem:[%s292 + $0xd0] sm:$0xff]
        %v369 = vld [vmem:[%s292 + $0xd8] sm:$0xff]
        %v370 = vld [vmem:[%s292 + $0xe0] sm:$0xff]
        %v371 = vld [vmem:[%s292 + $0xe8] sm:$0xff]
        %v372 = vld [vmem:[%s292 + $0xf0] sm:$0xff]
        %v373 = vld [vmem:[%s292 + $0xf8] sm:$0xff]
        %v374 = vld [vmem:[%s292 + $0x100] sm:$0xff]
        %v375 = vld [vmem:[%s292 + $0x108] sm:$0xff]
        %v376 = vld [vmem:[%s292 + $0x110] sm:$0xff]
        %v377 = vld [vmem:[%s292 + $0x118] sm:$0xff]
        %v378 = vld [vmem:[%s292 + $0x120] sm:$0xff]
        %v379 = vld [vmem:[%s292 + $0x128] sm:$0xff]
        %v380 = vld [vmem:[%s292 + $0x130] sm:$0xff]
        %v381 = vld [vmem:[%s292 + $0x138] sm:$0xff]
        %v382 = vld [vmem:[%s292 + $0x140] sm:$0xff]
        %v383 = vld [vmem:[%s292 + $0x148] sm:$0xff]
        %v384 = vld [vmem:[%s292 + $0x150] sm:$0xff]
        %v385 = vld [vmem:[%s292 + $0x158] sm:$0xff]
        %v386 = vld [vmem:[%s292 + $0x160] sm:$0xff]
        %v387 = vld [vmem:[%s292 + $0x168] sm:$0xff]
        %v388 = vld [vmem:[%s292 + $0x170] sm:$0xff]
        %v389 = vld [vmem:[%s292 + $0x178] sm:$0xff]
        %v390 = vld [vmem:[%s292 + $0x180] sm:$0xff]
        %v391 = vld [vmem:[%s292 + $0x188] sm:$0xff]
        %v392 = vld [vmem:[%s292 + $0x190] sm:$0xff]
        %v393 = vld [vmem:[%s292 + $0x198] sm:$0xff]
        %v394 = vld [vmem:[%s292 + $0x1a0] sm:$0xff]
        %v395 = vld [vmem:[%s292 + $0x1a8] sm:$0xff]
        %v396 = vld [vmem:[%s292 + $0x1b0] sm:$0xff]
        %v397 = vld [vmem:[%s292 + $0x1b8] sm:$0xff]
        %v398 = vld [vmem:[%s292 + $0x1c0] sm:$0xff]
        %v399 = vld [vmem:[%s292 + $0x1c8] sm:$0xff]
        %v400 = vld [vmem:[%s292 + $0x1d0] sm:$0xff]
        %v401 = vld [vmem:[%s292 + $0x1d8] sm:$0xff]
        %v402 = vld [vmem:[%s292 + $0x1e0] sm:$0xff]
        %v403 = vld [vmem:[%s292 + $0x1e8] sm:$0xff]
        %v404 = vld [vmem:[%s292 + $0x1f0] sm:$0xff]
        %v405 = vld [vmem:[%s292 + $0x1f8] sm:$0xff]
        %v422 = vunpack.c.l.b16 %v326
        %v423 = vunpack.c.h.b16 %v326
        %v424 = vunpack.c.l.b16 %v327
        %v425 = vunpack.c.h.b16 %v327
        %v426 = vunpack.c.l.b16 %v328
        %v427 = vunpack.c.h.b16 %v328
        %v428 = vunpack.c.l.b16 %v329
        %v429 = vunpack.c.h.b16 %v329
        %v430 = vunpack.c.l.b16 %v330
        %v431 = vunpack.c.h.b16 %v330
        %v432 = vunpack.c.l.b16 %v331
        %v433 = vunpack.c.h.b16 %v331
        %v434 = vunpack.c.l.b16 %v332
        %v435 = vunpack.c.h.b16 %v332
        %v436 = vunpack.c.l.b16 %v333
        %v437 = vunpack.c.h.b16 %v333
        %v438 = vunpack.c.l.b16 %v334
        %v439 = vunpack.c.h.b16 %v334
        %v440 = vunpack.c.l.b16 %v335
        %v441 = vunpack.c.h.b16 %v335
        %v442 = vunpack.c.l.b16 %v336
        %v443 = vunpack.c.h.b16 %v336
        %v444 = vunpack.c.l.b16 %v337
        %v445 = vunpack.c.h.b16 %v337
        %v446 = vunpack.c.l.b16 %v338
        %v447 = vunpack.c.h.b16 %v338
        %v448 = vunpack.c.l.b16 %v339
        %v449 = vunpack.c.h.b16 %v339
        %v450 = vunpack.c.l.b16 %v340
        %v451 = vunpack.c.h.b16 %v340
        %v452 = vunpack.c.l.b16 %v341
        %v453 = vunpack.c.h.b16 %v341
        %v454 = vpack.c.b16 %v424, %v422
        %v455 = vpack.c.b16 %v425, %v423
        %v456 = vpack.c.b16 %v428, %v426
        %v457 = vpack.c.b16 %v429, %v427
        %v458 = vpack.c.b16 %v432, %v430
        %v459 = vpack.c.b16 %v433, %v431
        %v460 = vpack.c.b16 %v436, %v434
        %v461 = vpack.c.b16 %v437, %v435
        %v462 = vpack.c.b16 %v440, %v438
        %v463 = vpack.c.b16 %v441, %v439
        %v464 = vpack.c.b16 %v444, %v442
        %v465 = vpack.c.b16 %v445, %v443
        %v466 = vpack.c.b16 %v448, %v446
        %v467 = vpack.c.b16 %v449, %v447
        %v468 = vpack.c.b16 %v452, %v450
        %v469 = vpack.c.b16 %v453, %v451
        %v550 = vunpack.c.l.b16 %v342
        %v551 = vunpack.c.h.b16 %v342
        %v552 = vunpack.c.l.b16 %v343
        %v553 = vunpack.c.h.b16 %v343
        %v554 = vunpack.c.l.b16 %v344
        %v555 = vunpack.c.h.b16 %v344
        %v556 = vunpack.c.l.b16 %v345
        %v557 = vunpack.c.h.b16 %v345
        %v558 = vunpack.c.l.b16 %v346
        %v559 = vunpack.c.h.b16 %v346
        %v560 = vunpack.c.l.b16 %v347
        %v561 = vunpack.c.h.b16 %v347
        %v562 = vunpack.c.l.b16 %v348
        %v563 = vunpack.c.h.b16 %v348
        %v564 = vunpack.c.l.b16 %v349
        %v565 = vunpack.c.h.b16 %v349
        %v566 = vunpack.c.l.b16 %v350
        %v567 = vunpack.c.h.b16 %v350
        %v568 = vunpack.c.l.b16 %v351
        %v569 = vunpack.c.h.b16 %v351
        %v570 = vunpack.c.l.b16 %v352
        %v571 = vunpack.c.h.b16 %v352
        %v572 = vunpack.c.l.b16 %v353
        %v573 = vunpack.c.h.b16 %v353
        %v574 = vunpack.c.l.b16 %v354
        %v575 = vunpack.c.h.b16 %v354
        %v576 = vunpack.c.l.b16 %v355
        %v577 = vunpack.c.h.b16 %v355
        %v578 = vunpack.c.l.b16 %v356
        %v579 = vunpack.c.h.b16 %v356
        %v580 = vunpack.c.l.b16 %v357
        %v581 = vunpack.c.h.b16 %v357
        %v582 = vunpack.c.l.b16 %v358
        %v583 = vunpack.c.h.b16 %v358
        %v584 = vunpack.c.l.b16 %v359
        %v585 = vunpack.c.h.b16 %v359
        %v586 = vunpack.c.l.b16 %v360
        %v587 = vunpack.c.h.b16 %v360
        %v588 = vunpack.c.l.b16 %v361
        %v589 = vunpack.c.h.b16 %v361
        %v590 = vunpack.c.l.b16 %v362
        %v591 = vunpack.c.h.b16 %v362
        %v592 = vunpack.c.l.b16 %v363
        %v593 = vunpack.c.h.b16 %v363
        %v594 = vunpack.c.l.b16 %v364
        %v595 = vunpack.c.h.b16 %v364
        %v596 = vunpack.c.l.b16 %v365
        %v597 = vunpack.c.h.b16 %v365
        %v598 = vunpack.c.l.b16 %v366
        %v599 = vunpack.c.h.b16 %v366
        %v600 = vunpack.c.l.b16 %v367
        %v601 = vunpack.c.h.b16 %v367
        %v602 = vunpack.c.l.b16 %v368
        %v603 = vunpack.c.h.b16 %v368
        %v604 = vunpack.c.l.b16 %v369
        %v605 = vunpack.c.h.b16 %v369
        %v606 = vunpack.c.l.b16 %v370
        %v607 = vunpack.c.h.b16 %v370
        %v608 = vunpack.c.l.b16 %v371
        %v609 = vunpack.c.h.b16 %v371
        %v610 = vunpack.c.l.b16 %v372
        %v611 = vunpack.c.h.b16 %v372
        %v612 = vunpack.c.l.b16 %v373
        %v613 = vunpack.c.h.b16 %v373
        %v614 = vunpack.c.l.b16 %v374
        %v615 = vunpack.c.h.b16 %v374
        %v616 = vunpack.c.l.b16 %v375
        %v617 = vunpack.c.h.b16 %v375
        %v618 = vunpack.c.l.b16 %v376
        %v619 = vunpack.c.h.b16 %v376
        %v620 = vunpack.c.l.b16 %v377
        %v621 = vunpack.c.h.b16 %v377
        %v622 = vunpack.c.l.b16 %v378
        %v623 = vunpack.c.h.b16 %v378
        %v624 = vunpack.c.l.b16 %v379
        %v625 = vunpack.c.h.b16 %v379
        %v626 = vunpack.c.l.b16 %v380
        %v627 = vunpack.c.h.b16 %v380
        %v628 = vunpack.c.l.b16 %v381
        %v629 = vunpack.c.h.b16 %v381
        %v630 = vunpack.c.l.b16 %v382
        %v631 = vunpack.c.h.b16 %v382
        %v632 = vunpack.c.l.b16 %v383
        %v633 = vunpack.c.h.b16 %v383
        %v634 = vunpack.c.l.b16 %v384
        %v635 = vunpack.c.h.b16 %v384
        %v636 = vunpack.c.l.b16 %v385
        %v637 = vunpack.c.h.b16 %v385
        %v638 = vunpack.c.l.b16 %v386
        %v639 = vunpack.c.h.b16 %v386
        %v640 = vunpack.c.l.b16 %v387
        %v641 = vunpack.c.h.b16 %v387
        %v642 = vunpack.c.l.b16 %v388
        %v643 = vunpack.c.h.b16 %v388
        %v644 = vunpack.c.l.b16 %v389
        %v645 = vunpack.c.h.b16 %v389
        %v646 = vunpack.c.l.b16 %v390
        %v647 = vunpack.c.h.b16 %v390
        %v648 = vunpack.c.l.b16 %v391
        %v649 = vunpack.c.h.b16 %v391
        %v650 = vunpack.c.l.b16 %v392
        %v651 = vunpack.c.h.b16 %v392
        %v652 = vunpack.c.l.b16 %v393
        %v653 = vunpack.c.h.b16 %v393
        %v654 = vunpack.c.l.b16 %v394
        %v655 = vunpack.c.h.b16 %v394
        %v656 = vunpack.c.l.b16 %v395
        %v657 = vunpack.c.h.b16 %v395
        %v658 = vunpack.c.l.b16 %v396
        %v659 = vunpack.c.h.b16 %v396
        %v660 = vunpack.c.l.b16 %v397
        %v661 = vunpack.c.h.b16 %v397
        %v662 = vunpack.c.l.b16 %v398
        %v663 = vunpack.c.h.b16 %v398
        %v664 = vunpack.c.l.b16 %v399
        %v665 = vunpack.c.h.b16 %v399
        %v666 = vunpack.c.l.b16 %v400
        %v667 = vunpack.c.h.b16 %v400
        %v668 = vunpack.c.l.b16 %v401
        %v669 = vunpack.c.h.b16 %v401
        %v670 = vunpack.c.l.b16 %v402
        %v671 = vunpack.c.h.b16 %v402
        %v672 = vunpack.c.l.b16 %v403
        %v673 = vunpack.c.h.b16 %v403
        %v674 = vunpack.c.l.b16 %v404
        %v675 = vunpack.c.h.b16 %v404
        %v676 = vunpack.c.l.b16 %v405
        %v677 = vunpack.c.h.b16 %v405
        %v678 = vpack.c.b16 %v554, %v550
        %v679 = vpack.c.b16 %v555, %v551
        %v680 = vpack.c.b16 %v556, %v552
        %v681 = vpack.c.b16 %v557, %v553
        %v682 = vpack.c.b16 %v562, %v558
        %v683 = vpack.c.b16 %v563, %v559
        %v684 = vpack.c.b16 %v564, %v560
        %v685 = vpack.c.b16 %v565, %v561
        %v686 = vpack.c.b16 %v570, %v566
        %v687 = vpack.c.b16 %v571, %v567
        %v688 = vpack.c.b16 %v572, %v568
        %v689 = vpack.c.b16 %v573, %v569
        %v690 = vpack.c.b16 %v578, %v574
        %v691 = vpack.c.b16 %v579, %v575
        %v692 = vpack.c.b16 %v580, %v576
        %v693 = vpack.c.b16 %v581, %v577
        %v694 = vpack.c.b16 %v586, %v582
        %v695 = vpack.c.b16 %v587, %v583
        %v696 = vpack.c.b16 %v588, %v584
        %v697 = vpack.c.b16 %v589, %v585
        %v698 = vpack.c.b16 %v594, %v590
        %v699 = vpack.c.b16 %v595, %v591
        %v700 = vpack.c.b16 %v596, %v592
        %v701 = vpack.c.b16 %v597, %v593
        %v702 = vpack.c.b16 %v602, %v598
        %v703 = vpack.c.b16 %v603, %v599
        %v704 = vpack.c.b16 %v604, %v600
        %v705 = vpack.c.b16 %v605, %v601
        %v706 = vpack.c.b16 %v610, %v606
        %v707 = vpack.c.b16 %v611, %v607
        %v708 = vpack.c.b16 %v612, %v608
        %v709 = vpack.c.b16 %v613, %v609
        %v710 = vpack.c.b16 %v618, %v614
        %v711 = vpack.c.b16 %v619, %v615
        %v712 = vpack.c.b16 %v620, %v616
        %v713 = vpack.c.b16 %v621, %v617
        %v714 = vpack.c.b16 %v626, %v622
        %v715 = vpack.c.b16 %v627, %v623
        %v716 = vpack.c.b16 %v628, %v624
        %v717 = vpack.c.b16 %v629, %v625
        %v718 = vpack.c.b16 %v634, %v630
        %v719 = vpack.c.b16 %v635, %v631
        %v720 = vpack.c.b16 %v636, %v632
        %v721 = vpack.c.b16 %v637, %v633
        %v722 = vpack.c.b16 %v642, %v638
        %v723 = vpack.c.b16 %v643, %v639
        %v724 = vpack.c.b16 %v644, %v640
        %v725 = vpack.c.b16 %v645, %v641
        %v726 = vpack.c.b16 %v650, %v646
        %v727 = vpack.c.b16 %v651, %v647
        %v728 = vpack.c.b16 %v652, %v648
        %v729 = vpack.c.b16 %v653, %v649
        %v730 = vpack.c.b16 %v658, %v654
        %v731 = vpack.c.b16 %v659, %v655
        %v732 = vpack.c.b16 %v660, %v656
        %v733 = vpack.c.b16 %v661, %v657
        %v734 = vpack.c.b16 %v666, %v662
        %v735 = vpack.c.b16 %v667, %v663
        %v736 = vpack.c.b16 %v668, %v664
        %v737 = vpack.c.b16 %v669, %v665
        %v738 = vpack.c.b16 %v674, %v670
        %v739 = vpack.c.b16 %v675, %v671
        %v740 = vpack.c.b16 %v676, %v672
        %v741 = vpack.c.b16 %v677, %v673
        %806 = vmatprep.subr.bf16.mxu0 %v707
        %807 = vmatpush1.bf16.msra.mxu0 %v706
        %808 = vmatprep.subr.bf16.mxu0 %v703
        %809 = vmatpush1.bf16.msra.mxu0 %v702
        %810 = vmatprep.subr.bf16.mxu0 %v699
        %811 = vmatpush1.bf16.msra.mxu0 %v698
        %812 = vmatprep.subr.bf16.mxu0 %v695
        %813 = vmatpush1.bf16.msra.mxu0 %v694
        %814 = vmatprep.subr.bf16.mxu0 %v691
        %815 = vmatpush1.bf16.msra.mxu0 %v690
        %816 = vmatprep.subr.bf16.mxu0 %v687
        %817 = vmatpush1.bf16.msra.mxu0 %v686
        %818 = vmatprep.subr.bf16.mxu0 %v683
        %819 = vmatpush1.bf16.msra.mxu0 %v682
        %820 = vmatprep.subr.bf16.mxu0 %v679
        %821 = vmatpush1.bf16.msra.mxu0 %v678
        %822 = vmatprep.subr.bf16.mxu0 %v739
        %823 = vmatpush2.bf16.msra.mxu0 %v738
        %824 = vmatprep.subr.bf16.mxu0 %v735
        %825 = vmatpush2.bf16.msra.mxu0 %v734
        %826 = vmatprep.subr.bf16.mxu0 %v731
        %827 = vmatpush2.bf16.msra.mxu0 %v730
        %828 = vmatprep.subr.bf16.mxu0 %v727
        %829 = vmatpush2.bf16.msra.mxu0 %v726
        %830 = vmatprep.subr.bf16.mxu0 %v723
        %831 = vmatpush2.bf16.msra.mxu0 %v722
        %832 = vmatprep.subr.bf16.mxu0 %v719
        %833 = vmatpush2.bf16.msra.mxu0 %v718
        %834 = vmatprep.subr.bf16.mxu0 %v715
        %835 = vmatpush2.bf16.msra.mxu0 %v714
        %836 = vmatprep.subr.bf16.mxu0 %v711
        %837 = vmatpush2.bf16.msra.mxu0 %v710
        %838 = vmatprep.mubr.bf16.mxu0 %v455
        %839 = vmatmul.mubr.bf16.gmra.mxu0 %v454
        %v840 = vpop.f32.mrf.mxu0
        %v841 = vadd.f32 0.0, %v840
        %v842 = vpop.f32.mrf.mxu0
        %v843 = vadd.f32 0.0, %v842
        %v844 = vpop.f32.mrf.mxu0
        %v845 = vadd.f32 0.0, %v844
        %v846 = vpop.f32.mrf.mxu0
        %v847 = vadd.f32 0.0, %v846
        %848 = vmatprep.mubr.bf16.mxu0 %v457
        %849 = vmatmul.mubr.bf16.gmra.mxu0 %v456
        %v850 = vpop.f32.mrf.mxu0
        %v851 = vadd.f32 0.0, %v850
        %v852 = vpop.f32.mrf.mxu0
        %v853 = vadd.f32 0.0, %v852
        %v854 = vpop.f32.mrf.mxu0
        %v855 = vadd.f32 0.0, %v854
        %v856 = vpop.f32.mrf.mxu0
        %v857 = vadd.f32 0.0, %v856
        %858 = vmatprep.mubr.bf16.mxu0 %v459
        %859 = vmatmul.mubr.bf16.gmra.mxu0 %v458
        %v860 = vpop.f32.mrf.mxu0
        %v861 = vadd.f32 0.0, %v860
        %v862 = vpop.f32.mrf.mxu0
        %v863 = vadd.f32 0.0, %v862
        %v864 = vpop.f32.mrf.mxu0
        %v865 = vadd.f32 0.0, %v864
        %v866 = vpop.f32.mrf.mxu0
        %v867 = vadd.f32 0.0, %v866
        %868 = vmatprep.mubr.bf16.mxu0 %v461
        %869 = vmatmul.mubr.bf16.gmra.mxu0 %v460
        %v870 = vpop.f32.mrf.mxu0
        %v871 = vadd.f32 0.0, %v870
        %v872 = vpop.f32.mrf.mxu0
        %v873 = vadd.f32 0.0, %v872
        %v874 = vpop.f32.mrf.mxu0
        %v875 = vadd.f32 0.0, %v874
        %v876 = vpop.f32.mrf.mxu0
        %v877 = vadd.f32 0.0, %v876
        %878 = vmatprep.mubr.bf16.mxu0 %v463
        %879 = vmatmul.mubr.bf16.gmra.mxu0 %v462
        %v880 = vpop.f32.mrf.mxu0
        %v881 = vadd.f32 0.0, %v880
        %v882 = vpop.f32.mrf.mxu0
        %v883 = vadd.f32 0.0, %v882
        %v884 = vpop.f32.mrf.mxu0
        %v885 = vadd.f32 0.0, %v884
        %v886 = vpop.f32.mrf.mxu0
        %v887 = vadd.f32 0.0, %v886
        %888 = vmatprep.mubr.bf16.mxu0 %v465
        %889 = vmatmul.mubr.bf16.gmra.mxu0 %v464
        %v890 = vpop.f32.mrf.mxu0
        %v891 = vadd.f32 0.0, %v890
        %v892 = vpop.f32.mrf.mxu0
        %v893 = vadd.f32 0.0, %v892
        %v894 = vpop.f32.mrf.mxu0
        %v895 = vadd.f32 0.0, %v894
        %v896 = vpop.f32.mrf.mxu0
        %v897 = vadd.f32 0.0, %v896
        %898 = vmatprep.mubr.bf16.mxu0 %v467
        %899 = vmatmul.mubr.bf16.gmra.mxu0 %v466
        %v900 = vpop.f32.mrf.mxu0
        %v901 = vadd.f32 0.0, %v900
        %v902 = vpop.f32.mrf.mxu0
        %v903 = vadd.f32 0.0, %v902
        %v904 = vpop.f32.mrf.mxu0
        %v905 = vadd.f32 0.0, %v904
        %v906 = vpop.f32.mrf.mxu0
        %v907 = vadd.f32 0.0, %v906
        %908 = vmatprep.mubr.bf16.mxu0 %v469
        %909 = vmatmul.mubr.bf16.gmra.mxu0 %v468
        %v910 = vpop.f32.mrf.mxu0
        %v911 = vadd.f32 0.0, %v910
        %v912 = vpop.f32.mrf.mxu0
        %v913 = vadd.f32 0.0, %v912
        %v914 = vpop.f32.mrf.mxu0
        %v915 = vadd.f32 0.0, %v914
        %v916 = vpop.f32.mrf.mxu0
        %v917 = vadd.f32 0.0, %v916
        %918 = vdwg.mxu0
        %919 = vmatprep.subr.bf16.mxu0 %v709
        %920 = vmatpush1.bf16.msra.mxu0 %v708
        %921 = vmatprep.subr.bf16.mxu0 %v705
        %922 = vmatpush1.bf16.msra.mxu0 %v704
        %923 = vmatprep.subr.bf16.mxu0 %v701
        %924 = vmatpush1.bf16.msra.mxu0 %v700
        %925 = vmatprep.subr.bf16.mxu0 %v697
        %926 = vmatpush1.bf16.msra.mxu0 %v696
        %927 = vmatprep.subr.bf16.mxu0 %v693
        %928 = vmatpush1.bf16.msra.mxu0 %v692
        %929 = vmatprep.subr.bf16.mxu0 %v689
        %930 = vmatpush1.bf16.msra.mxu0 %v688
        %931 = vmatprep.subr.bf16.mxu0 %v685
        %932 = vmatpush1.bf16.msra.mxu0 %v684
        %933 = vmatprep.subr.bf16.mxu0 %v681
        %934 = vmatpush1.bf16.msra.mxu0 %v680
        %935 = vmatprep.subr.bf16.mxu0 %v741
        %936 = vmatpush2.bf16.msra.mxu0 %v740
        %937 = vmatprep.subr.bf16.mxu0 %v737
        %938 = vmatpush2.bf16.msra.mxu0 %v736
        %939 = vmatprep.subr.bf16.mxu0 %v733
        %940 = vmatpush2.bf16.msra.mxu0 %v732
        %941 = vmatprep.subr.bf16.mxu0 %v729
        %942 = vmatpush2.bf16.msra.mxu0 %v728
        %943 = vmatprep.subr.bf16.mxu0 %v725
        %944 = vmatpush2.bf16.msra.mxu0 %v724
        %945 = vmatprep.subr.bf16.mxu0 %v721
        %946 = vmatpush2.bf16.msra.mxu0 %v720
        %947 = vmatprep.subr.bf16.mxu0 %v717
        %948 = vmatpush2.bf16.msra.mxu0 %v716
        %949 = vmatprep.subr.bf16.mxu0 %v713
        %950 = vmatpush2.bf16.msra.mxu0 %v712
        %951 = vmatprep.mubr.bf16.mxu0 %v455
        %952 = vmatmul.mubr.bf16.gmra.mxu0 %v454
        %v953 = vpop.f32.mrf.mxu0
        %v954 = vadd.f32 0.0, %v953
        %v955 = vpop.f32.mrf.mxu0
        %v956 = vadd.f32 0.0, %v955
        %v957 = vpop.f32.mrf.mxu0
        %v958 = vadd.f32 0.0, %v957
        %v959 = vpop.f32.mrf.mxu0
        %v960 = vadd.f32 0.0, %v959
        %961 = vmatprep.mubr.bf16.mxu0 %v457
        %962 = vmatmul.mubr.bf16.gmra.mxu0 %v456
        %v963 = vpop.f32.mrf.mxu0
        %v964 = vadd.f32 0.0, %v963
        %v965 = vpop.f32.mrf.mxu0
        %v966 = vadd.f32 0.0, %v965
        %v967 = vpop.f32.mrf.mxu0
        %v968 = vadd.f32 0.0, %v967
        %v969 = vpop.f32.mrf.mxu0
        %v970 = vadd.f32 0.0, %v969
        %971 = vmatprep.mubr.bf16.mxu0 %v459
        %972 = vmatmul.mubr.bf16.gmra.mxu0 %v458
        %v973 = vpop.f32.mrf.mxu0
        %v974 = vadd.f32 0.0, %v973
        %v975 = vpop.f32.mrf.mxu0
        %v976 = vadd.f32 0.0, %v975
        %v977 = vpop.f32.mrf.mxu0
        %v978 = vadd.f32 0.0, %v977
        %v979 = vpop.f32.mrf.mxu0
        %v980 = vadd.f32 0.0, %v979
        %981 = vmatprep.mubr.bf16.mxu0 %v461
        %982 = vmatmul.mubr.bf16.gmra.mxu0 %v460
        %v983 = vpop.f32.mrf.mxu0
        %v984 = vadd.f32 0.0, %v983
        %v985 = vpop.f32.mrf.mxu0
        %v986 = vadd.f32 0.0, %v985
        %v987 = vpop.f32.mrf.mxu0
        %v988 = vadd.f32 0.0, %v987
        %v989 = vpop.f32.mrf.mxu0
        %v990 = vadd.f32 0.0, %v989
        %991 = vmatprep.mubr.bf16.mxu0 %v463
        %992 = vmatmul.mubr.bf16.gmra.mxu0 %v462
        %v993 = vpop.f32.mrf.mxu0
        %v994 = vadd.f32 0.0, %v993
        %v995 = vpop.f32.mrf.mxu0
        %v996 = vadd.f32 0.0, %v995
        %v997 = vpop.f32.mrf.mxu0
        %v998 = vadd.f32 0.0, %v997
        %v999 = vpop.f32.mrf.mxu0
        %v1000 = vadd.f32 0.0, %v999
        %1001 = vmatprep.mubr.bf16.mxu0 %v465
        %1002 = vmatmul.mubr.bf16.gmra.mxu0 %v464
        %v1003 = vpop.f32.mrf.mxu0
        %v1004 = vadd.f32 0.0, %v1003
        %v1005 = vpop.f32.mrf.mxu0
        %v1006 = vadd.f32 0.0, %v1005
        %v1007 = vpop.f32.mrf.mxu0
        %v1008 = vadd.f32 0.0, %v1007
        %v1009 = vpop.f32.mrf.mxu0
        %v1010 = vadd.f32 0.0, %v1009
        %1011 = vmatprep.mubr.bf16.mxu0 %v467
        %1012 = vmatmul.mubr.bf16.gmra.mxu0 %v466
        %v1013 = vpop.f32.mrf.mxu0
        %v1014 = vadd.f32 0.0, %v1013
        %v1015 = vpop.f32.mrf.mxu0
        %v1016 = vadd.f32 0.0, %v1015
        %v1017 = vpop.f32.mrf.mxu0
        %v1018 = vadd.f32 0.0, %v1017
        %v1019 = vpop.f32.mrf.mxu0
        %v1020 = vadd.f32 0.0, %v1019
        %1021 = vmatprep.mubr.bf16.mxu0 %v469
        %1022 = vmatmul.mubr.bf16.gmra.mxu0 %v468
        %v1023 = vpop.f32.mrf.mxu0
        %v1024 = vadd.f32 0.0, %v1023
        %v1025 = vpop.f32.mrf.mxu0
        %v1026 = vadd.f32 0.0, %v1025
        %v1027 = vpop.f32.mrf.mxu0
        %v1028 = vadd.f32 0.0, %v1027
        %v1029 = vpop.f32.mrf.mxu0
        %v1030 = vadd.f32 0.0, %v1029
        %1031 = vdwg.mxu0
        %1032 = vst [vmem:[%s315] sm:$0xff] %v841
        %1033 = vst [vmem:[%s315 + $0x8] sm:$0xff] %v843
        %1034 = vst [vmem:[%s315 + $0x10] sm:$0xff] %v954
        %1035 = vst [vmem:[%s315 + $0x18] sm:$0xff] %v956
        %1036 = vst [vmem:[%s315 + $0x20] sm:$0xff] %v845
        %1037 = vst [vmem:[%s315 + $0x28] sm:$0xff] %v847
        %1038 = vst [vmem:[%s315 + $0x30] sm:$0xff] %v958
        %1039 = vst [vmem:[%s315 + $0x38] sm:$0xff] %v960
        %1040 = vst [vmem:[%s315 + $0x40] sm:$0xff] %v851
        %1041 = vst [vmem:[%s315 + $0x48] sm:$0xff] %v853
        %1042 = vst [vmem:[%s315 + $0x50] sm:$0xff] %v964
        %1043 = vst [vmem:[%s315 + $0x58] sm:$0xff] %v966
        %1044 = vst [vmem:[%s315 + $0x60] sm:$0xff] %v855
        %1045 = vst [vmem:[%s315 + $0x68] sm:$0xff] %v857
        %1046 = vst [vmem:[%s315 + $0x70] sm:$0xff] %v968
        %1047 = vst [vmem:[%s315 + $0x78] sm:$0xff] %v970
        %1048 = vst [vmem:[%s315 + $0x80] sm:$0xff] %v861
        %1049 = vst [vmem:[%s315 + $0x88] sm:$0xff] %v863
        %1050 = vst [vmem:[%s315 + $0x90] sm:$0xff] %v974
        %1051 = vst [vmem:[%s315 + $0x98] sm:$0xff] %v976
        %1052 = vst [vmem:[%s315 + $0xa0] sm:$0xff] %v865
        %1053 = vst [vmem:[%s315 + $0xa8] sm:$0xff] %v867
        %1054 = vst [vmem:[%s315 + $0xb0] sm:$0xff] %v978
        %1055 = vst [vmem:[%s315 + $0xb8] sm:$0xff] %v980
        %1056 = vst [vmem:[%s315 + $0xc0] sm:$0xff] %v871
        %1057 = vst [vmem:[%s315 + $0xc8] sm:$0xff] %v873
        %1058 = vst [vmem:[%s315 + $0xd0] sm:$0xff] %v984
        %1059 = vst [vmem:[%s315 + $0xd8] sm:$0xff] %v986
        %1060 = vst [vmem:[%s315 + $0xe0] sm:$0xff] %v875
        %1061 = vst [vmem:[%s315 + $0xe8] sm:$0xff] %v877
        %1062 = vst [vmem:[%s315 + $0xf0] sm:$0xff] %v988
        %1063 = vst [vmem:[%s315 + $0xf8] sm:$0xff] %v990
        %1064 = vst [vmem:[%s315 + $0x100] sm:$0xff] %v881
        %1065 = vst [vmem:[%s315 + $0x108] sm:$0xff] %v883
        %1066 = vst [vmem:[%s315 + $0x110] sm:$0xff] %v994
        %1067 = vst [vmem:[%s315 + $0x118] sm:$0xff] %v996
        %1068 = vst [vmem:[%s315 + $0x120] sm:$0xff] %v885
        %1069 = vst [vmem:[%s315 + $0x128] sm:$0xff] %v887
        %1070 = vst [vmem:[%s315 + $0x130] sm:$0xff] %v998
        %1071 = vst [vmem:[%s315 + $0x138] sm:$0xff] %v1000
        %1072 = vst [vmem:[%s315 + $0x140] sm:$0xff] %v891
        %1073 = vst [vmem:[%s315 + $0x148] sm:$0xff] %v893
        %1074 = vst [vmem:[%s315 + $0x150] sm:$0xff] %v1004
        %1075 = vst [vmem:[%s315 + $0x158] sm:$0xff] %v1006
        %1076 = vst [vmem:[%s315 + $0x160] sm:$0xff] %v895
        %1077 = vst [vmem:[%s315 + $0x168] sm:$0xff] %v897
        %1078 = vst [vmem:[%s315 + $0x170] sm:$0xff] %v1008
        %1079 = vst [vmem:[%s315 + $0x178] sm:$0xff] %v1010
        %1080 = vst [vmem:[%s315 + $0x180] sm:$0xff] %v901
        %1081 = vst [vmem:[%s315 + $0x188] sm:$0xff] %v903
        %1082 = vst [vmem:[%s315 + $0x190] sm:$0xff] %v1014
        %1083 = vst [vmem:[%s315 + $0x198] sm:$0xff] %v1016
        %1084 = vst [vmem:[%s315 + $0x1a0] sm:$0xff] %v905
        %1085 = vst [vmem:[%s315 + $0x1a8] sm:$0xff] %v907
        %1086 = vst [vmem:[%s315 + $0x1b0] sm:$0xff] %v1018
        %1087 = vst [vmem:[%s315 + $0x1b8] sm:$0xff] %v1020
        %1088 = vst [vmem:[%s315 + $0x1c0] sm:$0xff] %v911
        %1089 = vst [vmem:[%s315 + $0x1c8] sm:$0xff] %v913
        %1090 = vst [vmem:[%s315 + $0x1d0] sm:$0xff] %v1024
        %1091 = vst [vmem:[%s315 + $0x1d8] sm:$0xff] %v1026
        %1092 = vst [vmem:[%s315 + $0x1e0] sm:$0xff] %v915
        %1093 = vst [vmem:[%s315 + $0x1e8] sm:$0xff] %v917
        %1094 = vst [vmem:[%s315 + $0x1f0] sm:$0xff] %v1028
        %1095 = vst [vmem:[%s315 + $0x1f8] sm:$0xff] %v1030
        %s1096 = sand.u32 %s87, 1
        %s1097 = sand.u32 %s87, 1
        %s1098 = smul.addr %s1097, 512
        %s1099 = scalar_lea.vmem [#allocation3], %s1098
        // Predicated region
        $region52: #{generator_forward.8} parent=46 // pred_check
          %p1100 = pneg %p97
        $region53: #{generator_forward.8} parent=46 // pred_check_branch
          %1102 = sbr.rel (%p1100) target = $region55
        $region54: #{generator_forward.8} parent=46 // pred_region
          %s1103 = smul.u32 16, %s17
          %s1104 = smul.u32 4, %s18
          %s1105 = smul.addr %s1103, 16
          %s1106 = sadd.s32 %s1104, %s1105
          %s1107 = smul.addr %s1106, 8
          %s1108 = scalar_lea.vmem %s2, %s1107
          // Predicated region
          $region56: #{generator_forward.8} parent=54 // pred_check
            _
          $region57: #{generator_forward.8} parent=54 // pred_check_branch
            %1110 = sbr.rel (0) target = $region59
          $region58: #{generator_forward.8} parent=54 // pred_region
            // Predicated region
            $region60: #{generator_forward.8} parent=58 // pred_check
              _
            $region61: #{generator_forward.8} parent=58 // pred_check_branch
              %1112 = sbr.rel (0) target = $region63
            $region62: #{generator_forward.8} parent=58 // pred_region
              loop: start=0, step=1, limit=1
              $region64: #{generator_forward.8} parent=62 // loop_pre_header
                _
              $region65: #{generator_forward.8} parent=62 // loop_header
                %s1114 = sphi 0, %s1118
                %p1115 = scmp.ge.s32.totalorder %s1114, 1
                %s1119 = sphi %s1099, %s1099
                %s1120 = sphi %s1108, %s1108
              $region66: #{generator_forward.8} parent=62 // loop_header_branch
                %1117 = sbr.rel (%p1115) target = $region70
              $region67: #{generator_forward.8} parent=62 // loop_body
                %v1121 = vld [vmem:[%s1119] sm:$0xff]
                %1122 = vst [vmem:[%s1120] sm:$0xff] %v1121
                %v1123 = vld [vmem:[%s1119 + $0x8] sm:$0xff]
                %1124 = vst [vmem:[%s1120 + $0x8] sm:$0xff] %v1123
                %v1125 = vld [vmem:[%s1119 + $0x10] sm:$0xff]
                %1126 = vst [vmem:[%s1120 + $0x10] sm:$0xff] %v1125
                %v1127 = vld [vmem:[%s1119 + $0x18] sm:$0xff]
                %1128 = vst [vmem:[%s1120 + $0x18] sm:$0xff] %v1127
                %v1129 = vld [vmem:[%s1119 + $0x20] sm:$0xff]
                %1130 = vst [vmem:[%s1120 + $0x80] sm:$0xff] %v1129
                %v1131 = vld [vmem:[%s1119 + $0x28] sm:$0xff]
                %1132 = vst [vmem:[%s1120 + $0x88] sm:$0xff] %v1131
                %v1133 = vld [vmem:[%s1119 + $0x30] sm:$0xff]
                %1134 = vst [vmem:[%s1120 + $0x90] sm:$0xff] %v1133
                %v1135 = vld [vmem:[%s1119 + $0x38] sm:$0xff]
                %1136 = vst [vmem:[%s1120 + $0x98] sm:$0xff] %v1135
                %v1137 = vld [vmem:[%s1119 + $0x40] sm:$0xff]
                %1138 = vst [vmem:[%s1120 + $0x100] sm:$0xff] %v1137
                %v1139 = vld [vmem:[%s1119 + $0x48] sm:$0xff]
                %1140 = vst [vmem:[%s1120 + $0x108] sm:$0xff] %v1139
                %v1141 = vld [vmem:[%s1119 + $0x50] sm:$0xff]
                %1142 = vst [vmem:[%s1120 + $0x110] sm:$0xff] %v1141
                %v1143 = vld [vmem:[%s1119 + $0x58] sm:$0xff]
                %1144 = vst [vmem:[%s1120 + $0x118] sm:$0xff] %v1143
                %v1145 = vld [vmem:[%s1119 + $0x60] sm:$0xff]
                %1146 = vst [vmem:[%s1120 + $0x180] sm:$0xff] %v1145
                %v1147 = vld [vmem:[%s1119 + $0x68] sm:$0xff]
                %1148 = vst [vmem:[%s1120 + $0x188] sm:$0xff] %v1147
                %v1149 = vld [vmem:[%s1119 + $0x70] sm:$0xff]
                %1150 = vst [vmem:[%s1120 + $0x190] sm:$0xff] %v1149
                %v1151 = vld [vmem:[%s1119 + $0x78] sm:$0xff]
                %1152 = vst [vmem:[%s1120 + $0x198] sm:$0xff] %v1151
                %v1153 = vld [vmem:[%s1119 + $0x80] sm:$0xff]
                %1154 = vst [vmem:[%s1120 + $0x200] sm:$0xff] %v1153
                %v1155 = vld [vmem:[%s1119 + $0x88] sm:$0xff]
                %1156 = vst [vmem:[%s1120 + $0x208] sm:$0xff] %v1155
                %v1157 = vld [vmem:[%s1119 + $0x90] sm:$0xff]
                %1158 = vst [vmem:[%s1120 + $0x210] sm:$0xff] %v1157
                %v1159 = vld [vmem:[%s1119 + $0x98] sm:$0xff]
                %1160 = vst [vmem:[%s1120 + $0x218] sm:$0xff] %v1159
                %v1161 = vld [vmem:[%s1119 + $0xa0] sm:$0xff]
                %1162 = vst [vmem:[%s1120 + $0x280] sm:$0xff] %v1161
                %v1163 = vld [vmem:[%s1119 + $0xa8] sm:$0xff]
                %1164 = vst [vmem:[%s1120 + $0x288] sm:$0xff] %v1163
                %v1165 = vld [vmem:[%s1119 + $0xb0] sm:$0xff]
                %1166 = vst [vmem:[%s1120 + $0x290] sm:$0xff] %v1165
                %v1167 = vld [vmem:[%s1119 + $0xb8] sm:$0xff]
                %1168 = vst [vmem:[%s1120 + $0x298] sm:$0xff] %v1167
                %v1169 = vld [vmem:[%s1119 + $0xc0] sm:$0xff]
                %1170 = vst [vmem:[%s1120 + $0x300] sm:$0xff] %v1169
                %v1171 = vld [vmem:[%s1119 + $0xc8] sm:$0xff]
                %1172 = vst [vmem:[%s1120 + $0x308] sm:$0xff] %v1171
                %v1173 = vld [vmem:[%s1119 + $0xd0] sm:$0xff]
                %1174 = vst [vmem:[%s1120 + $0x310] sm:$0xff] %v1173
                %v1175 = vld [vmem:[%s1119 + $0xd8] sm:$0xff]
                %1176 = vst [vmem:[%s1120 + $0x318] sm:$0xff] %v1175
                %v1177 = vld [vmem:[%s1119 + $0xe0] sm:$0xff]
                %1178 = vst [vmem:[%s1120 + $0x380] sm:$0xff] %v1177
                %v1179 = vld [vmem:[%s1119 + $0xe8] sm:$0xff]
                %1180 = vst [vmem:[%s1120 + $0x388] sm:$0xff] %v1179
                %v1181 = vld [vmem:[%s1119 + $0xf0] sm:$0xff]
                %1182 = vst [vmem:[%s1120 + $0x390] sm:$0xff] %v1181
                %v1183 = vld [vmem:[%s1119 + $0xf8] sm:$0xff]
                %1184 = vst [vmem:[%s1120 + $0x398] sm:$0xff] %v1183
                %v1185 = vld [vmem:[%s1119 + $0x100] sm:$0xff]
                %1186 = vst [vmem:[%s1120 + $0x400] sm:$0xff] %v1185
                %v1187 = vld [vmem:[%s1119 + $0x108] sm:$0xff]
                %1188 = vst [vmem:[%s1120 + $0x408] sm:$0xff] %v1187
                %v1189 = vld [vmem:[%s1119 + $0x110] sm:$0xff]
                %1190 = vst [vmem:[%s1120 + $0x410] sm:$0xff] %v1189
                %v1191 = vld [vmem:[%s1119 + $0x118] sm:$0xff]
                %1192 = vst [vmem:[%s1120 + $0x418] sm:$0xff] %v1191
                %v1193 = vld [vmem:[%s1119 + $0x120] sm:$0xff]
                %1194 = vst [vmem:[%s1120 + $0x480] sm:$0xff] %v1193
                %v1195 = vld [vmem:[%s1119 + $0x128] sm:$0xff]
                %1196 = vst [vmem:[%s1120 + $0x488] sm:$0xff] %v1195
                %v1197 = vld [vmem:[%s1119 + $0x130] sm:$0xff]
                %1198 = vst [vmem:[%s1120 + $0x490] sm:$0xff] %v1197
                %v1199 = vld [vmem:[%s1119 + $0x138] sm:$0xff]
                %1200 = vst [vmem:[%s1120 + $0x498] sm:$0xff] %v1199
                %v1201 = vld [vmem:[%s1119 + $0x140] sm:$0xff]
                %1202 = vst [vmem:[%s1120 + $0x500] sm:$0xff] %v1201
                %v1203 = vld [vmem:[%s1119 + $0x148] sm:$0xff]
                %1204 = vst [vmem:[%s1120 + $0x508] sm:$0xff] %v1203
                %v1205 = vld [vmem:[%s1119 + $0x150] sm:$0xff]
                %1206 = vst [vmem:[%s1120 + $0x510] sm:$0xff] %v1205
                %v1207 = vld [vmem:[%s1119 + $0x158] sm:$0xff]
                %1208 = vst [vmem:[%s1120 + $0x518] sm:$0xff] %v1207
                %v1209 = vld [vmem:[%s1119 + $0x160] sm:$0xff]
                %1210 = vst [vmem:[%s1120 + $0x580] sm:$0xff] %v1209
                %v1211 = vld [vmem:[%s1119 + $0x168] sm:$0xff]
                %1212 = vst [vmem:[%s1120 + $0x588] sm:$0xff] %v1211
                %v1213 = vld [vmem:[%s1119 + $0x170] sm:$0xff]
                %1214 = vst [vmem:[%s1120 + $0x590] sm:$0xff] %v1213
                %v1215 = vld [vmem:[%s1119 + $0x178] sm:$0xff]
                %1216 = vst [vmem:[%s1120 + $0x598] sm:$0xff] %v1215
                %v1217 = vld [vmem:[%s1119 + $0x180] sm:$0xff]
                %1218 = vst [vmem:[%s1120 + $0x600] sm:$0xff] %v1217
                %v1219 = vld [vmem:[%s1119 + $0x188] sm:$0xff]
                %1220 = vst [vmem:[%s1120 + $0x608] sm:$0xff] %v1219
                %v1221 = vld [vmem:[%s1119 + $0x190] sm:$0xff]
                %1222 = vst [vmem:[%s1120 + $0x610] sm:$0xff] %v1221
                %v1223 = vld [vmem:[%s1119 + $0x198] sm:$0xff]
                %1224 = vst [vmem:[%s1120 + $0x618] sm:$0xff] %v1223
                %v1225 = vld [vmem:[%s1119 + $0x1a0] sm:$0xff]
                %1226 = vst [vmem:[%s1120 + $0x680] sm:$0xff] %v1225
                %v1227 = vld [vmem:[%s1119 + $0x1a8] sm:$0xff]
                %1228 = vst [vmem:[%s1120 + $0x688] sm:$0xff] %v1227
                %v1229 = vld [vmem:[%s1119 + $0x1b0] sm:$0xff]
                %1230 = vst [vmem:[%s1120 + $0x690] sm:$0xff] %v1229
                %v1231 = vld [vmem:[%s1119 + $0x1b8] sm:$0xff]
                %1232 = vst [vmem:[%s1120 + $0x698] sm:$0xff] %v1231
                %v1233 = vld [vmem:[%s1119 + $0x1c0] sm:$0xff]
                %1234 = vst [vmem:[%s1120 + $0x700] sm:$0xff] %v1233
                %v1235 = vld [vmem:[%s1119 + $0x1c8] sm:$0xff]
                %1236 = vst [vmem:[%s1120 + $0x708] sm:$0xff] %v1235
                %v1237 = vld [vmem:[%s1119 + $0x1d0] sm:$0xff]
                %1238 = vst [vmem:[%s1120 + $0x710] sm:$0xff] %v1237
                %v1239 = vld [vmem:[%s1119 + $0x1d8] sm:$0xff]
                %1240 = vst [vmem:[%s1120 + $0x718] sm:$0xff] %v1239
                %v1241 = vld [vmem:[%s1119 + $0x1e0] sm:$0xff]
                %1242 = vst [vmem:[%s1120 + $0x780] sm:$0xff] %v1241
                %v1243 = vld [vmem:[%s1119 + $0x1e8] sm:$0xff]
                %1244 = vst [vmem:[%s1120 + $0x788] sm:$0xff] %v1243
                %v1245 = vld [vmem:[%s1119 + $0x1f0] sm:$0xff]
                %1246 = vst [vmem:[%s1120 + $0x790] sm:$0xff] %v1245
                %v1247 = vld [vmem:[%s1119 + $0x1f8] sm:$0xff]
                %1248 = vst [vmem:[%s1120 + $0x798] sm:$0xff] %v1247
              $region68: #{generator_forward.8} parent=62 // loop_footer
                %s1118 = sadd.s32 1, %s1114
              $region69: #{generator_forward.8} parent=62 // loop_footer_branch
                %1113 = sbr.rel target = $region65
              $region70: #{generator_forward.8} parent=62 // loop_exit
                _
            $region63: #{generator_forward.8} parent=58 // pred_fallthru
              _
            // Predicated region
            $region71: #{generator_forward.8} parent=58 // pred_check
              _
            $region72: #{generator_forward.8} parent=58 // pred_check_branch
              %1250 = sbr.rel target = $region74
            $region73: #{generator_forward.8} parent=58 // pred_region
              _
            $region74: #{generator_forward.8} parent=58 // pred_fallthru
              _
          $region59: #{generator_forward.8} parent=54 // pred_fallthru
            _
          %1251 = vnop
        $region55: #{generator_forward.8} parent=46 // pred_fallthru
          _
      $region47: #{generator_forward.8} parent=5 // pred_fallthru
        _
      %p1252 = scmp.le.s32.totalorder 2, %s8
      // Predicated region
      $region75: #{generator_forward.8} parent=5 // pred_check
        %p1253 = pneg %p1252
      $region76: #{generator_forward.8} parent=5 // pred_check_branch
        %1255 = sbr.rel (%p1253) target = $region78
      $region77: #{generator_forward.8} parent=5 // pred_region
        %s1256 = ssub.s32 %s8, 2
        // Predicated region
        $region79: #{generator_forward.8} parent=77 // pred_check
          %p1257 = pneg %p103
        $region80: #{generator_forward.8} parent=77 // pred_check_branch
          %1259 = sbr.rel (%p1257) target = $region82
        $region81: #{generator_forward.8} parent=77 // pred_region
          %s1260 = sand.u32 %s88, 1
          %s1261 = sand.u32 %s88, 1
          %s1262 = smul.addr %s1261, 512
          %s1263 = scalar_lea.vmem [#allocation3], %s1262
        $region82: #{generator_forward.8} parent=77 // pred_fallthru
          _
      $region78: #{generator_forward.8} parent=5 // pred_fallthru
        _
    $region6: #{generator_forward.8} parent=1 // loop_footer
      %s12 = sadd.s32 1, %s8
    $region7: #{generator_forward.8} parent=1 // loop_footer_branch
      %7 = sbr.rel target = $region3
    $region8: #{generator_forward.8} parent=1 // loop_exit
      _

// kernel: generator_forward.9
$region0: #{generator_forward.9}
  #allocation0 [shape = 'u32[]', space=smem, size = 0x4, offset = 0x4, fixed_abs, tag = 'smem constant byte address 0x4 - core index']
  #allocation1 [shape = 'u32[144,128]{1,0:T(1,128)}', space=vmem, size = 0x12000, scoped, tag = 'internal scratch']
  %s0 = inlined_call_operand.vmem [shape: bf16[512,128], index: 0, kind: input, shape index: {}]
  %s1 = inlined_call_operand.vmem [shape: bf16[128,1024], index: 1, kind: input, shape index: {}]
  %s2 = inlined_call_operand.vmem [shape: f32[512,1024], index: 2, kind: output, shape index: {}]
  %s3 = sld [smem:[#allocation0]]
  $region83: #{generator_forward.9} parent=0
    _
  %s5 = ssub.s32 1, %s3
  %s6 = scalar_select 0, %s5, %s3
  $region1: #{generator_forward.9} parent=0
    #allocation2 [shape = 'u8[262144]{0}', space=vmem, size = 0x40000, scoped, tag = 'input window, operand 1']
    #allocation3 [shape = 'u8[2097152]{0}', space=vmem, size = 0x200000, scoped, tag = 'output window, operand 0']
    loop: start=0, step=1, limit=4
    $region2: #{generator_forward.9} parent=1 // loop_pre_header
      _
    $region3: #{generator_forward.9} parent=1 // loop_header
      %s8 = sphi 0, %s12
      %p9 = scmp.ge.s32.totalorder %s8, 4
      %s15 = sphi 0, %s27
      %s16 = sphi 0, %s23
      %s17 = sphi 0, %s15
      %s18 = sphi 0, %s16
      %s19 = sphi 0, %s17
      %s20 = sphi 0, %s18
      %s30 = sphi 0, %s32
      %s33 = sphi 0, %s30
      %s34 = sphi 0, %s33
      %s50 = sphi 0, %s34
      %s56 = sphi 0, %s58
      %s59 = sphi 0, %s56
      %s60 = sphi 0, %s59
      %s76 = sphi 0, %s60
      %s84 = sphi 0, %s86
      %s87 = sphi 0, %s84
      %s88 = sphi 0, %s87
      %s104 = sphi 0, %s88
    $region4: #{generator_forward.9} parent=1 // loop_header_branch
      %11 = sbr.rel (%p9) target = $region8
    $region5: #{generator_forward.9} parent=1 // loop_body
      %s13 = ssub.s32 %s8, 1
      %s14 = ssub.s32 %s8, 2
      %s21 = sadd.s32 1, %s16
      %p22 = scmp.ge.s32.totalorder %s21, 2
      %s23 = scalar_select %p22, 0, %s21
      %s24 = sadd.s32 1, %s15
      %s25 = scalar_select %p22, %s24, %s15
      %p26 = scmp.ge.s32.totalorder %s25, 1
      %s27 = scalar_select %p26, 0, %s25
      %s28 = ssub.s32 %s15, %s27
      %p29 = scmp.eq.s32.totalorder %s28, 0
      %s31 = sadd.s32 %s30, 1
      %s32 = scalar_select %p29, %s30, %s31
      %p35 = pneg %p29
      %p36 = scmp.eq.s32.totalorder %s8, 1
      %p37 = por %p35, %p36
      %p38 = scmp.ne.s32.totalorder %s30, %s33
      %p39 = scmp.eq.s32.totalorder %s8, 0
      %p40 = por %p38, %p39
      %p41 = scmp.ne.s32.totalorder %s30, %s33
      %p42 = scmp.eq.s32.totalorder %s13, 1
      %p43 = por %p41, %p42
      %p44 = scmp.ne.s32.totalorder %s33, %s34
      %p45 = scmp.eq.s32.totalorder %s13, 0
      %p46 = por %p44, %p45
      %p47 = scmp.ne.s32.totalorder %s33, %s34
      %p48 = scmp.eq.s32.totalorder %s14, 1
      %p49 = por %p47, %p48
      %p51 = scmp.ne.s32.totalorder %s34, %s50
      %p52 = scmp.eq.s32.totalorder %s14, 0
      %p53 = por %p51, %p52
      %s54 = ssub.s32 %s16, %s23
      %p55 = scmp.eq.s32.totalorder %s54, 0
      %s57 = sadd.s32 %s56, 1
      %s58 = scalar_select %p55, %s56, %s57
      %p61 = pneg %p55
      %p62 = scmp.eq.s32.totalorder %s8, 1
      %p63 = por %p61, %p62
      %p64 = scmp.ne.s32.totalorder %s56, %s59
      %p65 = scmp.eq.s32.totalorder %s8, 0
      %p66 = por %p64, %p65
      %p67 = scmp.ne.s32.totalorder %s56, %s59
      %p68 = scmp.eq.s32.totalorder %s13, 1
      %p69 = por %p67, %p68
      %p70 = scmp.ne.s32.totalorder %s59, %s60
      %p71 = scmp.eq.s32.totalorder %s13, 0
      %p72 = por %p70, %p71
      %p73 = scmp.ne.s32.totalorder %s59, %s60
      %p74 = scmp.eq.s32.totalorder %s14, 1
      %p75 = por %p73, %p74
      %p77 = scmp.ne.s32.totalorder %s60, %s76
      %p78 = scmp.eq.s32.totalorder %s14, 0
      %p79 = por %p77, %p78
      %s80 = ssub.s32 %s15, %s27
      %s81 = ssub.s32 %s16, %s23
      %s82 = sor.u32 %s80, %s81
      %p83 = scmp.eq.s32.totalorder %s82, 0
      %s85 = sadd.s32 %s84, 1
      %s86 = scalar_select %p83, %s84, %s85
      %p89 = pneg %p83
      %p90 = scmp.eq.s32.totalorder %s8, 1
      %p91 = por %p89, %p90
      %p92 = scmp.ne.s32.totalorder %s84, %s87
      %p93 = scmp.eq.s32.totalorder %s8, 0
      %p94 = por %p92, %p93
      %p95 = scmp.ne.s32.totalorder %s84, %s87
      %p96 = scmp.eq.s32.totalorder %s13, 1
      %p97 = por %p95, %p96
      %p98 = scmp.ne.s32.totalorder %s87, %s88
      %p99 = scmp.eq.s32.totalorder %s13, 0
      %p100 = por %p98, %p99
      %p101 = scmp.ne.s32.totalorder %s87, %s88
      %p102 = scmp.eq.s32.totalorder %s14, 1
      %p103 = por %p101, %p102
      %p105 = scmp.ne.s32.totalorder %s88, %s104
      %p106 = scmp.eq.s32.totalorder %s14, 0
      %p107 = por %p105, %p106
      %p108 = scmp.le.s32.totalorder 1, %s8
      %p109 = scmp.lt.s32.totalorder %s8, 3
      %p110 = pnand %p108, %p109
      %p111 = pneg %p110
      // Predicated region
      $region9: #{generator_forward.9} parent=5 // pred_check
        _
      $region10: #{generator_forward.9} parent=5 // pred_check_branch
        %113 = sbr.rel (%p110) target = $region12
      $region11: #{generator_forward.9} parent=5 // pred_region
        %s114 = ssub.s32 %s8, 1
        // Predicated region
        $region13: #{generator_forward.9} parent=11 // pred_check
          %p115 = pneg %p46
        $region14: #{generator_forward.9} parent=11 // pred_check_branch
          %117 = sbr.rel (%p115) target = $region16
        $region15: #{generator_forward.9} parent=11 // pred_region
          %s118 = smul.u32 64, %s17
          %p119 = scmp.lt.s32.totalorder %s118, 63
          %s120 = scalar_select %p119, %s118, 63
          %s121 = smul.addr %s120, 4
          %s122 = scalar_lea.vmem %s0, %s121
          %s123 = smul.u32 64, %s17
        $region16: #{generator_forward.9} parent=11 // pred_fallthru
          _
      $region12: #{generator_forward.9} parent=5 // pred_fallthru
        _
      %p124 = scmp.lt.s32.totalorder %s8, 2
      // Predicated region
      $region17: #{generator_forward.9} parent=5 // pred_check
        %p125 = pneg %p124
      $region18: #{generator_forward.9} parent=5 // pred_check_branch
        %127 = sbr.rel (%p125) target = $region20
      $region19: #{generator_forward.9} parent=5 // pred_region
        // Predicated region
        $region21: #{generator_forward.9} parent=19 // pred_check
          %p128 = pneg %p66
        $region22: #{generator_forward.9} parent=19 // pred_check_branch
          %130 = sbr.rel (%p128) target = $region24
        $region23: #{generator_forward.9} parent=19 // pred_region
          %s131 = sand.u32 %s56, 1
          %s132 = sand.u32 %s56, 1
          %s133 = smul.addr %s132, 256
          %s134 = scalar_lea.vmem [#allocation2], %s133
          %s135 = smul.u32 4, %s16
          %s136 = smul.addr %s135, 4
          %s137 = scalar_lea.vmem %s1, %s136
          // Predicated region
          $region25: #{generator_forward.9} parent=23 // pred_check
            _
          $region26: #{generator_forward.9} parent=23 // pred_check_branch
            %139 = sbr.rel (0) target = $region28
          $region27: #{generator_forward.9} parent=23 // pred_region
            // Predicated region
            $region29: #{generator_forward.9} parent=27 // pred_check
              _
            $region30: #{generator_forward.9} parent=27 // pred_check_branch
              %141 = sbr.rel (0) target = $region32
            $region31: #{generator_forward.9} parent=27 // pred_region
              loop: start=0, step=1, limit=1
              $region33: #{generator_forward.9} parent=31 // loop_pre_header
                _
              $region34: #{generator_forward.9} parent=31 // loop_header
                %s143 = sphi 0, %s147
                %p144 = scmp.ge.s32.totalorder %s143, 1
                %s148 = sphi %s137, %s137
                %s149 = sphi %s134, %s134
              $region35: #{generator_forward.9} parent=31 // loop_header_branch
                %146 = sbr.rel (%p144) target = $region39
              $region36: #{generator_forward.9} parent=31 // loop_body
                %v150 = vld [vmem:[%s148] sm:$0xff]
                %151 = vst [vmem:[%s149] sm:$0xff] %v150
                %v152 = vld [vmem:[%s148 + $0x8] sm:$0xff]
                %153 = vst [vmem:[%s149 + $0x8] sm:$0xff] %v152
                %v154 = vld [vmem:[%s148 + $0x20] sm:$0xff]
                %155 = vst [vmem:[%s149 + $0x10] sm:$0xff] %v154
                %v156 = vld [vmem:[%s148 + $0x28] sm:$0xff]
                %157 = vst [vmem:[%s149 + $0x18] sm:$0xff] %v156
                %v158 = vld [vmem:[%s148 + $0x40] sm:$0xff]
                %159 = vst [vmem:[%s149 + $0x20] sm:$0xff] %v158
                %v160 = vld [vmem:[%s148 + $0x48] sm:$0xff]
                %161 = vst [vmem:[%s149 + $0x28] sm:$0xff] %v160
                %v162 = vld [vmem:[%s148 + $0x60] sm:$0xff]
                %163 = vst [vmem:[%s149 + $0x30] sm:$0xff] %v162
                %v164 = vld [vmem:[%s148 + $0x68] sm:$0xff]
                %165 = vst [vmem:[%s149 + $0x38] sm:$0xff] %v164
                %v166 = vld [vmem:[%s148 + $0x80] sm:$0xff]
                %167 = vst [vmem:[%s149 + $0x40] sm:$0xff] %v166
                %v168 = vld [vmem:[%s148 + $0x88] sm:$0xff]
                %169 = vst [vmem:[%s149 + $0x48] sm:$0xff] %v168
                %v170 = vld [vmem:[%s148 + $0xa0] sm:$0xff]
                %171 = vst [vmem:[%s149 + $0x50] sm:$0xff] %v170
                %v172 = vld [vmem:[%s148 + $0xa8] sm:$0xff]
                %173 = vst [vmem:[%s149 + $0x58] sm:$0xff] %v172
                %v174 = vld [vmem:[%s148 + $0xc0] sm:$0xff]
                %175 = vst [vmem:[%s149 + $0x60] sm:$0xff] %v174
                %v176 = vld [vmem:[%s148 + $0xc8] sm:$0xff]
                %177 = vst [vmem:[%s149 + $0x68] sm:$0xff] %v176
                %v178 = vld [vmem:[%s148 + $0xe0] sm:$0xff]
                %179 = vst [vmem:[%s149 + $0x70] sm:$0xff] %v178
                %v180 = vld [vmem:[%s148 + $0xe8] sm:$0xff]
                %181 = vst [vmem:[%s149 + $0x78] sm:$0xff] %v180
                %v182 = vld [vmem:[%s148 + $0x100] sm:$0xff]
                %183 = vst [vmem:[%s149 + $0x80] sm:$0xff] %v182
                %v184 = vld [vmem:[%s148 + $0x108] sm:$0xff]
                %185 = vst [vmem:[%s149 + $0x88] sm:$0xff] %v184
                %v186 = vld [vmem:[%s148 + $0x120] sm:$0xff]
                %187 = vst [vmem:[%s149 + $0x90] sm:$0xff] %v186
                %v188 = vld [vmem:[%s148 + $0x128] sm:$0xff]
                %189 = vst [vmem:[%s149 + $0x98] sm:$0xff] %v188
                %v190 = vld [vmem:[%s148 + $0x140] sm:$0xff]
                %191 = vst [vmem:[%s149 + $0xa0] sm:$0xff] %v190
                %v192 = vld [vmem:[%s148 + $0x148] sm:$0xff]
                %193 = vst [vmem:[%s149 + $0xa8] sm:$0xff] %v192
                %v194 = vld [vmem:[%s148 + $0x160] sm:$0xff]
                %195 = vst [vmem:[%s149 + $0xb0] sm:$0xff] %v194
                %v196 = vld [vmem:[%s148 + $0x168] sm:$0xff]
                %197 = vst [vmem:[%s149 + $0xb8] sm:$0xff] %v196
                %v198 = vld [vmem:[%s148 + $0x180] sm:$0xff]
                %199 = vst [vmem:[%s149 + $0xc0] sm:$0xff] %v198
                %v200 = vld [vmem:[%s148 + $0x188] sm:$0xff]
                %201 = vst [vmem:[%s149 + $0xc8] sm:$0xff] %v200
                %v202 = vld [vmem:[%s148 + $0x1a0] sm:$0xff]
                %203 = vst [vmem:[%s149 + $0xd0] sm:$0xff] %v202
                %v204 = vld [vmem:[%s148 + $0x1a8] sm:$0xff]
                %205 = vst [vmem:[%s149 + $0xd8] sm:$0xff] %v204
                %v206 = vld [vmem:[%s148 + $0x1c0] sm:$0xff]
                %207 = vst [vmem:[%s149 + $0xe0] sm:$0xff] %v206
                %v208 = vld [vmem:[%s148 + $0x1c8] sm:$0xff]
                %209 = vst [vmem:[%s149 + $0xe8] sm:$0xff] %v208
                %v210 = vld [vmem:[%s148 + $0x1e0] sm:$0xff]
                %211 = vst [vmem:[%s149 + $0xf0] sm:$0xff] %v210
                %v212 = vld [vmem:[%s148 + $0x1e8] sm:$0xff]
                %213 = vst [vmem:[%s149 + $0xf8] sm:$0xff] %v212
              $region37: #{generator_forward.9} parent=31 // loop_footer
                %s147 = sadd.s32 1, %s143
              $region38: #{generator_forward.9} parent=31 // loop_footer_branch
                %142 = sbr.rel target = $region34
              $region39: #{generator_forward.9} parent=31 // loop_exit
                _
            $region32: #{generator_forward.9} parent=27 // pred_fallthru
              _
            // Predicated region
            $region40: #{generator_forward.9} parent=27 // pred_check
              _
            $region41: #{generator_forward.9} parent=27 // pred_check_branch
              %215 = sbr.rel target = $region43
            $region42: #{generator_forward.9} parent=27 // pred_region
              _
            $region43: #{generator_forward.9} parent=27 // pred_fallthru
              _
          $region28: #{generator_forward.9} parent=23 // pred_fallthru
            _
          %216 = vnop
        $region24: #{generator_forward.9} parent=19 // pred_fallthru
          _
      $region20: #{generator_forward.9} parent=5 // pred_fallthru
        _
      %p217 = scmp.le.s32.totalorder 1, %s8
      %p218 = scmp.lt.s32.totalorder %s8, 3
      %p219 = pnand %p217, %p218
      %p220 = pneg %p219
      // Predicated region
      $region44: #{generator_forward.9} parent=5 // pred_check
        _
      $region45: #{generator_forward.9} parent=5 // pred_check_branch
        %222 = sbr.rel (%p219) target = $region47
      $region46: #{generator_forward.9} parent=5 // pred_region
        %s223 = ssub.s32 %s8, 1
        %s224 = sand.u32 %s59, 1
        %s225 = sand.u32 %s59, 1
        %s226 = smul.addr %s225, 256
        %s227 = scalar_lea.vmem [#allocation2], %s226
        // Predicated region
        $region48: #{generator_forward.9} parent=46 // pred_check
          %p228 = pneg %p72
        $region49: #{generator_forward.9} parent=46 // pred_check_branch
          %230 = sbr.rel (%p228) target = $region51
        $region50: #{generator_forward.9} parent=46 // pred_region
          _
        $region51: #{generator_forward.9} parent=46 // pred_fallthru
          _
        %s231 = smul.u32 64, %s17
        %p232 = scmp.lt.s32.totalorder %s231, 63
        %s233 = scalar_select %p232, %s231, 63
        %s234 = smul.addr %s233, 4
        %s235 = scalar_lea.vmem %s0, %s234
        %p236 = pneg %p46
        %p237 = pneg %p43
        %s238 = sand.u32 %s59, 1
        %s239 = sand.u32 %s59, 1
        %s240 = smul.addr %s239, 256
        %s241 = scalar_lea.vmem [#allocation2], %s240
        %p242 = pneg %p72
        %p243 = pneg %p69
        %p244 = pneg %p100
        %p245 = pneg %p97
        %s246 = sand.u32 %s87, 1
        %s247 = sand.u32 %s87, 1
        %s248 = smul.addr %s247, 2048
        %s249 = scalar_lea.vmem [#allocation3], %s248
        %s250 = smul.u32 64, %s17
        %p251 = scmp.lt.s32.totalorder %s250, 63
        %s252 = scalar_select %p251, %s250, 63
        %s253 = smul.addr %s252, 4
        %s254 = scalar_lea.vmem %s0, %s253
        %s255 = smul.u32 64, %s17
        %s256 = smul.u32 4, %s18
        %s257 = smul.u32 64, %s17
        %s258 = smul.u32 4, %s18
        %v260 = vld [vmem:[%s254] sm:$0xf]
        %v261 = vld [vmem:[%s254 + $0x4] sm:$0xf]
        %v262 = vld [vmem:[%s254 + $0x8] sm:$0xf]
        %v263 = vld [vmem:[%s254 + $0xc] sm:$0xf]
        %v264 = vld [vmem:[%s254 + $0x10] sm:$0xf]
        %v265 = vld [vmem:[%s254 + $0x14] sm:$0xf]
        %v266 = vld [vmem:[%s254 + $0x18] sm:$0xf]
        %v267 = vld [vmem:[%s254 + $0x1c] sm:$0xf]
        %v268 = vld [vmem:[%s254 + $0x20] sm:$0xf]
        %v269 = vld [vmem:[%s254 + $0x24] sm:$0xf]
        %v270 = vld [vmem:[%s254 + $0x28] sm:$0xf]
        %v271 = vld [vmem:[%s254 + $0x2c] sm:$0xf]
        %v272 = vld [vmem:[%s254 + $0x30] sm:$0xf]
        %v273 = vld [vmem:[%s254 + $0x34] sm:$0xf]
        %v274 = vld [vmem:[%s254 + $0x38] sm:$0xf]
        %v275 = vld [vmem:[%s254 + $0x3c] sm:$0xf]
        %v276 = vld [vmem:[%s254 + $0x40] sm:$0xf]
        %v277 = vld [vmem:[%s254 + $0x44] sm:$0xf]
        %v278 = vld [vmem:[%s254 + $0x48] sm:$0xf]
        %v279 = vld [vmem:[%s254 + $0x4c] sm:$0xf]
        %v280 = vld [vmem:[%s254 + $0x50] sm:$0xf]
        %v281 = vld [vmem:[%s254 + $0x54] sm:$0xf]
        %v282 = vld [vmem:[%s254 + $0x58] sm:$0xf]
        %v283 = vld [vmem:[%s254 + $0x5c] sm:$0xf]
        %v284 = vld [vmem:[%s254 + $0x60] sm:$0xf]
        %v285 = vld [vmem:[%s254 + $0x64] sm:$0xf]
        %v286 = vld [vmem:[%s254 + $0x68] sm:$0xf]
        %v287 = vld [vmem:[%s254 + $0x6c] sm:$0xf]
        %v288 = vld [vmem:[%s254 + $0x70] sm:$0xf]
        %v289 = vld [vmem:[%s254 + $0x74] sm:$0xf]
        %v290 = vld [vmem:[%s254 + $0x78] sm:$0xf]
        %v291 = vld [vmem:[%s254 + $0x7c] sm:$0xf]
        %v292 = vld [vmem:[%s254 + $0x80] sm:$0xf]
        %v293 = vld [vmem:[%s254 + $0x84] sm:$0xf]
        %v294 = vld [vmem:[%s254 + $0x88] sm:$0xf]
        %v295 = vld [vmem:[%s254 + $0x8c] sm:$0xf]
        %v296 = vld [vmem:[%s254 + $0x90] sm:$0xf]
        %v297 = vld [vmem:[%s254 + $0x94] sm:$0xf]
        %v298 = vld [vmem:[%s254 + $0x98] sm:$0xf]
        %v299 = vld [vmem:[%s254 + $0x9c] sm:$0xf]
        %v300 = vld [vmem:[%s254 + $0xa0] sm:$0xf]
        %v301 = vld [vmem:[%s254 + $0xa4] sm:$0xf]
        %v302 = vld [vmem:[%s254 + $0xa8] sm:$0xf]
        %v303 = vld [vmem:[%s254 + $0xac] sm:$0xf]
        %v304 = vld [vmem:[%s254 + $0xb0] sm:$0xf]
        %v305 = vld [vmem:[%s254 + $0xb4] sm:$0xf]
        %v306 = vld [vmem:[%s254 + $0xb8] sm:$0xf]
        %v307 = vld [vmem:[%s254 + $0xbc] sm:$0xf]
        %v308 = vld [vmem:[%s254 + $0xc0] sm:$0xf]
        %v309 = vld [vmem:[%s254 + $0xc4] sm:$0xf]
        %v310 = vld [vmem:[%s254 + $0xc8] sm:$0xf]
        %v311 = vld [vmem:[%s254 + $0xcc] sm:$0xf]
        %v312 = vld [vmem:[%s254 + $0xd0] sm:$0xf]
        %v313 = vld [vmem:[%s254 + $0xd4] sm:$0xf]
        %v314 = vld [vmem:[%s254 + $0xd8] sm:$0xf]
        %v315 = vld [vmem:[%s254 + $0xdc] sm:$0xf]
        %v316 = vld [vmem:[%s254 + $0xe0] sm:$0xf]
        %v317 = vld [vmem:[%s254 + $0xe4] sm:$0xf]
        %v318 = vld [vmem:[%s254 + $0xe8] sm:$0xf]
        %v319 = vld [vmem:[%s254 + $0xec] sm:$0xf]
        %v320 = vld [vmem:[%s254 + $0xf0] sm:$0xf]
        %v321 = vld [vmem:[%s254 + $0xf4] sm:$0xf]
        %v322 = vld [vmem:[%s254 + $0xf8] sm:$0xf]
        %v323 = vld [vmem:[%s254 + $0xfc] sm:$0xf]
        %v324 = vld [vmem:[%s227] sm:$0xff]
        %v325 = vld [vmem:[%s227 + $0x8] sm:$0xff]
        %v326 = vld [vmem:[%s227 + $0x10] sm:$0xff]
        %v327 = vld [vmem:[%s227 + $0x18] sm:$0xff]
        %v328 = vld [vmem:[%s227 + $0x20] sm:$0xff]
        %v329 = vld [vmem:[%s227 + $0x28] sm:$0xff]
        %v330 = vld [vmem:[%s227 + $0x30] sm:$0xff]
        %v331 = vld [vmem:[%s227 + $0x38] sm:$0xff]
        %v332 = vld [vmem:[%s227 + $0x40] sm:$0xff]
        %v333 = vld [vmem:[%s227 + $0x48] sm:$0xff]
        %v334 = vld [vmem:[%s227 + $0x50] sm:$0xff]
        %v335 = vld [vmem:[%s227 + $0x58] sm:$0xff]
        %v336 = vld [vmem:[%s227 + $0x60] sm:$0xff]
        %v337 = vld [vmem:[%s227 + $0x68] sm:$0xff]
        %v338 = vld [vmem:[%s227 + $0x70] sm:$0xff]
        %v339 = vld [vmem:[%s227 + $0x78] sm:$0xff]
        %v340 = vld [vmem:[%s227 + $0x80] sm:$0xff]
        %v341 = vld [vmem:[%s227 + $0x88] sm:$0xff]
        %v342 = vld [vmem:[%s227 + $0x90] sm:$0xff]
        %v343 = vld [vmem:[%s227 + $0x98] sm:$0xff]
        %v344 = vld [vmem:[%s227 + $0xa0] sm:$0xff]
        %v345 = vld [vmem:[%s227 + $0xa8] sm:$0xff]
        %v346 = vld [vmem:[%s227 + $0xb0] sm:$0xff]
        %v347 = vld [vmem:[%s227 + $0xb8] sm:$0xff]
        %v348 = vld [vmem:[%s227 + $0xc0] sm:$0xff]
        %v349 = vld [vmem:[%s227 + $0xc8] sm:$0xff]
        %v350 = vld [vmem:[%s227 + $0xd0] sm:$0xff]
        %v351 = vld [vmem:[%s227 + $0xd8] sm:$0xff]
        %v352 = vld [vmem:[%s227 + $0xe0] sm:$0xff]
        %v353 = vld [vmem:[%s227 + $0xe8] sm:$0xff]
        %v354 = vld [vmem:[%s227 + $0xf0] sm:$0xff]
        %v355 = vld [vmem:[%s227 + $0xf8] sm:$0xff]
        %v420 = vunpack.c.l.b16 %v260
        %v421 = vunpack.c.l.b16 %v261
        %v422 = vunpack.c.l.b16 %v262
        %v423 = vunpack.c.l.b16 %v263
        %v424 = vunpack.c.l.b16 %v264
        %v425 = vunpack.c.l.b16 %v265
        %v426 = vunpack.c.l.b16 %v266
        %v427 = vunpack.c.l.b16 %v267
        %v428 = vunpack.c.l.b16 %v268
        %v429 = vunpack.c.l.b16 %v269
        %v430 = vunpack.c.l.b16 %v270
        %v431 = vunpack.c.l.b16 %v271
        %v432 = vunpack.c.l.b16 %v272
        %v433 = vunpack.c.l.b16 %v273
        %v434 = vunpack.c.l.b16 %v274
        %v435 = vunpack.c.l.b16 %v275
        %v436 = vunpack.c.l.b16 %v276
        %v437 = vunpack.c.l.b16 %v277
        %v438 = vunpack.c.l.b16 %v278
        %v439 = vunpack.c.l.b16 %v279
        %v440 = vunpack.c.l.b16 %v280
        %v441 = vunpack.c.l.b16 %v281
        %v442 = vunpack.c.l.b16 %v282
        %v443 = vunpack.c.l.b16 %v283
        %v444 = vunpack.c.l.b16 %v284
        %v445 = vunpack.c.l.b16 %v285
        %v446 = vunpack.c.l.b16 %v286
        %v447 = vunpack.c.l.b16 %v287
        %v448 = vunpack.c.l.b16 %v288
        %v449 = vunpack.c.l.b16 %v289
        %v450 = vunpack.c.l.b16 %v290
        %v451 = vunpack.c.l.b16 %v291
        %v452 = vunpack.c.l.b16 %v292
        %v453 = vunpack.c.l.b16 %v293
        %v454 = vunpack.c.l.b16 %v294
        %v455 = vunpack.c.l.b16 %v295
        %v456 = vunpack.c.l.b16 %v296
        %v457 = vunpack.c.l.b16 %v297
        %v458 = vunpack.c.l.b16 %v298
        %v459 = vunpack.c.l.b16 %v299
        %v460 = vunpack.c.l.b16 %v300
        %v461 = vunpack.c.l.b16 %v301
        %v462 = vunpack.c.l.b16 %v302
        %v463 = vunpack.c.l.b16 %v303
        %v464 = vunpack.c.l.b16 %v304
        %v465 = vunpack.c.l.b16 %v305
        %v466 = vunpack.c.l.b16 %v306
        %v467 = vunpack.c.l.b16 %v307
        %v468 = vunpack.c.l.b16 %v308
        %v469 = vunpack.c.l.b16 %v309
        %v470 = vunpack.c.l.b16 %v310
        %v471 = vunpack.c.l.b16 %v311
        %v472 = vunpack.c.l.b16 %v312
        %v473 = vunpack.c.l.b16 %v313
        %v474 = vunpack.c.l.b16 %v314
        %v475 = vunpack.c.l.b16 %v315
        %v476 = vunpack.c.l.b16 %v316
        %v477 = vunpack.c.l.b16 %v317
        %v478 = vunpack.c.l.b16 %v318
        %v479 = vunpack.c.l.b16 %v319
        %v480 = vunpack.c.l.b16 %v320
        %v481 = vunpack.c.l.b16 %v321
        %v482 = vunpack.c.l.b16 %v322
        %v483 = vunpack.c.l.b16 %v323
        %v484 = vpack.c.b16 %v421, %v420
        %v485 = vpack.c.b16 %v423, %v422
        %v486 = vpack.c.b16 %v425, %v424
        %v487 = vpack.c.b16 %v427, %v426
        %v488 = vpack.c.b16 %v429, %v428
        %v489 = vpack.c.b16 %v431, %v430
        %v490 = vpack.c.b16 %v433, %v432
        %v491 = vpack.c.b16 %v435, %v434
        %v492 = vpack.c.b16 %v437, %v436
        %v493 = vpack.c.b16 %v439, %v438
        %v494 = vpack.c.b16 %v441, %v440
        %v495 = vpack.c.b16 %v443, %v442
        %v496 = vpack.c.b16 %v445, %v444
        %v497 = vpack.c.b16 %v447, %v446
        %v498 = vpack.c.b16 %v449, %v448
        %v499 = vpack.c.b16 %v451, %v450
        %v500 = vpack.c.b16 %v453, %v452
        %v501 = vpack.c.b16 %v455, %v454
        %v502 = vpack.c.b16 %v457, %v456
        %v503 = vpack.c.b16 %v459, %v458
        %v504 = vpack.c.b16 %v461, %v460
        %v505 = vpack.c.b16 %v463, %v462
        %v506 = vpack.c.b16 %v465, %v464
        %v507 = vpack.c.b16 %v467, %v466
        %v508 = vpack.c.b16 %v469, %v468
        %v509 = vpack.c.b16 %v471, %v470
        %v510 = vpack.c.b16 %v473, %v472
        %v511 = vpack.c.b16 %v475, %v474
        %v512 = vpack.c.b16 %v477, %v476
        %v513 = vpack.c.b16 %v479, %v478
        %v514 = vpack.c.b16 %v481, %v480
        %v515 = vpack.c.b16 %v483, %v482
        %v580 = vunpack.c.l.b16 %v324
        %v581 = vunpack.c.h.b16 %v324
        %v582 = vunpack.c.l.b16 %v325
        %v583 = vunpack.c.h.b16 %v325
        %v584 = vunpack.c.l.b16 %v326
        %v585 = vunpack.c.h.b16 %v326
        %v586 = vunpack.c.l.b16 %v327
        %v587 = vunpack.c.h.b16 %v327
        %v588 = vunpack.c.l.b16 %v328
        %v589 = vunpack.c.h.b16 %v328
        %v590 = vunpack.c.l.b16 %v329
        %v591 = vunpack.c.h.b16 %v329
        %v592 = vunpack.c.l.b16 %v330
        %v593 = vunpack.c.h.b16 %v330
        %v594 = vunpack.c.l.b16 %v331
        %v595 = vunpack.c.h.b16 %v331
        %v596 = vunpack.c.l.b16 %v332
        %v597 = vunpack.c.h.b16 %v332
        %v598 = vunpack.c.l.b16 %v333
        %v599 = vunpack.c.h.b16 %v333
        %v600 = vunpack.c.l.b16 %v334
        %v601 = vunpack.c.h.b16 %v334
        %v602 = vunpack.c.l.b16 %v335
        %v603 = vunpack.c.h.b16 %v335
        %v604 = vunpack.c.l.b16 %v336
        %v605 = vunpack.c.h.b16 %v336
        %v606 = vunpack.c.l.b16 %v337
        %v607 = vunpack.c.h.b16 %v337
        %v608 = vunpack.c.l.b16 %v338
        %v609 = vunpack.c.h.b16 %v338
        %v610 = vunpack.c.l.b16 %v339
        %v611 = vunpack.c.h.b16 %v339
        %v612 = vunpack.c.l.b16 %v340
        %v613 = vunpack.c.h.b16 %v340
        %v614 = vunpack.c.l.b16 %v341
        %v615 = vunpack.c.h.b16 %v341
        %v616 = vunpack.c.l.b16 %v342
        %v617 = vunpack.c.h.b16 %v342
        %v618 = vunpack.c.l.b16 %v343
        %v619 = vunpack.c.h.b16 %v343
        %v620 = vunpack.c.l.b16 %v344
        %v621 = vunpack.c.h.b16 %v344
        %v622 = vunpack.c.l.b16 %v345
        %v623 = vunpack.c.h.b16 %v345
        %v624 = vunpack.c.l.b16 %v346
        %v625 = vunpack.c.h.b16 %v346
        %v626 = vunpack.c.l.b16 %v347
        %v627 = vunpack.c.h.b16 %v347
        %v628 = vunpack.c.l.b16 %v348
        %v629 = vunpack.c.h.b16 %v348
        %v630 = vunpack.c.l.b16 %v349
        %v631 = vunpack.c.h.b16 %v349
        %v632 = vunpack.c.l.b16 %v350
        %v633 = vunpack.c.h.b16 %v350
        %v634 = vunpack.c.l.b16 %v351
        %v635 = vunpack.c.h.b16 %v351
        %v636 = vunpack.c.l.b16 %v352
        %v637 = vunpack.c.h.b16 %v352
        %v638 = vunpack.c.l.b16 %v353
        %v639 = vunpack.c.h.b16 %v353
        %v640 = vunpack.c.l.b16 %v354
        %v641 = vunpack.c.h.b16 %v354
        %v642 = vunpack.c.l.b16 %v355
        %v643 = vunpack.c.h.b16 %v355
        %v644 = vpack.c.b16 %v584, %v580
        %v645 = vpack.c.b16 %v585, %v581
        %v646 = vpack.c.b16 %v586, %v582
        %v647 = vpack.c.b16 %v587, %v583
        %v648 = vpack.c.b16 %v592, %v588
        %v649 = vpack.c.b16 %v593, %v589
        %v650 = vpack.c.b16 %v594, %v590
        %v651 = vpack.c.b16 %v595, %v591
        %v652 = vpack.c.b16 %v600, %v596
        %v653 = vpack.c.b16 %v601, %v597
        %v654 = vpack.c.b16 %v602, %v598
        %v655 = vpack.c.b16 %v603, %v599
        %v656 = vpack.c.b16 %v608, %v604
        %v657 = vpack.c.b16 %v609, %v605
        %v658 = vpack.c.b16 %v610, %v606
        %v659 = vpack.c.b16 %v611, %v607
        %v660 = vpack.c.b16 %v616, %v612
        %v661 = vpack.c.b16 %v617, %v613
        %v662 = vpack.c.b16 %v618, %v614
        %v663 = vpack.c.b16 %v619, %v615
        %v664 = vpack.c.b16 %v624, %v620
        %v665 = vpack.c.b16 %v625, %v621
        %v666 = vpack.c.b16 %v626, %v622
        %v667 = vpack.c.b16 %v627, %v623
        %v668 = vpack.c.b16 %v632, %v628
        %v669 = vpack.c.b16 %v633, %v629
        %v670 = vpack.c.b16 %v634, %v630
        %v671 = vpack.c.b16 %v635, %v631
        %v672 = vpack.c.b16 %v640, %v636
        %v673 = vpack.c.b16 %v641, %v637
        %v674 = vpack.c.b16 %v642, %v638
        %v675 = vpack.c.b16 %v643, %v639
        %708 = vmatprep.subr.bf16.mxu0 %v673
        %709 = vmatpush1.bf16.msra.mxu0 %v672
        %710 = vmatprep.subr.bf16.mxu0 %v669
        %711 = vmatpush1.bf16.msra.mxu0 %v668
        %712 = vmatprep.subr.bf16.mxu0 %v665
        %713 = vmatpush1.bf16.msra.mxu0 %v664
        %714 = vmatprep.subr.bf16.mxu0 %v661
        %715 = vmatpush1.bf16.msra.mxu0 %v660
        %716 = vmatprep.subr.bf16.mxu0 %v657
        %717 = vmatpush1.bf16.msra.mxu0 %v656
        %718 = vmatprep.subr.bf16.mxu0 %v653
        %719 = vmatpush1.bf16.msra.mxu0 %v652
        %720 = vmatprep.subr.bf16.mxu0 %v649
        %721 = vmatpush1.bf16.msra.mxu0 %v648
        %722 = vmatprep.subr.bf16.mxu0 %v645
        %723 = vmatpush1.bf16.msra.mxu0 %v644
        %724 = vmatprep.subr.bf16.mxu0 0
        %725 = vmatpush2.bf16.msra.mxu0 0
        %726 = vmatprep.subr.bf16.mxu0 0
        %727 = vmatpush2.bf16.msra.mxu0 0
        %728 = vmatprep.subr.bf16.mxu0 0
        %729 = vmatpush2.bf16.msra.mxu0 0
        %730 = vmatprep.subr.bf16.mxu0 0
        %731 = vmatpush2.bf16.msra.mxu0 0
        %732 = vmatprep.subr.bf16.mxu0 0
        %733 = vmatpush2.bf16.msra.mxu0 0
        %734 = vmatprep.subr.bf16.mxu0 0
        %735 = vmatpush2.bf16.msra.mxu0 0
        %736 = vmatprep.subr.bf16.mxu0 0
        %737 = vmatpush2.bf16.msra.mxu0 0
        %738 = vmatprep.subr.bf16.mxu0 0
        %739 = vmatpush2.bf16.msra.mxu0 0
        %740 = vmatprep.mubr.bf16.mxu0 0
        %741 = vmatmul.mubr.bf16.gmra.mxu0 %v484
        %v742 = vpop.f32.mrf.mxu0
        %v743 = vadd.f32 0.0, %v742
        %v744 = vpop.f32.mrf.mxu0
        %v745 = vadd.f32 0.0, %v744
        %v746 = vpop.f32.mrf.mxu0
        %v747 = vadd.f32 0.0, %v746
        %v748 = vpop.f32.mrf.mxu0
        %v749 = vadd.f32 0.0, %v748
        %750 = vmatprep.mubr.bf16.mxu0 0
        %751 = vmatmul.mubr.bf16.gmra.mxu0 %v485
        %v752 = vpop.f32.mrf.mxu0
        %v753 = vadd.f32 0.0, %v752
        %v754 = vpop.f32.mrf.mxu0
        %v755 = vadd.f32 0.0, %v754
        %v756 = vpop.f32.mrf.mxu0
        %v757 = vadd.f32 0.0, %v756
        %v758 = vpop.f32.mrf.mxu0
        %v759 = vadd.f32 0.0, %v758
        %760 = vmatprep.mubr.bf16.mxu0 0
        %761 = vmatmul.mubr.bf16.gmra.mxu0 %v486
        %v762 = vpop.f32.mrf.mxu0
        %v763 = vadd.f32 0.0, %v762
        %v764 = vpop.f32.mrf.mxu0
        %v765 = vadd.f32 0.0, %v764
        %v766 = vpop.f32.mrf.mxu0
        %v767 = vadd.f32 0.0, %v766
        %v768 = vpop.f32.mrf.mxu0
        %v769 = vadd.f32 0.0, %v768
        %770 = vmatprep.mubr.bf16.mxu0 0
        %771 = vmatmul.mubr.bf16.gmra.mxu0 %v487
        %v772 = vpop.f32.mrf.mxu0
        %v773 = vadd.f32 0.0, %v772
        %v774 = vpop.f32.mrf.mxu0
        %v775 = vadd.f32 0.0, %v774
        %v776 = vpop.f32.mrf.mxu0
        %v777 = vadd.f32 0.0, %v776
        %v778 = vpop.f32.mrf.mxu0
        %v779 = vadd.f32 0.0, %v778
        %780 = vmatprep.mubr.bf16.mxu0 0
        %781 = vmatmul.mubr.bf16.gmra.mxu0 %v488
        %v782 = vpop.f32.mrf.mxu0
        %v783 = vadd.f32 0.0, %v782
        %v784 = vpop.f32.mrf.mxu0
        %v785 = vadd.f32 0.0, %v784
        %v786 = vpop.f32.mrf.mxu0
        %v787 = vadd.f32 0.0, %v786
        %v788 = vpop.f32.mrf.mxu0
        %v789 = vadd.f32 0.0, %v788
        %790 = vmatprep.mubr.bf16.mxu0 0
        %791 = vmatmul.mubr.bf16.gmra.mxu0 %v489
        %v792 = vpop.f32.mrf.mxu0
        %v793 = vadd.f32 0.0, %v792
        %v794 = vpop.f32.mrf.mxu0
        %v795 = vadd.f32 0.0, %v794
        %v796 = vpop.f32.mrf.mxu0
        %v797 = vadd.f32 0.0, %v796
        %v798 = vpop.f32.mrf.mxu0
        %v799 = vadd.f32 0.0, %v798
        %800 = vmatprep.mubr.bf16.mxu0 0
        %801 = vmatmul.mubr.bf16.gmra.mxu0 %v490
        %v802 = vpop.f32.mrf.mxu0
        %v803 = vadd.f32 0.0, %v802
        %v804 = vpop.f32.mrf.mxu0
        %v805 = vadd.f32 0.0, %v804
        %v806 = vpop.f32.mrf.mxu0
        %v807 = vadd.f32 0.0, %v806
        %v808 = vpop.f32.mrf.mxu0
        %v809 = vadd.f32 0.0, %v808
        %810 = vmatprep.mubr.bf16.mxu0 0
        %811 = vmatmul.mubr.bf16.gmra.mxu0 %v491
        %v812 = vpop.f32.mrf.mxu0
        %v813 = vadd.f32 0.0, %v812
        %v814 = vpop.f32.mrf.mxu0
        %v815 = vadd.f32 0.0, %v814
        %v816 = vpop.f32.mrf.mxu0
        %v817 = vadd.f32 0.0, %v816
        %v818 = vpop.f32.mrf.mxu0
        %v819 = vadd.f32 0.0, %v818
        %820 = vmatprep.mubr.bf16.mxu0 0
        %821 = vmatmul.mubr.bf16.gmra.mxu0 %v492
        %v822 = vpop.f32.mrf.mxu0
        %v823 = vadd.f32 0.0, %v822
        %v824 = vpop.f32.mrf.mxu0
        %v825 = vadd.f32 0.0, %v824
        %v826 = vpop.f32.mrf.mxu0
        %v827 = vadd.f32 0.0, %v826
        %v828 = vpop.f32.mrf.mxu0
        %v829 = vadd.f32 0.0, %v828
        %830 = vmatprep.mubr.bf16.mxu0 0
        %831 = vmatmul.mubr.bf16.gmra.mxu0 %v493
        %v832 = vpop.f32.mrf.mxu0
        %v833 = vadd.f32 0.0, %v832
        %v834 = vpop.f32.mrf.mxu0
        %v835 = vadd.f32 0.0, %v834
        %v836 = vpop.f32.mrf.mxu0
        %v837 = vadd.f32 0.0, %v836
        %v838 = vpop.f32.mrf.mxu0
        %v839 = vadd.f32 0.0, %v838
        %840 = vmatprep.mubr.bf16.mxu0 0
        %841 = vmatmul.mubr.bf16.gmra.mxu0 %v494
        %v842 = vpop.f32.mrf.mxu0
        %v843 = vadd.f32 0.0, %v842
        %v844 = vpop.f32.mrf.mxu0
        %v845 = vadd.f32 0.0, %v844
        %v846 = vpop.f32.mrf.mxu0
        %v847 = vadd.f32 0.0, %v846
        %v848 = vpop.f32.mrf.mxu0
        %v849 = vadd.f32 0.0, %v848
        %850 = vmatprep.mubr.bf16.mxu0 0
        %851 = vmatmul.mubr.bf16.gmra.mxu0 %v495
        %v852 = vpop.f32.mrf.mxu0
        %v853 = vadd.f32 0.0, %v852
        %v854 = vpop.f32.mrf.mxu0
        %v855 = vadd.f32 0.0, %v854
        %v856 = vpop.f32.mrf.mxu0
        %v857 = vadd.f32 0.0, %v856
        %v858 = vpop.f32.mrf.mxu0
        %v859 = vadd.f32 0.0, %v858
        %860 = vmatprep.mubr.bf16.mxu0 0
        %861 = vmatmul.mubr.bf16.gmra.mxu0 %v496
        %v862 = vpop.f32.mrf.mxu0
        %v863 = vadd.f32 0.0, %v862
        %v864 = vpop.f32.mrf.mxu0
        %v865 = vadd.f32 0.0, %v864
        %v866 = vpop.f32.mrf.mxu0
        %v867 = vadd.f32 0.0, %v866
        %v868 = vpop.f32.mrf.mxu0
        %v869 = vadd.f32 0.0, %v868
        %870 = vmatprep.mubr.bf16.mxu0 0
        %871 = vmatmul.mubr.bf16.gmra.mxu0 %v497
        %v872 = vpop.f32.mrf.mxu0
        %v873 = vadd.f32 0.0, %v872
        %v874 = vpop.f32.mrf.mxu0
        %v875 = vadd.f32 0.0, %v874
        %v876 = vpop.f32.mrf.mxu0
        %v877 = vadd.f32 0.0, %v876
        %v878 = vpop.f32.mrf.mxu0
        %v879 = vadd.f32 0.0, %v878
        %880 = vmatprep.mubr.bf16.mxu0 0
        %881 = vmatmul.mubr.bf16.gmra.mxu0 %v498
        %v882 = vpop.f32.mrf.mxu0
        %v883 = vadd.f32 0.0, %v882
        %v884 = vpop.f32.mrf.mxu0
        %v885 = vadd.f32 0.0, %v884
        %v886 = vpop.f32.mrf.mxu0
        %v887 = vadd.f32 0.0, %v886
        %v888 = vpop.f32.mrf.mxu0
        %v889 = vadd.f32 0.0, %v888
        %890 = vmatprep.mubr.bf16.mxu0 0
        %891 = vmatmul.mubr.bf16.gmra.mxu0 %v499
        %v892 = vpop.f32.mrf.mxu0
        %v893 = vadd.f32 0.0, %v892
        %v894 = vpop.f32.mrf.mxu0
        %v895 = vadd.f32 0.0, %v894
        %v896 = vpop.f32.mrf.mxu0
        %v897 = vadd.f32 0.0, %v896
        %v898 = vpop.f32.mrf.mxu0
        %v899 = vadd.f32 0.0, %v898
        %900 = vmatprep.mubr.bf16.mxu0 0
        %901 = vmatmul.mubr.bf16.gmra.mxu0 %v500
        %v902 = vpop.f32.mrf.mxu0
        %v903 = vadd.f32 0.0, %v902
        %v904 = vpop.f32.mrf.mxu0
        %v905 = vadd.f32 0.0, %v904
        %v906 = vpop.f32.mrf.mxu0
        %v907 = vadd.f32 0.0, %v906
        %v908 = vpop.f32.mrf.mxu0
        %v909 = vadd.f32 0.0, %v908
        %910 = vmatprep.mubr.bf16.mxu0 0
        %911 = vmatmul.mubr.bf16.gmra.mxu0 %v501
        %v912 = vpop.f32.mrf.mxu0
        %v913 = vadd.f32 0.0, %v912
        %v914 = vpop.f32.mrf.mxu0
        %v915 = vadd.f32 0.0, %v914
        %v916 = vpop.f32.mrf.mxu0
        %v917 = vadd.f32 0.0, %v916
        %v918 = vpop.f32.mrf.mxu0
        %v919 = vadd.f32 0.0, %v918
        %920 = vmatprep.mubr.bf16.mxu0 0
        %921 = vmatmul.mubr.bf16.gmra.mxu0 %v502
        %v922 = vpop.f32.mrf.mxu0
        %v923 = vadd.f32 0.0, %v922
        %v924 = vpop.f32.mrf.mxu0
        %v925 = vadd.f32 0.0, %v924
        %v926 = vpop.f32.mrf.mxu0
        %v927 = vadd.f32 0.0, %v926
        %v928 = vpop.f32.mrf.mxu0
        %v929 = vadd.f32 0.0, %v928
        %930 = vmatprep.mubr.bf16.mxu0 0
        %931 = vmatmul.mubr.bf16.gmra.mxu0 %v503
        %v932 = vpop.f32.mrf.mxu0
        %v933 = vadd.f32 0.0, %v932
        %v934 = vpop.f32.mrf.mxu0
        %v935 = vadd.f32 0.0, %v934
        %v936 = vpop.f32.mrf.mxu0
        %v937 = vadd.f32 0.0, %v936
        %v938 = vpop.f32.mrf.mxu0
        %v939 = vadd.f32 0.0, %v938
        %940 = vmatprep.mubr.bf16.mxu0 0
        %941 = vmatmul.mubr.bf16.gmra.mxu0 %v504
        %v942 = vpop.f32.mrf.mxu0
        %v943 = vadd.f32 0.0, %v942
        %v944 = vpop.f32.mrf.mxu0
        %v945 = vadd.f32 0.0, %v944
        %v946 = vpop.f32.mrf.mxu0
        %v947 = vadd.f32 0.0, %v946
        %v948 = vpop.f32.mrf.mxu0
        %v949 = vadd.f32 0.0, %v948
        %950 = vmatprep.mubr.bf16.mxu0 0
        %951 = vmatmul.mubr.bf16.gmra.mxu0 %v505
        %v952 = vpop.f32.mrf.mxu0
        %v953 = vadd.f32 0.0, %v952
        %v954 = vpop.f32.mrf.mxu0
        %v955 = vadd.f32 0.0, %v954
        %v956 = vpop.f32.mrf.mxu0
        %v957 = vadd.f32 0.0, %v956
        %v958 = vpop.f32.mrf.mxu0
        %v959 = vadd.f32 0.0, %v958
        %960 = vmatprep.mubr.bf16.mxu0 0
        %961 = vmatmul.mubr.bf16.gmra.mxu0 %v506
        %v962 = vpop.f32.mrf.mxu0
        %v963 = vadd.f32 0.0, %v962
        %v964 = vpop.f32.mrf.mxu0
        %v965 = vadd.f32 0.0, %v964
        %v966 = vpop.f32.mrf.mxu0
        %v967 = vadd.f32 0.0, %v966
        %v968 = vpop.f32.mrf.mxu0
        %v969 = vadd.f32 0.0, %v968
        %970 = vmatprep.mubr.bf16.mxu0 0
        %971 = vmatmul.mubr.bf16.gmra.mxu0 %v507
        %v972 = vpop.f32.mrf.mxu0
        %v973 = vadd.f32 0.0, %v972
        %v974 = vpop.f32.mrf.mxu0
        %v975 = vadd.f32 0.0, %v974
        %v976 = vpop.f32.mrf.mxu0
        %v977 = vadd.f32 0.0, %v976
        %v978 = vpop.f32.mrf.mxu0
        %v979 = vadd.f32 0.0, %v978
        %980 = vmatprep.mubr.bf16.mxu0 0
        %981 = vmatmul.mubr.bf16.gmra.mxu0 %v508
        %v982 = vpop.f32.mrf.mxu0
        %v983 = vadd.f32 0.0, %v982
        %v984 = vpop.f32.mrf.mxu0
        %v985 = vadd.f32 0.0, %v984
        %v986 = vpop.f32.mrf.mxu0
        %v987 = vadd.f32 0.0, %v986
        %v988 = vpop.f32.mrf.mxu0
        %v989 = vadd.f32 0.0, %v988
        %990 = vmatprep.mubr.bf16.mxu0 0
        %991 = vmatmul.mubr.bf16.gmra.mxu0 %v509
        %v992 = vpop.f32.mrf.mxu0
        %v993 = vadd.f32 0.0, %v992
        %v994 = vpop.f32.mrf.mxu0
        %v995 = vadd.f32 0.0, %v994
        %v996 = vpop.f32.mrf.mxu0
        %v997 = vadd.f32 0.0, %v996
        %v998 = vpop.f32.mrf.mxu0
        %v999 = vadd.f32 0.0, %v998
        %1000 = vmatprep.mubr.bf16.mxu0 0
        %1001 = vmatmul.mubr.bf16.gmra.mxu0 %v510
        %v1002 = vpop.f32.mrf.mxu0
        %v1003 = vadd.f32 0.0, %v1002
        %v1004 = vpop.f32.mrf.mxu0
        %v1005 = vadd.f32 0.0, %v1004
        %v1006 = vpop.f32.mrf.mxu0
        %v1007 = vadd.f32 0.0, %v1006
        %v1008 = vpop.f32.mrf.mxu0
        %v1009 = vadd.f32 0.0, %v1008
        %1010 = vmatprep.mubr.bf16.mxu0 0
        %1011 = vmatmul.mubr.bf16.gmra.mxu0 %v511
        %v1012 = vpop.f32.mrf.mxu0
        %v1013 = vadd.f32 0.0, %v1012
        %v1014 = vpop.f32.mrf.mxu0
        %v1015 = vadd.f32 0.0, %v1014
        %v1016 = vpop.f32.mrf.mxu0
        %v1017 = vadd.f32 0.0, %v1016
        %v1018 = vpop.f32.mrf.mxu0
        %v1019 = vadd.f32 0.0, %v1018
        %1020 = vmatprep.mubr.bf16.mxu0 0
        %1021 = vmatmul.mubr.bf16.gmra.mxu0 %v512
        %v1022 = vpop.f32.mrf.mxu0
        %v1023 = vadd.f32 0.0, %v1022
        %v1024 = vpop.f32.mrf.mxu0
        %v1025 = vadd.f32 0.0, %v1024
        %v1026 = vpop.f32.mrf.mxu0
        %v1027 = vadd.f32 0.0, %v1026
        %v1028 = vpop.f32.mrf.mxu0
        %v1029 = vadd.f32 0.0, %v1028
        %1030 = vmatprep.mubr.bf16.mxu0 0
        %1031 = vmatmul.mubr.bf16.gmra.mxu0 %v513
        %v1032 = vpop.f32.mrf.mxu0
        %v1033 = vadd.f32 0.0, %v1032
        %v1034 = vpop.f32.mrf.mxu0
        %v1035 = vadd.f32 0.0, %v1034
        %v1036 = vpop.f32.mrf.mxu0
        %v1037 = vadd.f32 0.0, %v1036
        %v1038 = vpop.f32.mrf.mxu0
        %v1039 = vadd.f32 0.0, %v1038
        %1040 = vmatprep.mubr.bf16.mxu0 0
        %1041 = vmatmul.mubr.bf16.gmra.mxu0 %v514
        %v1042 = vpop.f32.mrf.mxu0
        %v1043 = vadd.f32 0.0, %v1042
        %v1044 = vpop.f32.mrf.mxu0
        %v1045 = vadd.f32 0.0, %v1044
        %v1046 = vpop.f32.mrf.mxu0
        %v1047 = vadd.f32 0.0, %v1046
        %v1048 = vpop.f32.mrf.mxu0
        %v1049 = vadd.f32 0.0, %v1048
        %1050 = vmatprep.mubr.bf16.mxu0 0
        %1051 = vmatmul.mubr.bf16.gmra.mxu0 %v515
        %v1052 = vpop.f32.mrf.mxu0
        %v1053 = vadd.f32 0.0, %v1052
        %v1054 = vpop.f32.mrf.mxu0
        %v1055 = vadd.f32 0.0, %v1054
        %v1056 = vpop.f32.mrf.mxu0
        %v1057 = vadd.f32 0.0, %v1056
        %v1058 = vpop.f32.mrf.mxu0
        %v1059 = vadd.f32 0.0, %v1058
        %1060 = vdwg.mxu0
        %1061 = vmatprep.subr.bf16.mxu0 %v675
        %1062 = vmatpush1.bf16.msra.mxu0 %v674
        %1063 = vmatprep.subr.bf16.mxu0 %v671
        %1064 = vmatpush1.bf16.msra.mxu0 %v670
        %1065 = vmatprep.subr.bf16.mxu0 %v667
        %1066 = vmatpush1.bf16.msra.mxu0 %v666
        %1067 = vmatprep.subr.bf16.mxu0 %v663
        %1068 = vmatpush1.bf16.msra.mxu0 %v662
        %1069 = vmatprep.subr.bf16.mxu0 %v659
        %1070 = vmatpush1.bf16.msra.mxu0 %v658
        %1071 = vmatprep.subr.bf16.mxu0 %v655
        %1072 = vmatpush1.bf16.msra.mxu0 %v654
        %1073 = vmatprep.subr.bf16.mxu0 %v651
        %1074 = vmatpush1.bf16.msra.mxu0 %v650
        %1075 = vmatprep.subr.bf16.mxu0 %v647
        %1076 = vmatpush1.bf16.msra.mxu0 %v646
        %1077 = vmatprep.subr.bf16.mxu0 0
        %1078 = vmatpush2.bf16.msra.mxu0 0
        %1079 = vmatprep.subr.bf16.mxu0 0
        %1080 = vmatpush2.bf16.msra.mxu0 0
        %1081 = vmatprep.subr.bf16.mxu0 0
        %1082 = vmatpush2.bf16.msra.mxu0 0
        %1083 = vmatprep.subr.bf16.mxu0 0
        %1084 = vmatpush2.bf16.msra.mxu0 0
        %1085 = vmatprep.subr.bf16.mxu0 0
        %1086 = vmatpush2.bf16.msra.mxu0 0
        %1087 = vmatprep.subr.bf16.mxu0 0
        %1088 = vmatpush2.bf16.msra.mxu0 0
        %1089 = vmatprep.subr.bf16.mxu0 0
        %1090 = vmatpush2.bf16.msra.mxu0 0
        %1091 = vmatprep.subr.bf16.mxu0 0
        %1092 = vmatpush2.bf16.msra.mxu0 0
        %1093 = vmatprep.mubr.bf16.mxu0 0
        %1094 = vmatmul.mubr.bf16.gmra.mxu0 %v484
        %v1095 = vpop.f32.mrf.mxu0
        %v1096 = vadd.f32 0.0, %v1095
        %v1097 = vpop.f32.mrf.mxu0
        %v1098 = vadd.f32 0.0, %v1097
        %v1099 = vpop.f32.mrf.mxu0
        %v1100 = vadd.f32 0.0, %v1099
        %v1101 = vpop.f32.mrf.mxu0
        %v1102 = vadd.f32 0.0, %v1101
        %1103 = vmatprep.mubr.bf16.mxu0 0
        %1104 = vmatmul.mubr.bf16.gmra.mxu0 %v485
        %v1105 = vpop.f32.mrf.mxu0
        %v1106 = vadd.f32 0.0, %v1105
        %v1107 = vpop.f32.mrf.mxu0
        %v1108 = vadd.f32 0.0, %v1107
        %v1109 = vpop.f32.mrf.mxu0
        %v1110 = vadd.f32 0.0, %v1109
        %v1111 = vpop.f32.mrf.mxu0
        %v1112 = vadd.f32 0.0, %v1111
        %1113 = vmatprep.mubr.bf16.mxu0 0
        %1114 = vmatmul.mubr.bf16.gmra.mxu0 %v486
        %v1115 = vpop.f32.mrf.mxu0
        %v1116 = vadd.f32 0.0, %v1115
        %v1117 = vpop.f32.mrf.mxu0
        %v1118 = vadd.f32 0.0, %v1117
        %v1119 = vpop.f32.mrf.mxu0
        %v1120 = vadd.f32 0.0, %v1119
        %v1121 = vpop.f32.mrf.mxu0
        %v1122 = vadd.f32 0.0, %v1121
        %1123 = vmatprep.mubr.bf16.mxu0 0
        %1124 = vmatmul.mubr.bf16.gmra.mxu0 %v487
        %v1125 = vpop.f32.mrf.mxu0
        %v1126 = vadd.f32 0.0, %v1125
        %v1127 = vpop.f32.mrf.mxu0
        %v1128 = vadd.f32 0.0, %v1127
        %v1129 = vpop.f32.mrf.mxu0
        %v1130 = vadd.f32 0.0, %v1129
        %v1131 = vpop.f32.mrf.mxu0
        %v1132 = vadd.f32 0.0, %v1131
        %1133 = vmatprep.mubr.bf16.mxu0 0
        %1134 = vmatmul.mubr.bf16.gmra.mxu0 %v488
        %v1135 = vpop.f32.mrf.mxu0
        %v1136 = vadd.f32 0.0, %v1135
        %v1137 = vpop.f32.mrf.mxu0
        %v1138 = vadd.f32 0.0, %v1137
        %v1139 = vpop.f32.mrf.mxu0
        %v1140 = vadd.f32 0.0, %v1139
        %v1141 = vpop.f32.mrf.mxu0
        %v1142 = vadd.f32 0.0, %v1141
        %1143 = vmatprep.mubr.bf16.mxu0 0
        %1144 = vmatmul.mubr.bf16.gmra.mxu0 %v489
        %v1145 = vpop.f32.mrf.mxu0
        %v1146 = vadd.f32 0.0, %v1145
        %v1147 = vpop.f32.mrf.mxu0
        %v1148 = vadd.f32 0.0, %v1147
        %v1149 = vpop.f32.mrf.mxu0
        %v1150 = vadd.f32 0.0, %v1149
        %v1151 = vpop.f32.mrf.mxu0
        %v1152 = vadd.f32 0.0, %v1151
        %1153 = vmatprep.mubr.bf16.mxu0 0
        %1154 = vmatmul.mubr.bf16.gmra.mxu0 %v490
        %v1155 = vpop.f32.mrf.mxu0
        %v1156 = vadd.f32 0.0, %v1155
        %v1157 = vpop.f32.mrf.mxu0
        %v1158 = vadd.f32 0.0, %v1157
        %v1159 = vpop.f32.mrf.mxu0
        %v1160 = vadd.f32 0.0, %v1159
        %v1161 = vpop.f32.mrf.mxu0
        %v1162 = vadd.f32 0.0, %v1161
        %1163 = vmatprep.mubr.bf16.mxu0 0
        %1164 = vmatmul.mubr.bf16.gmra.mxu0 %v491
        %v1165 = vpop.f32.mrf.mxu0
        %v1166 = vadd.f32 0.0, %v1165
        %v1167 = vpop.f32.mrf.mxu0
        %v1168 = vadd.f32 0.0, %v1167
        %v1169 = vpop.f32.mrf.mxu0
        %v1170 = vadd.f32 0.0, %v1169
        %v1171 = vpop.f32.mrf.mxu0
        %v1172 = vadd.f32 0.0, %v1171
        %1173 = vmatprep.mubr.bf16.mxu0 0
        %1174 = vmatmul.mubr.bf16.gmra.mxu0 %v492
        %v1175 = vpop.f32.mrf.mxu0
        %v1176 = vadd.f32 0.0, %v1175
        %v1177 = vpop.f32.mrf.mxu0
        %v1178 = vadd.f32 0.0, %v1177
        %v1179 = vpop.f32.mrf.mxu0
        %v1180 = vadd.f32 0.0, %v1179
        %v1181 = vpop.f32.mrf.mxu0
        %v1182 = vadd.f32 0.0, %v1181
        %1183 = vmatprep.mubr.bf16.mxu0 0
        %1184 = vmatmul.mubr.bf16.gmra.mxu0 %v493
        %v1185 = vpop.f32.mrf.mxu0
        %v1186 = vadd.f32 0.0, %v1185
        %v1187 = vpop.f32.mrf.mxu0
        %v1188 = vadd.f32 0.0, %v1187
        %v1189 = vpop.f32.mrf.mxu0
        %v1190 = vadd.f32 0.0, %v1189
        %v1191 = vpop.f32.mrf.mxu0
        %v1192 = vadd.f32 0.0, %v1191
        %1193 = vmatprep.mubr.bf16.mxu0 0
        %1194 = vmatmul.mubr.bf16.gmra.mxu0 %v494
        %v1195 = vpop.f32.mrf.mxu0
        %v1196 = vadd.f32 0.0, %v1195
        %v1197 = vpop.f32.mrf.mxu0
        %v1198 = vadd.f32 0.0, %v1197
        %v1199 = vpop.f32.mrf.mxu0
        %v1200 = vadd.f32 0.0, %v1199
        %v1201 = vpop.f32.mrf.mxu0
        %v1202 = vadd.f32 0.0, %v1201
        %1203 = vmatprep.mubr.bf16.mxu0 0
        %1204 = vmatmul.mubr.bf16.gmra.mxu0 %v495
        %v1205 = vpop.f32.mrf.mxu0
        %v1206 = vadd.f32 0.0, %v1205
        %v1207 = vpop.f32.mrf.mxu0
        %v1208 = vadd.f32 0.0, %v1207
        %v1209 = vpop.f32.mrf.mxu0
        %v1210 = vadd.f32 0.0, %v1209
        %v1211 = vpop.f32.mrf.mxu0
        %v1212 = vadd.f32 0.0, %v1211
        %1213 = vmatprep.mubr.bf16.mxu0 0
        %1214 = vmatmul.mubr.bf16.gmra.mxu0 %v496
        %v1215 = vpop.f32.mrf.mxu0
        %v1216 = vadd.f32 0.0, %v1215
        %v1217 = vpop.f32.mrf.mxu0
        %v1218 = vadd.f32 0.0, %v1217
        %v1219 = vpop.f32.mrf.mxu0
        %v1220 = vadd.f32 0.0, %v1219
        %v1221 = vpop.f32.mrf.mxu0
        %v1222 = vadd.f32 0.0, %v1221
        %1223 = vmatprep.mubr.bf16.mxu0 0
        %1224 = vmatmul.mubr.bf16.gmra.mxu0 %v497
        %v1225 = vpop.f32.mrf.mxu0
        %v1226 = vadd.f32 0.0, %v1225
        %v1227 = vpop.f32.mrf.mxu0
        %v1228 = vadd.f32 0.0, %v1227
        %v1229 = vpop.f32.mrf.mxu0
        %v1230 = vadd.f32 0.0, %v1229
        %v1231 = vpop.f32.mrf.mxu0
        %v1232 = vadd.f32 0.0, %v1231
        %1233 = vmatprep.mubr.bf16.mxu0 0
        %1234 = vmatmul.mubr.bf16.gmra.mxu0 %v498
        %v1235 = vpop.f32.mrf.mxu0
        %v1236 = vadd.f32 0.0, %v1235
        %v1237 = vpop.f32.mrf.mxu0
        %v1238 = vadd.f32 0.0, %v1237
        %v1239 = vpop.f32.mrf.mxu0
        %v1240 = vadd.f32 0.0, %v1239
        %v1241 = vpop.f32.mrf.mxu0
        %v1242 = vadd.f32 0.0, %v1241
        %1243 = vmatprep.mubr.bf16.mxu0 0
        %1244 = vmatmul.mubr.bf16.gmra.mxu0 %v499
        %v1245 = vpop.f32.mrf.mxu0
        %v1246 = vadd.f32 0.0, %v1245
        %v1247 = vpop.f32.mrf.mxu0
        %v1248 = vadd.f32 0.0, %v1247
        %v1249 = vpop.f32.mrf.mxu0
        %v1250 = vadd.f32 0.0, %v1249
        %v1251 = vpop.f32.mrf.mxu0
        %v1252 = vadd.f32 0.0, %v1251
        %1253 = vmatprep.mubr.bf16.mxu0 0
        %1254 = vmatmul.mubr.bf16.gmra.mxu0 %v500
        %v1255 = vpop.f32.mrf.mxu0
        %v1256 = vadd.f32 0.0, %v1255
        %v1257 = vpop.f32.mrf.mxu0
        %v1258 = vadd.f32 0.0, %v1257
        %v1259 = vpop.f32.mrf.mxu0
        %v1260 = vadd.f32 0.0, %v1259
        %v1261 = vpop.f32.mrf.mxu0
        %v1262 = vadd.f32 0.0, %v1261
        %1263 = vmatprep.mubr.bf16.mxu0 0
        %1264 = vmatmul.mubr.bf16.gmra.mxu0 %v501
        %v1265 = vpop.f32.mrf.mxu0
        %v1266 = vadd.f32 0.0, %v1265
        %v1267 = vpop.f32.mrf.mxu0
        %v1268 = vadd.f32 0.0, %v1267
        %v1269 = vpop.f32.mrf.mxu0
        %v1270 = vadd.f32 0.0, %v1269
        %v1271 = vpop.f32.mrf.mxu0
        %v1272 = vadd.f32 0.0, %v1271
        %1273 = vmatprep.mubr.bf16.mxu0 0
        %1274 = vmatmul.mubr.bf16.gmra.mxu0 %v502
        %v1275 = vpop.f32.mrf.mxu0
        %v1276 = vadd.f32 0.0, %v1275
        %v1277 = vpop.f32.mrf.mxu0
        %v1278 = vadd.f32 0.0, %v1277
        %v1279 = vpop.f32.mrf.mxu0
        %v1280 = vadd.f32 0.0, %v1279
        %v1281 = vpop.f32.mrf.mxu0
        %v1282 = vadd.f32 0.0, %v1281
        %1283 = vmatprep.mubr.bf16.mxu0 0
        %1284 = vmatmul.mubr.bf16.gmra.mxu0 %v503
        %v1285 = vpop.f32.mrf.mxu0
        %v1286 = vadd.f32 0.0, %v1285
        %v1287 = vpop.f32.mrf.mxu0
        %v1288 = vadd.f32 0.0, %v1287
        %v1289 = vpop.f32.mrf.mxu0
        %v1290 = vadd.f32 0.0, %v1289
        %v1291 = vpop.f32.mrf.mxu0
        %v1292 = vadd.f32 0.0, %v1291
        %1293 = vmatprep.mubr.bf16.mxu0 0
        %1294 = vmatmul.mubr.bf16.gmra.mxu0 %v504
        %v1295 = vpop.f32.mrf.mxu0
        %v1296 = vadd.f32 0.0, %v1295
        %v1297 = vpop.f32.mrf.mxu0
        %v1298 = vadd.f32 0.0, %v1297
        %v1299 = vpop.f32.mrf.mxu0
        %v1300 = vadd.f32 0.0, %v1299
        %v1301 = vpop.f32.mrf.mxu0
        %v1302 = vadd.f32 0.0, %v1301
        %1303 = vmatprep.mubr.bf16.mxu0 0
        %1304 = vmatmul.mubr.bf16.gmra.mxu0 %v505
        %v1305 = vpop.f32.mrf.mxu0
        %v1306 = vadd.f32 0.0, %v1305
        %v1307 = vpop.f32.mrf.mxu0
        %v1308 = vadd.f32 0.0, %v1307
        %v1309 = vpop.f32.mrf.mxu0
        %v1310 = vadd.f32 0.0, %v1309
        %v1311 = vpop.f32.mrf.mxu0
        %v1312 = vadd.f32 0.0, %v1311
        %1313 = vmatprep.mubr.bf16.mxu0 0
        %1314 = vmatmul.mubr.bf16.gmra.mxu0 %v506
        %v1315 = vpop.f32.mrf.mxu0
        %v1316 = vadd.f32 0.0, %v1315
        %v1317 = vpop.f32.mrf.mxu0
        %v1318 = vadd.f32 0.0, %v1317
        %v1319 = vpop.f32.mrf.mxu0
        %v1320 = vadd.f32 0.0, %v1319
        %v1321 = vpop.f32.mrf.mxu0
        %v1322 = vadd.f32 0.0, %v1321
        %1323 = vmatprep.mubr.bf16.mxu0 0
        %1324 = vmatmul.mubr.bf16.gmra.mxu0 %v507
        %v1325 = vpop.f32.mrf.mxu0
        %v1326 = vadd.f32 0.0, %v1325
        %v1327 = vpop.f32.mrf.mxu0
        %v1328 = vadd.f32 0.0, %v1327
        %v1329 = vpop.f32.mrf.mxu0
        %v1330 = vadd.f32 0.0, %v1329
        %v1331 = vpop.f32.mrf.mxu0
        %v1332 = vadd.f32 0.0, %v1331
        %1333 = vmatprep.mubr.bf16.mxu0 0
        %1334 = vmatmul.mubr.bf16.gmra.mxu0 %v508
        %v1335 = vpop.f32.mrf.mxu0
        %v1336 = vadd.f32 0.0, %v1335
        %v1337 = vpop.f32.mrf.mxu0
        %v1338 = vadd.f32 0.0, %v1337
        %v1339 = vpop.f32.mrf.mxu0
        %v1340 = vadd.f32 0.0, %v1339
        %v1341 = vpop.f32.mrf.mxu0
        %v1342 = vadd.f32 0.0, %v1341
        %1343 = vmatprep.mubr.bf16.mxu0 0
        %1344 = vmatmul.mubr.bf16.gmra.mxu0 %v509
        %v1345 = vpop.f32.mrf.mxu0
        %v1346 = vadd.f32 0.0, %v1345
        %v1347 = vpop.f32.mrf.mxu0
        %v1348 = vadd.f32 0.0, %v1347
        %v1349 = vpop.f32.mrf.mxu0
        %v1350 = vadd.f32 0.0, %v1349
        %v1351 = vpop.f32.mrf.mxu0
        %v1352 = vadd.f32 0.0, %v1351
        %1353 = vmatprep.mubr.bf16.mxu0 0
        %1354 = vmatmul.mubr.bf16.gmra.mxu0 %v510
        %v1355 = vpop.f32.mrf.mxu0
        %v1356 = vadd.f32 0.0, %v1355
        %v1357 = vpop.f32.mrf.mxu0
        %v1358 = vadd.f32 0.0, %v1357
        %v1359 = vpop.f32.mrf.mxu0
        %v1360 = vadd.f32 0.0, %v1359
        %v1361 = vpop.f32.mrf.mxu0
        %v1362 = vadd.f32 0.0, %v1361
        %1363 = vmatprep.mubr.bf16.mxu0 0
        %1364 = vmatmul.mubr.bf16.gmra.mxu0 %v511
        %v1365 = vpop.f32.mrf.mxu0
        %v1366 = vadd.f32 0.0, %v1365
        %v1367 = vpop.f32.mrf.mxu0
        %v1368 = vadd.f32 0.0, %v1367
        %v1369 = vpop.f32.mrf.mxu0
        %v1370 = vadd.f32 0.0, %v1369
        %v1371 = vpop.f32.mrf.mxu0
        %v1372 = vadd.f32 0.0, %v1371
        %1373 = vmatprep.mubr.bf16.mxu0 0
        %1374 = vmatmul.mubr.bf16.gmra.mxu0 %v512
        %v1375 = vpop.f32.mrf.mxu0
        %v1376 = vadd.f32 0.0, %v1375
        %v1377 = vpop.f32.mrf.mxu0
        %v1378 = vadd.f32 0.0, %v1377
        %v1379 = vpop.f32.mrf.mxu0
        %v1380 = vadd.f32 0.0, %v1379
        %v1381 = vpop.f32.mrf.mxu0
        %v1382 = vadd.f32 0.0, %v1381
        %1383 = vmatprep.mubr.bf16.mxu0 0
        %1384 = vmatmul.mubr.bf16.gmra.mxu0 %v513
        %v1385 = vpop.f32.mrf.mxu0
        %v1386 = vadd.f32 0.0, %v1385
        %v1387 = vpop.f32.mrf.mxu0
        %v1388 = vadd.f32 0.0, %v1387
        %v1389 = vpop.f32.mrf.mxu0
        %v1390 = vadd.f32 0.0, %v1389
        %v1391 = vpop.f32.mrf.mxu0
        %v1392 = vadd.f32 0.0, %v1391
        %1393 = vmatprep.mubr.bf16.mxu0 0
        %1394 = vmatmul.mubr.bf16.gmra.mxu0 %v514
        %v1395 = vpop.f32.mrf.mxu0
        %v1396 = vadd.f32 0.0, %v1395
        %v1397 = vpop.f32.mrf.mxu0
        %v1398 = vadd.f32 0.0, %v1397
        %v1399 = vpop.f32.mrf.mxu0
        %v1400 = vadd.f32 0.0, %v1399
        %v1401 = vpop.f32.mrf.mxu0
        %v1402 = vadd.f32 0.0, %v1401
        %1403 = vmatprep.mubr.bf16.mxu0 0
        %1404 = vmatmul.mubr.bf16.gmra.mxu0 %v515
        %v1405 = vpop.f32.mrf.mxu0
        %v1406 = vadd.f32 0.0, %v1405
        %v1407 = vpop.f32.mrf.mxu0
        %v1408 = vadd.f32 0.0, %v1407
        %v1409 = vpop.f32.mrf.mxu0
        %v1410 = vadd.f32 0.0, %v1409
        %v1411 = vpop.f32.mrf.mxu0
        %v1412 = vadd.f32 0.0, %v1411
        %1413 = vdwg.mxu0
        %1414 = vst [vmem:[%s249] sm:$0xff] %v743
        %1415 = vst [vmem:[%s249 + $0x8] sm:$0xff] %v745
        %1416 = vst [vmem:[%s249 + $0x10] sm:$0xff] %v1096
        %1417 = vst [vmem:[%s249 + $0x18] sm:$0xff] %v1098
        %1418 = vst [vmem:[%s249 + $0x20] sm:$0xff] %v747
        %1419 = vst [vmem:[%s249 + $0x28] sm:$0xff] %v749
        %1420 = vst [vmem:[%s249 + $0x30] sm:$0xff] %v1100
        %1421 = vst [vmem:[%s249 + $0x38] sm:$0xff] %v1102
        %1422 = vst [vmem:[%s249 + $0x40] sm:$0xff] %v753
        %1423 = vst [vmem:[%s249 + $0x48] sm:$0xff] %v755
        %1424 = vst [vmem:[%s249 + $0x50] sm:$0xff] %v1106
        %1425 = vst [vmem:[%s249 + $0x58] sm:$0xff] %v1108
        %1426 = vst [vmem:[%s249 + $0x60] sm:$0xff] %v757
        %1427 = vst [vmem:[%s249 + $0x68] sm:$0xff] %v759
        %1428 = vst [vmem:[%s249 + $0x70] sm:$0xff] %v1110
        %1429 = vst [vmem:[%s249 + $0x78] sm:$0xff] %v1112
        %1430 = vst [vmem:[%s249 + $0x80] sm:$0xff] %v763
        %1431 = vst [vmem:[%s249 + $0x88] sm:$0xff] %v765
        %1432 = vst [vmem:[%s249 + $0x90] sm:$0xff] %v1116
        %1433 = vst [vmem:[%s249 + $0x98] sm:$0xff] %v1118
        %1434 = vst [vmem:[%s249 + $0xa0] sm:$0xff] %v767
        %1435 = vst [vmem:[%s249 + $0xa8] sm:$0xff] %v769
        %1436 = vst [vmem:[%s249 + $0xb0] sm:$0xff] %v1120
        %1437 = vst [vmem:[%s249 + $0xb8] sm:$0xff] %v1122
        %1438 = vst [vmem:[%s249 + $0xc0] sm:$0xff] %v773
        %1439 = vst [vmem:[%s249 + $0xc8] sm:$0xff] %v775
        %1440 = vst [vmem:[%s249 + $0xd0] sm:$0xff] %v1126
        %1441 = vst [vmem:[%s249 + $0xd8] sm:$0xff] %v1128
        %1442 = vst [vmem:[%s249 + $0xe0] sm:$0xff] %v777
        %1443 = vst [vmem:[%s249 + $0xe8] sm:$0xff] %v779
        %1444 = vst [vmem:[%s249 + $0xf0] sm:$0xff] %v1130
        %1445 = vst [vmem:[%s249 + $0xf8] sm:$0xff] %v1132
        %1446 = vst [vmem:[%s249 + $0x100] sm:$0xff] %v783
        %1447 = vst [vmem:[%s249 + $0x108] sm:$0xff] %v785
        %1448 = vst [vmem:[%s249 + $0x110] sm:$0xff] %v1136
        %1449 = vst [vmem:[%s249 + $0x118] sm:$0xff] %v1138
        %1450 = vst [vmem:[%s249 + $0x120] sm:$0xff] %v787
        %1451 = vst [vmem:[%s249 + $0x128] sm:$0xff] %v789
        %1452 = vst [vmem:[%s249 + $0x130] sm:$0xff] %v1140
        %1453 = vst [vmem:[%s249 + $0x138] sm:$0xff] %v1142
        %1454 = vst [vmem:[%s249 + $0x140] sm:$0xff] %v793
        %1455 = vst [vmem:[%s249 + $0x148] sm:$0xff] %v795
        %1456 = vst [vmem:[%s249 + $0x150] sm:$0xff] %v1146
        %1457 = vst [vmem:[%s249 + $0x158] sm:$0xff] %v1148
        %1458 = vst [vmem:[%s249 + $0x160] sm:$0xff] %v797
        %1459 = vst [vmem:[%s249 + $0x168] sm:$0xff] %v799
        %1460 = vst [vmem:[%s249 + $0x170] sm:$0xff] %v1150
        %1461 = vst [vmem:[%s249 + $0x178] sm:$0xff] %v1152
        %1462 = vst [vmem:[%s249 + $0x180] sm:$0xff] %v803
        %1463 = vst [vmem:[%s249 + $0x188] sm:$0xff] %v805
        %1464 = vst [vmem:[%s249 + $0x190] sm:$0xff] %v1156
        %1465 = vst [vmem:[%s249 + $0x198] sm:$0xff] %v1158
        %1466 = vst [vmem:[%s249 + $0x1a0] sm:$0xff] %v807
        %1467 = vst [vmem:[%s249 + $0x1a8] sm:$0xff] %v809
        %1468 = vst [vmem:[%s249 + $0x1b0] sm:$0xff] %v1160
        %1469 = vst [vmem:[%s249 + $0x1b8] sm:$0xff] %v1162
        %1470 = vst [vmem:[%s249 + $0x1c0] sm:$0xff] %v813
        %1471 = vst [vmem:[%s249 + $0x1c8] sm:$0xff] %v815
        %1472 = vst [vmem:[%s249 + $0x1d0] sm:$0xff] %v1166
        %1473 = vst [vmem:[%s249 + $0x1d8] sm:$0xff] %v1168
        %1474 = vst [vmem:[%s249 + $0x1e0] sm:$0xff] %v817
        %1475 = vst [vmem:[%s249 + $0x1e8] sm:$0xff] %v819
        %1476 = vst [vmem:[%s249 + $0x1f0] sm:$0xff] %v1170
        %1477 = vst [vmem:[%s249 + $0x1f8] sm:$0xff] %v1172
        %1478 = vst [vmem:[%s249 + $0x200] sm:$0xff] %v823
        %1479 = vst [vmem:[%s249 + $0x208] sm:$0xff] %v825
        %1480 = vst [vmem:[%s249 + $0x210] sm:$0xff] %v1176
        %1481 = vst [vmem:[%s249 + $0x218] sm:$0xff] %v1178
        %1482 = vst [vmem:[%s249 + $0x220] sm:$0xff] %v827
        %1483 = vst [vmem:[%s249 + $0x228] sm:$0xff] %v829
        %1484 = vst [vmem:[%s249 + $0x230] sm:$0xff] %v1180
        %1485 = vst [vmem:[%s249 + $0x238] sm:$0xff] %v1182
        %1486 = vst [vmem:[%s249 + $0x240] sm:$0xff] %v833
        %1487 = vst [vmem:[%s249 + $0x248] sm:$0xff] %v835
        %1488 = vst [vmem:[%s249 + $0x250] sm:$0xff] %v1186
        %1489 = vst [vmem:[%s249 + $0x258] sm:$0xff] %v1188
        %1490 = vst [vmem:[%s249 + $0x260] sm:$0xff] %v837
        %1491 = vst [vmem:[%s249 + $0x268] sm:$0xff] %v839
        %1492 = vst [vmem:[%s249 + $0x270] sm:$0xff] %v1190
        %1493 = vst [vmem:[%s249 + $0x278] sm:$0xff] %v1192
        %1494 = vst [vmem:[%s249 + $0x280] sm:$0xff] %v843
        %1495 = vst [vmem:[%s249 + $0x288] sm:$0xff] %v845
        %1496 = vst [vmem:[%s249 + $0x290] sm:$0xff] %v1196
        %1497 = vst [vmem:[%s249 + $0x298] sm:$0xff] %v1198
        %1498 = vst [vmem:[%s249 + $0x2a0] sm:$0xff] %v847
        %1499 = vst [vmem:[%s249 + $0x2a8] sm:$0xff] %v849
        %1500 = vst [vmem:[%s249 + $0x2b0] sm:$0xff] %v1200
        %1501 = vst [vmem:[%s249 + $0x2b8] sm:$0xff] %v1202
        %1502 = vst [vmem:[%s249 + $0x2c0] sm:$0xff] %v853
        %1503 = vst [vmem:[%s249 + $0x2c8] sm:$0xff] %v855
        %1504 = vst [vmem:[%s249 + $0x2d0] sm:$0xff] %v1206
        %1505 = vst [vmem:[%s249 + $0x2d8] sm:$0xff] %v1208
        %1506 = vst [vmem:[%s249 + $0x2e0] sm:$0xff] %v857
        %1507 = vst [vmem:[%s249 + $0x2e8] sm:$0xff] %v859
        %1508 = vst [vmem:[%s249 + $0x2f0] sm:$0xff] %v1210
        %1509 = vst [vmem:[%s249 + $0x2f8] sm:$0xff] %v1212
        %1510 = vst [vmem:[%s249 + $0x300] sm:$0xff] %v863
        %1511 = vst [vmem:[%s249 + $0x308] sm:$0xff] %v865
        %1512 = vst [vmem:[%s249 + $0x310] sm:$0xff] %v1216
        %1513 = vst [vmem:[%s249 + $0x318] sm:$0xff] %v1218
        %1514 = vst [vmem:[%s249 + $0x320] sm:$0xff] %v867
        %1515 = vst [vmem:[%s249 + $0x328] sm:$0xff] %v869
        %1516 = vst [vmem:[%s249 + $0x330] sm:$0xff] %v1220
        %1517 = vst [vmem:[%s249 + $0x338] sm:$0xff] %v1222
        %1518 = vst [vmem:[%s249 + $0x340] sm:$0xff] %v873
        %1519 = vst [vmem:[%s249 + $0x348] sm:$0xff] %v875
        %1520 = vst [vmem:[%s249 + $0x350] sm:$0xff] %v1226
        %1521 = vst [vmem:[%s249 + $0x358] sm:$0xff] %v1228
        %1522 = vst [vmem:[%s249 + $0x360] sm:$0xff] %v877
        %1523 = vst [vmem:[%s249 + $0x368] sm:$0xff] %v879
        %1524 = vst [vmem:[%s249 + $0x370] sm:$0xff] %v1230
        %1525 = vst [vmem:[%s249 + $0x378] sm:$0xff] %v1232
        %1526 = vst [vmem:[%s249 + $0x380] sm:$0xff] %v883
        %1527 = vst [vmem:[%s249 + $0x388] sm:$0xff] %v885
        %1528 = vst [vmem:[%s249 + $0x390] sm:$0xff] %v1236
        %1529 = vst [vmem:[%s249 + $0x398] sm:$0xff] %v1238
        %1530 = vst [vmem:[%s249 + $0x3a0] sm:$0xff] %v887
        %1531 = vst [vmem:[%s249 + $0x3a8] sm:$0xff] %v889
        %1532 = vst [vmem:[%s249 + $0x3b0] sm:$0xff] %v1240
        %1533 = vst [vmem:[%s249 + $0x3b8] sm:$0xff] %v1242
        %1534 = vst [vmem:[%s249 + $0x3c0] sm:$0xff] %v893
        %1535 = vst [vmem:[%s249 + $0x3c8] sm:$0xff] %v895
        %1536 = vst [vmem:[%s249 + $0x3d0] sm:$0xff] %v1246
        %1537 = vst [vmem:[%s249 + $0x3d8] sm:$0xff] %v1248
        %1538 = vst [vmem:[%s249 + $0x3e0] sm:$0xff] %v897
        %1539 = vst [vmem:[%s249 + $0x3e8] sm:$0xff] %v899
        %1540 = vst [vmem:[%s249 + $0x3f0] sm:$0xff] %v1250
        %1541 = vst [vmem:[%s249 + $0x3f8] sm:$0xff] %v1252
        %1542 = vst [vmem:[%s249 + $0x400] sm:$0xff] %v903
        %1543 = vst [vmem:[%s249 + $0x408] sm:$0xff] %v905
        %1544 = vst [vmem:[%s249 + $0x410] sm:$0xff] %v1256
        %1545 = vst [vmem:[%s249 + $0x418] sm:$0xff] %v1258
        %1546 = vst [vmem:[%s249 + $0x420] sm:$0xff] %v907
        %1547 = vst [vmem:[%s249 + $0x428] sm:$0xff] %v909
        %1548 = vst [vmem:[%s249 + $0x430] sm:$0xff] %v1260
        %1549 = vst [vmem:[%s249 + $0x438] sm:$0xff] %v1262
        %1550 = vst [vmem:[%s249 + $0x440] sm:$0xff] %v913
        %1551 = vst [vmem:[%s249 + $0x448] sm:$0xff] %v915
        %1552 = vst [vmem:[%s249 + $0x450] sm:$0xff] %v1266
        %1553 = vst [vmem:[%s249 + $0x458] sm:$0xff] %v1268
        %1554 = vst [vmem:[%s249 + $0x460] sm:$0xff] %v917
        %1555 = vst [vmem:[%s249 + $0x468] sm:$0xff] %v919
        %1556 = vst [vmem:[%s249 + $0x470] sm:$0xff] %v1270
        %1557 = vst [vmem:[%s249 + $0x478] sm:$0xff] %v1272
        %1558 = vst [vmem:[%s249 + $0x480] sm:$0xff] %v923
        %1559 = vst [vmem:[%s249 + $0x488] sm:$0xff] %v925
        %1560 = vst [vmem:[%s249 + $0x490] sm:$0xff] %v1276
        %1561 = vst [vmem:[%s249 + $0x498] sm:$0xff] %v1278
        %1562 = vst [vmem:[%s249 + $0x4a0] sm:$0xff] %v927
        %1563 = vst [vmem:[%s249 + $0x4a8] sm:$0xff] %v929
        %1564 = vst [vmem:[%s249 + $0x4b0] sm:$0xff] %v1280
        %1565 = vst [vmem:[%s249 + $0x4b8] sm:$0xff] %v1282
        %1566 = vst [vmem:[%s249 + $0x4c0] sm:$0xff] %v933
        %1567 = vst [vmem:[%s249 + $0x4c8] sm:$0xff] %v935
        %1568 = vst [vmem:[%s249 + $0x4d0] sm:$0xff] %v1286
        %1569 = vst [vmem:[%s249 + $0x4d8] sm:$0xff] %v1288
        %1570 = vst [vmem:[%s249 + $0x4e0] sm:$0xff] %v937
        %1571 = vst [vmem:[%s249 + $0x4e8] sm:$0xff] %v939
        %1572 = vst [vmem:[%s249 + $0x4f0] sm:$0xff] %v1290
        %1573 = vst [vmem:[%s249 + $0x4f8] sm:$0xff] %v1292
        %1574 = vst [vmem:[%s249 + $0x500] sm:$0xff] %v943
        %1575 = vst [vmem:[%s249 + $0x508] sm:$0xff] %v945
        %1576 = vst [vmem:[%s249 + $0x510] sm:$0xff] %v1296
        %1577 = vst [vmem:[%s249 + $0x518] sm:$0xff] %v1298
        %1578 = vst [vmem:[%s249 + $0x520] sm:$0xff] %v947
        %1579 = vst [vmem:[%s249 + $0x528] sm:$0xff] %v949
        %1580 = vst [vmem:[%s249 + $0x530] sm:$0xff] %v1300
        %1581 = vst [vmem:[%s249 + $0x538] sm:$0xff] %v1302
        %1582 = vst [vmem:[%s249 + $0x540] sm:$0xff] %v953
        %1583 = vst [vmem:[%s249 + $0x548] sm:$0xff] %v955
        %1584 = vst [vmem:[%s249 + $0x550] sm:$0xff] %v1306
        %1585 = vst [vmem:[%s249 + $0x558] sm:$0xff] %v1308
        %1586 = vst [vmem:[%s249 + $0x560] sm:$0xff] %v957
        %1587 = vst [vmem:[%s249 + $0x568] sm:$0xff] %v959
        %1588 = vst [vmem:[%s249 + $0x570] sm:$0xff] %v1310
        %1589 = vst [vmem:[%s249 + $0x578] sm:$0xff] %v1312
        %1590 = vst [vmem:[%s249 + $0x580] sm:$0xff] %v963
        %1591 = vst [vmem:[%s249 + $0x588] sm:$0xff] %v965
        %1592 = vst [vmem:[%s249 + $0x590] sm:$0xff] %v1316
        %1593 = vst [vmem:[%s249 + $0x598] sm:$0xff] %v1318
        %1594 = vst [vmem:[%s249 + $0x5a0] sm:$0xff] %v967
        %1595 = vst [vmem:[%s249 + $0x5a8] sm:$0xff] %v969
        %1596 = vst [vmem:[%s249 + $0x5b0] sm:$0xff] %v1320
        %1597 = vst [vmem:[%s249 + $0x5b8] sm:$0xff] %v1322
        %1598 = vst [vmem:[%s249 + $0x5c0] sm:$0xff] %v973
        %1599 = vst [vmem:[%s249 + $0x5c8] sm:$0xff] %v975
        %1600 = vst [vmem:[%s249 + $0x5d0] sm:$0xff] %v1326
        %1601 = vst [vmem:[%s249 + $0x5d8] sm:$0xff] %v1328
        %1602 = vst [vmem:[%s249 + $0x5e0] sm:$0xff] %v977
        %1603 = vst [vmem:[%s249 + $0x5e8] sm:$0xff] %v979
        %1604 = vst [vmem:[%s249 + $0x5f0] sm:$0xff] %v1330
        %1605 = vst [vmem:[%s249 + $0x5f8] sm:$0xff] %v1332
        %1606 = vst [vmem:[%s249 + $0x600] sm:$0xff] %v983
        %1607 = vst [vmem:[%s249 + $0x608] sm:$0xff] %v985
        %1608 = vst [vmem:[%s249 + $0x610] sm:$0xff] %v1336
        %1609 = vst [vmem:[%s249 + $0x618] sm:$0xff] %v1338
        %1610 = vst [vmem:[%s249 + $0x620] sm:$0xff] %v987
        %1611 = vst [vmem:[%s249 + $0x628] sm:$0xff] %v989
        %1612 = vst [vmem:[%s249 + $0x630] sm:$0xff] %v1340
        %1613 = vst [vmem:[%s249 + $0x638] sm:$0xff] %v1342
        %1614 = vst [vmem:[%s249 + $0x640] sm:$0xff] %v993
        %1615 = vst [vmem:[%s249 + $0x648] sm:$0xff] %v995
        %1616 = vst [vmem:[%s249 + $0x650] sm:$0xff] %v1346
        %1617 = vst [vmem:[%s249 + $0x658] sm:$0xff] %v1348
        %1618 = vst [vmem:[%s249 + $0x660] sm:$0xff] %v997
        %1619 = vst [vmem:[%s249 + $0x668] sm:$0xff] %v999
        %1620 = vst [vmem:[%s249 + $0x670] sm:$0xff] %v1350
        %1621 = vst [vmem:[%s249 + $0x678] sm:$0xff] %v1352
        %1622 = vst [vmem:[%s249 + $0x680] sm:$0xff] %v1003
        %1623 = vst [vmem:[%s249 + $0x688] sm:$0xff] %v1005
        %1624 = vst [vmem:[%s249 + $0x690] sm:$0xff] %v1356
        %1625 = vst [vmem:[%s249 + $0x698] sm:$0xff] %v1358
        %1626 = vst [vmem:[%s249 + $0x6a0] sm:$0xff] %v1007
        %1627 = vst [vmem:[%s249 + $0x6a8] sm:$0xff] %v1009
        %1628 = vst [vmem:[%s249 + $0x6b0] sm:$0xff] %v1360
        %1629 = vst [vmem:[%s249 + $0x6b8] sm:$0xff] %v1362
        %1630 = vst [vmem:[%s249 + $0x6c0] sm:$0xff] %v1013
        %1631 = vst [vmem:[%s249 + $0x6c8] sm:$0xff] %v1015
        %1632 = vst [vmem:[%s249 + $0x6d0] sm:$0xff] %v1366
        %1633 = vst [vmem:[%s249 + $0x6d8] sm:$0xff] %v1368
        %1634 = vst [vmem:[%s249 + $0x6e0] sm:$0xff] %v1017
        %1635 = vst [vmem:[%s249 + $0x6e8] sm:$0xff] %v1019
        %1636 = vst [vmem:[%s249 + $0x6f0] sm:$0xff] %v1370
        %1637 = vst [vmem:[%s249 + $0x6f8] sm:$0xff] %v1372
        %1638 = vst [vmem:[%s249 + $0x700] sm:$0xff] %v1023
        %1639 = vst [vmem:[%s249 + $0x708] sm:$0xff] %v1025
        %1640 = vst [vmem:[%s249 + $0x710] sm:$0xff] %v1376
        %1641 = vst [vmem:[%s249 + $0x718] sm:$0xff] %v1378
        %1642 = vst [vmem:[%s249 + $0x720] sm:$0xff] %v1027
        %1643 = vst [vmem:[%s249 + $0x728] sm:$0xff] %v1029
        %1644 = vst [vmem:[%s249 + $0x730] sm:$0xff] %v1380
        %1645 = vst [vmem:[%s249 + $0x738] sm:$0xff] %v1382
        %1646 = vst [vmem:[%s249 + $0x740] sm:$0xff] %v1033
        %1647 = vst [vmem:[%s249 + $0x748] sm:$0xff] %v1035
        %1648 = vst [vmem:[%s249 + $0x750] sm:$0xff] %v1386
        %1649 = vst [vmem:[%s249 + $0x758] sm:$0xff] %v1388
        %1650 = vst [vmem:[%s249 + $0x760] sm:$0xff] %v1037
        %1651 = vst [vmem:[%s249 + $0x768] sm:$0xff] %v1039
        %1652 = vst [vmem:[%s249 + $0x770] sm:$0xff] %v1390
        %1653 = vst [vmem:[%s249 + $0x778] sm:$0xff] %v1392
        %1654 = vst [vmem:[%s249 + $0x780] sm:$0xff] %v1043
        %1655 = vst [vmem:[%s249 + $0x788] sm:$0xff] %v1045
        %1656 = vst [vmem:[%s249 + $0x790] sm:$0xff] %v1396
        %1657 = vst [vmem:[%s249 + $0x798] sm:$0xff] %v1398
        %1658 = vst [vmem:[%s249 + $0x7a0] sm:$0xff] %v1047
        %1659 = vst [vmem:[%s249 + $0x7a8] sm:$0xff] %v1049
        %1660 = vst [vmem:[%s249 + $0x7b0] sm:$0xff] %v1400
        %1661 = vst [vmem:[%s249 + $0x7b8] sm:$0xff] %v1402
        %1662 = vst [vmem:[%s249 + $0x7c0] sm:$0xff] %v1053
        %1663 = vst [vmem:[%s249 + $0x7c8] sm:$0xff] %v1055
        %1664 = vst [vmem:[%s249 + $0x7d0] sm:$0xff] %v1406
        %1665 = vst [vmem:[%s249 + $0x7d8] sm:$0xff] %v1408
        %1666 = vst [vmem:[%s249 + $0x7e0] sm:$0xff] %v1057
        %1667 = vst [vmem:[%s249 + $0x7e8] sm:$0xff] %v1059
        %1668 = vst [vmem:[%s249 + $0x7f0] sm:$0xff] %v1410
        %1669 = vst [vmem:[%s249 + $0x7f8] sm:$0xff] %v1412
        %s1670 = sand.u32 %s87, 1
        %s1671 = sand.u32 %s87, 1
        %s1672 = smul.addr %s1671, 2048
        %s1673 = scalar_lea.vmem [#allocation3], %s1672
        // Predicated region
        $region52: #{generator_forward.9} parent=46 // pred_check
          %p1674 = pneg %p97
        $region53: #{generator_forward.9} parent=46 // pred_check_branch
          %1676 = sbr.rel (%p1674) target = $region55
        $region54: #{generator_forward.9} parent=46 // pred_region
          %s1677 = smul.u32 64, %s17
          %s1678 = smul.u32 4, %s18
          %s1679 = smul.addr %s1677, 8
          %s1680 = sadd.s32 %s1678, %s1679
          %s1681 = smul.addr %s1680, 8
          %s1682 = scalar_lea.vmem %s2, %s1681
          // Predicated region
          $region56: #{generator_forward.9} parent=54 // pred_check
            _
          $region57: #{generator_forward.9} parent=54 // pred_check_branch
            %1684 = sbr.rel (0) target = $region59
          $region58: #{generator_forward.9} parent=54 // pred_region
            // Predicated region
            $region60: #{generator_forward.9} parent=58 // pred_check
              _
            $region61: #{generator_forward.9} parent=58 // pred_check_branch
              %1686 = sbr.rel (0) target = $region63
            $region62: #{generator_forward.9} parent=58 // pred_region
              loop: start=0, step=1, limit=1
              $region64: #{generator_forward.9} parent=62 // loop_pre_header
                _
              $region65: #{generator_forward.9} parent=62 // loop_header
                %s1688 = sphi 0, %s1692
                %p1689 = scmp.ge.s32.totalorder %s1688, 1
                %s1693 = sphi %s1673, %s1673
                %s1694 = sphi %s1682, %s1682
              $region66: #{generator_forward.9} parent=62 // loop_header_branch
                %1691 = sbr.rel (%p1689) target = $region70
              $region67: #{generator_forward.9} parent=62 // loop_body
                %v1695 = vld [vmem:[%s1693] sm:$0xff]
                %1696 = vst [vmem:[%s1694] sm:$0xff] %v1695
                %v1697 = vld [vmem:[%s1693 + $0x8] sm:$0xff]
                %1698 = vst [vmem:[%s1694 + $0x8] sm:$0xff] %v1697
                %v1699 = vld [vmem:[%s1693 + $0x10] sm:$0xff]
                %1700 = vst [vmem:[%s1694 + $0x10] sm:$0xff] %v1699
                %v1701 = vld [vmem:[%s1693 + $0x18] sm:$0xff]
                %1702 = vst [vmem:[%s1694 + $0x18] sm:$0xff] %v1701
                %v1703 = vld [vmem:[%s1693 + $0x20] sm:$0xff]
                %1704 = vst [vmem:[%s1694 + $0x40] sm:$0xff] %v1703
                %v1705 = vld [vmem:[%s1693 + $0x28] sm:$0xff]
                %1706 = vst [vmem:[%s1694 + $0x48] sm:$0xff] %v1705
                %v1707 = vld [vmem:[%s1693 + $0x30] sm:$0xff]
                %1708 = vst [vmem:[%s1694 + $0x50] sm:$0xff] %v1707
                %v1709 = vld [vmem:[%s1693 + $0x38] sm:$0xff]
                %1710 = vst [vmem:[%s1694 + $0x58] sm:$0xff] %v1709
                %v1711 = vld [vmem:[%s1693 + $0x40] sm:$0xff]
                %1712 = vst [vmem:[%s1694 + $0x80] sm:$0xff] %v1711
                %v1713 = vld [vmem:[%s1693 + $0x48] sm:$0xff]
                %1714 = vst [vmem:[%s1694 + $0x88] sm:$0xff] %v1713
                %v1715 = vld [vmem:[%s1693 + $0x50] sm:$0xff]
                %1716 = vst [vmem:[%s1694 + $0x90] sm:$0xff] %v1715
                %v1717 = vld [vmem:[%s1693 + $0x58] sm:$0xff]
                %1718 = vst [vmem:[%s1694 + $0x98] sm:$0xff] %v1717
                %v1719 = vld [vmem:[%s1693 + $0x60] sm:$0xff]
                %1720 = vst [vmem:[%s1694 + $0xc0] sm:$0xff] %v1719
                %v1721 = vld [vmem:[%s1693 + $0x68] sm:$0xff]
                %1722 = vst [vmem:[%s1694 + $0xc8] sm:$0xff] %v1721
                %v1723 = vld [vmem:[%s1693 + $0x70] sm:$0xff]
                %1724 = vst [vmem:[%s1694 + $0xd0] sm:$0xff] %v1723
                %v1725 = vld [vmem:[%s1693 + $0x78] sm:$0xff]
                %1726 = vst [vmem:[%s1694 + $0xd8] sm:$0xff] %v1725
                %v1727 = vld [vmem:[%s1693 + $0x80] sm:$0xff]
                %1728 = vst [vmem:[%s1694 + $0x100] sm:$0xff] %v1727
                %v1729 = vld [vmem:[%s1693 + $0x88] sm:$0xff]
                %1730 = vst [vmem:[%s1694 + $0x108] sm:$0xff] %v1729
                %v1731 = vld [vmem:[%s1693 + $0x90] sm:$0xff]
                %1732 = vst [vmem:[%s1694 + $0x110] sm:$0xff] %v1731
                %v1733 = vld [vmem:[%s1693 + $0x98] sm:$0xff]
                %1734 = vst [vmem:[%s1694 + $0x118] sm:$0xff] %v1733
                %v1735 = vld [vmem:[%s1693 + $0xa0] sm:$0xff]
                %1736 = vst [vmem:[%s1694 + $0x140] sm:$0xff] %v1735
                %v1737 = vld [vmem:[%s1693 + $0xa8] sm:$0xff]
                %1738 = vst [vmem:[%s1694 + $0x148] sm:$0xff] %v1737
                %v1739 = vld [vmem:[%s1693 + $0xb0] sm:$0xff]
                %1740 = vst [vmem:[%s1694 + $0x150] sm:$0xff] %v1739
                %v1741 = vld [vmem:[%s1693 + $0xb8] sm:$0xff]
                %1742 = vst [vmem:[%s1694 + $0x158] sm:$0xff] %v1741
                %v1743 = vld [vmem:[%s1693 + $0xc0] sm:$0xff]
                %1744 = vst [vmem:[%s1694 + $0x180] sm:$0xff] %v1743
                %v1745 = vld [vmem:[%s1693 + $0xc8] sm:$0xff]
                %1746 = vst [vmem:[%s1694 + $0x188] sm:$0xff] %v1745
                %v1747 = vld [vmem:[%s1693 + $0xd0] sm:$0xff]
                %1748 = vst [vmem:[%s1694 + $0x190] sm:$0xff] %v1747
                %v1749 = vld [vmem:[%s1693 + $0xd8] sm:$0xff]
                %1750 = vst [vmem:[%s1694 + $0x198] sm:$0xff] %v1749
                %v1751 = vld [vmem:[%s1693 + $0xe0] sm:$0xff]
                %1752 = vst [vmem:[%s1694 + $0x1c0] sm:$0xff] %v1751
                %v1753 = vld [vmem:[%s1693 + $0xe8] sm:$0xff]
                %1754 = vst [vmem:[%s1694 + $0x1c8] sm:$0xff] %v1753
                %v1755 = vld [vmem:[%s1693 + $0xf0] sm:$0xff]
                %1756 = vst [vmem:[%s1694 + $0x1d0] sm:$0xff] %v1755
                %v1757 = vld [vmem:[%s1693 + $0xf8] sm:$0xff]
                %1758 = vst [vmem:[%s1694 + $0x1d8] sm:$0xff] %v1757
                %v1759 = vld [vmem:[%s1693 + $0x100] sm:$0xff]
                %1760 = vst [vmem:[%s1694 + $0x200] sm:$0xff] %v1759
                %v1761 = vld [vmem:[%s1693 + $0x108] sm:$0xff]
                %1762 = vst [vmem:[%s1694 + $0x208] sm:$0xff] %v1761
                %v1763 = vld [vmem:[%s1693 + $0x110] sm:$0xff]
                %1764 = vst [vmem:[%s1694 + $0x210] sm:$0xff] %v1763
                %v1765 = vld [vmem:[%s1693 + $0x118] sm:$0xff]
                %1766 = vst [vmem:[%s1694 + $0x218] sm:$0xff] %v1765
                %v1767 = vld [vmem:[%s1693 + $0x120] sm:$0xff]
                %1768 = vst [vmem:[%s1694 + $0x240] sm:$0xff] %v1767
                %v1769 = vld [vmem:[%s1693 + $0x128] sm:$0xff]
                %1770 = vst [vmem:[%s1694 + $0x248] sm:$0xff] %v1769
                %v1771 = vld [vmem:[%s1693 + $0x130] sm:$0xff]
                %1772 = vst [vmem:[%s1694 + $0x250] sm:$0xff] %v1771
                %v1773 = vld [vmem:[%s1693 + $0x138] sm:$0xff]
                %1774 = vst [vmem:[%s1694 + $0x258] sm:$0xff] %v1773
                %v1775 = vld [vmem:[%s1693 + $0x140] sm:$0xff]
                %1776 = vst [vmem:[%s1694 + $0x280] sm:$0xff] %v1775
                %v1777 = vld [vmem:[%s1693 + $0x148] sm:$0xff]
                %1778 = vst [vmem:[%s1694 + $0x288] sm:$0xff] %v1777
                %v1779 = vld [vmem:[%s1693 + $0x150] sm:$0xff]
                %1780 = vst [vmem:[%s1694 + $0x290] sm:$0xff] %v1779
                %v1781 = vld [vmem:[%s1693 + $0x158] sm:$0xff]
                %1782 = vst [vmem:[%s1694 + $0x298] sm:$0xff] %v1781
                %v1783 = vld [vmem:[%s1693 + $0x160] sm:$0xff]
                %1784 = vst [vmem:[%s1694 + $0x2c0] sm:$0xff] %v1783
                %v1785 = vld [vmem:[%s1693 + $0x168] sm:$0xff]
                %1786 = vst [vmem:[%s1694 + $0x2c8] sm:$0xff] %v1785
                %v1787 = vld [vmem:[%s1693 + $0x170] sm:$0xff]
                %1788 = vst [vmem:[%s1694 + $0x2d0] sm:$0xff] %v1787
                %v1789 = vld [vmem:[%s1693 + $0x178] sm:$0xff]
                %1790 = vst [vmem:[%s1694 + $0x2d8] sm:$0xff] %v1789
                %v1791 = vld [vmem:[%s1693 + $0x180] sm:$0xff]
                %1792 = vst [vmem:[%s1694 + $0x300] sm:$0xff] %v1791
                %v1793 = vld [vmem:[%s1693 + $0x188] sm:$0xff]
                %1794 = vst [vmem:[%s1694 + $0x308] sm:$0xff] %v1793
                %v1795 = vld [vmem:[%s1693 + $0x190] sm:$0xff]
                %1796 = vst [vmem:[%s1694 + $0x310] sm:$0xff] %v1795
                %v1797 = vld [vmem:[%s1693 + $0x198] sm:$0xff]
                %1798 = vst [vmem:[%s1694 + $0x318] sm:$0xff] %v1797
                %v1799 = vld [vmem:[%s1693 + $0x1a0] sm:$0xff]
                %1800 = vst [vmem:[%s1694 + $0x340] sm:$0xff] %v1799
                %v1801 = vld [vmem:[%s1693 + $0x1a8] sm:$0xff]
                %1802 = vst [vmem:[%s1694 + $0x348] sm:$0xff] %v1801
                %v1803 = vld [vmem:[%s1693 + $0x1b0] sm:$0xff]
                %1804 = vst [vmem:[%s1694 + $0x350] sm:$0xff] %v1803
                %v1805 = vld [vmem:[%s1693 + $0x1b8] sm:$0xff]
                %1806 = vst [vmem:[%s1694 + $0x358] sm:$0xff] %v1805
                %v1807 = vld [vmem:[%s1693 + $0x1c0] sm:$0xff]
                %1808 = vst [vmem:[%s1694 + $0x380] sm:$0xff] %v1807
                %v1809 = vld [vmem:[%s1693 + $0x1c8] sm:$0xff]
                %1810 = vst [vmem:[%s1694 + $0x388] sm:$0xff] %v1809
                %v1811 = vld [vmem:[%s1693 + $0x1d0] sm:$0xff]
                %1812 = vst [vmem:[%s1694 + $0x390] sm:$0xff] %v1811
                %v1813 = vld [vmem:[%s1693 + $0x1d8] sm:$0xff]
                %1814 = vst [vmem:[%s1694 + $0x398] sm:$0xff] %v1813
                %v1815 = vld [vmem:[%s1693 + $0x1e0] sm:$0xff]
                %1816 = vst [vmem:[%s1694 + $0x3c0] sm:$0xff] %v1815
                %v1817 = vld [vmem:[%s1693 + $0x1e8] sm:$0xff]
                %1818 = vst [vmem:[%s1694 + $0x3c8] sm:$0xff] %v1817
                %v1819 = vld [vmem:[%s1693 + $0x1f0] sm:$0xff]
                %1820 = vst [vmem:[%s1694 + $0x3d0] sm:$0xff] %v1819
                %v1821 = vld [vmem:[%s1693 + $0x1f8] sm:$0xff]
                %1822 = vst [vmem:[%s1694 + $0x3d8] sm:$0xff] %v1821
                %v1823 = vld [vmem:[%s1693 + $0x200] sm:$0xff]
                %1824 = vst [vmem:[%s1694 + $0x400] sm:$0xff] %v1823
                %v1825 = vld [vmem:[%s1693 + $0x208] sm:$0xff]
                %1826 = vst [vmem:[%s1694 + $0x408] sm:$0xff] %v1825
                %v1827 = vld [vmem:[%s1693 + $0x210] sm:$0xff]
                %1828 = vst [vmem:[%s1694 + $0x410] sm:$0xff] %v1827
                %v1829 = vld [vmem:[%s1693 + $0x218] sm:$0xff]
                %1830 = vst [vmem:[%s1694 + $0x418] sm:$0xff] %v1829
                %v1831 = vld [vmem:[%s1693 + $0x220] sm:$0xff]
                %1832 = vst [vmem:[%s1694 + $0x440] sm:$0xff] %v1831
                %v1833 = vld [vmem:[%s1693 + $0x228] sm:$0xff]
                %1834 = vst [vmem:[%s1694 + $0x448] sm:$0xff] %v1833
                %v1835 = vld [vmem:[%s1693 + $0x230] sm:$0xff]
                %1836 = vst [vmem:[%s1694 + $0x450] sm:$0xff] %v1835
                %v1837 = vld [vmem:[%s1693 + $0x238] sm:$0xff]
                %1838 = vst [vmem:[%s1694 + $0x458] sm:$0xff] %v1837
                %v1839 = vld [vmem:[%s1693 + $0x240] sm:$0xff]
                %1840 = vst [vmem:[%s1694 + $0x480] sm:$0xff] %v1839
                %v1841 = vld [vmem:[%s1693 + $0x248] sm:$0xff]
                %1842 = vst [vmem:[%s1694 + $0x488] sm:$0xff] %v1841
                %v1843 = vld [vmem:[%s1693 + $0x250] sm:$0xff]
                %1844 = vst [vmem:[%s1694 + $0x490] sm:$0xff] %v1843
                %v1845 = vld [vmem:[%s1693 + $0x258] sm:$0xff]
                %1846 = vst [vmem:[%s1694 + $0x498] sm:$0xff] %v1845
                %v1847 = vld [vmem:[%s1693 + $0x260] sm:$0xff]
                %1848 = vst [vmem:[%s1694 + $0x4c0] sm:$0xff] %v1847
                %v1849 = vld [vmem:[%s1693 + $0x268] sm:$0xff]
                %1850 = vst [vmem:[%s1694 + $0x4c8] sm:$0xff] %v1849
                %v1851 = vld [vmem:[%s1693 + $0x270] sm:$0xff]
                %1852 = vst [vmem:[%s1694 + $0x4d0] sm:$0xff] %v1851
                %v1853 = vld [vmem:[%s1693 + $0x278] sm:$0xff]
                %1854 = vst [vmem:[%s1694 + $0x4d8] sm:$0xff] %v1853
                %v1855 = vld [vmem:[%s1693 + $0x280] sm:$0xff]
                %1856 = vst [vmem:[%s1694 + $0x500] sm:$0xff] %v1855
                %v1857 = vld [vmem:[%s1693 + $0x288] sm:$0xff]
                %1858 = vst [vmem:[%s1694 + $0x508] sm:$0xff] %v1857
                %v1859 = vld [vmem:[%s1693 + $0x290] sm:$0xff]
                %1860 = vst [vmem:[%s1694 + $0x510] sm:$0xff] %v1859
                %v1861 = vld [vmem:[%s1693 + $0x298] sm:$0xff]
                %1862 = vst [vmem:[%s1694 + $0x518] sm:$0xff] %v1861
                %v1863 = vld [vmem:[%s1693 + $0x2a0] sm:$0xff]
                %1864 = vst [vmem:[%s1694 + $0x540] sm:$0xff] %v1863
                %v1865 = vld [vmem:[%s1693 + $0x2a8] sm:$0xff]
                %1866 = vst [vmem:[%s1694 + $0x548] sm:$0xff] %v1865
                %v1867 = vld [vmem:[%s1693 + $0x2b0] sm:$0xff]
                %1868 = vst [vmem:[%s1694 + $0x550] sm:$0xff] %v1867
                %v1869 = vld [vmem:[%s1693 + $0x2b8] sm:$0xff]
                %1870 = vst [vmem:[%s1694 + $0x558] sm:$0xff] %v1869
                %v1871 = vld [vmem:[%s1693 + $0x2c0] sm:$0xff]
                %1872 = vst [vmem:[%s1694 + $0x580] sm:$0xff] %v1871
                %v1873 = vld [vmem:[%s1693 + $0x2c8] sm:$0xff]
                %1874 = vst [vmem:[%s1694 + $0x588] sm:$0xff] %v1873
                %v1875 = vld [vmem:[%s1693 + $0x2d0] sm:$0xff]
                %1876 = vst [vmem:[%s1694 + $0x590] sm:$0xff] %v1875
                %v1877 = vld [vmem:[%s1693 + $0x2d8] sm:$0xff]
                %1878 = vst [vmem:[%s1694 + $0x598] sm:$0xff] %v1877
                %v1879 = vld [vmem:[%s1693 + $0x2e0] sm:$0xff]
                %1880 = vst [vmem:[%s1694 + $0x5c0] sm:$0xff] %v1879
                %v1881 = vld [vmem:[%s1693 + $0x2e8] sm:$0xff]
                %1882 = vst [vmem:[%s1694 + $0x5c8] sm:$0xff] %v1881
                %v1883 = vld [vmem:[%s1693 + $0x2f0] sm:$0xff]
                %1884 = vst [vmem:[%s1694 + $0x5d0] sm:$0xff] %v1883
                %v1885 = vld [vmem:[%s1693 + $0x2f8] sm:$0xff]
                %1886 = vst [vmem:[%s1694 + $0x5d8] sm:$0xff] %v1885
                %v1887 = vld [vmem:[%s1693 + $0x300] sm:$0xff]
                %1888 = vst [vmem:[%s1694 + $0x600] sm:$0xff] %v1887
                %v1889 = vld [vmem:[%s1693 + $0x308] sm:$0xff]
                %1890 = vst [vmem:[%s1694 + $0x608] sm:$0xff] %v1889
                %v1891 = vld [vmem:[%s1693 + $0x310] sm:$0xff]
                %1892 = vst [vmem:[%s1694 + $0x610] sm:$0xff] %v1891
                %v1893 = vld [vmem:[%s1693 + $0x318] sm:$0xff]
                %1894 = vst [vmem:[%s1694 + $0x618] sm:$0xff] %v1893
                %v1895 = vld [vmem:[%s1693 + $0x320] sm:$0xff]
                %1896 = vst [vmem:[%s1694 + $0x640] sm:$0xff] %v1895
                %v1897 = vld [vmem:[%s1693 + $0x328] sm:$0xff]
                %1898 = vst [vmem:[%s1694 + $0x648] sm:$0xff] %v1897
                %v1899 = vld [vmem:[%s1693 + $0x330] sm:$0xff]
                %1900 = vst [vmem:[%s1694 + $0x650] sm:$0xff] %v1899
                %v1901 = vld [vmem:[%s1693 + $0x338] sm:$0xff]
                %1902 = vst [vmem:[%s1694 + $0x658] sm:$0xff] %v1901
                %v1903 = vld [vmem:[%s1693 + $0x340] sm:$0xff]
                %1904 = vst [vmem:[%s1694 + $0x680] sm:$0xff] %v1903
                %v1905 = vld [vmem:[%s1693 + $0x348] sm:$0xff]
                %1906 = vst [vmem:[%s1694 + $0x688] sm:$0xff] %v1905
                %v1907 = vld [vmem:[%s1693 + $0x350] sm:$0xff]
                %1908 = vst [vmem:[%s1694 + $0x690] sm:$0xff] %v1907
                %v1909 = vld [vmem:[%s1693 + $0x358] sm:$0xff]
                %1910 = vst [vmem:[%s1694 + $0x698] sm:$0xff] %v1909
                %v1911 = vld [vmem:[%s1693 + $0x360] sm:$0xff]
                %1912 = vst [vmem:[%s1694 + $0x6c0] sm:$0xff] %v1911
                %v1913 = vld [vmem:[%s1693 + $0x368] sm:$0xff]
                %1914 = vst [vmem:[%s1694 + $0x6c8] sm:$0xff] %v1913
                %v1915 = vld [vmem:[%s1693 + $0x370] sm:$0xff]
                %1916 = vst [vmem:[%s1694 + $0x6d0] sm:$0xff] %v1915
                %v1917 = vld [vmem:[%s1693 + $0x378] sm:$0xff]
                %1918 = vst [vmem:[%s1694 + $0x6d8] sm:$0xff] %v1917
                %v1919 = vld [vmem:[%s1693 + $0x380] sm:$0xff]
                %1920 = vst [vmem:[%s1694 + $0x700] sm:$0xff] %v1919
                %v1921 = vld [vmem:[%s1693 + $0x388] sm:$0xff]
                %1922 = vst [vmem:[%s1694 + $0x708] sm:$0xff] %v1921
                %v1923 = vld [vmem:[%s1693 + $0x390] sm:$0xff]
                %1924 = vst [vmem:[%s1694 + $0x710] sm:$0xff] %v1923
                %v1925 = vld [vmem:[%s1693 + $0x398] sm:$0xff]
                %1926 = vst [vmem:[%s1694 + $0x718] sm:$0xff] %v1925
                %v1927 = vld [vmem:[%s1693 + $0x3a0] sm:$0xff]
                %1928 = vst [vmem:[%s1694 + $0x740] sm:$0xff] %v1927
                %v1929 = vld [vmem:[%s1693 + $0x3a8] sm:$0xff]
                %1930 = vst [vmem:[%s1694 + $0x748] sm:$0xff] %v1929
                %v1931 = vld [vmem:[%s1693 + $0x3b0] sm:$0xff]
                %1932 = vst [vmem:[%s1694 + $0x750] sm:$0xff] %v1931
                %v1933 = vld [vmem:[%s1693 + $0x3b8] sm:$0xff]
                %1934 = vst [vmem:[%s1694 + $0x758] sm:$0xff] %v1933
                %v1935 = vld [vmem:[%s1693 + $0x3c0] sm:$0xff]
                %1936 = vst [vmem:[%s1694 + $0x780] sm:$0xff] %v1935
                %v1937 = vld [vmem:[%s1693 + $0x3c8] sm:$0xff]
                %1938 = vst [vmem:[%s1694 + $0x788] sm:$0xff] %v1937
                %v1939 = vld [vmem:[%s1693 + $0x3d0] sm:$0xff]
                %1940 = vst [vmem:[%s1694 + $0x790] sm:$0xff] %v1939
                %v1941 = vld [vmem:[%s1693 + $0x3d8] sm:$0xff]
                %1942 = vst [vmem:[%s1694 + $0x798] sm:$0xff] %v1941
                %v1943 = vld [vmem:[%s1693 + $0x3e0] sm:$0xff]
                %1944 = vst [vmem:[%s1694 + $0x7c0] sm:$0xff] %v1943
                %v1945 = vld [vmem:[%s1693 + $0x3e8] sm:$0xff]
                %1946 = vst [vmem:[%s1694 + $0x7c8] sm:$0xff] %v1945
                %v1947 = vld [vmem:[%s1693 + $0x3f0] sm:$0xff]
                %1948 = vst [vmem:[%s1694 + $0x7d0] sm:$0xff] %v1947
                %v1949 = vld [vmem:[%s1693 + $0x3f8] sm:$0xff]
                %1950 = vst [vmem:[%s1694 + $0x7d8] sm:$0xff] %v1949
                %v1951 = vld [vmem:[%s1693 + $0x400] sm:$0xff]
                %1952 = vst [vmem:[%s1694 + $0x800] sm:$0xff] %v1951
                %v1953 = vld [vmem:[%s1693 + $0x408] sm:$0xff]
                %1954 = vst [vmem:[%s1694 + $0x808] sm:$0xff] %v1953
                %v1955 = vld [vmem:[%s1693 + $0x410] sm:$0xff]
                %1956 = vst [vmem:[%s1694 + $0x810] sm:$0xff] %v1955
                %v1957 = vld [vmem:[%s1693 + $0x418] sm:$0xff]
                %1958 = vst [vmem:[%s1694 + $0x818] sm:$0xff] %v1957
                %v1959 = vld [vmem:[%s1693 + $0x420] sm:$0xff]
                %1960 = vst [vmem:[%s1694 + $0x840] sm:$0xff] %v1959
                %v1961 = vld [vmem:[%s1693 + $0x428] sm:$0xff]
                %1962 = vst [vmem:[%s1694 + $0x848] sm:$0xff] %v1961
                %v1963 = vld [vmem:[%s1693 + $0x430] sm:$0xff]
                %1964 = vst [vmem:[%s1694 + $0x850] sm:$0xff] %v1963
                %v1965 = vld [vmem:[%s1693 + $0x438] sm:$0xff]
                %1966 = vst [vmem:[%s1694 + $0x858] sm:$0xff] %v1965
                %v1967 = vld [vmem:[%s1693 + $0x440] sm:$0xff]
                %1968 = vst [vmem:[%s1694 + $0x880] sm:$0xff] %v1967
                %v1969 = vld [vmem:[%s1693 + $0x448] sm:$0xff]
                %1970 = vst [vmem:[%s1694 + $0x888] sm:$0xff] %v1969
                %v1971 = vld [vmem:[%s1693 + $0x450] sm:$0xff]
                %1972 = vst [vmem:[%s1694 + $0x890] sm:$0xff] %v1971
                %v1973 = vld [vmem:[%s1693 + $0x458] sm:$0xff]
                %1974 = vst [vmem:[%s1694 + $0x898] sm:$0xff] %v1973
                %v1975 = vld [vmem:[%s1693 + $0x460] sm:$0xff]
                %1976 = vst [vmem:[%s1694 + $0x8c0] sm:$0xff] %v1975
                %v1977 = vld [vmem:[%s1693 + $0x468] sm:$0xff]
                %1978 = vst [vmem:[%s1694 + $0x8c8] sm:$0xff] %v1977
                %v1979 = vld [vmem:[%s1693 + $0x470] sm:$0xff]
                %1980 = vst [vmem:[%s1694 + $0x8d0] sm:$0xff] %v1979
                %v1981 = vld [vmem:[%s1693 + $0x478] sm:$0xff]
                %1982 = vst [vmem:[%s1694 + $0x8d8] sm:$0xff] %v1981
                %v1983 = vld [vmem:[%s1693 + $0x480] sm:$0xff]
                %1984 = vst [vmem:[%s1694 + $0x900] sm:$0xff] %v1983
                %v1985 = vld [vmem:[%s1693 + $0x488] sm:$0xff]
                %1986 = vst [vmem:[%s1694 + $0x908] sm:$0xff] %v1985
                %v1987 = vld [vmem:[%s1693 + $0x490] sm:$0xff]
                %1988 = vst [vmem:[%s1694 + $0x910] sm:$0xff] %v1987
                %v1989 = vld [vmem:[%s1693 + $0x498] sm:$0xff]
                %1990 = vst [vmem:[%s1694 + $0x918] sm:$0xff] %v1989
                %v1991 = vld [vmem:[%s1693 + $0x4a0] sm:$0xff]
                %1992 = vst [vmem:[%s1694 + $0x940] sm:$0xff] %v1991
                %v1993 = vld [vmem:[%s1693 + $0x4a8] sm:$0xff]
                %1994 = vst [vmem:[%s1694 + $0x948] sm:$0xff] %v1993
                %v1995 = vld [vmem:[%s1693 + $0x4b0] sm:$0xff]
                %1996 = vst [vmem:[%s1694 + $0x950] sm:$0xff] %v1995
                %v1997 = vld [vmem:[%s1693 + $0x4b8] sm:$0xff]
                %1998 = vst [vmem:[%s1694 + $0x958] sm:$0xff] %v1997
                %v1999 = vld [vmem:[%s1693 + $0x4c0] sm:$0xff]
                %2000 = vst [vmem:[%s1694 + $0x980] sm:$0xff] %v1999
                %v2001 = vld [vmem:[%s1693 + $0x4c8] sm:$0xff]
                %2002 = vst [vmem:[%s1694 + $0x988] sm:$0xff] %v2001
                %v2003 = vld [vmem:[%s1693 + $0x4d0] sm:$0xff]
                %2004 = vst [vmem:[%s1694 + $0x990] sm:$0xff] %v2003
                %v2005 = vld [vmem:[%s1693 + $0x4d8] sm:$0xff]
                %2006 = vst [vmem:[%s1694 + $0x998] sm:$0xff] %v2005
                %v2007 = vld [vmem:[%s1693 + $0x4e0] sm:$0xff]
                %2008 = vst [vmem:[%s1694 + $0x9c0] sm:$0xff] %v2007
                %v2009 = vld [vmem:[%s1693 + $0x4e8] sm:$0xff]
                %2010 = vst [vmem:[%s1694 + $0x9c8] sm:$0xff] %v2009
                %v2011 = vld [vmem:[%s1693 + $0x4f0] sm:$0xff]
                %2012 = vst [vmem:[%s1694 + $0x9d0] sm:$0xff] %v2011
                %v2013 = vld [vmem:[%s1693 + $0x4f8] sm:$0xff]
                %2014 = vst [vmem:[%s1694 + $0x9d8] sm:$0xff] %v2013
                %v2015 = vld [vmem:[%s1693 + $0x500] sm:$0xff]
                %2016 = vst [vmem:[%s1694 + $0xa00] sm:$0xff] %v2015
                %v2017 = vld [vmem:[%s1693 + $0x508] sm:$0xff]
                %2018 = vst [vmem:[%s1694 + $0xa08] sm:$0xff] %v2017
                %v2019 = vld [vmem:[%s1693 + $0x510] sm:$0xff]
                %2020 = vst [vmem:[%s1694 + $0xa10] sm:$0xff] %v2019
                %v2021 = vld [vmem:[%s1693 + $0x518] sm:$0xff]
                %2022 = vst [vmem:[%s1694 + $0xa18] sm:$0xff] %v2021
                %v2023 = vld [vmem:[%s1693 + $0x520] sm:$0xff]
                %2024 = vst [vmem:[%s1694 + $0xa40] sm:$0xff] %v2023
                %v2025 = vld [vmem:[%s1693 + $0x528] sm:$0xff]
                %2026 = vst [vmem:[%s1694 + $0xa48] sm:$0xff] %v2025
                %v2027 = vld [vmem:[%s1693 + $0x530] sm:$0xff]
                %2028 = vst [vmem:[%s1694 + $0xa50] sm:$0xff] %v2027
                %v2029 = vld [vmem:[%s1693 + $0x538] sm:$0xff]
                %2030 = vst [vmem:[%s1694 + $0xa58] sm:$0xff] %v2029
                %v2031 = vld [vmem:[%s1693 + $0x540] sm:$0xff]
                %2032 = vst [vmem:[%s1694 + $0xa80] sm:$0xff] %v2031
                %v2033 = vld [vmem:[%s1693 + $0x548] sm:$0xff]
                %2034 = vst [vmem:[%s1694 + $0xa88] sm:$0xff] %v2033
                %v2035 = vld [vmem:[%s1693 + $0x550] sm:$0xff]
                %2036 = vst [vmem:[%s1694 + $0xa90] sm:$0xff] %v2035
                %v2037 = vld [vmem:[%s1693 + $0x558] sm:$0xff]
                %2038 = vst [vmem:[%s1694 + $0xa98] sm:$0xff] %v2037
                %v2039 = vld [vmem:[%s1693 + $0x560] sm:$0xff]
                %2040 = vst [vmem:[%s1694 + $0xac0] sm:$0xff] %v2039
                %v2041 = vld [vmem:[%s1693 + $0x568] sm:$0xff]
                %2042 = vst [vmem:[%s1694 + $0xac8] sm:$0xff] %v2041
                %v2043 = vld [vmem:[%s1693 + $0x570] sm:$0xff]
                %2044 = vst [vmem:[%s1694 + $0xad0] sm:$0xff] %v2043
                %v2045 = vld [vmem:[%s1693 + $0x578] sm:$0xff]
                %2046 = vst [vmem:[%s1694 + $0xad8] sm:$0xff] %v2045
                %v2047 = vld [vmem:[%s1693 + $0x580] sm:$0xff]
                %2048 = vst [vmem:[%s1694 + $0xb00] sm:$0xff] %v2047
                %v2049 = vld [vmem:[%s1693 + $0x588] sm:$0xff]
                %2050 = vst [vmem:[%s1694 + $0xb08] sm:$0xff] %v2049
                %v2051 = vld [vmem:[%s1693 + $0x590] sm:$0xff]
                %2052 = vst [vmem:[%s1694 + $0xb10] sm:$0xff] %v2051
                %v2053 = vld [vmem:[%s1693 + $0x598] sm:$0xff]
                %2054 = vst [vmem:[%s1694 + $0xb18] sm:$0xff] %v2053
                %v2055 = vld [vmem:[%s1693 + $0x5a0] sm:$0xff]
                %2056 = vst [vmem:[%s1694 + $0xb40] sm:$0xff] %v2055
                %v2057 = vld [vmem:[%s1693 + $0x5a8] sm:$0xff]
                %2058 = vst [vmem:[%s1694 + $0xb48] sm:$0xff] %v2057
                %v2059 = vld [vmem:[%s1693 + $0x5b0] sm:$0xff]
                %2060 = vst [vmem:[%s1694 + $0xb50] sm:$0xff] %v2059
                %v2061 = vld [vmem:[%s1693 + $0x5b8] sm:$0xff]
                %2062 = vst [vmem:[%s1694 + $0xb58] sm:$0xff] %v2061
                %v2063 = vld [vmem:[%s1693 + $0x5c0] sm:$0xff]
                %2064 = vst [vmem:[%s1694 + $0xb80] sm:$0xff] %v2063
                %v2065 = vld [vmem:[%s1693 + $0x5c8] sm:$0xff]
                %2066 = vst [vmem:[%s1694 + $0xb88] sm:$0xff] %v2065
                %v2067 = vld [vmem:[%s1693 + $0x5d0] sm:$0xff]
                %2068 = vst [vmem:[%s1694 + $0xb90] sm:$0xff] %v2067
                %v2069 = vld [vmem:[%s1693 + $0x5d8] sm:$0xff]
                %2070 = vst [vmem:[%s1694 + $0xb98] sm:$0xff] %v2069
                %v2071 = vld [vmem:[%s1693 + $0x5e0] sm:$0xff]
                %2072 = vst [vmem:[%s1694 + $0xbc0] sm:$0xff] %v2071
                %v2073 = vld [vmem:[%s1693 + $0x5e8] sm:$0xff]
                %2074 = vst [vmem:[%s1694 + $0xbc8] sm:$0xff] %v2073
                %v2075 = vld [vmem:[%s1693 + $0x5f0] sm:$0xff]
                %2076 = vst [vmem:[%s1694 + $0xbd0] sm:$0xff] %v2075
                %v2077 = vld [vmem:[%s1693 + $0x5f8] sm:$0xff]
                %2078 = vst [vmem:[%s1694 + $0xbd8] sm:$0xff] %v2077
                %v2079 = vld [vmem:[%s1693 + $0x600] sm:$0xff]
                %2080 = vst [vmem:[%s1694 + $0xc00] sm:$0xff] %v2079
                %v2081 = vld [vmem:[%s1693 + $0x608] sm:$0xff]
                %2082 = vst [vmem:[%s1694 + $0xc08] sm:$0xff] %v2081
                %v2083 = vld [vmem:[%s1693 + $0x610] sm:$0xff]
                %2084 = vst [vmem:[%s1694 + $0xc10] sm:$0xff] %v2083
                %v2085 = vld [vmem:[%s1693 + $0x618] sm:$0xff]
                %2086 = vst [vmem:[%s1694 + $0xc18] sm:$0xff] %v2085
                %v2087 = vld [vmem:[%s1693 + $0x620] sm:$0xff]
                %2088 = vst [vmem:[%s1694 + $0xc40] sm:$0xff] %v2087
                %v2089 = vld [vmem:[%s1693 + $0x628] sm:$0xff]
                %2090 = vst [vmem:[%s1694 + $0xc48] sm:$0xff] %v2089
                %v2091 = vld [vmem:[%s1693 + $0x630] sm:$0xff]
                %2092 = vst [vmem:[%s1694 + $0xc50] sm:$0xff] %v2091
                %v2093 = vld [vmem:[%s1693 + $0x638] sm:$0xff]
                %2094 = vst [vmem:[%s1694 + $0xc58] sm:$0xff] %v2093
                %v2095 = vld [vmem:[%s1693 + $0x640] sm:$0xff]
                %2096 = vst [vmem:[%s1694 + $0xc80] sm:$0xff] %v2095
                %v2097 = vld [vmem:[%s1693 + $0x648] sm:$0xff]
                %2098 = vst [vmem:[%s1694 + $0xc88] sm:$0xff] %v2097
                %v2099 = vld [vmem:[%s1693 + $0x650] sm:$0xff]
                %2100 = vst [vmem:[%s1694 + $0xc90] sm:$0xff] %v2099
                %v2101 = vld [vmem:[%s1693 + $0x658] sm:$0xff]
                %2102 = vst [vmem:[%s1694 + $0xc98] sm:$0xff] %v2101
                %v2103 = vld [vmem:[%s1693 + $0x660] sm:$0xff]
                %2104 = vst [vmem:[%s1694 + $0xcc0] sm:$0xff] %v2103
                %v2105 = vld [vmem:[%s1693 + $0x668] sm:$0xff]
                %2106 = vst [vmem:[%s1694 + $0xcc8] sm:$0xff] %v2105
                %v2107 = vld [vmem:[%s1693 + $0x670] sm:$0xff]
                %2108 = vst [vmem:[%s1694 + $0xcd0] sm:$0xff] %v2107
                %v2109 = vld [vmem:[%s1693 + $0x678] sm:$0xff]
                %2110 = vst [vmem:[%s1694 + $0xcd8] sm:$0xff] %v2109
                %v2111 = vld [vmem:[%s1693 + $0x680] sm:$0xff]
                %2112 = vst [vmem:[%s1694 + $0xd00] sm:$0xff] %v2111
                %v2113 = vld [vmem:[%s1693 + $0x688] sm:$0xff]
                %2114 = vst [vmem:[%s1694 + $0xd08] sm:$0xff] %v2113
                %v2115 = vld [vmem:[%s1693 + $0x690] sm:$0xff]
                %2116 = vst [vmem:[%s1694 + $0xd10] sm:$0xff] %v2115
                %v2117 = vld [vmem:[%s1693 + $0x698] sm:$0xff]
                %2118 = vst [vmem:[%s1694 + $0xd18] sm:$0xff] %v2117
                %v2119 = vld [vmem:[%s1693 + $0x6a0] sm:$0xff]
                %2120 = vst [vmem:[%s1694 + $0xd40] sm:$0xff] %v2119
                %v2121 = vld [vmem:[%s1693 + $0x6a8] sm:$0xff]
                %2122 = vst [vmem:[%s1694 + $0xd48] sm:$0xff] %v2121
                %v2123 = vld [vmem:[%s1693 + $0x6b0] sm:$0xff]
                %2124 = vst [vmem:[%s1694 + $0xd50] sm:$0xff] %v2123
                %v2125 = vld [vmem:[%s1693 + $0x6b8] sm:$0xff]
                %2126 = vst [vmem:[%s1694 + $0xd58] sm:$0xff] %v2125
                %v2127 = vld [vmem:[%s1693 + $0x6c0] sm:$0xff]
                %2128 = vst [vmem:[%s1694 + $0xd80] sm:$0xff] %v2127
                %v2129 = vld [vmem:[%s1693 + $0x6c8] sm:$0xff]
                %2130 = vst [vmem:[%s1694 + $0xd88] sm:$0xff] %v2129
                %v2131 = vld [vmem:[%s1693 + $0x6d0] sm:$0xff]
                %2132 = vst [vmem:[%s1694 + $0xd90] sm:$0xff] %v2131
                %v2133 = vld [vmem:[%s1693 + $0x6d8] sm:$0xff]
                %2134 = vst [vmem:[%s1694 + $0xd98] sm:$0xff] %v2133
                %v2135 = vld [vmem:[%s1693 + $0x6e0] sm:$0xff]
                %2136 = vst [vmem:[%s1694 + $0xdc0] sm:$0xff] %v2135
                %v2137 = vld [vmem:[%s1693 + $0x6e8] sm:$0xff]
                %2138 = vst [vmem:[%s1694 + $0xdc8] sm:$0xff] %v2137
                %v2139 = vld [vmem:[%s1693 + $0x6f0] sm:$0xff]
                %2140 = vst [vmem:[%s1694 + $0xdd0] sm:$0xff] %v2139
                %v2141 = vld [vmem:[%s1693 + $0x6f8] sm:$0xff]
                %2142 = vst [vmem:[%s1694 + $0xdd8] sm:$0xff] %v2141
                %v2143 = vld [vmem:[%s1693 + $0x700] sm:$0xff]
                %2144 = vst [vmem:[%s1694 + $0xe00] sm:$0xff] %v2143
                %v2145 = vld [vmem:[%s1693 + $0x708] sm:$0xff]
                %2146 = vst [vmem:[%s1694 + $0xe08] sm:$0xff] %v2145
                %v2147 = vld [vmem:[%s1693 + $0x710] sm:$0xff]
                %2148 = vst [vmem:[%s1694 + $0xe10] sm:$0xff] %v2147
                %v2149 = vld [vmem:[%s1693 + $0x718] sm:$0xff]
                %2150 = vst [vmem:[%s1694 + $0xe18] sm:$0xff] %v2149
                %v2151 = vld [vmem:[%s1693 + $0x720] sm:$0xff]
                %2152 = vst [vmem:[%s1694 + $0xe40] sm:$0xff] %v2151
                %v2153 = vld [vmem:[%s1693 + $0x728] sm:$0xff]
                %2154 = vst [vmem:[%s1694 + $0xe48] sm:$0xff] %v2153
                %v2155 = vld [vmem:[%s1693 + $0x730] sm:$0xff]
                %2156 = vst [vmem:[%s1694 + $0xe50] sm:$0xff] %v2155
                %v2157 = vld [vmem:[%s1693 + $0x738] sm:$0xff]
                %2158 = vst [vmem:[%s1694 + $0xe58] sm:$0xff] %v2157
                %v2159 = vld [vmem:[%s1693 + $0x740] sm:$0xff]
                %2160 = vst [vmem:[%s1694 + $0xe80] sm:$0xff] %v2159
                %v2161 = vld [vmem:[%s1693 + $0x748] sm:$0xff]
                %2162 = vst [vmem:[%s1694 + $0xe88] sm:$0xff] %v2161
                %v2163 = vld [vmem:[%s1693 + $0x750] sm:$0xff]
                %2164 = vst [vmem:[%s1694 + $0xe90] sm:$0xff] %v2163
                %v2165 = vld [vmem:[%s1693 + $0x758] sm:$0xff]
                %2166 = vst [vmem:[%s1694 + $0xe98] sm:$0xff] %v2165
                %v2167 = vld [vmem:[%s1693 + $0x760] sm:$0xff]
                %2168 = vst [vmem:[%s1694 + $0xec0] sm:$0xff] %v2167
                %v2169 = vld [vmem:[%s1693 + $0x768] sm:$0xff]
                %2170 = vst [vmem:[%s1694 + $0xec8] sm:$0xff] %v2169
                %v2171 = vld [vmem:[%s1693 + $0x770] sm:$0xff]
                %2172 = vst [vmem:[%s1694 + $0xed0] sm:$0xff] %v2171
                %v2173 = vld [vmem:[%s1693 + $0x778] sm:$0xff]
                %2174 = vst [vmem:[%s1694 + $0xed8] sm:$0xff] %v2173
                %v2175 = vld [vmem:[%s1693 + $0x780] sm:$0xff]
                %2176 = vst [vmem:[%s1694 + $0xf00] sm:$0xff] %v2175
                %v2177 = vld [vmem:[%s1693 + $0x788] sm:$0xff]
                %2178 = vst [vmem:[%s1694 + $0xf08] sm:$0xff] %v2177
                %v2179 = vld [vmem:[%s1693 + $0x790] sm:$0xff]
                %2180 = vst [vmem:[%s1694 + $0xf10] sm:$0xff] %v2179
                %v2181 = vld [vmem:[%s1693 + $0x798] sm:$0xff]
                %2182 = vst [vmem:[%s1694 + $0xf18] sm:$0xff] %v2181
                %v2183 = vld [vmem:[%s1693 + $0x7a0] sm:$0xff]
                %2184 = vst [vmem:[%s1694 + $0xf40] sm:$0xff] %v2183
                %v2185 = vld [vmem:[%s1693 + $0x7a8] sm:$0xff]
                %2186 = vst [vmem:[%s1694 + $0xf48] sm:$0xff] %v2185
                %v2187 = vld [vmem:[%s1693 + $0x7b0] sm:$0xff]
                %2188 = vst [vmem:[%s1694 + $0xf50] sm:$0xff] %v2187
                %v2189 = vld [vmem:[%s1693 + $0x7b8] sm:$0xff]
                %2190 = vst [vmem:[%s1694 + $0xf58] sm:$0xff] %v2189
                %v2191 = vld [vmem:[%s1693 + $0x7c0] sm:$0xff]
                %2192 = vst [vmem:[%s1694 + $0xf80] sm:$0xff] %v2191
                %v2193 = vld [vmem:[%s1693 + $0x7c8] sm:$0xff]
                %2194 = vst [vmem:[%s1694 + $0xf88] sm:$0xff] %v2193
                %v2195 = vld [vmem:[%s1693 + $0x7d0] sm:$0xff]
                %2196 = vst [vmem:[%s1694 + $0xf90] sm:$0xff] %v2195
                %v2197 = vld [vmem:[%s1693 + $0x7d8] sm:$0xff]
                %2198 = vst [vmem:[%s1694 + $0xf98] sm:$0xff] %v2197
                %v2199 = vld [vmem:[%s1693 + $0x7e0] sm:$0xff]
                %2200 = vst [vmem:[%s1694 + $0xfc0] sm:$0xff] %v2199
                %v2201 = vld [vmem:[%s1693 + $0x7e8] sm:$0xff]
                %2202 = vst [vmem:[%s1694 + $0xfc8] sm:$0xff] %v2201
                %v2203 = vld [vmem:[%s1693 + $0x7f0] sm:$0xff]
                %2204 = vst [vmem:[%s1694 + $0xfd0] sm:$0xff] %v2203
                %v2205 = vld [vmem:[%s1693 + $0x7f8] sm:$0xff]
                %2206 = vst [vmem:[%s1694 + $0xfd8] sm:$0xff] %v2205
              $region68: #{generator_forward.9} parent=62 // loop_footer
                %s1692 = sadd.s32 1, %s1688
              $region69: #{generator_forward.9} parent=62 // loop_footer_branch
                %1687 = sbr.rel target = $region65
              $region70: #{generator_forward.9} parent=62 // loop_exit
                _
            $region63: #{generator_forward.9} parent=58 // pred_fallthru
              _
            // Predicated region
            $region71: #{generator_forward.9} parent=58 // pred_check
              _
            $region72: #{generator_forward.9} parent=58 // pred_check_branch
              %2208 = sbr.rel target = $region74
            $region73: #{generator_forward.9} parent=58 // pred_region
              _
            $region74: #{generator_forward.9} parent=58 // pred_fallthru
              _
          $region59: #{generator_forward.9} parent=54 // pred_fallthru
            _
          %2209 = vnop
        $region55: #{generator_forward.9} parent=46 // pred_fallthru
          _
      $region47: #{generator_forward.9} parent=5 // pred_fallthru
        _
      %p2210 = scmp.le.s32.totalorder 2, %s8
      // Predicated region
      $region75: #{generator_forward.9} parent=5 // pred_check
        %p2211 = pneg %p2210
      $region76: #{generator_forward.9} parent=5 // pred_check_branch
        %2213 = sbr.rel (%p2211) target = $region78
      $region77: #{generator_forward.9} parent=5 // pred_region
        %s2214 = ssub.s32 %s8, 2
        // Predicated region
        $region79: #{generator_forward.9} parent=77 // pred_check
          %p2215 = pneg %p103
        $region80: #{generator_forward.9} parent=77 // pred_check_branch
          %2217 = sbr.rel (%p2215) target = $region82
        $region81: #{generator_forward.9} parent=77 // pred_region
          %s2218 = sand.u32 %s88, 1
          %s2219 = sand.u32 %s88, 1
          %s2220 = smul.addr %s2219, 2048
          %s2221 = scalar_lea.vmem [#allocation3], %s2220
        $region82: #{generator_forward.9} parent=77 // pred_fallthru
          _
      $region78: #{generator_forward.9} parent=5 // pred_fallthru
        _
    $region6: #{generator_forward.9} parent=1 // loop_footer
      %s12 = sadd.s32 1, %s8
    $region7: #{generator_forward.9} parent=1 // loop_footer_branch
      %7 = sbr.rel target = $region3
    $region8: #{generator_forward.9} parent=1 // loop_exit
      _

// kernel: generator_forward.10
$region0: #{generator_forward.10}
  #allocation0 [shape = 'u32[]', space=smem, size = 0x4, offset = 0x4, fixed_abs, tag = 'smem constant byte address 0x4 - core index']
  #allocation1 [shape = 'u32[144,128]{1,0:T(1,128)}', space=vmem, size = 0x12000, scoped, tag = 'internal scratch']
  %s0 = inlined_call_operand.vmem [shape: bf16[2048,64], index: 0, kind: input, shape index: {}]
  %s1 = inlined_call_operand.vmem [shape: bf16[64,512], index: 1, kind: input, shape index: {}]
  %s2 = inlined_call_operand.vmem [shape: f32[2048,512], index: 2, kind: output, shape index: {}]
  %s3 = sld [smem:[#allocation0]]
  $region41: #{generator_forward.10} parent=0
    _
  %s5 = ssub.s32 1, %s3
  %s6 = scalar_select 0, %s5, %s3
  loop: start=0, step=1, limit=4
  $region2: #{generator_forward.10} parent=0 // loop_pre_header
    _
  $region3: #{generator_forward.10} parent=0 // loop_header
    %s8 = sphi 0, %s12
    %p9 = scmp.ge.s32.totalorder %s8, 4
    %s15 = sphi 0, %s27
    %s16 = sphi 0, %s23
    %s17 = sphi 0, %s15
    %s18 = sphi 0, %s16
    %s19 = sphi 0, %s17
    %s20 = sphi 0, %s18
    %s30 = sphi 0, %s32
    %s33 = sphi 0, %s30
    %s34 = sphi 0, %s33
    %s50 = sphi 0, %s34
    %s56 = sphi 0, %s58
    %s59 = sphi 0, %s56
    %s60 = sphi 0, %s59
    %s76 = sphi 0, %s60
    %s84 = sphi 0, %s86
    %s87 = sphi 0, %s84
    %s88 = sphi 0, %s87
    %s104 = sphi 0, %s88
  $region4: #{generator_forward.10} parent=0 // loop_header_branch
    %11 = sbr.rel (%p9) target = $region8
  $region5: #{generator_forward.10} parent=0 // loop_body
    %s13 = ssub.s32 %s8, 1
    %s14 = ssub.s32 %s8, 2
    %s21 = sadd.s32 1, %s16
    %p22 = scmp.ge.s32.totalorder %s21, 1
    %s23 = scalar_select %p22, 0, %s21
    %s24 = sadd.s32 1, %s15
    %s25 = scalar_select %p22, %s24, %s15
    %p26 = scmp.ge.s32.totalorder %s25, 2
    %s27 = scalar_select %p26, 0, %s25
    %s28 = ssub.s32 %s15, %s27
    %p29 = scmp.eq.s32.totalorder %s28, 0
    %s31 = sadd.s32 %s30, 1
    %s32 = scalar_select %p29, %s30, %s31
    %p35 = pneg %p29
    %p36 = scmp.eq.s32.totalorder %s8, 1
    %p37 = por %p35, %p36
    %p38 = scmp.ne.s32.totalorder %s30, %s33
    %p39 = scmp.eq.s32.totalorder %s8, 0
    %p40 = por %p38, %p39
    %p41 = scmp.ne.s32.totalorder %s30, %s33
    %p42 = scmp.eq.s32.totalorder %s13, 1
    %p43 = por %p41, %p42
    %p44 = scmp.ne.s32.totalorder %s33, %s34
    %p45 = scmp.eq.s32.totalorder %s13, 0
    %p46 = por %p44, %p45
    %p47 = scmp.ne.s32.totalorder %s33, %s34
    %p48 = scmp.eq.s32.totalorder %s14, 1
    %p49 = por %p47, %p48
    %p51 = scmp.ne.s32.totalorder %s34, %s50
    %p52 = scmp.eq.s32.totalorder %s14, 0
    %p53 = por %p51, %p52
    %s54 = ssub.s32 %s16, %s23
    %p55 = scmp.eq.s32.totalorder %s54, 0
    %s57 = sadd.s32 %s56, 1
    %s58 = scalar_select %p55, %s56, %s57
    %p61 = pneg %p55
    %p62 = scmp.eq.s32.totalorder %s8, 1
    %p63 = por %p61, %p62
    %p64 = scmp.ne.s32.totalorder %s56, %s59
    %p65 = scmp.eq.s32.totalorder %s8, 0
    %p66 = por %p64, %p65
    %p67 = scmp.ne.s32.totalorder %s56, %s59
    %p68 = scmp.eq.s32.totalorder %s13, 1
    %p69 = por %p67, %p68
    %p70 = scmp.ne.s32.totalorder %s59, %s60
    %p71 = scmp.eq.s32.totalorder %s13, 0
    %p72 = por %p70, %p71
    %p73 = scmp.ne.s32.totalorder %s59, %s60
    %p74 = scmp.eq.s32.totalorder %s14, 1
    %p75 = por %p73, %p74
    %p77 = scmp.ne.s32.totalorder %s60, %s76
    %p78 = scmp.eq.s32.totalorder %s14, 0
    %p79 = por %p77, %p78
    %s80 = ssub.s32 %s15, %s27
    %s81 = ssub.s32 %s16, %s23
    %s82 = sor.u32 %s80, %s81
    %p83 = scmp.eq.s32.totalorder %s82, 0
    %s85 = sadd.s32 %s84, 1
    %s86 = scalar_select %p83, %s84, %s85
    %p89 = pneg %p83
    %p90 = scmp.eq.s32.totalorder %s8, 1
    %p91 = por %p89, %p90
    %p92 = scmp.ne.s32.totalorder %s84, %s87
    %p93 = scmp.eq.s32.totalorder %s8, 0
    %p94 = por %p92, %p93
    %p95 = scmp.ne.s32.totalorder %s84, %s87
    %p96 = scmp.eq.s32.totalorder %s13, 1
    %p97 = por %p95, %p96
    %p98 = scmp.ne.s32.totalorder %s87, %s88
    %p99 = scmp.eq.s32.totalorder %s13, 0
    %p100 = por %p98, %p99
    %p101 = scmp.ne.s32.totalorder %s87, %s88
    %p102 = scmp.eq.s32.totalorder %s14, 1
    %p103 = por %p101, %p102
    %p105 = scmp.ne.s32.totalorder %s88, %s104
    %p106 = scmp.eq.s32.totalorder %s14, 0
    %p107 = por %p105, %p106
    %p108 = scmp.le.s32.totalorder 1, %s8
    %p109 = scmp.lt.s32.totalorder %s8, 3
    %p110 = pnand %p108, %p109
    %p111 = pneg %p110
    // Predicated region
    $region9: #{generator_forward.10} parent=5 // pred_check
      _
    $region10: #{generator_forward.10} parent=5 // pred_check_branch
      %113 = sbr.rel (%p110) target = $region12
    $region11: #{generator_forward.10} parent=5 // pred_region
      %s114 = ssub.s32 %s8, 1
      // Predicated region
      $region13: #{generator_forward.10} parent=11 // pred_check
        %p115 = pneg %p72
      $region14: #{generator_forward.10} parent=11 // pred_check_branch
        %117 = sbr.rel (%p115) target = $region16
      $region15: #{generator_forward.10} parent=11 // pred_region
        %s118 = smul.u32 4, %s18
        %p119 = scmp.lt.s32.totalorder %s118, 3
        %s120 = scalar_select %p119, %s118, 3
        %s121 = smul.addr %s120, 4
        %s122 = scalar_lea.vmem %s1, %s121
        %s123 = smul.u32 4, %s18
      $region16: #{generator_forward.10} parent=11 // pred_fallthru
        _
    $region12: #{generator_forward.10} parent=5 // pred_fallthru
      _
    %p124 = scmp.lt.s32.totalorder %s8, 2
    // Predicated region
    $region17: #{generator_forward.10} parent=5 // pred_check
      %p125 = pneg %p124
    $region18: #{generator_forward.10} parent=5 // pred_check_branch
      %127 = sbr.rel (%p125) target = $region20
    $region19: #{generator_forward.10} parent=5 // pred_region
      // Predicated region
      $region21: #{generator_forward.10} parent=19 // pred_check
        %p128 = pneg %p40
      $region22: #{generator_forward.10} parent=19 // pred_check_branch
        %130 = sbr.rel (%p128) target = $region24
      $region23: #{generator_forward.10} parent=19 // pred_region
        %s131 = smul.u32 128, %s15
        %p132 = scmp.lt.s32.totalorder %s131, 255
        %s133 = scalar_select %p132, %s131, 255
        %s134 = smul.addr %s133, 4
        %s135 = scalar_lea.vmem %s0, %s134
        %s136 = smul.u32 128, %s15
      $region24: #{generator_forward.10} parent=19 // pred_fallthru
        _
    $region20: #{generator_forward.10} parent=5 // pred_fallthru
      _
    %p137 = scmp.le.s32.totalorder 1, %s8
    %p138 = scmp.lt.s32.totalorder %s8, 3
    %p139 = pnand %p137, %p138
    %p140 = pneg %p139
    // Predicated region
    $region25: #{generator_forward.10} parent=5 // pred_check
      _
    $region26: #{generator_forward.10} parent=5 // pred_check_branch
      %142 = sbr.rel (%p139) target = $region28
    $region27: #{generator_forward.10} parent=5 // pred_region
      %s143 = ssub.s32 %s8, 1
      %s144 = smul.u32 128, %s17
      %p145 = scmp.lt.s32.totalorder %s144, 255
      %s146 = scalar_select %p145, %s144, 255
      %s147 = smul.addr %s146, 4
      %s148 = scalar_lea.vmem %s0, %s147
      %p149 = pneg %p46
      %p150 = pneg %p43
      %s151 = smul.u32 4, %s18
      %p152 = scmp.lt.s32.totalorder %s151, 3
      %s153 = scalar_select %p152, %s151, 3
      %s154 = smul.addr %s153, 4
      %s155 = scalar_lea.vmem %s1, %s154
      %p156 = pneg %p72
      %p157 = pneg %p69
      %p158 = pneg %p100
      %p159 = pneg %p97
      %s160 = smul.u32 128, %s17
      %s161 = smul.u32 4, %s18
      %p162 = scmp.lt.s32.totalorder %s160, 255
      %s163 = scalar_select %p162, %s160, 255
      %p164 = scmp.lt.s32.totalorder %s161, 3
      %s165 = scalar_select %p164, %s161, 3
      %s166 = smul.addr %s163, 4
      %s167 = sadd.s32 %s165, %s166
      %s168 = smul.addr %s167, 8
      %s169 = scalar_lea.vmem %s2, %s168
      %s170 = smul.u32 128, %s17
      %p171 = scmp.lt.s32.totalorder %s170, 255
      %s172 = scalar_select %p171, %s170, 255
      %s173 = smul.addr %s172, 4
      %s174 = scalar_lea.vmem %s0, %s173
      %s175 = smul.u32 128, %s17
      %s176 = smul.u32 4, %s18
      %p177 = scmp.lt.s32.totalorder %s176, 3
      %s178 = scalar_select %p177, %s176, 3
      %s179 = smul.addr %s178, 4
      %s180 = scalar_lea.vmem %s1, %s179
      %s181 = smul.u32 4, %s18
      %s182 = smul.u32 128, %s17
      %s183 = smul.u32 4, %s18
      %p184 = scmp.lt.s32.totalorder %s182, 255
      %s185 = scalar_select %p184, %s182, 255
      %p186 = scmp.lt.s32.totalorder %s183, 3
      %s187 = scalar_select %p186, %s183, 3
      %s188 = smul.addr %s185, 4
      %s189 = sadd.s32 %s187, %s188
      %s190 = smul.addr %s189, 8
      %s191 = scalar_lea.vmem %s2, %s190
      %s192 = smul.u32 128, %s17
      %s193 = smul.u32 4, %s18
      %v195 = vld [vmem:[%s174] sm:$0xf]
      %v196 = vld [vmem:[%s174 + $0x4] sm:$0xf]
      %v197 = vld [vmem:[%s174 + $0x8] sm:$0xf]
      %v198 = vld [vmem:[%s174 + $0xc] sm:$0xf]
      %v199 = vld [vmem:[%s174 + $0x10] sm:$0xf]
      %v200 = vld [vmem:[%s174 + $0x14] sm:$0xf]
      %v201 = vld [vmem:[%s174 + $0x18] sm:$0xf]
      %v202 = vld [vmem:[%s174 + $0x1c] sm:$0xf]
      %v203 = vld [vmem:[%s174 + $0x20] sm:$0xf]
      %v204 = vld [vmem:[%s174 + $0x24] sm:$0xf]
      %v205 = vld [vmem:[%s174 + $0x28] sm:$0xf]
      %v206 = vld [vmem:[%s174 + $0x2c] sm:$0xf]
      %v207 = vld [vmem:[%s174 + $0x30] sm:$0xf]
      %v208 = vld [vmem:[%s174 + $0x34] sm:$0xf]
      %v209 = vld [vmem:[%s174 + $0x38] sm:$0xf]
      %v210 = vld [vmem:[%s174 + $0x3c] sm:$0xf]
      %v211 = vld [vmem:[%s174 + $0x40] sm:$0xf]
      %v212 = vld [vmem:[%s174 + $0x44] sm:$0xf]
      %v213 = vld [vmem:[%s174 + $0x48] sm:$0xf]
      %v214 = vld [vmem:[%s174 + $0x4c] sm:$0xf]
      %v215 = vld [vmem:[%s174 + $0x50] sm:$0xf]
      %v216 = vld [vmem:[%s174 + $0x54] sm:$0xf]
      %v217 = vld [vmem:[%s174 + $0x58] sm:$0xf]
      %v218 = vld [vmem:[%s174 + $0x5c] sm:$0xf]
      %v219 = vld [vmem:[%s174 + $0x60] sm:$0xf]
      %v220 = vld [vmem:[%s174 + $0x64] sm:$0xf]
      %v221 = vld [vmem:[%s174 + $0x68] sm:$0xf]
      %v222 = vld [vmem:[%s174 + $0x6c] sm:$0xf]
      %v223 = vld [vmem:[%s174 + $0x70] sm:$0xf]
      %v224 = vld [vmem:[%s174 + $0x74] sm:$0xf]
      %v225 = vld [vmem:[%s174 + $0x78] sm:$0xf]
      %v226 = vld [vmem:[%s174 + $0x7c] sm:$0xf]
      %v227 = vld [vmem:[%s174 + $0x80] sm:$0xf]
      %v228 = vld [vmem:[%s174 + $0x84] sm:$0xf]
      %v229 = vld [vmem:[%s174 + $0x88] sm:$0xf]
      %v230 = vld [vmem:[%s174 + $0x8c] sm:$0xf]
      %v231 = vld [vmem:[%s174 + $0x90] sm:$0xf]
      %v232 = vld [vmem:[%s174 + $0x94] sm:$0xf]
      %v233 = vld [vmem:[%s174 + $0x98] sm:$0xf]
      %v234 = vld [vmem:[%s174 + $0x9c] sm:$0xf]
      %v235 = vld [vmem:[%s174 + $0xa0] sm:$0xf]
      %v236 = vld [vmem:[%s174 + $0xa4] sm:$0xf]
      %v237 = vld [vmem:[%s174 + $0xa8] sm:$0xf]
      %v238 = vld [vmem:[%s174 + $0xac] sm:$0xf]
      %v239 = vld [vmem:[%s174 + $0xb0] sm:$0xf]
      %v240 = vld [vmem:[%s174 + $0xb4] sm:$0xf]
      %v241 = vld [vmem:[%s174 + $0xb8] sm:$0xf]
      %v242 = vld [vmem:[%s174 + $0xbc] sm:$0xf]
      %v243 = vld [vmem:[%s174 + $0xc0] sm:$0xf]
      %v244 = vld [vmem:[%s174 + $0xc4] sm:$0xf]
      %v245 = vld [vmem:[%s174 + $0xc8] sm:$0xf]
      %v246 = vld [vmem:[%s174 + $0xcc] sm:$0xf]
      %v247 = vld [vmem:[%s174 + $0xd0] sm:$0xf]
      %v248 = vld [vmem:[%s174 + $0xd4] sm:$0xf]
      %v249 = vld [vmem:[%s174 + $0xd8] sm:$0xf]
      %v250 = vld [vmem:[%s174 + $0xdc] sm:$0xf]
      %v251 = vld [vmem:[%s174 + $0xe0] sm:$0xf]
      %v252 = vld [vmem:[%s174 + $0xe4] sm:$0xf]
      %v253 = vld [vmem:[%s174 + $0xe8] sm:$0xf]
      %v254 = vld [vmem:[%s174 + $0xec] sm:$0xf]
      %v255 = vld [vmem:[%s174 + $0xf0] sm:$0xf]
      %v256 = vld [vmem:[%s174 + $0xf4] sm:$0xf]
      %v257 = vld [vmem:[%s174 + $0xf8] sm:$0xf]
      %v258 = vld [vmem:[%s174 + $0xfc] sm:$0xf]
      %v259 = vld [vmem:[%s174 + $0x100] sm:$0xf]
      %v260 = vld [vmem:[%s174 + $0x104] sm:$0xf]
      %v261 = vld [vmem:[%s174 + $0x108] sm:$0xf]
      %v262 = vld [vmem:[%s174 + $0x10c] sm:$0xf]
      %v263 = vld [vmem:[%s174 + $0x110] sm:$0xf]
      %v264 = vld [vmem:[%s174 + $0x114] sm:$0xf]
      %v265 = vld [vmem:[%s174 + $0x118] sm:$0xf]
      %v266 = vld [vmem:[%s174 + $0x11c] sm:$0xf]
      %v267 = vld [vmem:[%s174 + $0x120] sm:$0xf]
      %v268 = vld [vmem:[%s174 + $0x124] sm:$0xf]
      %v269 = vld [vmem:[%s174 + $0x128] sm:$0xf]
      %v270 = vld [vmem:[%s174 + $0x12c] sm:$0xf]
      %v271 = vld [vmem:[%s174 + $0x130] sm:$0xf]
      %v272 = vld [vmem:[%s174 + $0x134] sm:$0xf]
      %v273 = vld [vmem:[%s174 + $0x138] sm:$0xf]
      %v274 = vld [vmem:[%s174 + $0x13c] sm:$0xf]
      %v275 = vld [vmem:[%s174 + $0x140] sm:$0xf]
      %v276 = vld [vmem:[%s174 + $0x144] sm:$0xf]
      %v277 = vld [vmem:[%s174 + $0x148] sm:$0xf]
      %v278 = vld [vmem:[%s174 + $0x14c] sm:$0xf]
      %v279 = vld [vmem:[%s174 + $0x150] sm:$0xf]
      %v280 = vld [vmem:[%s174 + $0x154] sm:$0xf]
      %v281 = vld [vmem:[%s174 + $0x158] sm:$0xf]
      %v282 = vld [vmem:[%s174 + $0x15c] sm:$0xf]
      %v283 = vld [vmem:[%s174 + $0x160] sm:$0xf]
      %v284 = vld [vmem:[%s174 + $0x164] sm:$0xf]
      %v285 = vld [vmem:[%s174 + $0x168] sm:$0xf]
      %v286 = vld [vmem:[%s174 + $0x16c] sm:$0xf]
      %v287 = vld [vmem:[%s174 + $0x170] sm:$0xf]
      %v288 = vld [vmem:[%s174 + $0x174] sm:$0xf]
      %v289 = vld [vmem:[%s174 + $0x178] sm:$0xf]
      %v290 = vld [vmem:[%s174 + $0x17c] sm:$0xf]
      %v291 = vld [vmem:[%s174 + $0x180] sm:$0xf]
      %v292 = vld [vmem:[%s174 + $0x184] sm:$0xf]
      %v293 = vld [vmem:[%s174 + $0x188] sm:$0xf]
      %v294 = vld [vmem:[%s174 + $0x18c] sm:$0xf]
      %v295 = vld [vmem:[%s174 + $0x190] sm:$0xf]
      %v296 = vld [vmem:[%s174 + $0x194] sm:$0xf]
      %v297 = vld [vmem:[%s174 + $0x198] sm:$0xf]
      %v298 = vld [vmem:[%s174 + $0x19c] sm:$0xf]
      %v299 = vld [vmem:[%s174 + $0x1a0] sm:$0xf]
      %v300 = vld [vmem:[%s174 + $0x1a4] sm:$0xf]
      %v301 = vld [vmem:[%s174 + $0x1a8] sm:$0xf]
      %v302 = vld [vmem:[%s174 + $0x1ac] sm:$0xf]
      %v303 = vld [vmem:[%s174 + $0x1b0] sm:$0xf]
      %v304 = vld [vmem:[%s174 + $0x1b4] sm:$0xf]
      %v305 = vld [vmem:[%s174 + $0x1b8] sm:$0xf]
      %v306 = vld [vmem:[%s174 + $0x1bc] sm:$0xf]
      %v307 = vld [vmem:[%s174 + $0x1c0] sm:$0xf]
      %v308 = vld [vmem:[%s174 + $0x1c4] sm:$0xf]
      %v309 = vld [vmem:[%s174 + $0x1c8] sm:$0xf]
      %v310 = vld [vmem:[%s174 + $0x1cc] sm:$0xf]
      %v311 = vld [vmem:[%s174 + $0x1d0] sm:$0xf]
      %v312 = vld [vmem:[%s174 + $0x1d4] sm:$0xf]
      %v313 = vld [vmem:[%s174 + $0x1d8] sm:$0xf]
      %v314 = vld [vmem:[%s174 + $0x1dc] sm:$0xf]
      %v315 = vld [vmem:[%s174 + $0x1e0] sm:$0xf]
      %v316 = vld [vmem:[%s174 + $0x1e4] sm:$0xf]
      %v317 = vld [vmem:[%s174 + $0x1e8] sm:$0xf]
      %v318 = vld [vmem:[%s174 + $0x1ec] sm:$0xf]
      %v319 = vld [vmem:[%s174 + $0x1f0] sm:$0xf]
      %v320 = vld [vmem:[%s174 + $0x1f4] sm:$0xf]
      %v321 = vld [vmem:[%s174 + $0x1f8] sm:$0xf]
      %v322 = vld [vmem:[%s174 + $0x1fc] sm:$0xf]
      %v323 = vld [vmem:[%s180] sm:$0xff]
      %v324 = vld [vmem:[%s180 + $0x8] sm:$0xff]
      %v325 = vld [vmem:[%s180 + $0x10] sm:$0xff]
      %v326 = vld [vmem:[%s180 + $0x18] sm:$0xff]
      %v327 = vld [vmem:[%s180 + $0x20] sm:$0xff]
      %v328 = vld [vmem:[%s180 + $0x28] sm:$0xff]
      %v329 = vld [vmem:[%s180 + $0x30] sm:$0xff]
      %v330 = vld [vmem:[%s180 + $0x38] sm:$0xff]
      %v331 = vld [vmem:[%s180 + $0x40] sm:$0xff]
      %v332 = vld [vmem:[%s180 + $0x48] sm:$0xff]
      %v333 = vld [vmem:[%s180 + $0x50] sm:$0xff]
      %v334 = vld [vmem:[%s180 + $0x58] sm:$0xff]
      %v335 = vld [vmem:[%s180 + $0x60] sm:$0xff]
      %v336 = vld [vmem:[%s180 + $0x68] sm:$0xff]
      %v337 = vld [vmem:[%s180 + $0x70] sm:$0xff]
      %v338 = vld [vmem:[%s180 + $0x78] sm:$0xff]
      %v467 = vunpack.c.l.b16 %v195
      %v468 = vunpack.c.l.b16 %v196
      %v469 = vunpack.c.l.b16 %v197
      %v470 = vunpack.c.l.b16 %v198
      %v471 = vunpack.c.l.b16 %v199
      %v472 = vunpack.c.l.b16 %v200
      %v473 = vunpack.c.l.b16 %v201
      %v474 = vunpack.c.l.b16 %v202
      %v475 = vunpack.c.l.b16 %v203
      %v476 = vunpack.c.l.b16 %v204
      %v477 = vunpack.c.l.b16 %v205
      %v478 = vunpack.c.l.b16 %v206
      %v479 = vunpack.c.l.b16 %v207
      %v480 = vunpack.c.l.b16 %v208
      %v481 = vunpack.c.l.b16 %v209
      %v482 = vunpack.c.l.b16 %v210
      %v483 = vunpack.c.l.b16 %v211
      %v484 = vunpack.c.l.b16 %v212
      %v485 = vunpack.c.l.b16 %v213
      %v486 = vunpack.c.l.b16 %v214
      %v487 = vunpack.c.l.b16 %v215
      %v488 = vunpack.c.l.b16 %v216
      %v489 = vunpack.c.l.b16 %v217
      %v490 = vunpack.c.l.b16 %v218
      %v491 = vunpack.c.l.b16 %v219
      %v492 = vunpack.c.l.b16 %v220
      %v493 = vunpack.c.l.b16 %v221
      %v494 = vunpack.c.l.b16 %v222
      %v495 = vunpack.c.l.b16 %v223
      %v496 = vunpack.c.l.b16 %v224
      %v497 = vunpack.c.l.b16 %v225
      %v498 = vunpack.c.l.b16 %v226
      %v499 = vunpack.c.l.b16 %v227
      %v500 = vunpack.c.l.b16 %v228
      %v501 = vunpack.c.l.b16 %v229
      %v502 = vunpack.c.l.b16 %v230
      %v503 = vunpack.c.l.b16 %v231
      %v504 = vunpack.c.l.b16 %v232
      %v505 = vunpack.c.l.b16 %v233
      %v506 = vunpack.c.l.b16 %v234
      %v507 = vunpack.c.l.b16 %v235
      %v508 = vunpack.c.l.b16 %v236
      %v509 = vunpack.c.l.b16 %v237
      %v510 = vunpack.c.l.b16 %v238
      %v511 = vunpack.c.l.b16 %v239
      %v512 = vunpack.c.l.b16 %v240
      %v513 = vunpack.c.l.b16 %v241
      %v514 = vunpack.c.l.b16 %v242
      %v515 = vunpack.c.l.b16 %v243
      %v516 = vunpack.c.l.b16 %v244
      %v517 = vunpack.c.l.b16 %v245
      %v518 = vunpack.c.l.b16 %v246
      %v519 = vunpack.c.l.b16 %v247
      %v520 = vunpack.c.l.b16 %v248
      %v521 = vunpack.c.l.b16 %v249
      %v522 = vunpack.c.l.b16 %v250
      %v523 = vunpack.c.l.b16 %v251
      %v524 = vunpack.c.l.b16 %v252
      %v525 = vunpack.c.l.b16 %v253
      %v526 = vunpack.c.l.b16 %v254
      %v527 = vunpack.c.l.b16 %v255
      %v528 = vunpack.c.l.b16 %v256
      %v529 = vunpack.c.l.b16 %v257
      %v530 = vunpack.c.l.b16 %v258
      %v531 = vunpack.c.l.b16 %v259
      %v532 = vunpack.c.l.b16 %v260
      %v533 = vunpack.c.l.b16 %v261
      %v534 = vunpack.c.l.b16 %v262
      %v535 = vunpack.c.l.b16 %v263
      %v536 = vunpack.c.l.b16 %v264
      %v537 = vunpack.c.l.b16 %v265
      %v538 = vunpack.c.l.b16 %v266
      %v539 = vunpack.c.l.b16 %v267
      %v540 = vunpack.c.l.b16 %v268
      %v541 = vunpack.c.l.b16 %v269
      %v542 = vunpack.c.l.b16 %v270
      %v543 = vunpack.c.l.b16 %v271
      %v544 = vunpack.c.l.b16 %v272
      %v545 = vunpack.c.l.b16 %v273
      %v546 = vunpack.c.l.b16 %v274
      %v547 = vunpack.c.l.b16 %v275
      %v548 = vunpack.c.l.b16 %v276
      %v549 = vunpack.c.l.b16 %v277
      %v550 = vunpack.c.l.b16 %v278
      %v551 = vunpack.c.l.b16 %v279
      %v552 = vunpack.c.l.b16 %v280
      %v553 = vunpack.c.l.b16 %v281
      %v554 = vunpack.c.l.b16 %v282
      %v555 = vunpack.c.l.b16 %v283
      %v556 = vunpack.c.l.b16 %v284
      %v557 = vunpack.c.l.b16 %v285
      %v558 = vunpack.c.l.b16 %v286
      %v559 = vunpack.c.l.b16 %v287
      %v560 = vunpack.c.l.b16 %v288
      %v561 = vunpack.c.l.b16 %v289
      %v562 = vunpack.c.l.b16 %v290
      %v563 = vunpack.c.l.b16 %v291
      %v564 = vunpack.c.l.b16 %v292
      %v565 = vunpack.c.l.b16 %v293
      %v566 = vunpack.c.l.b16 %v294
      %v567 = vunpack.c.l.b16 %v295
      %v568 = vunpack.c.l.b16 %v296
      %v569 = vunpack.c.l.b16 %v297
      %v570 = vunpack.c.l.b16 %v298
      %v571 = vunpack.c.l.b16 %v299
      %v572 = vunpack.c.l.b16 %v300
      %v573 = vunpack.c.l.b16 %v301
      %v574 = vunpack.c.l.b16 %v302
      %v575 = vunpack.c.l.b16 %v303
      %v576 = vunpack.c.l.b16 %v304
      %v577 = vunpack.c.l.b16 %v305
      %v578 = vunpack.c.l.b16 %v306
      %v579 = vunpack.c.l.b16 %v307
      %v580 = vunpack.c.l.b16 %v308
      %v581 = vunpack.c.l.b16 %v309
      %v582 = vunpack.c.l.b16 %v310
      %v583 = vunpack.c.l.b16 %v311
      %v584 = vunpack.c.l.b16 %v312
      %v585 = vunpack.c.l.b16 %v313
      %v586 = vunpack.c.l.b16 %v314
      %v587 = vunpack.c.l.b16 %v315
      %v588 = vunpack.c.l.b16 %v316
      %v589 = vunpack.c.l.b16 %v317
      %v590 = vunpack.c.l.b16 %v318
      %v591 = vunpack.c.l.b16 %v319
      %v592 = vunpack.c.l.b16 %v320
      %v593 = vunpack.c.l.b16 %v321
      %v594 = vunpack.c.l.b16 %v322
      %v595 = vpack.c.b16 %v468, %v467
      %v596 = vpack.c.b16 %v470, %v469
      %v597 = vpack.c.b16 %v472, %v471
      %v598 = vpack.c.b16 %v474, %v473
      %v599 = vpack.c.b16 %v476, %v475
      %v600 = vpack.c.b16 %v478, %v477
      %v601 = vpack.c.b16 %v480, %v479
      %v602 = vpack.c.b16 %v482, %v481
      %v603 = vpack.c.b16 %v484, %v483
      %v604 = vpack.c.b16 %v486, %v485
      %v605 = vpack.c.b16 %v488, %v487
      %v606 = vpack.c.b16 %v490, %v489
      %v607 = vpack.c.b16 %v492, %v491
      %v608 = vpack.c.b16 %v494, %v493
      %v609 = vpack.c.b16 %v496, %v495
      %v610 = vpack.c.b16 %v498, %v497
      %v611 = vpack.c.b16 %v500, %v499
      %v612 = vpack.c.b16 %v502, %v501
      %v613 = vpack.c.b16 %v504, %v503
      %v614 = vpack.c.b16 %v506, %v505
      %v615 = vpack.c.b16 %v508, %v507
      %v616 = vpack.c.b16 %v510, %v509
      %v617 = vpack.c.b16 %v512, %v511
      %v618 = vpack.c.b16 %v514, %v513
      %v619 = vpack.c.b16 %v516, %v515
      %v620 = vpack.c.b16 %v518, %v517
      %v621 = vpack.c.b16 %v520, %v519
      %v622 = vpack.c.b16 %v522, %v521
      %v623 = vpack.c.b16 %v524, %v523
      %v624 = vpack.c.b16 %v526, %v525
      %v625 = vpack.c.b16 %v528, %v527
      %v626 = vpack.c.b16 %v530, %v529
      %v627 = vpack.c.b16 %v532, %v531
      %v628 = vpack.c.b16 %v534, %v533
      %v629 = vpack.c.b16 %v536, %v535
      %v630 = vpack.c.b16 %v538, %v537
      %v631 = vpack.c.b16 %v540, %v539
      %v632 = vpack.c.b16 %v542, %v541
      %v633 = vpack.c.b16 %v544, %v543
      %v634 = vpack.c.b16 %v546, %v545
      %v635 = vpack.c.b16 %v548, %v547
      %v636 = vpack.c.b16 %v550, %v549
      %v637 = vpack.c.b16 %v552, %v551
      %v638 = vpack.c.b16 %v554, %v553
      %v639 = vpack.c.b16 %v556, %v555
      %v640 = vpack.c.b16 %v558, %v557
      %v641 = vpack.c.b16 %v560, %v559
      %v642 = vpack.c.b16 %v562, %v561
      %v643 = vpack.c.b16 %v564, %v563
      %v644 = vpack.c.b16 %v566, %v565
      %v645 = vpack.c.b16 %v568, %v567
      %v646 = vpack.c.b16 %v570, %v569
      %v647 = vpack.c.b16 %v572, %v571
      %v648 = vpack.c.b16 %v574, %v573
      %v649 = vpack.c.b16 %v576, %v575
      %v650 = vpack.c.b16 %v578, %v577
      %v651 = vpack.c.b16 %v580, %v579
      %v652 = vpack.c.b16 %v582, %v581
      %v653 = vpack.c.b16 %v584, %v583
      %v654 = vpack.c.b16 %v586, %v585
      %v655 = vpack.c.b16 %v588, %v587
      %v656 = vpack.c.b16 %v590, %v589
      %v657 = vpack.c.b16 %v592, %v591
      %v658 = vpack.c.b16 %v594, %v593
      %v675 = vunpack.c.l.b16 %v323
      %v676 = vunpack.c.h.b16 %v323
      %v677 = vunpack.c.l.b16 %v324
      %v678 = vunpack.c.h.b16 %v324
      %v679 = vunpack.c.l.b16 %v325
      %v680 = vunpack.c.h.b16 %v325
      %v681 = vunpack.c.l.b16 %v326
      %v682 = vunpack.c.h.b16 %v326
      %v683 = vunpack.c.l.b16 %v327
      %v684 = vunpack.c.h.b16 %v327
      %v685 = vunpack.c.l.b16 %v328
      %v686 = vunpack.c.h.b16 %v328
      %v687 = vunpack.c.l.b16 %v329
      %v688 = vunpack.c.h.b16 %v329
      %v689 = vunpack.c.l.b16 %v330
      %v690 = vunpack.c.h.b16 %v330
      %v691 = vunpack.c.l.b16 %v331
      %v692 = vunpack.c.h.b16 %v331
      %v693 = vunpack.c.l.b16 %v332
      %v694 = vunpack.c.h.b16 %v332
      %v695 = vunpack.c.l.b16 %v333
      %v696 = vunpack.c.h.b16 %v333
      %v697 = vunpack.c.l.b16 %v334
      %v698 = vunpack.c.h.b16 %v334
      %v699 = vunpack.c.l.b16 %v335
      %v700 = vunpack.c.h.b16 %v335
      %v701 = vunpack.c.l.b16 %v336
      %v702 = vunpack.c.h.b16 %v336
      %v703 = vunpack.c.l.b16 %v337
      %v704 = vunpack.c.h.b16 %v337
      %v705 = vunpack.c.l.b16 %v338
      %v706 = vunpack.c.h.b16 %v338
      %v707 = vpack.c.b16 %v679, %v675
      %v708 = vpack.c.b16 %v680, %v676
      %v709 = vpack.c.b16 %v681, %v677
      %v710 = vpack.c.b16 %v682, %v678
      %v711 = vpack.c.b16 %v687, %v683
      %v712 = vpack.c.b16 %v688, %v684
      %v713 = vpack.c.b16 %v689, %v685
      %v714 = vpack.c.b16 %v690, %v686
      %v715 = vpack.c.b16 %v695, %v691
      %v716 = vpack.c.b16 %v696, %v692
      %v717 = vpack.c.b16 %v697, %v693
      %v718 = vpack.c.b16 %v698, %v694
      %v719 = vpack.c.b16 %v703, %v699
      %v720 = vpack.c.b16 %v704, %v700
      %v721 = vpack.c.b16 %v705, %v701
      %v722 = vpack.c.b16 %v706, %v702
      %vm739 = vcmask 523264
      %v741 = vsel %vm739, %v595, 0
      %v744 = vsel %vm739, %v596, 0
      %v747 = vsel %vm739, %v597, 0
      %v750 = vsel %vm739, %v598, 0
      %v753 = vsel %vm739, %v599, 0
      %v756 = vsel %vm739, %v600, 0
      %v759 = vsel %vm739, %v601, 0
      %v762 = vsel %vm739, %v602, 0
      %v765 = vsel %vm739, %v603, 0
      %v768 = vsel %vm739, %v604, 0
      %v771 = vsel %vm739, %v605, 0
      %v774 = vsel %vm739, %v606, 0
      %v777 = vsel %vm739, %v607, 0
      %v780 = vsel %vm739, %v608, 0
      %v783 = vsel %vm739, %v609, 0
      %v786 = vsel %vm739, %v610, 0
      %v789 = vsel %vm739, %v611, 0
      %v792 = vsel %vm739, %v612, 0
      %v795 = vsel %vm739, %v613, 0
      %v798 = vsel %vm739, %v614, 0
      %v801 = vsel %vm739, %v615, 0
      %v804 = vsel %vm739, %v616, 0
      %v807 = vsel %vm739, %v617, 0
      %v810 = vsel %vm739, %v618, 0
      %v813 = vsel %vm739, %v619, 0
      %v816 = vsel %vm739, %v620, 0
      %v819 = vsel %vm739, %v621, 0
      %v822 = vsel %vm739, %v622, 0
      %v825 = vsel %vm739, %v623, 0
      %v828 = vsel %vm739, %v624, 0
      %v831 = vsel %vm739, %v625, 0
      %v834 = vsel %vm739, %v626, 0
      %v837 = vsel %vm739, %v627, 0
      %v840 = vsel %vm739, %v628, 0
      %v843 = vsel %vm739, %v629, 0
      %v846 = vsel %vm739, %v630, 0
      %v849 = vsel %vm739, %v631, 0
      %v852 = vsel %vm739, %v632, 0
      %v855 = vsel %vm739, %v633, 0
      %v858 = vsel %vm739, %v634, 0
      %v861 = vsel %vm739, %v635, 0
      %v864 = vsel %vm739, %v636, 0
      %v867 = vsel %vm739, %v637, 0
      %v870 = vsel %vm739, %v638, 0
      %v873 = vsel %vm739, %v639, 0
      %v876 = vsel %vm739, %v640, 0
      %v879 = vsel %vm739, %v641, 0
      %v882 = vsel %vm739, %v642, 0
      %v885 = vsel %vm739, %v643, 0
      %v888 = vsel %vm739, %v644, 0
      %v891 = vsel %vm739, %v645, 0
      %v894 = vsel %vm739, %v646, 0
      %v897 = vsel %vm739, %v647, 0
      %v900 = vsel %vm739, %v648, 0
      %v903 = vsel %vm739, %v649, 0
      %v906 = vsel %vm739, %v650, 0
      %v909 = vsel %vm739, %v651, 0
      %v912 = vsel %vm739, %v652, 0
      %v915 = vsel %vm739, %v653, 0
      %v918 = vsel %vm739, %v654, 0
      %v921 = vsel %vm739, %v655, 0
      %v924 = vsel %vm739, %v656, 0
      %v927 = vsel %vm739, %v657, 0
      %v930 = vsel %vm739, %v658, 0
      %932 = vmatprep.subr.bf16.mxu0 0
      %933 = vmatpush1.bf16.msra.mxu0 0
      %934 = vmatprep.subr.bf16.mxu0 0
      %935 = vmatpush1.bf16.msra.mxu0 0
      %936 = vmatprep.subr.bf16.mxu0 0
      %937 = vmatpush1.bf16.msra.mxu0 0
      %938 = vmatprep.subr.bf16.mxu0 0
      %939 = vmatpush1.bf16.msra.mxu0 0
      %940 = vmatprep.subr.bf16.mxu0 %v720
      %941 = vmatpush1.bf16.msra.mxu0 %v719
      %942 = vmatprep.subr.bf16.mxu0 %v716
      %943 = vmatpush1.bf16.msra.mxu0 %v715
      %944 = vmatprep.subr.bf16.mxu0 %v712
      %945 = vmatpush1.bf16.msra.mxu0 %v711
      %946 = vmatprep.subr.bf16.mxu0 %v708
      %947 = vmatpush1.bf16.msra.mxu0 %v707
      %948 = vmatprep.subr.bf16.mxu0 0
      %949 = vmatpush2.bf16.msra.mxu0 0
      %950 = vmatprep.subr.bf16.mxu0 0
      %951 = vmatpush2.bf16.msra.mxu0 0
      %952 = vmatprep.subr.bf16.mxu0 0
      %953 = vmatpush2.bf16.msra.mxu0 0
      %954 = vmatprep.subr.bf16.mxu0 0
      %955 = vmatpush2.bf16.msra.mxu0 0
      %956 = vmatprep.subr.bf16.mxu0 0
      %957 = vmatpush2.bf16.msra.mxu0 0
      %958 = vmatprep.subr.bf16.mxu0 0
      %959 = vmatpush2.bf16.msra.mxu0 0
      %960 = vmatprep.subr.bf16.mxu0 0
      %961 = vmatpush2.bf16.msra.mxu0 0
      %962 = vmatprep.subr.bf16.mxu0 0
      %963 = vmatpush2.bf16.msra.mxu0 0
      %964 = vmatprep.mubr.bf16.mxu0 0
      %965 = vmatmul.mubr.bf16.gmra.mxu0 %v741
      %v966 = vpop.f32.mrf.mxu0
      %v967 = vadd.f32 0.0, %v966
      %v968 = vpop.f32.mrf.mxu0
      %v969 = vadd.f32 0.0, %v968
      %v970 = vpop.f32.mrf.mxu0
      %v971 = vadd.f32 0.0, %v970
      %v972 = vpop.f32.mrf.mxu0
      %v973 = vadd.f32 0.0, %v972
      %974 = vmatprep.mubr.bf16.mxu0 0
      %975 = vmatmul.mubr.bf16.gmra.mxu0 %v744
      %v976 = vpop.f32.mrf.mxu0
      %v977 = vadd.f32 0.0, %v976
      %v978 = vpop.f32.mrf.mxu0
      %v979 = vadd.f32 0.0, %v978
      %v980 = vpop.f32.mrf.mxu0
      %v981 = vadd.f32 0.0, %v980
      %v982 = vpop.f32.mrf.mxu0
      %v983 = vadd.f32 0.0, %v982
      %984 = vmatprep.mubr.bf16.mxu0 0
      %985 = vmatmul.mubr.bf16.gmra.mxu0 %v747
      %v986 = vpop.f32.mrf.mxu0
      %v987 = vadd.f32 0.0, %v986
      %v988 = vpop.f32.mrf.mxu0
      %v989 = vadd.f32 0.0, %v988
      %v990 = vpop.f32.mrf.mxu0
      %v991 = vadd.f32 0.0, %v990
      %v992 = vpop.f32.mrf.mxu0
      %v993 = vadd.f32 0.0, %v992
      %994 = vmatprep.mubr.bf16.mxu0 0
      %995 = vmatmul.mubr.bf16.gmra.mxu0 %v750
      %v996 = vpop.f32.mrf.mxu0
      %v997 = vadd.f32 0.0, %v996
      %v998 = vpop.f32.mrf.mxu0
      %v999 = vadd.f32 0.0, %v998
      %v1000 = vpop.f32.mrf.mxu0
      %v1001 = vadd.f32 0.0, %v1000
      %v1002 = vpop.f32.mrf.mxu0
      %v1003 = vadd.f32 0.0, %v1002
      %1004 = vmatprep.mubr.bf16.mxu0 0
      %1005 = vmatmul.mubr.bf16.gmra.mxu0 %v753
      %v1006 = vpop.f32.mrf.mxu0
      %v1007 = vadd.f32 0.0, %v1006
      %v1008 = vpop.f32.mrf.mxu0
      %v1009 = vadd.f32 0.0, %v1008
      %v1010 = vpop.f32.mrf.mxu0
      %v1011 = vadd.f32 0.0, %v1010
      %v1012 = vpop.f32.mrf.mxu0
      %v1013 = vadd.f32 0.0, %v1012
      %1014 = vmatprep.mubr.bf16.mxu0 0
      %1015 = vmatmul.mubr.bf16.gmra.mxu0 %v756
      %v1016 = vpop.f32.mrf.mxu0
      %v1017 = vadd.f32 0.0, %v1016
      %v1018 = vpop.f32.mrf.mxu0
      %v1019 = vadd.f32 0.0, %v1018
      %v1020 = vpop.f32.mrf.mxu0
      %v1021 = vadd.f32 0.0, %v1020
      %v1022 = vpop.f32.mrf.mxu0
      %v1023 = vadd.f32 0.0, %v1022
      %1024 = vmatprep.mubr.bf16.mxu0 0
      %1025 = vmatmul.mubr.bf16.gmra.mxu0 %v759
      %v1026 = vpop.f32.mrf.mxu0
      %v1027 = vadd.f32 0.0, %v1026
      %v1028 = vpop.f32.mrf.mxu0
      %v1029 = vadd.f32 0.0, %v1028
      %v1030 = vpop.f32.mrf.mxu0
      %v1031 = vadd.f32 0.0, %v1030
      %v1032 = vpop.f32.mrf.mxu0
      %v1033 = vadd.f32 0.0, %v1032
      %1034 = vmatprep.mubr.bf16.mxu0 0
      %1035 = vmatmul.mubr.bf16.gmra.mxu0 %v762
      %v1036 = vpop.f32.mrf.mxu0
      %v1037 = vadd.f32 0.0, %v1036
      %v1038 = vpop.f32.mrf.mxu0
      %v1039 = vadd.f32 0.0, %v1038
      %v1040 = vpop.f32.mrf.mxu0
      %v1041 = vadd.f32 0.0, %v1040
      %v1042 = vpop.f32.mrf.mxu0
      %v1043 = vadd.f32 0.0, %v1042
      %1044 = vmatprep.mubr.bf16.mxu0 0
      %1045 = vmatmul.mubr.bf16.gmra.mxu0 %v765
      %v1046 = vpop.f32.mrf.mxu0
      %v1047 = vadd.f32 0.0, %v1046
      %v1048 = vpop.f32.mrf.mxu0
      %v1049 = vadd.f32 0.0, %v1048
      %v1050 = vpop.f32.mrf.mxu0
      %v1051 = vadd.f32 0.0, %v1050
      %v1052 = vpop.f32.mrf.mxu0
      %v1053 = vadd.f32 0.0, %v1052
      %1054 = vmatprep.mubr.bf16.mxu0 0
      %1055 = vmatmul.mubr.bf16.gmra.mxu0 %v768
      %v1056 = vpop.f32.mrf.mxu0
      %v1057 = vadd.f32 0.0, %v1056
      %v1058 = vpop.f32.mrf.mxu0
      %v1059 = vadd.f32 0.0, %v1058
      %v1060 = vpop.f32.mrf.mxu0
      %v1061 = vadd.f32 0.0, %v1060
      %v1062 = vpop.f32.mrf.mxu0
      %v1063 = vadd.f32 0.0, %v1062
      %1064 = vmatprep.mubr.bf16.mxu0 0
      %1065 = vmatmul.mubr.bf16.gmra.mxu0 %v771
      %v1066 = vpop.f32.mrf.mxu0
      %v1067 = vadd.f32 0.0, %v1066
      %v1068 = vpop.f32.mrf.mxu0
      %v1069 = vadd.f32 0.0, %v1068
      %v1070 = vpop.f32.mrf.mxu0
      %v1071 = vadd.f32 0.0, %v1070
      %v1072 = vpop.f32.mrf.mxu0
      %v1073 = vadd.f32 0.0, %v1072
      %1074 = vmatprep.mubr.bf16.mxu0 0
      %1075 = vmatmul.mubr.bf16.gmra.mxu0 %v774
      %v1076 = vpop.f32.mrf.mxu0
      %v1077 = vadd.f32 0.0, %v1076
      %v1078 = vpop.f32.mrf.mxu0
      %v1079 = vadd.f32 0.0, %v1078
      %v1080 = vpop.f32.mrf.mxu0
      %v1081 = vadd.f32 0.0, %v1080
      %v1082 = vpop.f32.mrf.mxu0
      %v1083 = vadd.f32 0.0, %v1082
      %1084 = vmatprep.mubr.bf16.mxu0 0
      %1085 = vmatmul.mubr.bf16.gmra.mxu0 %v777
      %v1086 = vpop.f32.mrf.mxu0
      %v1087 = vadd.f32 0.0, %v1086
      %v1088 = vpop.f32.mrf.mxu0
      %v1089 = vadd.f32 0.0, %v1088
      %v1090 = vpop.f32.mrf.mxu0
      %v1091 = vadd.f32 0.0, %v1090
      %v1092 = vpop.f32.mrf.mxu0
      %v1093 = vadd.f32 0.0, %v1092
      %1094 = vmatprep.mubr.bf16.mxu0 0
      %1095 = vmatmul.mubr.bf16.gmra.mxu0 %v780
      %v1096 = vpop.f32.mrf.mxu0
      %v1097 = vadd.f32 0.0, %v1096
      %v1098 = vpop.f32.mrf.mxu0
      %v1099 = vadd.f32 0.0, %v1098
      %v1100 = vpop.f32.mrf.mxu0
      %v1101 = vadd.f32 0.0, %v1100
      %v1102 = vpop.f32.mrf.mxu0
      %v1103 = vadd.f32 0.0, %v1102
      %1104 = vmatprep.mubr.bf16.mxu0 0
      %1105 = vmatmul.mubr.bf16.gmra.mxu0 %v783
      %v1106 = vpop.f32.mrf.mxu0
      %v1107 = vadd.f32 0.0, %v1106
      %v1108 = vpop.f32.mrf.mxu0
      %v1109 = vadd.f32 0.0, %v1108
      %v1110 = vpop.f32.mrf.mxu0
      %v1111 = vadd.f32 0.0, %v1110
      %v1112 = vpop.f32.mrf.mxu0
      %v1113 = vadd.f32 0.0, %v1112
      %1114 = vmatprep.mubr.bf16.mxu0 0
      %1115 = vmatmul.mubr.bf16.gmra.mxu0 %v786
      %v1116 = vpop.f32.mrf.mxu0
      %v1117 = vadd.f32 0.0, %v1116
      %v1118 = vpop.f32.mrf.mxu0
      %v1119 = vadd.f32 0.0, %v1118
      %v1120 = vpop.f32.mrf.mxu0
      %v1121 = vadd.f32 0.0, %v1120
      %v1122 = vpop.f32.mrf.mxu0
      %v1123 = vadd.f32 0.0, %v1122
      %1124 = vmatprep.mubr.bf16.mxu0 0
      %1125 = vmatmul.mubr.bf16.gmra.mxu0 %v789
      %v1126 = vpop.f32.mrf.mxu0
      %v1127 = vadd.f32 0.0, %v1126
      %v1128 = vpop.f32.mrf.mxu0
      %v1129 = vadd.f32 0.0, %v1128
      %v1130 = vpop.f32.mrf.mxu0
      %v1131 = vadd.f32 0.0, %v1130
      %v1132 = vpop.f32.mrf.mxu0
      %v1133 = vadd.f32 0.0, %v1132
      %1134 = vmatprep.mubr.bf16.mxu0 0
      %1135 = vmatmul.mubr.bf16.gmra.mxu0 %v792
      %v1136 = vpop.f32.mrf.mxu0
      %v1137 = vadd.f32 0.0, %v1136
      %v1138 = vpop.f32.mrf.mxu0
      %v1139 = vadd.f32 0.0, %v1138
      %v1140 = vpop.f32.mrf.mxu0
      %v1141 = vadd.f32 0.0, %v1140
      %v1142 = vpop.f32.mrf.mxu0
      %v1143 = vadd.f32 0.0, %v1142
      %1144 = vmatprep.mubr.bf16.mxu0 0
      %1145 = vmatmul.mubr.bf16.gmra.mxu0 %v795
      %v1146 = vpop.f32.mrf.mxu0
      %v1147 = vadd.f32 0.0, %v1146
      %v1148 = vpop.f32.mrf.mxu0
      %v1149 = vadd.f32 0.0, %v1148
      %v1150 = vpop.f32.mrf.mxu0
      %v1151 = vadd.f32 0.0, %v1150
      %v1152 = vpop.f32.mrf.mxu0
      %v1153 = vadd.f32 0.0, %v1152
      %1154 = vmatprep.mubr.bf16.mxu0 0
      %1155 = vmatmul.mubr.bf16.gmra.mxu0 %v798
      %v1156 = vpop.f32.mrf.mxu0
      %v1157 = vadd.f32 0.0, %v1156
      %v1158 = vpop.f32.mrf.mxu0
      %v1159 = vadd.f32 0.0, %v1158
      %v1160 = vpop.f32.mrf.mxu0
      %v1161 = vadd.f32 0.0, %v1160
      %v1162 = vpop.f32.mrf.mxu0
      %v1163 = vadd.f32 0.0, %v1162
      %1164 = vmatprep.mubr.bf16.mxu0 0
      %1165 = vmatmul.mubr.bf16.gmra.mxu0 %v801
      %v1166 = vpop.f32.mrf.mxu0
      %v1167 = vadd.f32 0.0, %v1166
      %v1168 = vpop.f32.mrf.mxu0
      %v1169 = vadd.f32 0.0, %v1168
      %v1170 = vpop.f32.mrf.mxu0
      %v1171 = vadd.f32 0.0, %v1170
      %v1172 = vpop.f32.mrf.mxu0
      %v1173 = vadd.f32 0.0, %v1172
      %1174 = vmatprep.mubr.bf16.mxu0 0
      %1175 = vmatmul.mubr.bf16.gmra.mxu0 %v804
      %v1176 = vpop.f32.mrf.mxu0
      %v1177 = vadd.f32 0.0, %v1176
      %v1178 = vpop.f32.mrf.mxu0
      %v1179 = vadd.f32 0.0, %v1178
      %v1180 = vpop.f32.mrf.mxu0
      %v1181 = vadd.f32 0.0, %v1180
      %v1182 = vpop.f32.mrf.mxu0
      %v1183 = vadd.f32 0.0, %v1182
      %1184 = vmatprep.mubr.bf16.mxu0 0
      %1185 = vmatmul.mubr.bf16.gmra.mxu0 %v807
      %v1186 = vpop.f32.mrf.mxu0
      %v1187 = vadd.f32 0.0, %v1186
      %v1188 = vpop.f32.mrf.mxu0
      %v1189 = vadd.f32 0.0, %v1188
      %v1190 = vpop.f32.mrf.mxu0
      %v1191 = vadd.f32 0.0, %v1190
      %v1192 = vpop.f32.mrf.mxu0
      %v1193 = vadd.f32 0.0, %v1192
      %1194 = vmatprep.mubr.bf16.mxu0 0
      %1195 = vmatmul.mubr.bf16.gmra.mxu0 %v810
      %v1196 = vpop.f32.mrf.mxu0
      %v1197 = vadd.f32 0.0, %v1196
      %v1198 = vpop.f32.mrf.mxu0
      %v1199 = vadd.f32 0.0, %v1198
      %v1200 = vpop.f32.mrf.mxu0
      %v1201 = vadd.f32 0.0, %v1200
      %v1202 = vpop.f32.mrf.mxu0
      %v1203 = vadd.f32 0.0, %v1202
      %1204 = vmatprep.mubr.bf16.mxu0 0
      %1205 = vmatmul.mubr.bf16.gmra.mxu0 %v813
      %v1206 = vpop.f32.mrf.mxu0
      %v1207 = vadd.f32 0.0, %v1206
      %v1208 = vpop.f32.mrf.mxu0
      %v1209 = vadd.f32 0.0, %v1208
      %v1210 = vpop.f32.mrf.mxu0
      %v1211 = vadd.f32 0.0, %v1210
      %v1212 = vpop.f32.mrf.mxu0
      %v1213 = vadd.f32 0.0, %v1212
      %1214 = vmatprep.mubr.bf16.mxu0 0
      %1215 = vmatmul.mubr.bf16.gmra.mxu0 %v816
      %v1216 = vpop.f32.mrf.mxu0
      %v1217 = vadd.f32 0.0, %v1216
      %v1218 = vpop.f32.mrf.mxu0
      %v1219 = vadd.f32 0.0, %v1218
      %v1220 = vpop.f32.mrf.mxu0
      %v1221 = vadd.f32 0.0, %v1220
      %v1222 = vpop.f32.mrf.mxu0
      %v1223 = vadd.f32 0.0, %v1222
      %1224 = vmatprep.mubr.bf16.mxu0 0
      %1225 = vmatmul.mubr.bf16.gmra.mxu0 %v819
      %v1226 = vpop.f32.mrf.mxu0
      %v1227 = vadd.f32 0.0, %v1226
      %v1228 = vpop.f32.mrf.mxu0
      %v1229 = vadd.f32 0.0, %v1228
      %v1230 = vpop.f32.mrf.mxu0
      %v1231 = vadd.f32 0.0, %v1230
      %v1232 = vpop.f32.mrf.mxu0
      %v1233 = vadd.f32 0.0, %v1232
      %1234 = vmatprep.mubr.bf16.mxu0 0
      %1235 = vmatmul.mubr.bf16.gmra.mxu0 %v822
      %v1236 = vpop.f32.mrf.mxu0
      %v1237 = vadd.f32 0.0, %v1236
      %v1238 = vpop.f32.mrf.mxu0
      %v1239 = vadd.f32 0.0, %v1238
      %v1240 = vpop.f32.mrf.mxu0
      %v1241 = vadd.f32 0.0, %v1240
      %v1242 = vpop.f32.mrf.mxu0
      %v1243 = vadd.f32 0.0, %v1242
      %1244 = vmatprep.mubr.bf16.mxu0 0
      %1245 = vmatmul.mubr.bf16.gmra.mxu0 %v825
      %v1246 = vpop.f32.mrf.mxu0
      %v1247 = vadd.f32 0.0, %v1246
      %v1248 = vpop.f32.mrf.mxu0
      %v1249 = vadd.f32 0.0, %v1248
      %v1250 = vpop.f32.mrf.mxu0
      %v1251 = vadd.f32 0.0, %v1250
      %v1252 = vpop.f32.mrf.mxu0
      %v1253 = vadd.f32 0.0, %v1252
      %1254 = vmatprep.mubr.bf16.mxu0 0
      %1255 = vmatmul.mubr.bf16.gmra.mxu0 %v828
      %v1256 = vpop.f32.mrf.mxu0
      %v1257 = vadd.f32 0.0, %v1256
      %v1258 = vpop.f32.mrf.mxu0
      %v1259 = vadd.f32 0.0, %v1258
      %v1260 = vpop.f32.mrf.mxu0
      %v1261 = vadd.f32 0.0, %v1260
      %v1262 = vpop.f32.mrf.mxu0
      %v1263 = vadd.f32 0.0, %v1262
      %1264 = vmatprep.mubr.bf16.mxu0 0
      %1265 = vmatmul.mubr.bf16.gmra.mxu0 %v831
      %v1266 = vpop.f32.mrf.mxu0
      %v1267 = vadd.f32 0.0, %v1266
      %v1268 = vpop.f32.mrf.mxu0
      %v1269 = vadd.f32 0.0, %v1268
      %v1270 = vpop.f32.mrf.mxu0
      %v1271 = vadd.f32 0.0, %v1270
      %v1272 = vpop.f32.mrf.mxu0
      %v1273 = vadd.f32 0.0, %v1272
      %1274 = vmatprep.mubr.bf16.mxu0 0
      %1275 = vmatmul.mubr.bf16.gmra.mxu0 %v834
      %v1276 = vpop.f32.mrf.mxu0
      %v1277 = vadd.f32 0.0, %v1276
      %v1278 = vpop.f32.mrf.mxu0
      %v1279 = vadd.f32 0.0, %v1278
      %v1280 = vpop.f32.mrf.mxu0
      %v1281 = vadd.f32 0.0, %v1280
      %v1282 = vpop.f32.mrf.mxu0
      %v1283 = vadd.f32 0.0, %v1282
      %1284 = vmatprep.mubr.bf16.mxu0 0
      %1285 = vmatmul.mubr.bf16.gmra.mxu0 %v837
      %v1286 = vpop.f32.mrf.mxu0
      %v1287 = vadd.f32 0.0, %v1286
      %v1288 = vpop.f32.mrf.mxu0
      %v1289 = vadd.f32 0.0, %v1288
      %v1290 = vpop.f32.mrf.mxu0
      %v1291 = vadd.f32 0.0, %v1290
      %v1292 = vpop.f32.mrf.mxu0
      %v1293 = vadd.f32 0.0, %v1292
      %1294 = vmatprep.mubr.bf16.mxu0 0
      %1295 = vmatmul.mubr.bf16.gmra.mxu0 %v840
      %v1296 = vpop.f32.mrf.mxu0
      %v1297 = vadd.f32 0.0, %v1296
      %v1298 = vpop.f32.mrf.mxu0
      %v1299 = vadd.f32 0.0, %v1298
      %v1300 = vpop.f32.mrf.mxu0
      %v1301 = vadd.f32 0.0, %v1300
      %v1302 = vpop.f32.mrf.mxu0
      %v1303 = vadd.f32 0.0, %v1302
      %1304 = vmatprep.mubr.bf16.mxu0 0
      %1305 = vmatmul.mubr.bf16.gmra.mxu0 %v843
      %v1306 = vpop.f32.mrf.mxu0
      %v1307 = vadd.f32 0.0, %v1306
      %v1308 = vpop.f32.mrf.mxu0
      %v1309 = vadd.f32 0.0, %v1308
      %v1310 = vpop.f32.mrf.mxu0
      %v1311 = vadd.f32 0.0, %v1310
      %v1312 = vpop.f32.mrf.mxu0
      %v1313 = vadd.f32 0.0, %v1312
      %1314 = vmatprep.mubr.bf16.mxu0 0
      %1315 = vmatmul.mubr.bf16.gmra.mxu0 %v846
      %v1316 = vpop.f32.mrf.mxu0
      %v1317 = vadd.f32 0.0, %v1316
      %v1318 = vpop.f32.mrf.mxu0
      %v1319 = vadd.f32 0.0, %v1318
      %v1320 = vpop.f32.mrf.mxu0
      %v1321 = vadd.f32 0.0, %v1320
      %v1322 = vpop.f32.mrf.mxu0
      %v1323 = vadd.f32 0.0, %v1322
      %1324 = vmatprep.mubr.bf16.mxu0 0
      %1325 = vmatmul.mubr.bf16.gmra.mxu0 %v849
      %v1326 = vpop.f32.mrf.mxu0
      %v1327 = vadd.f32 0.0, %v1326
      %v1328 = vpop.f32.mrf.mxu0
      %v1329 = vadd.f32 0.0, %v1328
      %v1330 = vpop.f32.mrf.mxu0
      %v1331 = vadd.f32 0.0, %v1330
      %v1332 = vpop.f32.mrf.mxu0
      %v1333 = vadd.f32 0.0, %v1332
      %1334 = vmatprep.mubr.bf16.mxu0 0
      %1335 = vmatmul.mubr.bf16.gmra.mxu0 %v852
      %v1336 = vpop.f32.mrf.mxu0
      %v1337 = vadd.f32 0.0, %v1336
      %v1338 = vpop.f32.mrf.mxu0
      %v1339 = vadd.f32 0.0, %v1338
      %v1340 = vpop.f32.mrf.mxu0
      %v1341 = vadd.f32 0.0, %v1340
      %v1342 = vpop.f32.mrf.mxu0
      %v1343 = vadd.f32 0.0, %v1342
      %1344 = vmatprep.mubr.bf16.mxu0 0
      %1345 = vmatmul.mubr.bf16.gmra.mxu0 %v855
      %v1346 = vpop.f32.mrf.mxu0
      %v1347 = vadd.f32 0.0, %v1346
      %v1348 = vpop.f32.mrf.mxu0
      %v1349 = vadd.f32 0.0, %v1348
      %v1350 = vpop.f32.mrf.mxu0
      %v1351 = vadd.f32 0.0, %v1350
      %v1352 = vpop.f32.mrf.mxu0
      %v1353 = vadd.f32 0.0, %v1352
      %1354 = vmatprep.mubr.bf16.mxu0 0
      %1355 = vmatmul.mubr.bf16.gmra.mxu0 %v858
      %v1356 = vpop.f32.mrf.mxu0
      %v1357 = vadd.f32 0.0, %v1356
      %v1358 = vpop.f32.mrf.mxu0
      %v1359 = vadd.f32 0.0, %v1358
      %v1360 = vpop.f32.mrf.mxu0
      %v1361 = vadd.f32 0.0, %v1360
      %v1362 = vpop.f32.mrf.mxu0
      %v1363 = vadd.f32 0.0, %v1362
      %1364 = vmatprep.mubr.bf16.mxu0 0
      %1365 = vmatmul.mubr.bf16.gmra.mxu0 %v861
      %v1366 = vpop.f32.mrf.mxu0
      %v1367 = vadd.f32 0.0, %v1366
      %v1368 = vpop.f32.mrf.mxu0
      %v1369 = vadd.f32 0.0, %v1368
      %v1370 = vpop.f32.mrf.mxu0
      %v1371 = vadd.f32 0.0, %v1370
      %v1372 = vpop.f32.mrf.mxu0
      %v1373 = vadd.f32 0.0, %v1372
      %1374 = vmatprep.mubr.bf16.mxu0 0
      %1375 = vmatmul.mubr.bf16.gmra.mxu0 %v864
      %v1376 = vpop.f32.mrf.mxu0
      %v1377 = vadd.f32 0.0, %v1376
      %v1378 = vpop.f32.mrf.mxu0
      %v1379 = vadd.f32 0.0, %v1378
      %v1380 = vpop.f32.mrf.mxu0
      %v1381 = vadd.f32 0.0, %v1380
      %v1382 = vpop.f32.mrf.mxu0
      %v1383 = vadd.f32 0.0, %v1382
      %1384 = vmatprep.mubr.bf16.mxu0 0
      %1385 = vmatmul.mubr.bf16.gmra.mxu0 %v867
      %v1386 = vpop.f32.mrf.mxu0
      %v1387 = vadd.f32 0.0, %v1386
      %v1388 = vpop.f32.mrf.mxu0
      %v1389 = vadd.f32 0.0, %v1388
      %v1390 = vpop.f32.mrf.mxu0
      %v1391 = vadd.f32 0.0, %v1390
      %v1392 = vpop.f32.mrf.mxu0
      %v1393 = vadd.f32 0.0, %v1392
      %1394 = vmatprep.mubr.bf16.mxu0 0
      %1395 = vmatmul.mubr.bf16.gmra.mxu0 %v870
      %v1396 = vpop.f32.mrf.mxu0
      %v1397 = vadd.f32 0.0, %v1396
      %v1398 = vpop.f32.mrf.mxu0
      %v1399 = vadd.f32 0.0, %v1398
      %v1400 = vpop.f32.mrf.mxu0
      %v1401 = vadd.f32 0.0, %v1400
      %v1402 = vpop.f32.mrf.mxu0
      %v1403 = vadd.f32 0.0, %v1402
      %1404 = vmatprep.mubr.bf16.mxu0 0
      %1405 = vmatmul.mubr.bf16.gmra.mxu0 %v873
      %v1406 = vpop.f32.mrf.mxu0
      %v1407 = vadd.f32 0.0, %v1406
      %v1408 = vpop.f32.mrf.mxu0
      %v1409 = vadd.f32 0.0, %v1408
      %v1410 = vpop.f32.mrf.mxu0
      %v1411 = vadd.f32 0.0, %v1410
      %v1412 = vpop.f32.mrf.mxu0
      %v1413 = vadd.f32 0.0, %v1412
      %1414 = vmatprep.mubr.bf16.mxu0 0
      %1415 = vmatmul.mubr.bf16.gmra.mxu0 %v876
      %v1416 = vpop.f32.mrf.mxu0
      %v1417 = vadd.f32 0.0, %v1416
      %v1418 = vpop.f32.mrf.mxu0
      %v1419 = vadd.f32 0.0, %v1418
      %v1420 = vpop.f32.mrf.mxu0
      %v1421 = vadd.f32 0.0, %v1420
      %v1422 = vpop.f32.mrf.mxu0
      %v1423 = vadd.f32 0.0, %v1422
      %1424 = vmatprep.mubr.bf16.mxu0 0
      %1425 = vmatmul.mubr.bf16.gmra.mxu0 %v879
      %v1426 = vpop.f32.mrf.mxu0
      %v1427 = vadd.f32 0.0, %v1426
      %v1428 = vpop.f32.mrf.mxu0
      %v1429 = vadd.f32 0.0, %v1428
      %v1430 = vpop.f32.mrf.mxu0
      %v1431 = vadd.f32 0.0, %v1430
      %v1432 = vpop.f32.mrf.mxu0
      %v1433 = vadd.f32 0.0, %v1432
      %1434 = vmatprep.mubr.bf16.mxu0 0
      %1435 = vmatmul.mubr.bf16.gmra.mxu0 %v882
      %v1436 = vpop.f32.mrf.mxu0
      %v1437 = vadd.f32 0.0, %v1436
      %v1438 = vpop.f32.mrf.mxu0
      %v1439 = vadd.f32 0.0, %v1438
      %v1440 = vpop.f32.mrf.mxu0
      %v1441 = vadd.f32 0.0, %v1440
      %v1442 = vpop.f32.mrf.mxu0
      %v1443 = vadd.f32 0.0, %v1442
      %1444 = vmatprep.mubr.bf16.mxu0 0
      %1445 = vmatmul.mubr.bf16.gmra.mxu0 %v885
      %v1446 = vpop.f32.mrf.mxu0
      %v1447 = vadd.f32 0.0, %v1446
      %v1448 = vpop.f32.mrf.mxu0
      %v1449 = vadd.f32 0.0, %v1448
      %v1450 = vpop.f32.mrf.mxu0
      %v1451 = vadd.f32 0.0, %v1450
      %v1452 = vpop.f32.mrf.mxu0
      %v1453 = vadd.f32 0.0, %v1452
      %1454 = vmatprep.mubr.bf16.mxu0 0
      %1455 = vmatmul.mubr.bf16.gmra.mxu0 %v888
      %v1456 = vpop.f32.mrf.mxu0
      %v1457 = vadd.f32 0.0, %v1456
      %v1458 = vpop.f32.mrf.mxu0
      %v1459 = vadd.f32 0.0, %v1458
      %v1460 = vpop.f32.mrf.mxu0
      %v1461 = vadd.f32 0.0, %v1460
      %v1462 = vpop.f32.mrf.mxu0
      %v1463 = vadd.f32 0.0, %v1462
      %1464 = vmatprep.mubr.bf16.mxu0 0
      %1465 = vmatmul.mubr.bf16.gmra.mxu0 %v891
      %v1466 = vpop.f32.mrf.mxu0
      %v1467 = vadd.f32 0.0, %v1466
      %v1468 = vpop.f32.mrf.mxu0
      %v1469 = vadd.f32 0.0, %v1468
      %v1470 = vpop.f32.mrf.mxu0
      %v1471 = vadd.f32 0.0, %v1470
      %v1472 = vpop.f32.mrf.mxu0
      %v1473 = vadd.f32 0.0, %v1472
      %1474 = vmatprep.mubr.bf16.mxu0 0
      %1475 = vmatmul.mubr.bf16.gmra.mxu0 %v894
      %v1476 = vpop.f32.mrf.mxu0
      %v1477 = vadd.f32 0.0, %v1476
      %v1478 = vpop.f32.mrf.mxu0
      %v1479 = vadd.f32 0.0, %v1478
      %v1480 = vpop.f32.mrf.mxu0
      %v1481 = vadd.f32 0.0, %v1480
      %v1482 = vpop.f32.mrf.mxu0
      %v1483 = vadd.f32 0.0, %v1482
      %1484 = vmatprep.mubr.bf16.mxu0 0
      %1485 = vmatmul.mubr.bf16.gmra.mxu0 %v897
      %v1486 = vpop.f32.mrf.mxu0
      %v1487 = vadd.f32 0.0, %v1486
      %v1488 = vpop.f32.mrf.mxu0
      %v1489 = vadd.f32 0.0, %v1488
      %v1490 = vpop.f32.mrf.mxu0
      %v1491 = vadd.f32 0.0, %v1490
      %v1492 = vpop.f32.mrf.mxu0
      %v1493 = vadd.f32 0.0, %v1492
      %1494 = vmatprep.mubr.bf16.mxu0 0
      %1495 = vmatmul.mubr.bf16.gmra.mxu0 %v900
      %v1496 = vpop.f32.mrf.mxu0
      %v1497 = vadd.f32 0.0, %v1496
      %v1498 = vpop.f32.mrf.mxu0
      %v1499 = vadd.f32 0.0, %v1498
      %v1500 = vpop.f32.mrf.mxu0
      %v1501 = vadd.f32 0.0, %v1500
      %v1502 = vpop.f32.mrf.mxu0
      %v1503 = vadd.f32 0.0, %v1502
      %1504 = vmatprep.mubr.bf16.mxu0 0
      %1505 = vmatmul.mubr.bf16.gmra.mxu0 %v903
      %v1506 = vpop.f32.mrf.mxu0
      %v1507 = vadd.f32 0.0, %v1506
      %v1508 = vpop.f32.mrf.mxu0
      %v1509 = vadd.f32 0.0, %v1508
      %v1510 = vpop.f32.mrf.mxu0
      %v1511 = vadd.f32 0.0, %v1510
      %v1512 = vpop.f32.mrf.mxu0
      %v1513 = vadd.f32 0.0, %v1512
      %1514 = vmatprep.mubr.bf16.mxu0 0
      %1515 = vmatmul.mubr.bf16.gmra.mxu0 %v906
      %v1516 = vpop.f32.mrf.mxu0
      %v1517 = vadd.f32 0.0, %v1516
      %v1518 = vpop.f32.mrf.mxu0
      %v1519 = vadd.f32 0.0, %v1518
      %v1520 = vpop.f32.mrf.mxu0
      %v1521 = vadd.f32 0.0, %v1520
      %v1522 = vpop.f32.mrf.mxu0
      %v1523 = vadd.f32 0.0, %v1522
      %1524 = vmatprep.mubr.bf16.mxu0 0
      %1525 = vmatmul.mubr.bf16.gmra.mxu0 %v909
      %v1526 = vpop.f32.mrf.mxu0
      %v1527 = vadd.f32 0.0, %v1526
      %v1528 = vpop.f32.mrf.mxu0
      %v1529 = vadd.f32 0.0, %v1528
      %v1530 = vpop.f32.mrf.mxu0
      %v1531 = vadd.f32 0.0, %v1530
      %v1532 = vpop.f32.mrf.mxu0
      %v1533 = vadd.f32 0.0, %v1532
      %1534 = vmatprep.mubr.bf16.mxu0 0
      %1535 = vmatmul.mubr.bf16.gmra.mxu0 %v912
      %v1536 = vpop.f32.mrf.mxu0
      %v1537 = vadd.f32 0.0, %v1536
      %v1538 = vpop.f32.mrf.mxu0
      %v1539 = vadd.f32 0.0, %v1538
      %v1540 = vpop.f32.mrf.mxu0
      %v1541 = vadd.f32 0.0, %v1540
      %v1542 = vpop.f32.mrf.mxu0
      %v1543 = vadd.f32 0.0, %v1542
      %1544 = vmatprep.mubr.bf16.mxu0 0
      %1545 = vmatmul.mubr.bf16.gmra.mxu0 %v915
      %v1546 = vpop.f32.mrf.mxu0
      %v1547 = vadd.f32 0.0, %v1546
      %v1548 = vpop.f32.mrf.mxu0
      %v1549 = vadd.f32 0.0, %v1548
      %v1550 = vpop.f32.mrf.mxu0
      %v1551 = vadd.f32 0.0, %v1550
      %v1552 = vpop.f32.mrf.mxu0
      %v1553 = vadd.f32 0.0, %v1552
      %1554 = vmatprep.mubr.bf16.mxu0 0
      %1555 = vmatmul.mubr.bf16.gmra.mxu0 %v918
      %v1556 = vpop.f32.mrf.mxu0
      %v1557 = vadd.f32 0.0, %v1556
      %v1558 = vpop.f32.mrf.mxu0
      %v1559 = vadd.f32 0.0, %v1558
      %v1560 = vpop.f32.mrf.mxu0
      %v1561 = vadd.f32 0.0, %v1560
      %v1562 = vpop.f32.mrf.mxu0
      %v1563 = vadd.f32 0.0, %v1562
      %1564 = vmatprep.mubr.bf16.mxu0 0
      %1565 = vmatmul.mubr.bf16.gmra.mxu0 %v921
      %v1566 = vpop.f32.mrf.mxu0
      %v1567 = vadd.f32 0.0, %v1566
      %v1568 = vpop.f32.mrf.mxu0
      %v1569 = vadd.f32 0.0, %v1568
      %v1570 = vpop.f32.mrf.mxu0
      %v1571 = vadd.f32 0.0, %v1570
      %v1572 = vpop.f32.mrf.mxu0
      %v1573 = vadd.f32 0.0, %v1572
      %1574 = vmatprep.mubr.bf16.mxu0 0
      %1575 = vmatmul.mubr.bf16.gmra.mxu0 %v924
      %v1576 = vpop.f32.mrf.mxu0
      %v1577 = vadd.f32 0.0, %v1576
      %v1578 = vpop.f32.mrf.mxu0
      %v1579 = vadd.f32 0.0, %v1578
      %v1580 = vpop.f32.mrf.mxu0
      %v1581 = vadd.f32 0.0, %v1580
      %v1582 = vpop.f32.mrf.mxu0
      %v1583 = vadd.f32 0.0, %v1582
      %1584 = vmatprep.mubr.bf16.mxu0 0
      %1585 = vmatmul.mubr.bf16.gmra.mxu0 %v927
      %v1586 = vpop.f32.mrf.mxu0
      %v1587 = vadd.f32 0.0, %v1586
      %v1588 = vpop.f32.mrf.mxu0
      %v1589 = vadd.f32 0.0, %v1588
      %v1590 = vpop.f32.mrf.mxu0
      %v1591 = vadd.f32 0.0, %v1590
      %v1592 = vpop.f32.mrf.mxu0
      %v1593 = vadd.f32 0.0, %v1592
      %1594 = vmatprep.mubr.bf16.mxu0 0
      %1595 = vmatmul.mubr.bf16.gmra.mxu0 %v930
      %v1596 = vpop.f32.mrf.mxu0
      %v1597 = vadd.f32 0.0, %v1596
      %v1598 = vpop.f32.mrf.mxu0
      %v1599 = vadd.f32 0.0, %v1598
      %v1600 = vpop.f32.mrf.mxu0
      %v1601 = vadd.f32 0.0, %v1600
      %v1602 = vpop.f32.mrf.mxu0
      %v1603 = vadd.f32 0.0, %v1602
      %1604 = vdwg.mxu0
      %1605 = vmatprep.subr.bf16.mxu0 0
      %1606 = vmatpush1.bf16.msra.mxu0 0
      %1607 = vmatprep.subr.bf16.mxu0 0
      %1608 = vmatpush1.bf16.msra.mxu0 0
      %1609 = vmatprep.subr.bf16.mxu0 0
      %1610 = vmatpush1.bf16.msra.mxu0 0
      %1611 = vmatprep.subr.bf16.mxu0 0
      %1612 = vmatpush1.bf16.msra.mxu0 0
      %1613 = vmatprep.subr.bf16.mxu0 %v722
      %1614 = vmatpush1.bf16.msra.mxu0 %v721
      %1615 = vmatprep.subr.bf16.mxu0 %v718
      %1616 = vmatpush1.bf16.msra.mxu0 %v717
      %1617 = vmatprep.subr.bf16.mxu0 %v714
      %1618 = vmatpush1.bf16.msra.mxu0 %v713
      %1619 = vmatprep.subr.bf16.mxu0 %v710
      %1620 = vmatpush1.bf16.msra.mxu0 %v709
      %1621 = vmatprep.subr.bf16.mxu0 0
      %1622 = vmatpush2.bf16.msra.mxu0 0
      %1623 = vmatprep.subr.bf16.mxu0 0
      %1624 = vmatpush2.bf16.msra.mxu0 0
      %1625 = vmatprep.subr.bf16.mxu0 0
      %1626 = vmatpush2.bf16.msra.mxu0 0
      %1627 = vmatprep.subr.bf16.mxu0 0
      %1628 = vmatpush2.bf16.msra.mxu0 0
      %1629 = vmatprep.subr.bf16.mxu0 0
      %1630 = vmatpush2.bf16.msra.mxu0 0
      %1631 = vmatprep.subr.bf16.mxu0 0
      %1632 = vmatpush2.bf16.msra.mxu0 0
      %1633 = vmatprep.subr.bf16.mxu0 0
      %1634 = vmatpush2.bf16.msra.mxu0 0
      %1635 = vmatprep.subr.bf16.mxu0 0
      %1636 = vmatpush2.bf16.msra.mxu0 0
      %1637 = vmatprep.mubr.bf16.mxu0 0
      %1638 = vmatmul.mubr.bf16.gmra.mxu0 %v741
      %v1639 = vpop.f32.mrf.mxu0
      %v1640 = vadd.f32 0.0, %v1639
      %v1641 = vpop.f32.mrf.mxu0
      %v1642 = vadd.f32 0.0, %v1641
      %v1643 = vpop.f32.mrf.mxu0
      %v1644 = vadd.f32 0.0, %v1643
      %v1645 = vpop.f32.mrf.mxu0
      %v1646 = vadd.f32 0.0, %v1645
      %1647 = vmatprep.mubr.bf16.mxu0 0
      %1648 = vmatmul.mubr.bf16.gmra.mxu0 %v744
      %v1649 = vpop.f32.mrf.mxu0
      %v1650 = vadd.f32 0.0, %v1649
      %v1651 = vpop.f32.mrf.mxu0
      %v1652 = vadd.f32 0.0, %v1651
      %v1653 = vpop.f32.mrf.mxu0
      %v1654 = vadd.f32 0.0, %v1653
      %v1655 = vpop.f32.mrf.mxu0
      %v1656 = vadd.f32 0.0, %v1655
      %1657 = vmatprep.mubr.bf16.mxu0 0
      %1658 = vmatmul.mubr.bf16.gmra.mxu0 %v747
      %v1659 = vpop.f32.mrf.mxu0
      %v1660 = vadd.f32 0.0, %v1659
      %v1661 = vpop.f32.mrf.mxu0
      %v1662 = vadd.f32 0.0, %v1661
      %v1663 = vpop.f32.mrf.mxu0
      %v1664 = vadd.f32 0.0, %v1663
      %v1665 = vpop.f32.mrf.mxu0
      %v1666 = vadd.f32 0.0, %v1665
      %1667 = vmatprep.mubr.bf16.mxu0 0
      %1668 = vmatmul.mubr.bf16.gmra.mxu0 %v750
      %v1669 = vpop.f32.mrf.mxu0
      %v1670 = vadd.f32 0.0, %v1669
      %v1671 = vpop.f32.mrf.mxu0
      %v1672 = vadd.f32 0.0, %v1671
      %v1673 = vpop.f32.mrf.mxu0
      %v1674 = vadd.f32 0.0, %v1673
      %v1675 = vpop.f32.mrf.mxu0
      %v1676 = vadd.f32 0.0, %v1675
      %1677 = vmatprep.mubr.bf16.mxu0 0
      %1678 = vmatmul.mubr.bf16.gmra.mxu0 %v753
      %v1679 = vpop.f32.mrf.mxu0
      %v1680 = vadd.f32 0.0, %v1679
      %v1681 = vpop.f32.mrf.mxu0
      %v1682 = vadd.f32 0.0, %v1681
      %v1683 = vpop.f32.mrf.mxu0
      %v1684 = vadd.f32 0.0, %v1683
      %v1685 = vpop.f32.mrf.mxu0
      %v1686 = vadd.f32 0.0, %v1685
      %1687 = vmatprep.mubr.bf16.mxu0 0
      %1688 = vmatmul.mubr.bf16.gmra.mxu0 %v756
      %v1689 = vpop.f32.mrf.mxu0
      %v1690 = vadd.f32 0.0, %v1689
      %v1691 = vpop.f32.mrf.mxu0
      %v1692 = vadd.f32 0.0, %v1691
      %v1693 = vpop.f32.mrf.mxu0
      %v1694 = vadd.f32 0.0, %v1693
      %v1695 = vpop.f32.mrf.mxu0
      %v1696 = vadd.f32 0.0, %v1695
      %1697 = vmatprep.mubr.bf16.mxu0 0
      %1698 = vmatmul.mubr.bf16.gmra.mxu0 %v759
      %v1699 = vpop.f32.mrf.mxu0
      %v1700 = vadd.f32 0.0, %v1699
      %v1701 = vpop.f32.mrf.mxu0
      %v1702 = vadd.f32 0.0, %v1701
      %v1703 = vpop.f32.mrf.mxu0
      %v1704 = vadd.f32 0.0, %v1703
      %v1705 = vpop.f32.mrf.mxu0
      %v1706 = vadd.f32 0.0, %v1705
      %1707 = vmatprep.mubr.bf16.mxu0 0
      %1708 = vmatmul.mubr.bf16.gmra.mxu0 %v762
      %v1709 = vpop.f32.mrf.mxu0
      %v1710 = vadd.f32 0.0, %v1709
      %v1711 = vpop.f32.mrf.mxu0
      %v1712 = vadd.f32 0.0, %v1711
      %v1713 = vpop.f32.mrf.mxu0
      %v1714 = vadd.f32 0.0, %v1713
      %v1715 = vpop.f32.mrf.mxu0
      %v1716 = vadd.f32 0.0, %v1715
      %1717 = vmatprep.mubr.bf16.mxu0 0
      %1718 = vmatmul.mubr.bf16.gmra.mxu0 %v765
      %v1719 = vpop.f32.mrf.mxu0
      %v1720 = vadd.f32 0.0, %v1719
      %v1721 = vpop.f32.mrf.mxu0
      %v1722 = vadd.f32 0.0, %v1721
      %v1723 = vpop.f32.mrf.mxu0
      %v1724 = vadd.f32 0.0, %v1723
      %v1725 = vpop.f32.mrf.mxu0
      %v1726 = vadd.f32 0.0, %v1725
      %1727 = vmatprep.mubr.bf16.mxu0 0
      %1728 = vmatmul.mubr.bf16.gmra.mxu0 %v768
      %v1729 = vpop.f32.mrf.mxu0
      %v1730 = vadd.f32 0.0, %v1729
      %v1731 = vpop.f32.mrf.mxu0
      %v1732 = vadd.f32 0.0, %v1731
      %v1733 = vpop.f32.mrf.mxu0
      %v1734 = vadd.f32 0.0, %v1733
      %v1735 = vpop.f32.mrf.mxu0
      %v1736 = vadd.f32 0.0, %v1735
      %1737 = vmatprep.mubr.bf16.mxu0 0
      %1738 = vmatmul.mubr.bf16.gmra.mxu0 %v771
      %v1739 = vpop.f32.mrf.mxu0
      %v1740 = vadd.f32 0.0, %v1739
      %v1741 = vpop.f32.mrf.mxu0
      %v1742 = vadd.f32 0.0, %v1741
      %v1743 = vpop.f32.mrf.mxu0
      %v1744 = vadd.f32 0.0, %v1743
      %v1745 = vpop.f32.mrf.mxu0
      %v1746 = vadd.f32 0.0, %v1745
      %1747 = vmatprep.mubr.bf16.mxu0 0
      %1748 = vmatmul.mubr.bf16.gmra.mxu0 %v774
      %v1749 = vpop.f32.mrf.mxu0
      %v1750 = vadd.f32 0.0, %v1749
      %v1751 = vpop.f32.mrf.mxu0
      %v1752 = vadd.f32 0.0, %v1751
      %v1753 = vpop.f32.mrf.mxu0
      %v1754 = vadd.f32 0.0, %v1753
      %v1755 = vpop.f32.mrf.mxu0
      %v1756 = vadd.f32 0.0, %v1755
      %1757 = vmatprep.mubr.bf16.mxu0 0
      %1758 = vmatmul.mubr.bf16.gmra.mxu0 %v777
      %v1759 = vpop.f32.mrf.mxu0
      %v1760 = vadd.f32 0.0, %v1759
      %v1761 = vpop.f32.mrf.mxu0
      %v1762 = vadd.f32 0.0, %v1761
      %v1763 = vpop.f32.mrf.mxu0
      %v1764 = vadd.f32 0.0, %v1763
      %v1765 = vpop.f32.mrf.mxu0
      %v1766 = vadd.f32 0.0, %v1765
      %1767 = vmatprep.mubr.bf16.mxu0 0
      %1768 = vmatmul.mubr.bf16.gmra.mxu0 %v780
      %v1769 = vpop.f32.mrf.mxu0
      %v1770 = vadd.f32 0.0, %v1769
      %v1771 = vpop.f32.mrf.mxu0
      %v1772 = vadd.f32 0.0, %v1771
      %v1773 = vpop.f32.mrf.mxu0
      %v1774 = vadd.f32 0.0, %v1773
      %v1775 = vpop.f32.mrf.mxu0
      %v1776 = vadd.f32 0.0, %v1775
      %1777 = vmatprep.mubr.bf16.mxu0 0
      %1778 = vmatmul.mubr.bf16.gmra.mxu0 %v783
      %v1779 = vpop.f32.mrf.mxu0
      %v1780 = vadd.f32 0.0, %v1779
      %v1781 = vpop.f32.mrf.mxu0
      %v1782 = vadd.f32 0.0, %v1781
      %v1783 = vpop.f32.mrf.mxu0
      %v1784 = vadd.f32 0.0, %v1783
      %v1785 = vpop.f32.mrf.mxu0
      %v1786 = vadd.f32 0.0, %v1785
      %1787 = vmatprep.mubr.bf16.mxu0 0
      %1788 = vmatmul.mubr.bf16.gmra.mxu0 %v786
      %v1789 = vpop.f32.mrf.mxu0
      %v1790 = vadd.f32 0.0, %v1789
      %v1791 = vpop.f32.mrf.mxu0
      %v1792 = vadd.f32 0.0, %v1791
      %v1793 = vpop.f32.mrf.mxu0
      %v1794 = vadd.f32 0.0, %v1793
      %v1795 = vpop.f32.mrf.mxu0
      %v1796 = vadd.f32 0.0, %v1795
      %1797 = vmatprep.mubr.bf16.mxu0 0
      %1798 = vmatmul.mubr.bf16.gmra.mxu0 %v789
      %v1799 = vpop.f32.mrf.mxu0
      %v1800 = vadd.f32 0.0, %v1799
      %v1801 = vpop.f32.mrf.mxu0
      %v1802 = vadd.f32 0.0, %v1801
      %v1803 = vpop.f32.mrf.mxu0
      %v1804 = vadd.f32 0.0, %v1803
      %v1805 = vpop.f32.mrf.mxu0
      %v1806 = vadd.f32 0.0, %v1805
      %1807 = vmatprep.mubr.bf16.mxu0 0
      %1808 = vmatmul.mubr.bf16.gmra.mxu0 %v792
      %v1809 = vpop.f32.mrf.mxu0
      %v1810 = vadd.f32 0.0, %v1809
      %v1811 = vpop.f32.mrf.mxu0
      %v1812 = vadd.f32 0.0, %v1811
      %v1813 = vpop.f32.mrf.mxu0
      %v1814 = vadd.f32 0.0, %v1813
      %v1815 = vpop.f32.mrf.mxu0
      %v1816 = vadd.f32 0.0, %v1815
      %1817 = vmatprep.mubr.bf16.mxu0 0
      %1818 = vmatmul.mubr.bf16.gmra.mxu0 %v795
      %v1819 = vpop.f32.mrf.mxu0
      %v1820 = vadd.f32 0.0, %v1819
      %v1821 = vpop.f32.mrf.mxu0
      %v1822 = vadd.f32 0.0, %v1821
      %v1823 = vpop.f32.mrf.mxu0
      %v1824 = vadd.f32 0.0, %v1823
      %v1825 = vpop.f32.mrf.mxu0
      %v1826 = vadd.f32 0.0, %v1825
      %1827 = vmatprep.mubr.bf16.mxu0 0
      %1828 = vmatmul.mubr.bf16.gmra.mxu0 %v798
      %v1829 = vpop.f32.mrf.mxu0
      %v1830 = vadd.f32 0.0, %v1829
      %v1831 = vpop.f32.mrf.mxu0
      %v1832 = vadd.f32 0.0, %v1831
      %v1833 = vpop.f32.mrf.mxu0
      %v1834 = vadd.f32 0.0, %v1833
      %v1835 = vpop.f32.mrf.mxu0
      %v1836 = vadd.f32 0.0, %v1835
      %1837 = vmatprep.mubr.bf16.mxu0 0
      %1838 = vmatmul.mubr.bf16.gmra.mxu0 %v801
      %v1839 = vpop.f32.mrf.mxu0
      %v1840 = vadd.f32 0.0, %v1839
      %v1841 = vpop.f32.mrf.mxu0
      %v1842 = vadd.f32 0.0, %v1841
      %v1843 = vpop.f32.mrf.mxu0
      %v1844 = vadd.f32 0.0, %v1843
      %v1845 = vpop.f32.mrf.mxu0
      %v1846 = vadd.f32 0.0, %v1845
      %1847 = vmatprep.mubr.bf16.mxu0 0
      %1848 = vmatmul.mubr.bf16.gmra.mxu0 %v804
      %v1849 = vpop.f32.mrf.mxu0
      %v1850 = vadd.f32 0.0, %v1849
      %v1851 = vpop.f32.mrf.mxu0
      %v1852 = vadd.f32 0.0, %v1851
      %v1853 = vpop.f32.mrf.mxu0
      %v1854 = vadd.f32 0.0, %v1853
      %v1855 = vpop.f32.mrf.mxu0
      %v1856 = vadd.f32 0.0, %v1855
      %1857 = vmatprep.mubr.bf16.mxu0 0
      %1858 = vmatmul.mubr.bf16.gmra.mxu0 %v807
      %v1859 = vpop.f32.mrf.mxu0
      %v1860 = vadd.f32 0.0, %v1859
      %v1861 = vpop.f32.mrf.mxu0
      %v1862 = vadd.f32 0.0, %v1861
      %v1863 = vpop.f32.mrf.mxu0
      %v1864 = vadd.f32 0.0, %v1863
      %v1865 = vpop.f32.mrf.mxu0
      %v1866 = vadd.f32 0.0, %v1865
      %1867 = vmatprep.mubr.bf16.mxu0 0
      %1868 = vmatmul.mubr.bf16.gmra.mxu0 %v810
      %v1869 = vpop.f32.mrf.mxu0
      %v1870 = vadd.f32 0.0, %v1869
      %v1871 = vpop.f32.mrf.mxu0
      %v1872 = vadd.f32 0.0, %v1871
      %v1873 = vpop.f32.mrf.mxu0
      %v1874 = vadd.f32 0.0, %v1873
      %v1875 = vpop.f32.mrf.mxu0
      %v1876 = vadd.f32 0.0, %v1875
      %1877 = vmatprep.mubr.bf16.mxu0 0
      %1878 = vmatmul.mubr.bf16.gmra.mxu0 %v813
      %v1879 = vpop.f32.mrf.mxu0
      %v1880 = vadd.f32 0.0, %v1879
      %v1881 = vpop.f32.mrf.mxu0
      %v1882 = vadd.f32 0.0, %v1881
      %v1883 = vpop.f32.mrf.mxu0
      %v1884 = vadd.f32 0.0, %v1883
      %v1885 = vpop.f32.mrf.mxu0
      %v1886 = vadd.f32 0.0, %v1885
      %1887 = vmatprep.mubr.bf16.mxu0 0
      %1888 = vmatmul.mubr.bf16.gmra.mxu0 %v816
      %v1889 = vpop.f32.mrf.mxu0
      %v1890 = vadd.f32 0.0, %v1889
      %v1891 = vpop.f32.mrf.mxu0
      %v1892 = vadd.f32 0.0, %v1891
      %v1893 = vpop.f32.mrf.mxu0
      %v1894 = vadd.f32 0.0, %v1893
      %v1895 = vpop.f32.mrf.mxu0
      %v1896 = vadd.f32 0.0, %v1895
      %1897 = vmatprep.mubr.bf16.mxu0 0
      %1898 = vmatmul.mubr.bf16.gmra.mxu0 %v819
      %v1899 = vpop.f32.mrf.mxu0
      %v1900 = vadd.f32 0.0, %v1899
      %v1901 = vpop.f32.mrf.mxu0
      %v1902 = vadd.f32 0.0, %v1901
      %v1903 = vpop.f32.mrf.mxu0
      %v1904 = vadd.f32 0.0, %v1903
      %v1905 = vpop.f32.mrf.mxu0
      %v1906 = vadd.f32 0.0, %v1905
      %1907 = vmatprep.mubr.bf16.mxu0 0
      %1908 = vmatmul.mubr.bf16.gmra.mxu0 %v822
      %v1909 = vpop.f32.mrf.mxu0
      %v1910 = vadd.f32 0.0, %v1909
      %v1911 = vpop.f32.mrf.mxu0
      %v1912 = vadd.f32 0.0, %v1911
      %v1913 = vpop.f32.mrf.mxu0
      %v1914 = vadd.f32 0.0, %v1913
      %v1915 = vpop.f32.mrf.mxu0
      %v1916 = vadd.f32 0.0, %v1915
      %1917 = vmatprep.mubr.bf16.mxu0 0
      %1918 = vmatmul.mubr.bf16.gmra.mxu0 %v825
      %v1919 = vpop.f32.mrf.mxu0
      %v1920 = vadd.f32 0.0, %v1919
      %v1921 = vpop.f32.mrf.mxu0
      %v1922 = vadd.f32 0.0, %v1921
      %v1923 = vpop.f32.mrf.mxu0
      %v1924 = vadd.f32 0.0, %v1923
      %v1925 = vpop.f32.mrf.mxu0
      %v1926 = vadd.f32 0.0, %v1925
      %1927 = vmatprep.mubr.bf16.mxu0 0
      %1928 = vmatmul.mubr.bf16.gmra.mxu0 %v828
      %v1929 = vpop.f32.mrf.mxu0
      %v1930 = vadd.f32 0.0, %v1929
      %v1931 = vpop.f32.mrf.mxu0
      %v1932 = vadd.f32 0.0, %v1931
      %v1933 = vpop.f32.mrf.mxu0
      %v1934 = vadd.f32 0.0, %v1933
      %v1935 = vpop.f32.mrf.mxu0
      %v1936 = vadd.f32 0.0, %v1935
      %1937 = vmatprep.mubr.bf16.mxu0 0
      %1938 = vmatmul.mubr.bf16.gmra.mxu0 %v831
      %v1939 = vpop.f32.mrf.mxu0
      %v1940 = vadd.f32 0.0, %v1939
      %v1941 = vpop.f32.mrf.mxu0
      %v1942 = vadd.f32 0.0, %v1941
      %v1943 = vpop.f32.mrf.mxu0
      %v1944 = vadd.f32 0.0, %v1943
      %v1945 = vpop.f32.mrf.mxu0
      %v1946 = vadd.f32 0.0, %v1945
      %1947 = vmatprep.mubr.bf16.mxu0 0
      %1948 = vmatmul.mubr.bf16.gmra.mxu0 %v834
      %v1949 = vpop.f32.mrf.mxu0
      %v1950 = vadd.f32 0.0, %v1949
      %v1951 = vpop.f32.mrf.mxu0
      %v1952 = vadd.f32 0.0, %v1951
      %v1953 = vpop.f32.mrf.mxu0
      %v1954 = vadd.f32 0.0, %v1953
      %v1955 = vpop.f32.mrf.mxu0
      %v1956 = vadd.f32 0.0, %v1955
      %1957 = vmatprep.mubr.bf16.mxu0 0
      %1958 = vmatmul.mubr.bf16.gmra.mxu0 %v837
      %v1959 = vpop.f32.mrf.mxu0
      %v1960 = vadd.f32 0.0, %v1959
      %v1961 = vpop.f32.mrf.mxu0
      %v1962 = vadd.f32 0.0, %v1961
      %v1963 = vpop.f32.mrf.mxu0
      %v1964 = vadd.f32 0.0, %v1963
      %v1965 = vpop.f32.mrf.mxu0
      %v1966 = vadd.f32 0.0, %v1965
      %1967 = vmatprep.mubr.bf16.mxu0 0
      %1968 = vmatmul.mubr.bf16.gmra.mxu0 %v840
      %v1969 = vpop.f32.mrf.mxu0
      %v1970 = vadd.f32 0.0, %v1969
      %v1971 = vpop.f32.mrf.mxu0
      %v1972 = vadd.f32 0.0, %v1971
      %v1973 = vpop.f32.mrf.mxu0
      %v1974 = vadd.f32 0.0, %v1973
      %v1975 = vpop.f32.mrf.mxu0
      %v1976 = vadd.f32 0.0, %v1975
      %1977 = vmatprep.mubr.bf16.mxu0 0
      %1978 = vmatmul.mubr.bf16.gmra.mxu0 %v843
      %v1979 = vpop.f32.mrf.mxu0
      %v1980 = vadd.f32 0.0, %v1979
      %v1981 = vpop.f32.mrf.mxu0
      %v1982 = vadd.f32 0.0, %v1981
      %v1983 = vpop.f32.mrf.mxu0
      %v1984 = vadd.f32 0.0, %v1983
      %v1985 = vpop.f32.mrf.mxu0
      %v1986 = vadd.f32 0.0, %v1985
      %1987 = vmatprep.mubr.bf16.mxu0 0
      %1988 = vmatmul.mubr.bf16.gmra.mxu0 %v846
      %v1989 = vpop.f32.mrf.mxu0
      %v1990 = vadd.f32 0.0, %v1989
      %v1991 = vpop.f32.mrf.mxu0
      %v1992 = vadd.f32 0.0, %v1991
      %v1993 = vpop.f32.mrf.mxu0
      %v1994 = vadd.f32 0.0, %v1993
      %v1995 = vpop.f32.mrf.mxu0
      %v1996 = vadd.f32 0.0, %v1995
      %1997 = vmatprep.mubr.bf16.mxu0 0
      %1998 = vmatmul.mubr.bf16.gmra.mxu0 %v849
      %v1999 = vpop.f32.mrf.mxu0
      %v2000 = vadd.f32 0.0, %v1999
      %v2001 = vpop.f32.mrf.mxu0
      %v2002 = vadd.f32 0.0, %v2001
      %v2003 = vpop.f32.mrf.mxu0
      %v2004 = vadd.f32 0.0, %v2003
      %v2005 = vpop.f32.mrf.mxu0
      %v2006 = vadd.f32 0.0, %v2005
      %2007 = vmatprep.mubr.bf16.mxu0 0
      %2008 = vmatmul.mubr.bf16.gmra.mxu0 %v852
      %v2009 = vpop.f32.mrf.mxu0
      %v2010 = vadd.f32 0.0, %v2009
      %v2011 = vpop.f32.mrf.mxu0
      %v2012 = vadd.f32 0.0, %v2011
      %v2013 = vpop.f32.mrf.mxu0
      %v2014 = vadd.f32 0.0, %v2013
      %v2015 = vpop.f32.mrf.mxu0
      %v2016 = vadd.f32 0.0, %v2015
      %2017 = vmatprep.mubr.bf16.mxu0 0
      %2018 = vmatmul.mubr.bf16.gmra.mxu0 %v855
      %v2019 = vpop.f32.mrf.mxu0
      %v2020 = vadd.f32 0.0, %v2019
      %v2021 = vpop.f32.mrf.mxu0
      %v2022 = vadd.f32 0.0, %v2021
      %v2023 = vpop.f32.mrf.mxu0
      %v2024 = vadd.f32 0.0, %v2023
      %v2025 = vpop.f32.mrf.mxu0
      %v2026 = vadd.f32 0.0, %v2025
      %2027 = vmatprep.mubr.bf16.mxu0 0
      %2028 = vmatmul.mubr.bf16.gmra.mxu0 %v858
      %v2029 = vpop.f32.mrf.mxu0
      %v2030 = vadd.f32 0.0, %v2029
      %v2031 = vpop.f32.mrf.mxu0
      %v2032 = vadd.f32 0.0, %v2031
      %v2033 = vpop.f32.mrf.mxu0
      %v2034 = vadd.f32 0.0, %v2033
      %v2035 = vpop.f32.mrf.mxu0
      %v2036 = vadd.f32 0.0, %v2035
      %2037 = vmatprep.mubr.bf16.mxu0 0
      %2038 = vmatmul.mubr.bf16.gmra.mxu0 %v861
      %v2039 = vpop.f32.mrf.mxu0
      %v2040 = vadd.f32 0.0, %v2039
      %v2041 = vpop.f32.mrf.mxu0
      %v2042 = vadd.f32 0.0, %v2041
      %v2043 = vpop.f32.mrf.mxu0
      %v2044 = vadd.f32 0.0, %v2043
      %v2045 = vpop.f32.mrf.mxu0
      %v2046 = vadd.f32 0.0, %v2045
      %2047 = vmatprep.mubr.bf16.mxu0 0
      %2048 = vmatmul.mubr.bf16.gmra.mxu0 %v864
      %v2049 = vpop.f32.mrf.mxu0
      %v2050 = vadd.f32 0.0, %v2049
      %v2051 = vpop.f32.mrf.mxu0
      %v2052 = vadd.f32 0.0, %v2051
      %v2053 = vpop.f32.mrf.mxu0
      %v2054 = vadd.f32 0.0, %v2053
      %v2055 = vpop.f32.mrf.mxu0
      %v2056 = vadd.f32 0.0, %v2055
      %2057 = vmatprep.mubr.bf16.mxu0 0
      %2058 = vmatmul.mubr.bf16.gmra.mxu0 %v867
      %v2059 = vpop.f32.mrf.mxu0
      %v2060 = vadd.f32 0.0, %v2059
      %v2061 = vpop.f32.mrf.mxu0
      %v2062 = vadd.f32 0.0, %v2061
      %v2063 = vpop.f32.mrf.mxu0
      %v2064 = vadd.f32 0.0, %v2063
      %v2065 = vpop.f32.mrf.mxu0
      %v2066 = vadd.f32 0.0, %v2065
      %2067 = vmatprep.mubr.bf16.mxu0 0
      %2068 = vmatmul.mubr.bf16.gmra.mxu0 %v870
      %v2069 = vpop.f32.mrf.mxu0
      %v2070 = vadd.f32 0.0, %v2069
      %v2071 = vpop.f32.mrf.mxu0
      %v2072 = vadd.f32 0.0, %v2071
      %v2073 = vpop.f32.mrf.mxu0
      %v2074 = vadd.f32 0.0, %v2073
      %v2075 = vpop.f32.mrf.mxu0
      %v2076 = vadd.f32 0.0, %v2075
      %2077 = vmatprep.mubr.bf16.mxu0 0
      %2078 = vmatmul.mubr.bf16.gmra.mxu0 %v873
      %v2079 = vpop.f32.mrf.mxu0
      %v2080 = vadd.f32 0.0, %v2079
      %v2081 = vpop.f32.mrf.mxu0
      %v2082 = vadd.f32 0.0, %v2081
      %v2083 = vpop.f32.mrf.mxu0
      %v2084 = vadd.f32 0.0, %v2083
      %v2085 = vpop.f32.mrf.mxu0
      %v2086 = vadd.f32 0.0, %v2085
      %2087 = vmatprep.mubr.bf16.mxu0 0
      %2088 = vmatmul.mubr.bf16.gmra.mxu0 %v876
      %v2089 = vpop.f32.mrf.mxu0
      %v2090 = vadd.f32 0.0, %v2089
      %v2091 = vpop.f32.mrf.mxu0
      %v2092 = vadd.f32 0.0, %v2091
      %v2093 = vpop.f32.mrf.mxu0
      %v2094 = vadd.f32 0.0, %v2093
      %v2095 = vpop.f32.mrf.mxu0
      %v2096 = vadd.f32 0.0, %v2095
      %2097 = vmatprep.mubr.bf16.mxu0 0
      %2098 = vmatmul.mubr.bf16.gmra.mxu0 %v879
      %v2099 = vpop.f32.mrf.mxu0
      %v2100 = vadd.f32 0.0, %v2099
      %v2101 = vpop.f32.mrf.mxu0
      %v2102 = vadd.f32 0.0, %v2101
      %v2103 = vpop.f32.mrf.mxu0
      %v2104 = vadd.f32 0.0, %v2103
      %v2105 = vpop.f32.mrf.mxu0
      %v2106 = vadd.f32 0.0, %v2105
      %2107 = vmatprep.mubr.bf16.mxu0 0
      %2108 = vmatmul.mubr.bf16.gmra.mxu0 %v882
      %v2109 = vpop.f32.mrf.mxu0
      %v2110 = vadd.f32 0.0, %v2109
      %v2111 = vpop.f32.mrf.mxu0
      %v2112 = vadd.f32 0.0, %v2111
      %v2113 = vpop.f32.mrf.mxu0
      %v2114 = vadd.f32 0.0, %v2113
      %v2115 = vpop.f32.mrf.mxu0
      %v2116 = vadd.f32 0.0, %v2115
      %2117 = vmatprep.mubr.bf16.mxu0 0
      %2118 = vmatmul.mubr.bf16.gmra.mxu0 %v885
      %v2119 = vpop.f32.mrf.mxu0
      %v2120 = vadd.f32 0.0, %v2119
      %v2121 = vpop.f32.mrf.mxu0
      %v2122 = vadd.f32 0.0, %v2121
      %v2123 = vpop.f32.mrf.mxu0
      %v2124 = vadd.f32 0.0, %v2123
      %v2125 = vpop.f32.mrf.mxu0
      %v2126 = vadd.f32 0.0, %v2125
      %2127 = vmatprep.mubr.bf16.mxu0 0
      %2128 = vmatmul.mubr.bf16.gmra.mxu0 %v888
      %v2129 = vpop.f32.mrf.mxu0
      %v2130 = vadd.f32 0.0, %v2129
      %v2131 = vpop.f32.mrf.mxu0
      %v2132 = vadd.f32 0.0, %v2131
      %v2133 = vpop.f32.mrf.mxu0
      %v2134 = vadd.f32 0.0, %v2133
      %v2135 = vpop.f32.mrf.mxu0
      %v2136 = vadd.f32 0.0, %v2135
      %2137 = vmatprep.mubr.bf16.mxu0 0
      %2138 = vmatmul.mubr.bf16.gmra.mxu0 %v891
      %v2139 = vpop.f32.mrf.mxu0
      %v2140 = vadd.f32 0.0, %v2139
      %v2141 = vpop.f32.mrf.mxu0
      %v2142 = vadd.f32 0.0, %v2141
      %v2143 = vpop.f32.mrf.mxu0
      %v2144 = vadd.f32 0.0, %v2143
      %v2145 = vpop.f32.mrf.mxu0
      %v2146 = vadd.f32 0.0, %v2145
      %2147 = vmatprep.mubr.bf16.mxu0 0
      %2148 = vmatmul.mubr.bf16.gmra.mxu0 %v894
      %v2149 = vpop.f32.mrf.mxu0
      %v2150 = vadd.f32 0.0, %v2149
      %v2151 = vpop.f32.mrf.mxu0
      %v2152 = vadd.f32 0.0, %v2151
      %v2153 = vpop.f32.mrf.mxu0
      %v2154 = vadd.f32 0.0, %v2153
      %v2155 = vpop.f32.mrf.mxu0
      %v2156 = vadd.f32 0.0, %v2155
      %2157 = vmatprep.mubr.bf16.mxu0 0
      %2158 = vmatmul.mubr.bf16.gmra.mxu0 %v897
      %v2159 = vpop.f32.mrf.mxu0
      %v2160 = vadd.f32 0.0, %v2159
      %v2161 = vpop.f32.mrf.mxu0
      %v2162 = vadd.f32 0.0, %v2161
      %v2163 = vpop.f32.mrf.mxu0
      %v2164 = vadd.f32 0.0, %v2163
      %v2165 = vpop.f32.mrf.mxu0
      %v2166 = vadd.f32 0.0, %v2165
      %2167 = vmatprep.mubr.bf16.mxu0 0
      %2168 = vmatmul.mubr.bf16.gmra.mxu0 %v900
      %v2169 = vpop.f32.mrf.mxu0
      %v2170 = vadd.f32 0.0, %v2169
      %v2171 = vpop.f32.mrf.mxu0
      %v2172 = vadd.f32 0.0, %v2171
      %v2173 = vpop.f32.mrf.mxu0
      %v2174 = vadd.f32 0.0, %v2173
      %v2175 = vpop.f32.mrf.mxu0
      %v2176 = vadd.f32 0.0, %v2175
      %2177 = vmatprep.mubr.bf16.mxu0 0
      %2178 = vmatmul.mubr.bf16.gmra.mxu0 %v903
      %v2179 = vpop.f32.mrf.mxu0
      %v2180 = vadd.f32 0.0, %v2179
      %v2181 = vpop.f32.mrf.mxu0
      %v2182 = vadd.f32 0.0, %v2181
      %v2183 = vpop.f32.mrf.mxu0
      %v2184 = vadd.f32 0.0, %v2183
      %v2185 = vpop.f32.mrf.mxu0
      %v2186 = vadd.f32 0.0, %v2185
      %2187 = vmatprep.mubr.bf16.mxu0 0
      %2188 = vmatmul.mubr.bf16.gmra.mxu0 %v906
      %v2189 = vpop.f32.mrf.mxu0
      %v2190 = vadd.f32 0.0, %v2189
      %v2191 = vpop.f32.mrf.mxu0
      %v2192 = vadd.f32 0.0, %v2191
      %v2193 = vpop.f32.mrf.mxu0
      %v2194 = vadd.f32 0.0, %v2193
      %v2195 = vpop.f32.mrf.mxu0
      %v2196 = vadd.f32 0.0, %v2195
      %2197 = vmatprep.mubr.bf16.mxu0 0
      %2198 = vmatmul.mubr.bf16.gmra.mxu0 %v909
      %v2199 = vpop.f32.mrf.mxu0
      %v2200 = vadd.f32 0.0, %v2199
      %v2201 = vpop.f32.mrf.mxu0
      %v2202 = vadd.f32 0.0, %v2201
      %v2203 = vpop.f32.mrf.mxu0
      %v2204 = vadd.f32 0.0, %v2203
      %v2205 = vpop.f32.mrf.mxu0
      %v2206 = vadd.f32 0.0, %v2205
      %2207 = vmatprep.mubr.bf16.mxu0 0
      %2208 = vmatmul.mubr.bf16.gmra.mxu0 %v912
      %v2209 = vpop.f32.mrf.mxu0
      %v2210 = vadd.f32 0.0, %v2209
      %v2211 = vpop.f32.mrf.mxu0
      %v2212 = vadd.f32 0.0, %v2211
      %v2213 = vpop.f32.mrf.mxu0
      %v2214 = vadd.f32 0.0, %v2213
      %v2215 = vpop.f32.mrf.mxu0
      %v2216 = vadd.f32 0.0, %v2215
      %2217 = vmatprep.mubr.bf16.mxu0 0
      %2218 = vmatmul.mubr.bf16.gmra.mxu0 %v915
      %v2219 = vpop.f32.mrf.mxu0
      %v2220 = vadd.f32 0.0, %v2219
      %v2221 = vpop.f32.mrf.mxu0
      %v2222 = vadd.f32 0.0, %v2221
      %v2223 = vpop.f32.mrf.mxu0
      %v2224 = vadd.f32 0.0, %v2223
      %v2225 = vpop.f32.mrf.mxu0
      %v2226 = vadd.f32 0.0, %v2225
      %2227 = vmatprep.mubr.bf16.mxu0 0
      %2228 = vmatmul.mubr.bf16.gmra.mxu0 %v918
      %v2229 = vpop.f32.mrf.mxu0
      %v2230 = vadd.f32 0.0, %v2229
      %v2231 = vpop.f32.mrf.mxu0
      %v2232 = vadd.f32 0.0, %v2231
      %v2233 = vpop.f32.mrf.mxu0
      %v2234 = vadd.f32 0.0, %v2233
      %v2235 = vpop.f32.mrf.mxu0
      %v2236 = vadd.f32 0.0, %v2235
      %2237 = vmatprep.mubr.bf16.mxu0 0
      %2238 = vmatmul.mubr.bf16.gmra.mxu0 %v921
      %v2239 = vpop.f32.mrf.mxu0
      %v2240 = vadd.f32 0.0, %v2239
      %v2241 = vpop.f32.mrf.mxu0
      %v2242 = vadd.f32 0.0, %v2241
      %v2243 = vpop.f32.mrf.mxu0
      %v2244 = vadd.f32 0.0, %v2243
      %v2245 = vpop.f32.mrf.mxu0
      %v2246 = vadd.f32 0.0, %v2245
      %2247 = vmatprep.mubr.bf16.mxu0 0
      %2248 = vmatmul.mubr.bf16.gmra.mxu0 %v924
      %v2249 = vpop.f32.mrf.mxu0
      %v2250 = vadd.f32 0.0, %v2249
      %v2251 = vpop.f32.mrf.mxu0
      %v2252 = vadd.f32 0.0, %v2251
      %v2253 = vpop.f32.mrf.mxu0
      %v2254 = vadd.f32 0.0, %v2253
      %v2255 = vpop.f32.mrf.mxu0
      %v2256 = vadd.f32 0.0, %v2255
      %2257 = vmatprep.mubr.bf16.mxu0 0
      %2258 = vmatmul.mubr.bf16.gmra.mxu0 %v927
      %v2259 = vpop.f32.mrf.mxu0
      %v2260 = vadd.f32 0.0, %v2259
      %v2261 = vpop.f32.mrf.mxu0
      %v2262 = vadd.f32 0.0, %v2261
      %v2263 = vpop.f32.mrf.mxu0
      %v2264 = vadd.f32 0.0, %v2263
      %v2265 = vpop.f32.mrf.mxu0
      %v2266 = vadd.f32 0.0, %v2265
      %2267 = vmatprep.mubr.bf16.mxu0 0
      %2268 = vmatmul.mubr.bf16.gmra.mxu0 %v930
      %v2269 = vpop.f32.mrf.mxu0
      %v2270 = vadd.f32 0.0, %v2269
      %v2271 = vpop.f32.mrf.mxu0
      %v2272 = vadd.f32 0.0, %v2271
      %v2273 = vpop.f32.mrf.mxu0
      %v2274 = vadd.f32 0.0, %v2273
      %v2275 = vpop.f32.mrf.mxu0
      %v2276 = vadd.f32 0.0, %v2275
      %2277 = vdwg.mxu0
      %2278 = vst [vmem:[%s191] sm:$0xff] %v967
      %2279 = vst [vmem:[%s191 + $0x8] sm:$0xff] %v969
      %2280 = vst [vmem:[%s191 + $0x10] sm:$0xff] %v1640
      %2281 = vst [vmem:[%s191 + $0x18] sm:$0xff] %v1642
      %2282 = vst [vmem:[%s191 + $0x20] sm:$0xff] %v971
      %2283 = vst [vmem:[%s191 + $0x28] sm:$0xff] %v973
      %2284 = vst [vmem:[%s191 + $0x30] sm:$0xff] %v1644
      %2285 = vst [vmem:[%s191 + $0x38] sm:$0xff] %v1646
      %2286 = vst [vmem:[%s191 + $0x40] sm:$0xff] %v977
      %2287 = vst [vmem:[%s191 + $0x48] sm:$0xff] %v979
      %2288 = vst [vmem:[%s191 + $0x50] sm:$0xff] %v1650
      %2289 = vst [vmem:[%s191 + $0x58] sm:$0xff] %v1652
      %2290 = vst [vmem:[%s191 + $0x60] sm:$0xff] %v981
      %2291 = vst [vmem:[%s191 + $0x68] sm:$0xff] %v983
      %2292 = vst [vmem:[%s191 + $0x70] sm:$0xff] %v1654
      %2293 = vst [vmem:[%s191 + $0x78] sm:$0xff] %v1656
      %2294 = vst [vmem:[%s191 + $0x80] sm:$0xff] %v987
      %2295 = vst [vmem:[%s191 + $0x88] sm:$0xff] %v989
      %2296 = vst [vmem:[%s191 + $0x90] sm:$0xff] %v1660
      %2297 = vst [vmem:[%s191 + $0x98] sm:$0xff] %v1662
      %2298 = vst [vmem:[%s191 + $0xa0] sm:$0xff] %v991
      %2299 = vst [vmem:[%s191 + $0xa8] sm:$0xff] %v993
      %2300 = vst [vmem:[%s191 + $0xb0] sm:$0xff] %v1664
      %2301 = vst [vmem:[%s191 + $0xb8] sm:$0xff] %v1666
      %2302 = vst [vmem:[%s191 + $0xc0] sm:$0xff] %v997
      %2303 = vst [vmem:[%s191 + $0xc8] sm:$0xff] %v999
      %2304 = vst [vmem:[%s191 + $0xd0] sm:$0xff] %v1670
      %2305 = vst [vmem:[%s191 + $0xd8] sm:$0xff] %v1672
      %2306 = vst [vmem:[%s191 + $0xe0] sm:$0xff] %v1001
      %2307 = vst [vmem:[%s191 + $0xe8] sm:$0xff] %v1003
      %2308 = vst [vmem:[%s191 + $0xf0] sm:$0xff] %v1674
      %2309 = vst [vmem:[%s191 + $0xf8] sm:$0xff] %v1676
      %2310 = vst [vmem:[%s191 + $0x100] sm:$0xff] %v1007
      %2311 = vst [vmem:[%s191 + $0x108] sm:$0xff] %v1009
      %2312 = vst [vmem:[%s191 + $0x110] sm:$0xff] %v1680
      %2313 = vst [vmem:[%s191 + $0x118] sm:$0xff] %v1682
      %2314 = vst [vmem:[%s191 + $0x120] sm:$0xff] %v1011
      %2315 = vst [vmem:[%s191 + $0x128] sm:$0xff] %v1013
      %2316 = vst [vmem:[%s191 + $0x130] sm:$0xff] %v1684
      %2317 = vst [vmem:[%s191 + $0x138] sm:$0xff] %v1686
      %2318 = vst [vmem:[%s191 + $0x140] sm:$0xff] %v1017
      %2319 = vst [vmem:[%s191 + $0x148] sm:$0xff] %v1019
      %2320 = vst [vmem:[%s191 + $0x150] sm:$0xff] %v1690
      %2321 = vst [vmem:[%s191 + $0x158] sm:$0xff] %v1692
      %2322 = vst [vmem:[%s191 + $0x160] sm:$0xff] %v1021
      %2323 = vst [vmem:[%s191 + $0x168] sm:$0xff] %v1023
      %2324 = vst [vmem:[%s191 + $0x170] sm:$0xff] %v1694
      %2325 = vst [vmem:[%s191 + $0x178] sm:$0xff] %v1696
      %2326 = vst [vmem:[%s191 + $0x180] sm:$0xff] %v1027
      %2327 = vst [vmem:[%s191 + $0x188] sm:$0xff] %v1029
      %2328 = vst [vmem:[%s191 + $0x190] sm:$0xff] %v1700
      %2329 = vst [vmem:[%s191 + $0x198] sm:$0xff] %v1702
      %2330 = vst [vmem:[%s191 + $0x1a0] sm:$0xff] %v1031
      %2331 = vst [vmem:[%s191 + $0x1a8] sm:$0xff] %v1033
      %2332 = vst [vmem:[%s191 + $0x1b0] sm:$0xff] %v1704
      %2333 = vst [vmem:[%s191 + $0x1b8] sm:$0xff] %v1706
      %2334 = vst [vmem:[%s191 + $0x1c0] sm:$0xff] %v1037
      %2335 = vst [vmem:[%s191 + $0x1c8] sm:$0xff] %v1039
      %2336 = vst [vmem:[%s191 + $0x1d0] sm:$0xff] %v1710
      %2337 = vst [vmem:[%s191 + $0x1d8] sm:$0xff] %v1712
      %2338 = vst [vmem:[%s191 + $0x1e0] sm:$0xff] %v1041
      %2339 = vst [vmem:[%s191 + $0x1e8] sm:$0xff] %v1043
      %2340 = vst [vmem:[%s191 + $0x1f0] sm:$0xff] %v1714
      %2341 = vst [vmem:[%s191 + $0x1f8] sm:$0xff] %v1716
      %2342 = vst [vmem:[%s191 + $0x200] sm:$0xff] %v1047
      %2343 = vst [vmem:[%s191 + $0x208] sm:$0xff] %v1049
      %2344 = vst [vmem:[%s191 + $0x210] sm:$0xff] %v1720
      %2345 = vst [vmem:[%s191 + $0x218] sm:$0xff] %v1722
      %2346 = vst [vmem:[%s191 + $0x220] sm:$0xff] %v1051
      %2347 = vst [vmem:[%s191 + $0x228] sm:$0xff] %v1053
      %2348 = vst [vmem:[%s191 + $0x230] sm:$0xff] %v1724
      %2349 = vst [vmem:[%s191 + $0x238] sm:$0xff] %v1726
      %2350 = vst [vmem:[%s191 + $0x240] sm:$0xff] %v1057
      %2351 = vst [vmem:[%s191 + $0x248] sm:$0xff] %v1059
      %2352 = vst [vmem:[%s191 + $0x250] sm:$0xff] %v1730
      %2353 = vst [vmem:[%s191 + $0x258] sm:$0xff] %v1732
      %2354 = vst [vmem:[%s191 + $0x260] sm:$0xff] %v1061
      %2355 = vst [vmem:[%s191 + $0x268] sm:$0xff] %v1063
      %2356 = vst [vmem:[%s191 + $0x270] sm:$0xff] %v1734
      %2357 = vst [vmem:[%s191 + $0x278] sm:$0xff] %v1736
      %2358 = vst [vmem:[%s191 + $0x280] sm:$0xff] %v1067
      %2359 = vst [vmem:[%s191 + $0x288] sm:$0xff] %v1069
      %2360 = vst [vmem:[%s191 + $0x290] sm:$0xff] %v1740
      %2361 = vst [vmem:[%s191 + $0x298] sm:$0xff] %v1742
      %2362 = vst [vmem:[%s191 + $0x2a0] sm:$0xff] %v1071
      %2363 = vst [vmem:[%s191 + $0x2a8] sm:$0xff] %v1073
      %2364 = vst [vmem:[%s191 + $0x2b0] sm:$0xff] %v1744
      %2365 = vst [vmem:[%s191 + $0x2b8] sm:$0xff] %v1746
      %2366 = vst [vmem:[%s191 + $0x2c0] sm:$0xff] %v1077
      %2367 = vst [vmem:[%s191 + $0x2c8] sm:$0xff] %v1079
      %2368 = vst [vmem:[%s191 + $0x2d0] sm:$0xff] %v1750
      %2369 = vst [vmem:[%s191 + $0x2d8] sm:$0xff] %v1752
      %2370 = vst [vmem:[%s191 + $0x2e0] sm:$0xff] %v1081
      %2371 = vst [vmem:[%s191 + $0x2e8] sm:$0xff] %v1083
      %2372 = vst [vmem:[%s191 + $0x2f0] sm:$0xff] %v1754
      %2373 = vst [vmem:[%s191 + $0x2f8] sm:$0xff] %v1756
      %2374 = vst [vmem:[%s191 + $0x300] sm:$0xff] %v1087
      %2375 = vst [vmem:[%s191 + $0x308] sm:$0xff] %v1089
      %2376 = vst [vmem:[%s191 + $0x310] sm:$0xff] %v1760
      %2377 = vst [vmem:[%s191 + $0x318] sm:$0xff] %v1762
      %2378 = vst [vmem:[%s191 + $0x320] sm:$0xff] %v1091
      %2379 = vst [vmem:[%s191 + $0x328] sm:$0xff] %v1093
      %2380 = vst [vmem:[%s191 + $0x330] sm:$0xff] %v1764
      %2381 = vst [vmem:[%s191 + $0x338] sm:$0xff] %v1766
      %2382 = vst [vmem:[%s191 + $0x340] sm:$0xff] %v1097
      %2383 = vst [vmem:[%s191 + $0x348] sm:$0xff] %v1099
      %2384 = vst [vmem:[%s191 + $0x350] sm:$0xff] %v1770
      %2385 = vst [vmem:[%s191 + $0x358] sm:$0xff] %v1772
      %2386 = vst [vmem:[%s191 + $0x360] sm:$0xff] %v1101
      %2387 = vst [vmem:[%s191 + $0x368] sm:$0xff] %v1103
      %2388 = vst [vmem:[%s191 + $0x370] sm:$0xff] %v1774
      %2389 = vst [vmem:[%s191 + $0x378] sm:$0xff] %v1776
      %2390 = vst [vmem:[%s191 + $0x380] sm:$0xff] %v1107
      %2391 = vst [vmem:[%s191 + $0x388] sm:$0xff] %v1109
      %2392 = vst [vmem:[%s191 + $0x390] sm:$0xff] %v1780
      %2393 = vst [vmem:[%s191 + $0x398] sm:$0xff] %v1782
      %2394 = vst [vmem:[%s191 + $0x3a0] sm:$0xff] %v1111
      %2395 = vst [vmem:[%s191 + $0x3a8] sm:$0xff] %v1113
      %2396 = vst [vmem:[%s191 + $0x3b0] sm:$0xff] %v1784
      %2397 = vst [vmem:[%s191 + $0x3b8] sm:$0xff] %v1786
      %2398 = vst [vmem:[%s191 + $0x3c0] sm:$0xff] %v1117
      %2399 = vst [vmem:[%s191 + $0x3c8] sm:$0xff] %v1119
      %2400 = vst [vmem:[%s191 + $0x3d0] sm:$0xff] %v1790
      %2401 = vst [vmem:[%s191 + $0x3d8] sm:$0xff] %v1792
      %2402 = vst [vmem:[%s191 + $0x3e0] sm:$0xff] %v1121
      %2403 = vst [vmem:[%s191 + $0x3e8] sm:$0xff] %v1123
      %2404 = vst [vmem:[%s191 + $0x3f0] sm:$0xff] %v1794
      %2405 = vst [vmem:[%s191 + $0x3f8] sm:$0xff] %v1796
      %2406 = vst [vmem:[%s191 + $0x400] sm:$0xff] %v1127
      %2407 = vst [vmem:[%s191 + $0x408] sm:$0xff] %v1129
      %2408 = vst [vmem:[%s191 + $0x410] sm:$0xff] %v1800
      %2409 = vst [vmem:[%s191 + $0x418] sm:$0xff] %v1802
      %2410 = vst [vmem:[%s191 + $0x420] sm:$0xff] %v1131
      %2411 = vst [vmem:[%s191 + $0x428] sm:$0xff] %v1133
      %2412 = vst [vmem:[%s191 + $0x430] sm:$0xff] %v1804
      %2413 = vst [vmem:[%s191 + $0x438] sm:$0xff] %v1806
      %2414 = vst [vmem:[%s191 + $0x440] sm:$0xff] %v1137
      %2415 = vst [vmem:[%s191 + $0x448] sm:$0xff] %v1139
      %2416 = vst [vmem:[%s191 + $0x450] sm:$0xff] %v1810
      %2417 = vst [vmem:[%s191 + $0x458] sm:$0xff] %v1812
      %2418 = vst [vmem:[%s191 + $0x460] sm:$0xff] %v1141
      %2419 = vst [vmem:[%s191 + $0x468] sm:$0xff] %v1143
      %2420 = vst [vmem:[%s191 + $0x470] sm:$0xff] %v1814
      %2421 = vst [vmem:[%s191 + $0x478] sm:$0xff] %v1816
      %2422 = vst [vmem:[%s191 + $0x480] sm:$0xff] %v1147
      %2423 = vst [vmem:[%s191 + $0x488] sm:$0xff] %v1149
      %2424 = vst [vmem:[%s191 + $0x490] sm:$0xff] %v1820
      %2425 = vst [vmem:[%s191 + $0x498] sm:$0xff] %v1822
      %2426 = vst [vmem:[%s191 + $0x4a0] sm:$0xff] %v1151
      %2427 = vst [vmem:[%s191 + $0x4a8] sm:$0xff] %v1153
      %2428 = vst [vmem:[%s191 + $0x4b0] sm:$0xff] %v1824
      %2429 = vst [vmem:[%s191 + $0x4b8] sm:$0xff] %v1826
      %2430 = vst [vmem:[%s191 + $0x4c0] sm:$0xff] %v1157
      %2431 = vst [vmem:[%s191 + $0x4c8] sm:$0xff] %v1159
      %2432 = vst [vmem:[%s191 + $0x4d0] sm:$0xff] %v1830
      %2433 = vst [vmem:[%s191 + $0x4d8] sm:$0xff] %v1832
      %2434 = vst [vmem:[%s191 + $0x4e0] sm:$0xff] %v1161
      %2435 = vst [vmem:[%s191 + $0x4e8] sm:$0xff] %v1163
      %2436 = vst [vmem:[%s191 + $0x4f0] sm:$0xff] %v1834
      %2437 = vst [vmem:[%s191 + $0x4f8] sm:$0xff] %v1836
      %2438 = vst [vmem:[%s191 + $0x500] sm:$0xff] %v1167
      %2439 = vst [vmem:[%s191 + $0x508] sm:$0xff] %v1169
      %2440 = vst [vmem:[%s191 + $0x510] sm:$0xff] %v1840
      %2441 = vst [vmem:[%s191 + $0x518] sm:$0xff] %v1842
      %2442 = vst [vmem:[%s191 + $0x520] sm:$0xff] %v1171
      %2443 = vst [vmem:[%s191 + $0x528] sm:$0xff] %v1173
      %2444 = vst [vmem:[%s191 + $0x530] sm:$0xff] %v1844
      %2445 = vst [vmem:[%s191 + $0x538] sm:$0xff] %v1846
      %2446 = vst [vmem:[%s191 + $0x540] sm:$0xff] %v1177
      %2447 = vst [vmem:[%s191 + $0x548] sm:$0xff] %v1179
      %2448 = vst [vmem:[%s191 + $0x550] sm:$0xff] %v1850
      %2449 = vst [vmem:[%s191 + $0x558] sm:$0xff] %v1852
      %2450 = vst [vmem:[%s191 + $0x560] sm:$0xff] %v1181
      %2451 = vst [vmem:[%s191 + $0x568] sm:$0xff] %v1183
      %2452 = vst [vmem:[%s191 + $0x570] sm:$0xff] %v1854
      %2453 = vst [vmem:[%s191 + $0x578] sm:$0xff] %v1856
      %2454 = vst [vmem:[%s191 + $0x580] sm:$0xff] %v1187
      %2455 = vst [vmem:[%s191 + $0x588] sm:$0xff] %v1189
      %2456 = vst [vmem:[%s191 + $0x590] sm:$0xff] %v1860
      %2457 = vst [vmem:[%s191 + $0x598] sm:$0xff] %v1862
      %2458 = vst [vmem:[%s191 + $0x5a0] sm:$0xff] %v1191
      %2459 = vst [vmem:[%s191 + $0x5a8] sm:$0xff] %v1193
      %2460 = vst [vmem:[%s191 + $0x5b0] sm:$0xff] %v1864
      %2461 = vst [vmem:[%s191 + $0x5b8] sm:$0xff] %v1866
      %2462 = vst [vmem:[%s191 + $0x5c0] sm:$0xff] %v1197
      %2463 = vst [vmem:[%s191 + $0x5c8] sm:$0xff] %v1199
      %2464 = vst [vmem:[%s191 + $0x5d0] sm:$0xff] %v1870
      %2465 = vst [vmem:[%s191 + $0x5d8] sm:$0xff] %v1872
      %2466 = vst [vmem:[%s191 + $0x5e0] sm:$0xff] %v1201
      %2467 = vst [vmem:[%s191 + $0x5e8] sm:$0xff] %v1203
      %2468 = vst [vmem:[%s191 + $0x5f0] sm:$0xff] %v1874
      %2469 = vst [vmem:[%s191 + $0x5f8] sm:$0xff] %v1876
      %2470 = vst [vmem:[%s191 + $0x600] sm:$0xff] %v1207
      %2471 = vst [vmem:[%s191 + $0x608] sm:$0xff] %v1209
      %2472 = vst [vmem:[%s191 + $0x610] sm:$0xff] %v1880
      %2473 = vst [vmem:[%s191 + $0x618] sm:$0xff] %v1882
      %2474 = vst [vmem:[%s191 + $0x620] sm:$0xff] %v1211
      %2475 = vst [vmem:[%s191 + $0x628] sm:$0xff] %v1213
      %2476 = vst [vmem:[%s191 + $0x630] sm:$0xff] %v1884
      %2477 = vst [vmem:[%s191 + $0x638] sm:$0xff] %v1886
      %2478 = vst [vmem:[%s191 + $0x640] sm:$0xff] %v1217
      %2479 = vst [vmem:[%s191 + $0x648] sm:$0xff] %v1219
      %2480 = vst [vmem:[%s191 + $0x650] sm:$0xff] %v1890
      %2481 = vst [vmem:[%s191 + $0x658] sm:$0xff] %v1892
      %2482 = vst [vmem:[%s191 + $0x660] sm:$0xff] %v1221
      %2483 = vst [vmem:[%s191 + $0x668] sm:$0xff] %v1223
      %2484 = vst [vmem:[%s191 + $0x670] sm:$0xff] %v1894
      %2485 = vst [vmem:[%s191 + $0x678] sm:$0xff] %v1896
      %2486 = vst [vmem:[%s191 + $0x680] sm:$0xff] %v1227
      %2487 = vst [vmem:[%s191 + $0x688] sm:$0xff] %v1229
      %2488 = vst [vmem:[%s191 + $0x690] sm:$0xff] %v1900
      %2489 = vst [vmem:[%s191 + $0x698] sm:$0xff] %v1902
      %2490 = vst [vmem:[%s191 + $0x6a0] sm:$0xff] %v1231
      %2491 = vst [vmem:[%s191 + $0x6a8] sm:$0xff] %v1233
      %2492 = vst [vmem:[%s191 + $0x6b0] sm:$0xff] %v1904
      %2493 = vst [vmem:[%s191 + $0x6b8] sm:$0xff] %v1906
      %2494 = vst [vmem:[%s191 + $0x6c0] sm:$0xff] %v1237
      %2495 = vst [vmem:[%s191 + $0x6c8] sm:$0xff] %v1239
      %2496 = vst [vmem:[%s191 + $0x6d0] sm:$0xff] %v1910
      %2497 = vst [vmem:[%s191 + $0x6d8] sm:$0xff] %v1912
      %2498 = vst [vmem:[%s191 + $0x6e0] sm:$0xff] %v1241
      %2499 = vst [vmem:[%s191 + $0x6e8] sm:$0xff] %v1243
      %2500 = vst [vmem:[%s191 + $0x6f0] sm:$0xff] %v1914
      %2501 = vst [vmem:[%s191 + $0x6f8] sm:$0xff] %v1916
      %2502 = vst [vmem:[%s191 + $0x700] sm:$0xff] %v1247
      %2503 = vst [vmem:[%s191 + $0x708] sm:$0xff] %v1249
      %2504 = vst [vmem:[%s191 + $0x710] sm:$0xff] %v1920
      %2505 = vst [vmem:[%s191 + $0x718] sm:$0xff] %v1922
      %2506 = vst [vmem:[%s191 + $0x720] sm:$0xff] %v1251
      %2507 = vst [vmem:[%s191 + $0x728] sm:$0xff] %v1253
      %2508 = vst [vmem:[%s191 + $0x730] sm:$0xff] %v1924
      %2509 = vst [vmem:[%s191 + $0x738] sm:$0xff] %v1926
      %2510 = vst [vmem:[%s191 + $0x740] sm:$0xff] %v1257
      %2511 = vst [vmem:[%s191 + $0x748] sm:$0xff] %v1259
      %2512 = vst [vmem:[%s191 + $0x750] sm:$0xff] %v1930
      %2513 = vst [vmem:[%s191 + $0x758] sm:$0xff] %v1932
      %2514 = vst [vmem:[%s191 + $0x760] sm:$0xff] %v1261
      %2515 = vst [vmem:[%s191 + $0x768] sm:$0xff] %v1263
      %2516 = vst [vmem:[%s191 + $0x770] sm:$0xff] %v1934
      %2517 = vst [vmem:[%s191 + $0x778] sm:$0xff] %v1936
      %2518 = vst [vmem:[%s191 + $0x780] sm:$0xff] %v1267
      %2519 = vst [vmem:[%s191 + $0x788] sm:$0xff] %v1269
      %2520 = vst [vmem:[%s191 + $0x790] sm:$0xff] %v1940
      %2521 = vst [vmem:[%s191 + $0x798] sm:$0xff] %v1942
      %2522 = vst [vmem:[%s191 + $0x7a0] sm:$0xff] %v1271
      %2523 = vst [vmem:[%s191 + $0x7a8] sm:$0xff] %v1273
      %2524 = vst [vmem:[%s191 + $0x7b0] sm:$0xff] %v1944
      %2525 = vst [vmem:[%s191 + $0x7b8] sm:$0xff] %v1946
      %2526 = vst [vmem:[%s191 + $0x7c0] sm:$0xff] %v1277
      %2527 = vst [vmem:[%s191 + $0x7c8] sm:$0xff] %v1279
      %2528 = vst [vmem:[%s191 + $0x7d0] sm:$0xff] %v1950
      %2529 = vst [vmem:[%s191 + $0x7d8] sm:$0xff] %v1952
      %2530 = vst [vmem:[%s191 + $0x7e0] sm:$0xff] %v1281
      %2531 = vst [vmem:[%s191 + $0x7e8] sm:$0xff] %v1283
      %2532 = vst [vmem:[%s191 + $0x7f0] sm:$0xff] %v1954
      %2533 = vst [vmem:[%s191 + $0x7f8] sm:$0xff] %v1956
      %2534 = vst [vmem:[%s191 + $0x800] sm:$0xff] %v1287
      %2535 = vst [vmem:[%s191 + $0x808] sm:$0xff] %v1289
      %2536 = vst [vmem:[%s191 + $0x810] sm:$0xff] %v1960
      %2537 = vst [vmem:[%s191 + $0x818] sm:$0xff] %v1962
      %2538 = vst [vmem:[%s191 + $0x820] sm:$0xff] %v1291
      %2539 = vst [vmem:[%s191 + $0x828] sm:$0xff] %v1293
      %2540 = vst [vmem:[%s191 + $0x830] sm:$0xff] %v1964
      %2541 = vst [vmem:[%s191 + $0x838] sm:$0xff] %v1966
      %2542 = vst [vmem:[%s191 + $0x840] sm:$0xff] %v1297
      %2543 = vst [vmem:[%s191 + $0x848] sm:$0xff] %v1299
      %2544 = vst [vmem:[%s191 + $0x850] sm:$0xff] %v1970
      %2545 = vst [vmem:[%s191 + $0x858] sm:$0xff] %v1972
      %2546 = vst [vmem:[%s191 + $0x860] sm:$0xff] %v1301
      %2547 = vst [vmem:[%s191 + $0x868] sm:$0xff] %v1303
      %2548 = vst [vmem:[%s191 + $0x870] sm:$0xff] %v1974
      %2549 = vst [vmem:[%s191 + $0x878] sm:$0xff] %v1976
      %2550 = vst [vmem:[%s191 + $0x880] sm:$0xff] %v1307
      %2551 = vst [vmem:[%s191 + $0x888] sm:$0xff] %v1309
      %2552 = vst [vmem:[%s191 + $0x890] sm:$0xff] %v1980
      %2553 = vst [vmem:[%s191 + $0x898] sm:$0xff] %v1982
      %2554 = vst [vmem:[%s191 + $0x8a0] sm:$0xff] %v1311
      %2555 = vst [vmem:[%s191 + $0x8a8] sm:$0xff] %v1313
      %2556 = vst [vmem:[%s191 + $0x8b0] sm:$0xff] %v1984
      %2557 = vst [vmem:[%s191 + $0x8b8] sm:$0xff] %v1986
      %2558 = vst [vmem:[%s191 + $0x8c0] sm:$0xff] %v1317
      %2559 = vst [vmem:[%s191 + $0x8c8] sm:$0xff] %v1319
      %2560 = vst [vmem:[%s191 + $0x8d0] sm:$0xff] %v1990
      %2561 = vst [vmem:[%s191 + $0x8d8] sm:$0xff] %v1992
      %2562 = vst [vmem:[%s191 + $0x8e0] sm:$0xff] %v1321
      %2563 = vst [vmem:[%s191 + $0x8e8] sm:$0xff] %v1323
      %2564 = vst [vmem:[%s191 + $0x8f0] sm:$0xff] %v1994
      %2565 = vst [vmem:[%s191 + $0x8f8] sm:$0xff] %v1996
      %2566 = vst [vmem:[%s191 + $0x900] sm:$0xff] %v1327
      %2567 = vst [vmem:[%s191 + $0x908] sm:$0xff] %v1329
      %2568 = vst [vmem:[%s191 + $0x910] sm:$0xff] %v2000
      %2569 = vst [vmem:[%s191 + $0x918] sm:$0xff] %v2002
      %2570 = vst [vmem:[%s191 + $0x920] sm:$0xff] %v1331
      %2571 = vst [vmem:[%s191 + $0x928] sm:$0xff] %v1333
      %2572 = vst [vmem:[%s191 + $0x930] sm:$0xff] %v2004
      %2573 = vst [vmem:[%s191 + $0x938] sm:$0xff] %v2006
      %2574 = vst [vmem:[%s191 + $0x940] sm:$0xff] %v1337
      %2575 = vst [vmem:[%s191 + $0x948] sm:$0xff] %v1339
      %2576 = vst [vmem:[%s191 + $0x950] sm:$0xff] %v2010
      %2577 = vst [vmem:[%s191 + $0x958] sm:$0xff] %v2012
      %2578 = vst [vmem:[%s191 + $0x960] sm:$0xff] %v1341
      %2579 = vst [vmem:[%s191 + $0x968] sm:$0xff] %v1343
      %2580 = vst [vmem:[%s191 + $0x970] sm:$0xff] %v2014
      %2581 = vst [vmem:[%s191 + $0x978] sm:$0xff] %v2016
      %2582 = vst [vmem:[%s191 + $0x980] sm:$0xff] %v1347
      %2583 = vst [vmem:[%s191 + $0x988] sm:$0xff] %v1349
      %2584 = vst [vmem:[%s191 + $0x990] sm:$0xff] %v2020
      %2585 = vst [vmem:[%s191 + $0x998] sm:$0xff] %v2022
      %2586 = vst [vmem:[%s191 + $0x9a0] sm:$0xff] %v1351
      %2587 = vst [vmem:[%s191 + $0x9a8] sm:$0xff] %v1353
      %2588 = vst [vmem:[%s191 + $0x9b0] sm:$0xff] %v2024
      %2589 = vst [vmem:[%s191 + $0x9b8] sm:$0xff] %v2026
      %2590 = vst [vmem:[%s191 + $0x9c0] sm:$0xff] %v1357
      %2591 = vst [vmem:[%s191 + $0x9c8] sm:$0xff] %v1359
      %2592 = vst [vmem:[%s191 + $0x9d0] sm:$0xff] %v2030
      %2593 = vst [vmem:[%s191 + $0x9d8] sm:$0xff] %v2032
      %2594 = vst [vmem:[%s191 + $0x9e0] sm:$0xff] %v1361
      %2595 = vst [vmem:[%s191 + $0x9e8] sm:$0xff] %v1363
      %2596 = vst [vmem:[%s191 + $0x9f0] sm:$0xff] %v2034
      %2597 = vst [vmem:[%s191 + $0x9f8] sm:$0xff] %v2036
      %2598 = vst [vmem:[%s191 + $0xa00] sm:$0xff] %v1367
      %2599 = vst [vmem:[%s191 + $0xa08] sm:$0xff] %v1369
      %2600 = vst [vmem:[%s191 + $0xa10] sm:$0xff] %v2040
      %2601 = vst [vmem:[%s191 + $0xa18] sm:$0xff] %v2042
      %2602 = vst [vmem:[%s191 + $0xa20] sm:$0xff] %v1371
      %2603 = vst [vmem:[%s191 + $0xa28] sm:$0xff] %v1373
      %2604 = vst [vmem:[%s191 + $0xa30] sm:$0xff] %v2044
      %2605 = vst [vmem:[%s191 + $0xa38] sm:$0xff] %v2046
      %2606 = vst [vmem:[%s191 + $0xa40] sm:$0xff] %v1377
      %2607 = vst [vmem:[%s191 + $0xa48] sm:$0xff] %v1379
      %2608 = vst [vmem:[%s191 + $0xa50] sm:$0xff] %v2050
      %2609 = vst [vmem:[%s191 + $0xa58] sm:$0xff] %v2052
      %2610 = vst [vmem:[%s191 + $0xa60] sm:$0xff] %v1381
      %2611 = vst [vmem:[%s191 + $0xa68] sm:$0xff] %v1383
      %2612 = vst [vmem:[%s191 + $0xa70] sm:$0xff] %v2054
      %2613 = vst [vmem:[%s191 + $0xa78] sm:$0xff] %v2056
      %2614 = vst [vmem:[%s191 + $0xa80] sm:$0xff] %v1387
      %2615 = vst [vmem:[%s191 + $0xa88] sm:$0xff] %v1389
      %2616 = vst [vmem:[%s191 + $0xa90] sm:$0xff] %v2060
      %2617 = vst [vmem:[%s191 + $0xa98] sm:$0xff] %v2062
      %2618 = vst [vmem:[%s191 + $0xaa0] sm:$0xff] %v1391
      %2619 = vst [vmem:[%s191 + $0xaa8] sm:$0xff] %v1393
      %2620 = vst [vmem:[%s191 + $0xab0] sm:$0xff] %v2064
      %2621 = vst [vmem:[%s191 + $0xab8] sm:$0xff] %v2066
      %2622 = vst [vmem:[%s191 + $0xac0] sm:$0xff] %v1397
      %2623 = vst [vmem:[%s191 + $0xac8] sm:$0xff] %v1399
      %2624 = vst [vmem:[%s191 + $0xad0] sm:$0xff] %v2070
      %2625 = vst [vmem:[%s191 + $0xad8] sm:$0xff] %v2072
      %2626 = vst [vmem:[%s191 + $0xae0] sm:$0xff] %v1401
      %2627 = vst [vmem:[%s191 + $0xae8] sm:$0xff] %v1403
      %2628 = vst [vmem:[%s191 + $0xaf0] sm:$0xff] %v2074
      %2629 = vst [vmem:[%s191 + $0xaf8] sm:$0xff] %v2076
      %2630 = vst [vmem:[%s191 + $0xb00] sm:$0xff] %v1407
      %2631 = vst [vmem:[%s191 + $0xb08] sm:$0xff] %v1409
      %2632 = vst [vmem:[%s191 + $0xb10] sm:$0xff] %v2080
      %2633 = vst [vmem:[%s191 + $0xb18] sm:$0xff] %v2082
      %2634 = vst [vmem:[%s191 + $0xb20] sm:$0xff] %v1411
      %2635 = vst [vmem:[%s191 + $0xb28] sm:$0xff] %v1413
      %2636 = vst [vmem:[%s191 + $0xb30] sm:$0xff] %v2084
      %2637 = vst [vmem:[%s191 + $0xb38] sm:$0xff] %v2086
      %2638 = vst [vmem:[%s191 + $0xb40] sm:$0xff] %v1417
      %2639 = vst [vmem:[%s191 + $0xb48] sm:$0xff] %v1419
      %2640 = vst [vmem:[%s191 + $0xb50] sm:$0xff] %v2090
      %2641 = vst [vmem:[%s191 + $0xb58] sm:$0xff] %v2092
      %2642 = vst [vmem:[%s191 + $0xb60] sm:$0xff] %v1421
      %2643 = vst [vmem:[%s191 + $0xb68] sm:$0xff] %v1423
      %2644 = vst [vmem:[%s191 + $0xb70] sm:$0xff] %v2094
      %2645 = vst [vmem:[%s191 + $0xb78] sm:$0xff] %v2096
      %2646 = vst [vmem:[%s191 + $0xb80] sm:$0xff] %v1427
      %2647 = vst [vmem:[%s191 + $0xb88] sm:$0xff] %v1429
      %2648 = vst [vmem:[%s191 + $0xb90] sm:$0xff] %v2100
      %2649 = vst [vmem:[%s191 + $0xb98] sm:$0xff] %v2102
      %2650 = vst [vmem:[%s191 + $0xba0] sm:$0xff] %v1431
      %2651 = vst [vmem:[%s191 + $0xba8] sm:$0xff] %v1433
      %2652 = vst [vmem:[%s191 + $0xbb0] sm:$0xff] %v2104
      %2653 = vst [vmem:[%s191 + $0xbb8] sm:$0xff] %v2106
      %2654 = vst [vmem:[%s191 + $0xbc0] sm:$0xff] %v1437
      %2655 = vst [vmem:[%s191 + $0xbc8] sm:$0xff] %v1439
      %2656 = vst [vmem:[%s191 + $0xbd0] sm:$0xff] %v2110
      %2657 = vst [vmem:[%s191 + $0xbd8] sm:$0xff] %v2112
      %2658 = vst [vmem:[%s191 + $0xbe0] sm:$0xff] %v1441
      %2659 = vst [vmem:[%s191 + $0xbe8] sm:$0xff] %v1443
      %2660 = vst [vmem:[%s191 + $0xbf0] sm:$0xff] %v2114
      %2661 = vst [vmem:[%s191 + $0xbf8] sm:$0xff] %v2116
      %2662 = vst [vmem:[%s191 + $0xc00] sm:$0xff] %v1447
      %2663 = vst [vmem:[%s191 + $0xc08] sm:$0xff] %v1449
      %2664 = vst [vmem:[%s191 + $0xc10] sm:$0xff] %v2120
      %2665 = vst [vmem:[%s191 + $0xc18] sm:$0xff] %v2122
      %2666 = vst [vmem:[%s191 + $0xc20] sm:$0xff] %v1451
      %2667 = vst [vmem:[%s191 + $0xc28] sm:$0xff] %v1453
      %2668 = vst [vmem:[%s191 + $0xc30] sm:$0xff] %v2124
      %2669 = vst [vmem:[%s191 + $0xc38] sm:$0xff] %v2126
      %2670 = vst [vmem:[%s191 + $0xc40] sm:$0xff] %v1457
      %2671 = vst [vmem:[%s191 + $0xc48] sm:$0xff] %v1459
      %2672 = vst [vmem:[%s191 + $0xc50] sm:$0xff] %v2130
      %2673 = vst [vmem:[%s191 + $0xc58] sm:$0xff] %v2132
      %2674 = vst [vmem:[%s191 + $0xc60] sm:$0xff] %v1461
      %2675 = vst [vmem:[%s191 + $0xc68] sm:$0xff] %v1463
      %2676 = vst [vmem:[%s191 + $0xc70] sm:$0xff] %v2134
      %2677 = vst [vmem:[%s191 + $0xc78] sm:$0xff] %v2136
      %2678 = vst [vmem:[%s191 + $0xc80] sm:$0xff] %v1467
      %2679 = vst [vmem:[%s191 + $0xc88] sm:$0xff] %v1469
      %2680 = vst [vmem:[%s191 + $0xc90] sm:$0xff] %v2140
      %2681 = vst [vmem:[%s191 + $0xc98] sm:$0xff] %v2142
      %2682 = vst [vmem:[%s191 + $0xca0] sm:$0xff] %v1471
      %2683 = vst [vmem:[%s191 + $0xca8] sm:$0xff] %v1473
      %2684 = vst [vmem:[%s191 + $0xcb0] sm:$0xff] %v2144
      %2685 = vst [vmem:[%s191 + $0xcb8] sm:$0xff] %v2146
      %2686 = vst [vmem:[%s191 + $0xcc0] sm:$0xff] %v1477
      %2687 = vst [vmem:[%s191 + $0xcc8] sm:$0xff] %v1479
      %2688 = vst [vmem:[%s191 + $0xcd0] sm:$0xff] %v2150
      %2689 = vst [vmem:[%s191 + $0xcd8] sm:$0xff] %v2152
      %2690 = vst [vmem:[%s191 + $0xce0] sm:$0xff] %v1481
      %2691 = vst [vmem:[%s191 + $0xce8] sm:$0xff] %v1483
      %2692 = vst [vmem:[%s191 + $0xcf0] sm:$0xff] %v2154
      %2693 = vst [vmem:[%s191 + $0xcf8] sm:$0xff] %v2156
      %2694 = vst [vmem:[%s191 + $0xd00] sm:$0xff] %v1487
      %2695 = vst [vmem:[%s191 + $0xd08] sm:$0xff] %v1489
      %2696 = vst [vmem:[%s191 + $0xd10] sm:$0xff] %v2160
      %2697 = vst [vmem:[%s191 + $0xd18] sm:$0xff] %v2162
      %2698 = vst [vmem:[%s191 + $0xd20] sm:$0xff] %v1491
      %2699 = vst [vmem:[%s191 + $0xd28] sm:$0xff] %v1493
      %2700 = vst [vmem:[%s191 + $0xd30] sm:$0xff] %v2164
      %2701 = vst [vmem:[%s191 + $0xd38] sm:$0xff] %v2166
      %2702 = vst [vmem:[%s191 + $0xd40] sm:$0xff] %v1497
      %2703 = vst [vmem:[%s191 + $0xd48] sm:$0xff] %v1499
      %2704 = vst [vmem:[%s191 + $0xd50] sm:$0xff] %v2170
      %2705 = vst [vmem:[%s191 + $0xd58] sm:$0xff] %v2172
      %2706 = vst [vmem:[%s191 + $0xd60] sm:$0xff] %v1501
      %2707 = vst [vmem:[%s191 + $0xd68] sm:$0xff] %v1503
      %2708 = vst [vmem:[%s191 + $0xd70] sm:$0xff] %v2174
      %2709 = vst [vmem:[%s191 + $0xd78] sm:$0xff] %v2176
      %2710 = vst [vmem:[%s191 + $0xd80] sm:$0xff] %v1507
      %2711 = vst [vmem:[%s191 + $0xd88] sm:$0xff] %v1509
      %2712 = vst [vmem:[%s191 + $0xd90] sm:$0xff] %v2180
      %2713 = vst [vmem:[%s191 + $0xd98] sm:$0xff] %v2182
      %2714 = vst [vmem:[%s191 + $0xda0] sm:$0xff] %v1511
      %2715 = vst [vmem:[%s191 + $0xda8] sm:$0xff] %v1513
      %2716 = vst [vmem:[%s191 + $0xdb0] sm:$0xff] %v2184
      %2717 = vst [vmem:[%s191 + $0xdb8] sm:$0xff] %v2186
      %2718 = vst [vmem:[%s191 + $0xdc0] sm:$0xff] %v1517
      %2719 = vst [vmem:[%s191 + $0xdc8] sm:$0xff] %v1519
      %2720 = vst [vmem:[%s191 + $0xdd0] sm:$0xff] %v2190
      %2721 = vst [vmem:[%s191 + $0xdd8] sm:$0xff] %v2192
      %2722 = vst [vmem:[%s191 + $0xde0] sm:$0xff] %v1521
      %2723 = vst [vmem:[%s191 + $0xde8] sm:$0xff] %v1523
      %2724 = vst [vmem:[%s191 + $0xdf0] sm:$0xff] %v2194
      %2725 = vst [vmem:[%s191 + $0xdf8] sm:$0xff] %v2196
      %2726 = vst [vmem:[%s191 + $0xe00] sm:$0xff] %v1527
      %2727 = vst [vmem:[%s191 + $0xe08] sm:$0xff] %v1529
      %2728 = vst [vmem:[%s191 + $0xe10] sm:$0xff] %v2200
      %2729 = vst [vmem:[%s191 + $0xe18] sm:$0xff] %v2202
      %2730 = vst [vmem:[%s191 + $0xe20] sm:$0xff] %v1531
      %2731 = vst [vmem:[%s191 + $0xe28] sm:$0xff] %v1533
      %2732 = vst [vmem:[%s191 + $0xe30] sm:$0xff] %v2204
      %2733 = vst [vmem:[%s191 + $0xe38] sm:$0xff] %v2206
      %2734 = vst [vmem:[%s191 + $0xe40] sm:$0xff] %v1537
      %2735 = vst [vmem:[%s191 + $0xe48] sm:$0xff] %v1539
      %2736 = vst [vmem:[%s191 + $0xe50] sm:$0xff] %v2210
      %2737 = vst [vmem:[%s191 + $0xe58] sm:$0xff] %v2212
      %2738 = vst [vmem:[%s191 + $0xe60] sm:$0xff] %v1541
      %2739 = vst [vmem:[%s191 + $0xe68] sm:$0xff] %v1543
      %2740 = vst [vmem:[%s191 + $0xe70] sm:$0xff] %v2214
      %2741 = vst [vmem:[%s191 + $0xe78] sm:$0xff] %v2216
      %2742 = vst [vmem:[%s191 + $0xe80] sm:$0xff] %v1547
      %2743 = vst [vmem:[%s191 + $0xe88] sm:$0xff] %v1549
      %2744 = vst [vmem:[%s191 + $0xe90] sm:$0xff] %v2220
      %2745 = vst [vmem:[%s191 + $0xe98] sm:$0xff] %v2222
      %2746 = vst [vmem:[%s191 + $0xea0] sm:$0xff] %v1551
      %2747 = vst [vmem:[%s191 + $0xea8] sm:$0xff] %v1553
      %2748 = vst [vmem:[%s191 + $0xeb0] sm:$0xff] %v2224
      %2749 = vst [vmem:[%s191 + $0xeb8] sm:$0xff] %v2226
      %2750 = vst [vmem:[%s191 + $0xec0] sm:$0xff] %v1557
      %2751 = vst [vmem:[%s191 + $0xec8] sm:$0xff] %v1559
      %2752 = vst [vmem:[%s191 + $0xed0] sm:$0xff] %v2230
      %2753 = vst [vmem:[%s191 + $0xed8] sm:$0xff] %v2232
      %2754 = vst [vmem:[%s191 + $0xee0] sm:$0xff] %v1561
      %2755 = vst [vmem:[%s191 + $0xee8] sm:$0xff] %v1563
      %2756 = vst [vmem:[%s191 + $0xef0] sm:$0xff] %v2234
      %2757 = vst [vmem:[%s191 + $0xef8] sm:$0xff] %v2236
      %2758 = vst [vmem:[%s191 + $0xf00] sm:$0xff] %v1567
      %2759 = vst [vmem:[%s191 + $0xf08] sm:$0xff] %v1569
      %2760 = vst [vmem:[%s191 + $0xf10] sm:$0xff] %v2240
      %2761 = vst [vmem:[%s191 + $0xf18] sm:$0xff] %v2242
      %2762 = vst [vmem:[%s191 + $0xf20] sm:$0xff] %v1571
      %2763 = vst [vmem:[%s191 + $0xf28] sm:$0xff] %v1573
      %2764 = vst [vmem:[%s191 + $0xf30] sm:$0xff] %v2244
      %2765 = vst [vmem:[%s191 + $0xf38] sm:$0xff] %v2246
      %2766 = vst [vmem:[%s191 + $0xf40] sm:$0xff] %v1577
      %2767 = vst [vmem:[%s191 + $0xf48] sm:$0xff] %v1579
      %2768 = vst [vmem:[%s191 + $0xf50] sm:$0xff] %v2250
      %2769 = vst [vmem:[%s191 + $0xf58] sm:$0xff] %v2252
      %2770 = vst [vmem:[%s191 + $0xf60] sm:$0xff] %v1581
      %2771 = vst [vmem:[%s191 + $0xf68] sm:$0xff] %v1583
      %2772 = vst [vmem:[%s191 + $0xf70] sm:$0xff] %v2254
      %2773 = vst [vmem:[%s191 + $0xf78] sm:$0xff] %v2256
      %2774 = vst [vmem:[%s191 + $0xf80] sm:$0xff] %v1587
      %2775 = vst [vmem:[%s191 + $0xf88] sm:$0xff] %v1589
      %2776 = vst [vmem:[%s191 + $0xf90] sm:$0xff] %v2260
      %2777 = vst [vmem:[%s191 + $0xf98] sm:$0xff] %v2262
      %2778 = vst [vmem:[%s191 + $0xfa0] sm:$0xff] %v1591
      %2779 = vst [vmem:[%s191 + $0xfa8] sm:$0xff] %v1593
      %2780 = vst [vmem:[%s191 + $0xfb0] sm:$0xff] %v2264
      %2781 = vst [vmem:[%s191 + $0xfb8] sm:$0xff] %v2266
      %2782 = vst [vmem:[%s191 + $0xfc0] sm:$0xff] %v1597
      %2783 = vst [vmem:[%s191 + $0xfc8] sm:$0xff] %v1599
      %2784 = vst [vmem:[%s191 + $0xfd0] sm:$0xff] %v2270
      %2785 = vst [vmem:[%s191 + $0xfd8] sm:$0xff] %v2272
      %2786 = vst [vmem:[%s191 + $0xfe0] sm:$0xff] %v1601
      %2787 = vst [vmem:[%s191 + $0xfe8] sm:$0xff] %v1603
      %2788 = vst [vmem:[%s191 + $0xff0] sm:$0xff] %v2274
      %2789 = vst [vmem:[%s191 + $0xff8] sm:$0xff] %v2276
      %s2790 = smul.u32 128, %s17
      %s2791 = smul.u32 4, %s18
      %p2792 = scmp.lt.s32.totalorder %s2790, 255
      %s2793 = scalar_select %p2792, %s2790, 255
      %p2794 = scmp.lt.s32.totalorder %s2791, 3
      %s2795 = scalar_select %p2794, %s2791, 3
      %s2796 = smul.addr %s2793, 4
      %s2797 = sadd.s32 %s2795, %s2796
      %s2798 = smul.addr %s2797, 8
      %s2799 = scalar_lea.vmem %s2, %s2798
      // Predicated region
      $region29: #{generator_forward.10} parent=27 // pred_check
        %p2800 = pneg %p97
      $region30: #{generator_forward.10} parent=27 // pred_check_branch
        %2802 = sbr.rel (%p2800) target = $region32
      $region31: #{generator_forward.10} parent=27 // pred_region
        %s2803 = smul.u32 128, %s17
        %s2804 = smul.u32 4, %s18
      $region32: #{generator_forward.10} parent=27 // pred_fallthru
        _
    $region28: #{generator_forward.10} parent=5 // pred_fallthru
      _
    %p2805 = scmp.le.s32.totalorder 2, %s8
    // Predicated region
    $region33: #{generator_forward.10} parent=5 // pred_check
      %p2806 = pneg %p2805
    $region34: #{generator_forward.10} parent=5 // pred_check_branch
      %2808 = sbr.rel (%p2806) target = $region36
    $region35: #{generator_forward.10} parent=5 // pred_region
      %s2809 = ssub.s32 %s8, 2
      // Predicated region
      $region37: #{generator_forward.10} parent=35 // pred_check
        %p2810 = pneg %p103
      $region38: #{generator_forward.10} parent=35 // pred_check_branch
        %2812 = sbr.rel (%p2810) target = $region40
      $region39: #{generator_forward.10} parent=35 // pred_region
        %s2813 = smul.u32 128, %s19
        %s2814 = smul.u32 4, %s20
        %p2815 = scmp.lt.s32.totalorder %s2813, 255
        %s2816 = scalar_select %p2815, %s2813, 255
        %p2817 = scmp.lt.s32.totalorder %s2814, 3
        %s2818 = scalar_select %p2817, %s2814, 3
        %s2819 = smul.addr %s2816, 4
        %s2820 = sadd.s32 %s2818, %s2819
        %s2821 = smul.addr %s2820, 8
        %s2822 = scalar_lea.vmem %s2, %s2821
      $region40: #{generator_forward.10} parent=35 // pred_fallthru
        _
    $region36: #{generator_forward.10} parent=5 // pred_fallthru
      _
  $region6: #{generator_forward.10} parent=0 // loop_footer
    %s12 = sadd.s32 1, %s8
  $region7: #{generator_forward.10} parent=0 // loop_footer_branch
    %7 = sbr.rel target = $region3
  $region8: #{generator_forward.10} parent=0 // loop_exit
    _

// kernel: generator_forward.11
$region0: #{generator_forward.11}
  #allocation0 [shape = 'u32[]', space=smem, size = 0x4, offset = 0x4, fixed_abs, tag = 'smem constant byte address 0x4 - core index']
  #allocation1 [shape = 'u32[144,128]{1,0:T(1,128)}', space=vmem, size = 0x12000, scoped, tag = 'internal scratch']
  %s0 = inlined_call_operand.vmem [shape: bf16[8192,32], index: 0, kind: input, shape index: {}]
  %s1 = inlined_call_operand.vmem [shape: bf16[32,128], index: 1, kind: input, shape index: {}]
  %s2 = inlined_call_operand.vmem [shape: f32[8192,128], index: 2, kind: output, shape index: {}]
  %s3 = sld [smem:[#allocation0]]
  $region41: #{generator_forward.11} parent=0
    _
  %s5 = ssub.s32 1, %s3
  %s6 = scalar_select 0, %s5, %s3
  loop: start=0, step=1, limit=10
  $region2: #{generator_forward.11} parent=0 // loop_pre_header
    _
  $region3: #{generator_forward.11} parent=0 // loop_header
    %s8 = sphi 0, %s12
    %p9 = scmp.ge.s32.totalorder %s8, 10
    %s15 = sphi 0, %s27
    %s16 = sphi 0, %s23
    %s17 = sphi 0, %s15
    %s18 = sphi 0, %s16
    %s19 = sphi 0, %s17
    %s20 = sphi 0, %s18
    %s30 = sphi 0, %s32
    %s33 = sphi 0, %s30
    %s34 = sphi 0, %s33
    %s50 = sphi 0, %s34
    %s56 = sphi 0, %s58
    %s59 = sphi 0, %s56
    %s60 = sphi 0, %s59
    %s76 = sphi 0, %s60
    %s84 = sphi 0, %s86
    %s87 = sphi 0, %s84
    %s88 = sphi 0, %s87
    %s104 = sphi 0, %s88
  $region4: #{generator_forward.11} parent=0 // loop_header_branch
    %11 = sbr.rel (%p9) target = $region8
  $region5: #{generator_forward.11} parent=0 // loop_body
    %s13 = ssub.s32 %s8, 1
    %s14 = ssub.s32 %s8, 2
    %s21 = sadd.s32 1, %s16
    %p22 = scmp.ge.s32.totalorder %s21, 1
    %s23 = scalar_select %p22, 0, %s21
    %s24 = sadd.s32 1, %s15
    %s25 = scalar_select %p22, %s24, %s15
    %p26 = scmp.ge.s32.totalorder %s25, 8
    %s27 = scalar_select %p26, 0, %s25
    %s28 = ssub.s32 %s15, %s27
    %p29 = scmp.eq.s32.totalorder %s28, 0
    %s31 = sadd.s32 %s30, 1
    %s32 = scalar_select %p29, %s30, %s31
    %p35 = pneg %p29
    %p36 = scmp.eq.s32.totalorder %s8, 7
    %p37 = por %p35, %p36
    %p38 = scmp.ne.s32.totalorder %s30, %s33
    %p39 = scmp.eq.s32.totalorder %s8, 0
    %p40 = por %p38, %p39
    %p41 = scmp.ne.s32.totalorder %s30, %s33
    %p42 = scmp.eq.s32.totalorder %s13, 7
    %p43 = por %p41, %p42
    %p44 = scmp.ne.s32.totalorder %s33, %s34
    %p45 = scmp.eq.s32.totalorder %s13, 0
    %p46 = por %p44, %p45
    %p47 = scmp.ne.s32.totalorder %s33, %s34
    %p48 = scmp.eq.s32.totalorder %s14, 7
    %p49 = por %p47, %p48
    %p51 = scmp.ne.s32.totalorder %s34, %s50
    %p52 = scmp.eq.s32.totalorder %s14, 0
    %p53 = por %p51, %p52
    %s54 = ssub.s32 %s16, %s23
    %p55 = scmp.eq.s32.totalorder %s54, 0
    %s57 = sadd.s32 %s56, 1
    %s58 = scalar_select %p55, %s56, %s57
    %p61 = pneg %p55
    %p62 = scmp.eq.s32.totalorder %s8, 7
    %p63 = por %p61, %p62
    %p64 = scmp.ne.s32.totalorder %s56, %s59
    %p65 = scmp.eq.s32.totalorder %s8, 0
    %p66 = por %p64, %p65
    %p67 = scmp.ne.s32.totalorder %s56, %s59
    %p68 = scmp.eq.s32.totalorder %s13, 7
    %p69 = por %p67, %p68
    %p70 = scmp.ne.s32.totalorder %s59, %s60
    %p71 = scmp.eq.s32.totalorder %s13, 0
    %p72 = por %p70, %p71
    %p73 = scmp.ne.s32.totalorder %s59, %s60
    %p74 = scmp.eq.s32.totalorder %s14, 7
    %p75 = por %p73, %p74
    %p77 = scmp.ne.s32.totalorder %s60, %s76
    %p78 = scmp.eq.s32.totalorder %s14, 0
    %p79 = por %p77, %p78
    %s80 = ssub.s32 %s15, %s27
    %s81 = ssub.s32 %s16, %s23
    %s82 = sor.u32 %s80, %s81
    %p83 = scmp.eq.s32.totalorder %s82, 0
    %s85 = sadd.s32 %s84, 1
    %s86 = scalar_select %p83, %s84, %s85
    %p89 = pneg %p83
    %p90 = scmp.eq.s32.totalorder %s8, 7
    %p91 = por %p89, %p90
    %p92 = scmp.ne.s32.totalorder %s84, %s87
    %p93 = scmp.eq.s32.totalorder %s8, 0
    %p94 = por %p92, %p93
    %p95 = scmp.ne.s32.totalorder %s84, %s87
    %p96 = scmp.eq.s32.totalorder %s13, 7
    %p97 = por %p95, %p96
    %p98 = scmp.ne.s32.totalorder %s87, %s88
    %p99 = scmp.eq.s32.totalorder %s13, 0
    %p100 = por %p98, %p99
    %p101 = scmp.ne.s32.totalorder %s87, %s88
    %p102 = scmp.eq.s32.totalorder %s14, 7
    %p103 = por %p101, %p102
    %p105 = scmp.ne.s32.totalorder %s88, %s104
    %p106 = scmp.eq.s32.totalorder %s14, 0
    %p107 = por %p105, %p106
    %p108 = scmp.le.s32.totalorder 1, %s8
    %p109 = scmp.lt.s32.totalorder %s8, 9
    %p110 = pnand %p108, %p109
    %p111 = pneg %p110
    // Predicated region
    $region9: #{generator_forward.11} parent=5 // pred_check
      _
    $region10: #{generator_forward.11} parent=5 // pred_check_branch
      %113 = sbr.rel (%p110) target = $region12
    $region11: #{generator_forward.11} parent=5 // pred_region
      %s114 = ssub.s32 %s8, 1
      // Predicated region
      $region13: #{generator_forward.11} parent=11 // pred_check
        %p115 = pneg %p72
      $region14: #{generator_forward.11} parent=11 // pred_check_branch
        %117 = sbr.rel (%p115) target = $region16
      $region15: #{generator_forward.11} parent=11 // pred_region
        %p118 = scmp.lt.s32.totalorder %s18, 0
        %s119 = scalar_select %p118, %s18, 0
        %s120 = smul.addr %s119, 4
        %s121 = scalar_lea.vmem %s1, %s120
      $region16: #{generator_forward.11} parent=11 // pred_fallthru
        _
    $region12: #{generator_forward.11} parent=5 // pred_fallthru
      _
    %p122 = scmp.lt.s32.totalorder %s8, 8
    // Predicated region
    $region17: #{generator_forward.11} parent=5 // pred_check
      %p123 = pneg %p122
    $region18: #{generator_forward.11} parent=5 // pred_check_branch
      %125 = sbr.rel (%p123) target = $region20
    $region19: #{generator_forward.11} parent=5 // pred_region
      // Predicated region
      $region21: #{generator_forward.11} parent=19 // pred_check
        %p126 = pneg %p40
      $region22: #{generator_forward.11} parent=19 // pred_check_branch
        %128 = sbr.rel (%p126) target = $region24
      $region23: #{generator_forward.11} parent=19 // pred_region
        %s129 = smul.u32 128, %s15
        %p130 = scmp.lt.s32.totalorder %s129, 1023
        %s131 = scalar_select %p130, %s129, 1023
        %s132 = smul.addr %s131, 4
        %s133 = scalar_lea.vmem %s0, %s132
        %s134 = smul.u32 128, %s15
      $region24: #{generator_forward.11} parent=19 // pred_fallthru
        _
    $region20: #{generator_forward.11} parent=5 // pred_fallthru
      _
    %p135 = scmp.le.s32.totalorder 1, %s8
    %p136 = scmp.lt.s32.totalorder %s8, 9
    %p137 = pnand %p135, %p136
    %p138 = pneg %p137
    // Predicated region
    $region25: #{generator_forward.11} parent=5 // pred_check
      _
    $region26: #{generator_forward.11} parent=5 // pred_check_branch
      %140 = sbr.rel (%p137) target = $region28
    $region27: #{generator_forward.11} parent=5 // pred_region
      %s141 = ssub.s32 %s8, 1
      %s142 = smul.u32 128, %s17
      %p143 = scmp.lt.s32.totalorder %s142, 1023
      %s144 = scalar_select %p143, %s142, 1023
      %s145 = smul.addr %s144, 4
      %s146 = scalar_lea.vmem %s0, %s145
      %p147 = pneg %p46
      %p148 = pneg %p43
      %p149 = scmp.lt.s32.totalorder %s18, 0
      %s150 = scalar_select %p149, %s18, 0
      %s151 = smul.addr %s150, 4
      %s152 = scalar_lea.vmem %s1, %s151
      %p153 = pneg %p72
      %p154 = pneg %p69
      %p155 = pneg %p100
      %p156 = pneg %p97
      %s157 = smul.u32 128, %s17
      %p158 = scmp.lt.s32.totalorder %s157, 1023
      %s159 = scalar_select %p158, %s157, 1023
      %p160 = scmp.lt.s32.totalorder %s18, 0
      %s161 = scalar_select %p160, %s18, 0
      %s162 = sadd.s32 %s161, %s159
      %s163 = smul.addr %s162, 8
      %s164 = scalar_lea.vmem %s2, %s163
      %s165 = smul.u32 128, %s17
      %p166 = scmp.lt.s32.totalorder %s165, 1023
      %s167 = scalar_select %p166, %s165, 1023
      %s168 = smul.addr %s167, 4
      %s169 = scalar_lea.vmem %s0, %s168
      %s170 = smul.u32 128, %s17
      %p171 = scmp.lt.s32.totalorder %s18, 0
      %s172 = scalar_select %p171, %s18, 0
      %s173 = smul.addr %s172, 4
      %s174 = scalar_lea.vmem %s1, %s173
      %s175 = smul.u32 128, %s17
      %p176 = scmp.lt.s32.totalorder %s175, 1023
      %s177 = scalar_select %p176, %s175, 1023
      %p178 = scmp.lt.s32.totalorder %s18, 0
      %s179 = scalar_select %p178, %s18, 0
      %s180 = sadd.s32 %s179, %s177
      %s181 = smul.addr %s180, 8
      %s182 = scalar_lea.vmem %s2, %s181
      %s183 = smul.u32 128, %s17
      %v185 = vld [vmem:[%s169] sm:$0xf]
      %v186 = vld [vmem:[%s169 + $0x4] sm:$0xf]
      %v187 = vld [vmem:[%s169 + $0x8] sm:$0xf]
      %v188 = vld [vmem:[%s169 + $0xc] sm:$0xf]
      %v189 = vld [vmem:[%s169 + $0x10] sm:$0xf]
      %v190 = vld [vmem:[%s169 + $0x14] sm:$0xf]
      %v191 = vld [vmem:[%s169 + $0x18] sm:$0xf]
      %v192 = vld [vmem:[%s169 + $0x1c] sm:$0xf]
      %v193 = vld [vmem:[%s169 + $0x20] sm:$0xf]
      %v194 = vld [vmem:[%s169 + $0x24] sm:$0xf]
      %v195 = vld [vmem:[%s169 + $0x28] sm:$0xf]
      %v196 = vld [vmem:[%s169 + $0x2c] sm:$0xf]
      %v197 = vld [vmem:[%s169 + $0x30] sm:$0xf]
      %v198 = vld [vmem:[%s169 + $0x34] sm:$0xf]
      %v199 = vld [vmem:[%s169 + $0x38] sm:$0xf]
      %v200 = vld [vmem:[%s169 + $0x3c] sm:$0xf]
      %v201 = vld [vmem:[%s169 + $0x40] sm:$0xf]
      %v202 = vld [vmem:[%s169 + $0x44] sm:$0xf]
      %v203 = vld [vmem:[%s169 + $0x48] sm:$0xf]
      %v204 = vld [vmem:[%s169 + $0x4c] sm:$0xf]
      %v205 = vld [vmem:[%s169 + $0x50] sm:$0xf]
      %v206 = vld [vmem:[%s169 + $0x54] sm:$0xf]
      %v207 = vld [vmem:[%s169 + $0x58] sm:$0xf]
      %v208 = vld [vmem:[%s169 + $0x5c] sm:$0xf]
      %v209 = vld [vmem:[%s169 + $0x60] sm:$0xf]
      %v210 = vld [vmem:[%s169 + $0x64] sm:$0xf]
      %v211 = vld [vmem:[%s169 + $0x68] sm:$0xf]
      %v212 = vld [vmem:[%s169 + $0x6c] sm:$0xf]
      %v213 = vld [vmem:[%s169 + $0x70] sm:$0xf]
      %v214 = vld [vmem:[%s169 + $0x74] sm:$0xf]
      %v215 = vld [vmem:[%s169 + $0x78] sm:$0xf]
      %v216 = vld [vmem:[%s169 + $0x7c] sm:$0xf]
      %v217 = vld [vmem:[%s169 + $0x80] sm:$0xf]
      %v218 = vld [vmem:[%s169 + $0x84] sm:$0xf]
      %v219 = vld [vmem:[%s169 + $0x88] sm:$0xf]
      %v220 = vld [vmem:[%s169 + $0x8c] sm:$0xf]
      %v221 = vld [vmem:[%s169 + $0x90] sm:$0xf]
      %v222 = vld [vmem:[%s169 + $0x94] sm:$0xf]
      %v223 = vld [vmem:[%s169 + $0x98] sm:$0xf]
      %v224 = vld [vmem:[%s169 + $0x9c] sm:$0xf]
      %v225 = vld [vmem:[%s169 + $0xa0] sm:$0xf]
      %v226 = vld [vmem:[%s169 + $0xa4] sm:$0xf]
      %v227 = vld [vmem:[%s169 + $0xa8] sm:$0xf]
      %v228 = vld [vmem:[%s169 + $0xac] sm:$0xf]
      %v229 = vld [vmem:[%s169 + $0xb0] sm:$0xf]
      %v230 = vld [vmem:[%s169 + $0xb4] sm:$0xf]
      %v231 = vld [vmem:[%s169 + $0xb8] sm:$0xf]
      %v232 = vld [vmem:[%s169 + $0xbc] sm:$0xf]
      %v233 = vld [vmem:[%s169 + $0xc0] sm:$0xf]
      %v234 = vld [vmem:[%s169 + $0xc4] sm:$0xf]
      %v235 = vld [vmem:[%s169 + $0xc8] sm:$0xf]
      %v236 = vld [vmem:[%s169 + $0xcc] sm:$0xf]
      %v237 = vld [vmem:[%s169 + $0xd0] sm:$0xf]
      %v238 = vld [vmem:[%s169 + $0xd4] sm:$0xf]
      %v239 = vld [vmem:[%s169 + $0xd8] sm:$0xf]
      %v240 = vld [vmem:[%s169 + $0xdc] sm:$0xf]
      %v241 = vld [vmem:[%s169 + $0xe0] sm:$0xf]
      %v242 = vld [vmem:[%s169 + $0xe4] sm:$0xf]
      %v243 = vld [vmem:[%s169 + $0xe8] sm:$0xf]
      %v244 = vld [vmem:[%s169 + $0xec] sm:$0xf]
      %v245 = vld [vmem:[%s169 + $0xf0] sm:$0xf]
      %v246 = vld [vmem:[%s169 + $0xf4] sm:$0xf]
      %v247 = vld [vmem:[%s169 + $0xf8] sm:$0xf]
      %v248 = vld [vmem:[%s169 + $0xfc] sm:$0xf]
      %v249 = vld [vmem:[%s169 + $0x100] sm:$0xf]
      %v250 = vld [vmem:[%s169 + $0x104] sm:$0xf]
      %v251 = vld [vmem:[%s169 + $0x108] sm:$0xf]
      %v252 = vld [vmem:[%s169 + $0x10c] sm:$0xf]
      %v253 = vld [vmem:[%s169 + $0x110] sm:$0xf]
      %v254 = vld [vmem:[%s169 + $0x114] sm:$0xf]
      %v255 = vld [vmem:[%s169 + $0x118] sm:$0xf]
      %v256 = vld [vmem:[%s169 + $0x11c] sm:$0xf]
      %v257 = vld [vmem:[%s169 + $0x120] sm:$0xf]
      %v258 = vld [vmem:[%s169 + $0x124] sm:$0xf]
      %v259 = vld [vmem:[%s169 + $0x128] sm:$0xf]
      %v260 = vld [vmem:[%s169 + $0x12c] sm:$0xf]
      %v261 = vld [vmem:[%s169 + $0x130] sm:$0xf]
      %v262 = vld [vmem:[%s169 + $0x134] sm:$0xf]
      %v263 = vld [vmem:[%s169 + $0x138] sm:$0xf]
      %v264 = vld [vmem:[%s169 + $0x13c] sm:$0xf]
      %v265 = vld [vmem:[%s169 + $0x140] sm:$0xf]
      %v266 = vld [vmem:[%s169 + $0x144] sm:$0xf]
      %v267 = vld [vmem:[%s169 + $0x148] sm:$0xf]
      %v268 = vld [vmem:[%s169 + $0x14c] sm:$0xf]
      %v269 = vld [vmem:[%s169 + $0x150] sm:$0xf]
      %v270 = vld [vmem:[%s169 + $0x154] sm:$0xf]
      %v271 = vld [vmem:[%s169 + $0x158] sm:$0xf]
      %v272 = vld [vmem:[%s169 + $0x15c] sm:$0xf]
      %v273 = vld [vmem:[%s169 + $0x160] sm:$0xf]
      %v274 = vld [vmem:[%s169 + $0x164] sm:$0xf]
      %v275 = vld [vmem:[%s169 + $0x168] sm:$0xf]
      %v276 = vld [vmem:[%s169 + $0x16c] sm:$0xf]
      %v277 = vld [vmem:[%s169 + $0x170] sm:$0xf]
      %v278 = vld [vmem:[%s169 + $0x174] sm:$0xf]
      %v279 = vld [vmem:[%s169 + $0x178] sm:$0xf]
      %v280 = vld [vmem:[%s169 + $0x17c] sm:$0xf]
      %v281 = vld [vmem:[%s169 + $0x180] sm:$0xf]
      %v282 = vld [vmem:[%s169 + $0x184] sm:$0xf]
      %v283 = vld [vmem:[%s169 + $0x188] sm:$0xf]
      %v284 = vld [vmem:[%s169 + $0x18c] sm:$0xf]
      %v285 = vld [vmem:[%s169 + $0x190] sm:$0xf]
      %v286 = vld [vmem:[%s169 + $0x194] sm:$0xf]
      %v287 = vld [vmem:[%s169 + $0x198] sm:$0xf]
      %v288 = vld [vmem:[%s169 + $0x19c] sm:$0xf]
      %v289 = vld [vmem:[%s169 + $0x1a0] sm:$0xf]
      %v290 = vld [vmem:[%s169 + $0x1a4] sm:$0xf]
      %v291 = vld [vmem:[%s169 + $0x1a8] sm:$0xf]
      %v292 = vld [vmem:[%s169 + $0x1ac] sm:$0xf]
      %v293 = vld [vmem:[%s169 + $0x1b0] sm:$0xf]
      %v294 = vld [vmem:[%s169 + $0x1b4] sm:$0xf]
      %v295 = vld [vmem:[%s169 + $0x1b8] sm:$0xf]
      %v296 = vld [vmem:[%s169 + $0x1bc] sm:$0xf]
      %v297 = vld [vmem:[%s169 + $0x1c0] sm:$0xf]
      %v298 = vld [vmem:[%s169 + $0x1c4] sm:$0xf]
      %v299 = vld [vmem:[%s169 + $0x1c8] sm:$0xf]
      %v300 = vld [vmem:[%s169 + $0x1cc] sm:$0xf]
      %v301 = vld [vmem:[%s169 + $0x1d0] sm:$0xf]
      %v302 = vld [vmem:[%s169 + $0x1d4] sm:$0xf]
      %v303 = vld [vmem:[%s169 + $0x1d8] sm:$0xf]
      %v304 = vld [vmem:[%s169 + $0x1dc] sm:$0xf]
      %v305 = vld [vmem:[%s169 + $0x1e0] sm:$0xf]
      %v306 = vld [vmem:[%s169 + $0x1e4] sm:$0xf]
      %v307 = vld [vmem:[%s169 + $0x1e8] sm:$0xf]
      %v308 = vld [vmem:[%s169 + $0x1ec] sm:$0xf]
      %v309 = vld [vmem:[%s169 + $0x1f0] sm:$0xf]
      %v310 = vld [vmem:[%s169 + $0x1f4] sm:$0xf]
      %v311 = vld [vmem:[%s169 + $0x1f8] sm:$0xf]
      %v312 = vld [vmem:[%s169 + $0x1fc] sm:$0xf]
      %v313 = vld [vmem:[%s174] sm:$0xf]
      %v314 = vld [vmem:[%s174 + $0x4] sm:$0xf]
      %v315 = vld [vmem:[%s174 + $0x8] sm:$0xf]
      %v316 = vld [vmem:[%s174 + $0xc] sm:$0xf]
      %v445 = vunpack.c.l.b16 %v185
      %v446 = vunpack.c.l.b16 %v186
      %v447 = vunpack.c.l.b16 %v187
      %v448 = vunpack.c.l.b16 %v188
      %v449 = vunpack.c.l.b16 %v189
      %v450 = vunpack.c.l.b16 %v190
      %v451 = vunpack.c.l.b16 %v191
      %v452 = vunpack.c.l.b16 %v192
      %v453 = vunpack.c.l.b16 %v193
      %v454 = vunpack.c.l.b16 %v194
      %v455 = vunpack.c.l.b16 %v195
      %v456 = vunpack.c.l.b16 %v196
      %v457 = vunpack.c.l.b16 %v197
      %v458 = vunpack.c.l.b16 %v198
      %v459 = vunpack.c.l.b16 %v199
      %v460 = vunpack.c.l.b16 %v200
      %v461 = vunpack.c.l.b16 %v201
      %v462 = vunpack.c.l.b16 %v202
      %v463 = vunpack.c.l.b16 %v203
      %v464 = vunpack.c.l.b16 %v204
      %v465 = vunpack.c.l.b16 %v205
      %v466 = vunpack.c.l.b16 %v206
      %v467 = vunpack.c.l.b16 %v207
      %v468 = vunpack.c.l.b16 %v208
      %v469 = vunpack.c.l.b16 %v209
      %v470 = vunpack.c.l.b16 %v210
      %v471 = vunpack.c.l.b16 %v211
      %v472 = vunpack.c.l.b16 %v212
      %v473 = vunpack.c.l.b16 %v213
      %v474 = vunpack.c.l.b16 %v214
      %v475 = vunpack.c.l.b16 %v215
      %v476 = vunpack.c.l.b16 %v216
      %v477 = vunpack.c.l.b16 %v217
      %v478 = vunpack.c.l.b16 %v218
      %v479 = vunpack.c.l.b16 %v219
      %v480 = vunpack.c.l.b16 %v220
      %v481 = vunpack.c.l.b16 %v221
      %v482 = vunpack.c.l.b16 %v222
      %v483 = vunpack.c.l.b16 %v223
      %v484 = vunpack.c.l.b16 %v224
      %v485 = vunpack.c.l.b16 %v225
      %v486 = vunpack.c.l.b16 %v226
      %v487 = vunpack.c.l.b16 %v227
      %v488 = vunpack.c.l.b16 %v228
      %v489 = vunpack.c.l.b16 %v229
      %v490 = vunpack.c.l.b16 %v230
      %v491 = vunpack.c.l.b16 %v231
      %v492 = vunpack.c.l.b16 %v232
      %v493 = vunpack.c.l.b16 %v233
      %v494 = vunpack.c.l.b16 %v234
      %v495 = vunpack.c.l.b16 %v235
      %v496 = vunpack.c.l.b16 %v236
      %v497 = vunpack.c.l.b16 %v237
      %v498 = vunpack.c.l.b16 %v238
      %v499 = vunpack.c.l.b16 %v239
      %v500 = vunpack.c.l.b16 %v240
      %v501 = vunpack.c.l.b16 %v241
      %v502 = vunpack.c.l.b16 %v242
      %v503 = vunpack.c.l.b16 %v243
      %v504 = vunpack.c.l.b16 %v244
      %v505 = vunpack.c.l.b16 %v245
      %v506 = vunpack.c.l.b16 %v246
      %v507 = vunpack.c.l.b16 %v247
      %v508 = vunpack.c.l.b16 %v248
      %v509 = vunpack.c.l.b16 %v249
      %v510 = vunpack.c.l.b16 %v250
      %v511 = vunpack.c.l.b16 %v251
      %v512 = vunpack.c.l.b16 %v252
      %v513 = vunpack.c.l.b16 %v253
      %v514 = vunpack.c.l.b16 %v254
      %v515 = vunpack.c.l.b16 %v255
      %v516 = vunpack.c.l.b16 %v256
      %v517 = vunpack.c.l.b16 %v257
      %v518 = vunpack.c.l.b16 %v258
      %v519 = vunpack.c.l.b16 %v259
      %v520 = vunpack.c.l.b16 %v260
      %v521 = vunpack.c.l.b16 %v261
      %v522 = vunpack.c.l.b16 %v262
      %v523 = vunpack.c.l.b16 %v263
      %v524 = vunpack.c.l.b16 %v264
      %v525 = vunpack.c.l.b16 %v265
      %v526 = vunpack.c.l.b16 %v266
      %v527 = vunpack.c.l.b16 %v267
      %v528 = vunpack.c.l.b16 %v268
      %v529 = vunpack.c.l.b16 %v269
      %v530 = vunpack.c.l.b16 %v270
      %v531 = vunpack.c.l.b16 %v271
      %v532 = vunpack.c.l.b16 %v272
      %v533 = vunpack.c.l.b16 %v273
      %v534 = vunpack.c.l.b16 %v274
      %v535 = vunpack.c.l.b16 %v275
      %v536 = vunpack.c.l.b16 %v276
      %v537 = vunpack.c.l.b16 %v277
      %v538 = vunpack.c.l.b16 %v278
      %v539 = vunpack.c.l.b16 %v279
      %v540 = vunpack.c.l.b16 %v280
      %v541 = vunpack.c.l.b16 %v281
      %v542 = vunpack.c.l.b16 %v282
      %v543 = vunpack.c.l.b16 %v283
      %v544 = vunpack.c.l.b16 %v284
      %v545 = vunpack.c.l.b16 %v285
      %v546 = vunpack.c.l.b16 %v286
      %v547 = vunpack.c.l.b16 %v287
      %v548 = vunpack.c.l.b16 %v288
      %v549 = vunpack.c.l.b16 %v289
      %v550 = vunpack.c.l.b16 %v290
      %v551 = vunpack.c.l.b16 %v291
      %v552 = vunpack.c.l.b16 %v292
      %v553 = vunpack.c.l.b16 %v293
      %v554 = vunpack.c.l.b16 %v294
      %v555 = vunpack.c.l.b16 %v295
      %v556 = vunpack.c.l.b16 %v296
      %v557 = vunpack.c.l.b16 %v297
      %v558 = vunpack.c.l.b16 %v298
      %v559 = vunpack.c.l.b16 %v299
      %v560 = vunpack.c.l.b16 %v300
      %v561 = vunpack.c.l.b16 %v301
      %v562 = vunpack.c.l.b16 %v302
      %v563 = vunpack.c.l.b16 %v303
      %v564 = vunpack.c.l.b16 %v304
      %v565 = vunpack.c.l.b16 %v305
      %v566 = vunpack.c.l.b16 %v306
      %v567 = vunpack.c.l.b16 %v307
      %v568 = vunpack.c.l.b16 %v308
      %v569 = vunpack.c.l.b16 %v309
      %v570 = vunpack.c.l.b16 %v310
      %v571 = vunpack.c.l.b16 %v311
      %v572 = vunpack.c.l.b16 %v312
      %v573 = vpack.c.b16 %v446, %v445
      %v574 = vpack.c.b16 %v448, %v447
      %v575 = vpack.c.b16 %v450, %v449
      %v576 = vpack.c.b16 %v452, %v451
      %v577 = vpack.c.b16 %v454, %v453
      %v578 = vpack.c.b16 %v456, %v455
      %v579 = vpack.c.b16 %v458, %v457
      %v580 = vpack.c.b16 %v460, %v459
      %v581 = vpack.c.b16 %v462, %v461
      %v582 = vpack.c.b16 %v464, %v463
      %v583 = vpack.c.b16 %v466, %v465
      %v584 = vpack.c.b16 %v468, %v467
      %v585 = vpack.c.b16 %v470, %v469
      %v586 = vpack.c.b16 %v472, %v471
      %v587 = vpack.c.b16 %v474, %v473
      %v588 = vpack.c.b16 %v476, %v475
      %v589 = vpack.c.b16 %v478, %v477
      %v590 = vpack.c.b16 %v480, %v479
      %v591 = vpack.c.b16 %v482, %v481
      %v592 = vpack.c.b16 %v484, %v483
      %v593 = vpack.c.b16 %v486, %v485
      %v594 = vpack.c.b16 %v488, %v487
      %v595 = vpack.c.b16 %v490, %v489
      %v596 = vpack.c.b16 %v492, %v491
      %v597 = vpack.c.b16 %v494, %v493
      %v598 = vpack.c.b16 %v496, %v495
      %v599 = vpack.c.b16 %v498, %v497
      %v600 = vpack.c.b16 %v500, %v499
      %v601 = vpack.c.b16 %v502, %v501
      %v602 = vpack.c.b16 %v504, %v503
      %v603 = vpack.c.b16 %v506, %v505
      %v604 = vpack.c.b16 %v508, %v507
      %v605 = vpack.c.b16 %v510, %v509
      %v606 = vpack.c.b16 %v512, %v511
      %v607 = vpack.c.b16 %v514, %v513
      %v608 = vpack.c.b16 %v516, %v515
      %v609 = vpack.c.b16 %v518, %v517
      %v610 = vpack.c.b16 %v520, %v519
      %v611 = vpack.c.b16 %v522, %v521
      %v612 = vpack.c.b16 %v524, %v523
      %v613 = vpack.c.b16 %v526, %v525
      %v614 = vpack.c.b16 %v528, %v527
      %v615 = vpack.c.b16 %v530, %v529
      %v616 = vpack.c.b16 %v532, %v531
      %v617 = vpack.c.b16 %v534, %v533
      %v618 = vpack.c.b16 %v536, %v535
      %v619 = vpack.c.b16 %v538, %v537
      %v620 = vpack.c.b16 %v540, %v539
      %v621 = vpack.c.b16 %v542, %v541
      %v622 = vpack.c.b16 %v544, %v543
      %v623 = vpack.c.b16 %v546, %v545
      %v624 = vpack.c.b16 %v548, %v547
      %v625 = vpack.c.b16 %v550, %v549
      %v626 = vpack.c.b16 %v552, %v551
      %v627 = vpack.c.b16 %v554, %v553
      %v628 = vpack.c.b16 %v556, %v555
      %v629 = vpack.c.b16 %v558, %v557
      %v630 = vpack.c.b16 %v560, %v559
      %v631 = vpack.c.b16 %v562, %v561
      %v632 = vpack.c.b16 %v564, %v563
      %v633 = vpack.c.b16 %v566, %v565
      %v634 = vpack.c.b16 %v568, %v567
      %v635 = vpack.c.b16 %v570, %v569
      %v636 = vpack.c.b16 %v572, %v571
      %v641 = vunpack.c.l.b16 %v313
      %v642 = vunpack.c.l.b16 %v314
      %v643 = vunpack.c.l.b16 %v315
      %v644 = vunpack.c.l.b16 %v316
      %v645 = vpack.c.b16 %v642, %v641
      %v646 = vpack.c.b16 %v644, %v643
      %vm649 = vcmask 261120
      %v651 = vsel %vm649, %v573, 0
      %v654 = vsel %vm649, %v574, 0
      %v657 = vsel %vm649, %v575, 0
      %v660 = vsel %vm649, %v576, 0
      %v663 = vsel %vm649, %v577, 0
      %v666 = vsel %vm649, %v578, 0
      %v669 = vsel %vm649, %v579, 0
      %v672 = vsel %vm649, %v580, 0
      %v675 = vsel %vm649, %v581, 0
      %v678 = vsel %vm649, %v582, 0
      %v681 = vsel %vm649, %v583, 0
      %v684 = vsel %vm649, %v584, 0
      %v687 = vsel %vm649, %v585, 0
      %v690 = vsel %vm649, %v586, 0
      %v693 = vsel %vm649, %v587, 0
      %v696 = vsel %vm649, %v588, 0
      %v699 = vsel %vm649, %v589, 0
      %v702 = vsel %vm649, %v590, 0
      %v705 = vsel %vm649, %v591, 0
      %v708 = vsel %vm649, %v592, 0
      %v711 = vsel %vm649, %v593, 0
      %v714 = vsel %vm649, %v594, 0
      %v717 = vsel %vm649, %v595, 0
      %v720 = vsel %vm649, %v596, 0
      %v723 = vsel %vm649, %v597, 0
      %v726 = vsel %vm649, %v598, 0
      %v729 = vsel %vm649, %v599, 0
      %v732 = vsel %vm649, %v600, 0
      %v735 = vsel %vm649, %v601, 0
      %v738 = vsel %vm649, %v602, 0
      %v741 = vsel %vm649, %v603, 0
      %v744 = vsel %vm649, %v604, 0
      %v747 = vsel %vm649, %v605, 0
      %v750 = vsel %vm649, %v606, 0
      %v753 = vsel %vm649, %v607, 0
      %v756 = vsel %vm649, %v608, 0
      %v759 = vsel %vm649, %v609, 0
      %v762 = vsel %vm649, %v610, 0
      %v765 = vsel %vm649, %v611, 0
      %v768 = vsel %vm649, %v612, 0
      %v771 = vsel %vm649, %v613, 0
      %v774 = vsel %vm649, %v614, 0
      %v777 = vsel %vm649, %v615, 0
      %v780 = vsel %vm649, %v616, 0
      %v783 = vsel %vm649, %v617, 0
      %v786 = vsel %vm649, %v618, 0
      %v789 = vsel %vm649, %v619, 0
      %v792 = vsel %vm649, %v620, 0
      %v795 = vsel %vm649, %v621, 0
      %v798 = vsel %vm649, %v622, 0
      %v801 = vsel %vm649, %v623, 0
      %v804 = vsel %vm649, %v624, 0
      %v807 = vsel %vm649, %v625, 0
      %v810 = vsel %vm649, %v626, 0
      %v813 = vsel %vm649, %v627, 0
      %v816 = vsel %vm649, %v628, 0
      %v819 = vsel %vm649, %v629, 0
      %v822 = vsel %vm649, %v630, 0
      %v825 = vsel %vm649, %v631, 0
      %v828 = vsel %vm649, %v632, 0
      %v831 = vsel %vm649, %v633, 0
      %v834 = vsel %vm649, %v634, 0
      %v837 = vsel %vm649, %v635, 0
      %v840 = vsel %vm649, %v636, 0
      %842 = vmatprep.subr.bf16.mxu0 0
      %843 = vmatpush1.bf16.msra.mxu0 0
      %844 = vmatprep.subr.bf16.mxu0 0
      %845 = vmatpush1.bf16.msra.mxu0 0
      %846 = vmatprep.subr.bf16.mxu0 0
      %847 = vmatpush1.bf16.msra.mxu0 0
      %848 = vmatprep.subr.bf16.mxu0 0
      %849 = vmatpush1.bf16.msra.mxu0 0
      %850 = vmatprep.subr.bf16.mxu0 0
      %851 = vmatpush1.bf16.msra.mxu0 0
      %852 = vmatprep.subr.bf16.mxu0 0
      %853 = vmatpush1.bf16.msra.mxu0 0
      %854 = vmatprep.subr.bf16.mxu0 0
      %855 = vmatpush1.bf16.msra.mxu0 %v646
      %856 = vmatprep.subr.bf16.mxu0 0
      %857 = vmatpush1.bf16.msra.mxu0 %v645
      %858 = vmatprep.subr.bf16.mxu0 0
      %859 = vmatpush2.bf16.msra.mxu0 0
      %860 = vmatprep.subr.bf16.mxu0 0
      %861 = vmatpush2.bf16.msra.mxu0 0
      %862 = vmatprep.subr.bf16.mxu0 0
      %863 = vmatpush2.bf16.msra.mxu0 0
      %864 = vmatprep.subr.bf16.mxu0 0
      %865 = vmatpush2.bf16.msra.mxu0 0
      %866 = vmatprep.subr.bf16.mxu0 0
      %867 = vmatpush2.bf16.msra.mxu0 0
      %868 = vmatprep.subr.bf16.mxu0 0
      %869 = vmatpush2.bf16.msra.mxu0 0
      %870 = vmatprep.subr.bf16.mxu0 0
      %871 = vmatpush2.bf16.msra.mxu0 0
      %872 = vmatprep.subr.bf16.mxu0 0
      %873 = vmatpush2.bf16.msra.mxu0 0
      %874 = vmatprep.mubr.bf16.mxu0 0
      %875 = vmatmul.mubr.bf16.gmra.mxu0 %v651
      %v876 = vpop.f32.mrf.mxu0
      %v877 = vadd.f32 0.0, %v876
      %v878 = vpop.f32.mrf.mxu0
      %v879 = vpop.f32.mrf.mxu0
      %v880 = vadd.f32 0.0, %v879
      %v881 = vpop.f32.mrf.mxu0
      %882 = vmatprep.mubr.bf16.mxu0 0
      %883 = vmatmul.mubr.bf16.gmra.mxu0 %v654
      %v884 = vpop.f32.mrf.mxu0
      %v885 = vadd.f32 0.0, %v884
      %v886 = vpop.f32.mrf.mxu0
      %v887 = vpop.f32.mrf.mxu0
      %v888 = vadd.f32 0.0, %v887
      %v889 = vpop.f32.mrf.mxu0
      %890 = vmatprep.mubr.bf16.mxu0 0
      %891 = vmatmul.mubr.bf16.gmra.mxu0 %v657
      %v892 = vpop.f32.mrf.mxu0
      %v893 = vadd.f32 0.0, %v892
      %v894 = vpop.f32.mrf.mxu0
      %v895 = vpop.f32.mrf.mxu0
      %v896 = vadd.f32 0.0, %v895
      %v897 = vpop.f32.mrf.mxu0
      %898 = vmatprep.mubr.bf16.mxu0 0
      %899 = vmatmul.mubr.bf16.gmra.mxu0 %v660
      %v900 = vpop.f32.mrf.mxu0
      %v901 = vadd.f32 0.0, %v900
      %v902 = vpop.f32.mrf.mxu0
      %v903 = vpop.f32.mrf.mxu0
      %v904 = vadd.f32 0.0, %v903
      %v905 = vpop.f32.mrf.mxu0
      %906 = vmatprep.mubr.bf16.mxu0 0
      %907 = vmatmul.mubr.bf16.gmra.mxu0 %v663
      %v908 = vpop.f32.mrf.mxu0
      %v909 = vadd.f32 0.0, %v908
      %v910 = vpop.f32.mrf.mxu0
      %v911 = vpop.f32.mrf.mxu0
      %v912 = vadd.f32 0.0, %v911
      %v913 = vpop.f32.mrf.mxu0
      %914 = vmatprep.mubr.bf16.mxu0 0
      %915 = vmatmul.mubr.bf16.gmra.mxu0 %v666
      %v916 = vpop.f32.mrf.mxu0
      %v917 = vadd.f32 0.0, %v916
      %v918 = vpop.f32.mrf.mxu0
      %v919 = vpop.f32.mrf.mxu0
      %v920 = vadd.f32 0.0, %v919
      %v921 = vpop.f32.mrf.mxu0
      %922 = vmatprep.mubr.bf16.mxu0 0
      %923 = vmatmul.mubr.bf16.gmra.mxu0 %v669
      %v924 = vpop.f32.mrf.mxu0
      %v925 = vadd.f32 0.0, %v924
      %v926 = vpop.f32.mrf.mxu0
      %v927 = vpop.f32.mrf.mxu0
      %v928 = vadd.f32 0.0, %v927
      %v929 = vpop.f32.mrf.mxu0
      %930 = vmatprep.mubr.bf16.mxu0 0
      %931 = vmatmul.mubr.bf16.gmra.mxu0 %v672
      %v932 = vpop.f32.mrf.mxu0
      %v933 = vadd.f32 0.0, %v932
      %v934 = vpop.f32.mrf.mxu0
      %v935 = vpop.f32.mrf.mxu0
      %v936 = vadd.f32 0.0, %v935
      %v937 = vpop.f32.mrf.mxu0
      %938 = vmatprep.mubr.bf16.mxu0 0
      %939 = vmatmul.mubr.bf16.gmra.mxu0 %v675
      %v940 = vpop.f32.mrf.mxu0
      %v941 = vadd.f32 0.0, %v940
      %v942 = vpop.f32.mrf.mxu0
      %v943 = vpop.f32.mrf.mxu0
      %v944 = vadd.f32 0.0, %v943
      %v945 = vpop.f32.mrf.mxu0
      %946 = vmatprep.mubr.bf16.mxu0 0
      %947 = vmatmul.mubr.bf16.gmra.mxu0 %v678
      %v948 = vpop.f32.mrf.mxu0
      %v949 = vadd.f32 0.0, %v948
      %v950 = vpop.f32.mrf.mxu0
      %v951 = vpop.f32.mrf.mxu0
      %v952 = vadd.f32 0.0, %v951
      %v953 = vpop.f32.mrf.mxu0
      %954 = vmatprep.mubr.bf16.mxu0 0
      %955 = vmatmul.mubr.bf16.gmra.mxu0 %v681
      %v956 = vpop.f32.mrf.mxu0
      %v957 = vadd.f32 0.0, %v956
      %v958 = vpop.f32.mrf.mxu0
      %v959 = vpop.f32.mrf.mxu0
      %v960 = vadd.f32 0.0, %v959
      %v961 = vpop.f32.mrf.mxu0
      %962 = vmatprep.mubr.bf16.mxu0 0
      %963 = vmatmul.mubr.bf16.gmra.mxu0 %v684
      %v964 = vpop.f32.mrf.mxu0
      %v965 = vadd.f32 0.0, %v964
      %v966 = vpop.f32.mrf.mxu0
      %v967 = vpop.f32.mrf.mxu0
      %v968 = vadd.f32 0.0, %v967
      %v969 = vpop.f32.mrf.mxu0
      %970 = vmatprep.mubr.bf16.mxu0 0
      %971 = vmatmul.mubr.bf16.gmra.mxu0 %v687
      %v972 = vpop.f32.mrf.mxu0
      %v973 = vadd.f32 0.0, %v972
      %v974 = vpop.f32.mrf.mxu0
      %v975 = vpop.f32.mrf.mxu0
      %v976 = vadd.f32 0.0, %v975
      %v977 = vpop.f32.mrf.mxu0
      %978 = vmatprep.mubr.bf16.mxu0 0
      %979 = vmatmul.mubr.bf16.gmra.mxu0 %v690
      %v980 = vpop.f32.mrf.mxu0
      %v981 = vadd.f32 0.0, %v980
      %v982 = vpop.f32.mrf.mxu0
      %v983 = vpop.f32.mrf.mxu0
      %v984 = vadd.f32 0.0, %v983
      %v985 = vpop.f32.mrf.mxu0
      %986 = vmatprep.mubr.bf16.mxu0 0
      %987 = vmatmul.mubr.bf16.gmra.mxu0 %v693
      %v988 = vpop.f32.mrf.mxu0
      %v989 = vadd.f32 0.0, %v988
      %v990 = vpop.f32.mrf.mxu0
      %v991 = vpop.f32.mrf.mxu0
      %v992 = vadd.f32 0.0, %v991
      %v993 = vpop.f32.mrf.mxu0
      %994 = vmatprep.mubr.bf16.mxu0 0
      %995 = vmatmul.mubr.bf16.gmra.mxu0 %v696
      %v996 = vpop.f32.mrf.mxu0
      %v997 = vadd.f32 0.0, %v996
      %v998 = vpop.f32.mrf.mxu0
      %v999 = vpop.f32.mrf.mxu0
      %v1000 = vadd.f32 0.0, %v999
      %v1001 = vpop.f32.mrf.mxu0
      %1002 = vmatprep.mubr.bf16.mxu0 0
      %1003 = vmatmul.mubr.bf16.gmra.mxu0 %v699
      %v1004 = vpop.f32.mrf.mxu0
      %v1005 = vadd.f32 0.0, %v1004
      %v1006 = vpop.f32.mrf.mxu0
      %v1007 = vpop.f32.mrf.mxu0
      %v1008 = vadd.f32 0.0, %v1007
      %v1009 = vpop.f32.mrf.mxu0
      %1010 = vmatprep.mubr.bf16.mxu0 0
      %1011 = vmatmul.mubr.bf16.gmra.mxu0 %v702
      %v1012 = vpop.f32.mrf.mxu0
      %v1013 = vadd.f32 0.0, %v1012
      %v1014 = vpop.f32.mrf.mxu0
      %v1015 = vpop.f32.mrf.mxu0
      %v1016 = vadd.f32 0.0, %v1015
      %v1017 = vpop.f32.mrf.mxu0
      %1018 = vmatprep.mubr.bf16.mxu0 0
      %1019 = vmatmul.mubr.bf16.gmra.mxu0 %v705
      %v1020 = vpop.f32.mrf.mxu0
      %v1021 = vadd.f32 0.0, %v1020
      %v1022 = vpop.f32.mrf.mxu0
      %v1023 = vpop.f32.mrf.mxu0
      %v1024 = vadd.f32 0.0, %v1023
      %v1025 = vpop.f32.mrf.mxu0
      %1026 = vmatprep.mubr.bf16.mxu0 0
      %1027 = vmatmul.mubr.bf16.gmra.mxu0 %v708
      %v1028 = vpop.f32.mrf.mxu0
      %v1029 = vadd.f32 0.0, %v1028
      %v1030 = vpop.f32.mrf.mxu0
      %v1031 = vpop.f32.mrf.mxu0
      %v1032 = vadd.f32 0.0, %v1031
      %v1033 = vpop.f32.mrf.mxu0
      %1034 = vmatprep.mubr.bf16.mxu0 0
      %1035 = vmatmul.mubr.bf16.gmra.mxu0 %v711
      %v1036 = vpop.f32.mrf.mxu0
      %v1037 = vadd.f32 0.0, %v1036
      %v1038 = vpop.f32.mrf.mxu0
      %v1039 = vpop.f32.mrf.mxu0
      %v1040 = vadd.f32 0.0, %v1039
      %v1041 = vpop.f32.mrf.mxu0
      %1042 = vmatprep.mubr.bf16.mxu0 0
      %1043 = vmatmul.mubr.bf16.gmra.mxu0 %v714
      %v1044 = vpop.f32.mrf.mxu0
      %v1045 = vadd.f32 0.0, %v1044
      %v1046 = vpop.f32.mrf.mxu0
      %v1047 = vpop.f32.mrf.mxu0
      %v1048 = vadd.f32 0.0, %v1047
      %v1049 = vpop.f32.mrf.mxu0
      %1050 = vmatprep.mubr.bf16.mxu0 0
      %1051 = vmatmul.mubr.bf16.gmra.mxu0 %v717
      %v1052 = vpop.f32.mrf.mxu0
      %v1053 = vadd.f32 0.0, %v1052
      %v1054 = vpop.f32.mrf.mxu0
      %v1055 = vpop.f32.mrf.mxu0
      %v1056 = vadd.f32 0.0, %v1055
      %v1057 = vpop.f32.mrf.mxu0
      %1058 = vmatprep.mubr.bf16.mxu0 0
      %1059 = vmatmul.mubr.bf16.gmra.mxu0 %v720
      %v1060 = vpop.f32.mrf.mxu0
      %v1061 = vadd.f32 0.0, %v1060
      %v1062 = vpop.f32.mrf.mxu0
      %v1063 = vpop.f32.mrf.mxu0
      %v1064 = vadd.f32 0.0, %v1063
      %v1065 = vpop.f32.mrf.mxu0
      %1066 = vmatprep.mubr.bf16.mxu0 0
      %1067 = vmatmul.mubr.bf16.gmra.mxu0 %v723
      %v1068 = vpop.f32.mrf.mxu0
      %v1069 = vadd.f32 0.0, %v1068
      %v1070 = vpop.f32.mrf.mxu0
      %v1071 = vpop.f32.mrf.mxu0
      %v1072 = vadd.f32 0.0, %v1071
      %v1073 = vpop.f32.mrf.mxu0
      %1074 = vmatprep.mubr.bf16.mxu0 0
      %1075 = vmatmul.mubr.bf16.gmra.mxu0 %v726
      %v1076 = vpop.f32.mrf.mxu0
      %v1077 = vadd.f32 0.0, %v1076
      %v1078 = vpop.f32.mrf.mxu0
      %v1079 = vpop.f32.mrf.mxu0
      %v1080 = vadd.f32 0.0, %v1079
      %v1081 = vpop.f32.mrf.mxu0
      %1082 = vmatprep.mubr.bf16.mxu0 0
      %1083 = vmatmul.mubr.bf16.gmra.mxu0 %v729
      %v1084 = vpop.f32.mrf.mxu0
      %v1085 = vadd.f32 0.0, %v1084
      %v1086 = vpop.f32.mrf.mxu0
      %v1087 = vpop.f32.mrf.mxu0
      %v1088 = vadd.f32 0.0, %v1087
      %v1089 = vpop.f32.mrf.mxu0
      %1090 = vmatprep.mubr.bf16.mxu0 0
      %1091 = vmatmul.mubr.bf16.gmra.mxu0 %v732
      %v1092 = vpop.f32.mrf.mxu0
      %v1093 = vadd.f32 0.0, %v1092
      %v1094 = vpop.f32.mrf.mxu0
      %v1095 = vpop.f32.mrf.mxu0
      %v1096 = vadd.f32 0.0, %v1095
      %v1097 = vpop.f32.mrf.mxu0
      %1098 = vmatprep.mubr.bf16.mxu0 0
      %1099 = vmatmul.mubr.bf16.gmra.mxu0 %v735
      %v1100 = vpop.f32.mrf.mxu0
      %v1101 = vadd.f32 0.0, %v1100
      %v1102 = vpop.f32.mrf.mxu0
      %v1103 = vpop.f32.mrf.mxu0
      %v1104 = vadd.f32 0.0, %v1103
      %v1105 = vpop.f32.mrf.mxu0
      %1106 = vmatprep.mubr.bf16.mxu0 0
      %1107 = vmatmul.mubr.bf16.gmra.mxu0 %v738
      %v1108 = vpop.f32.mrf.mxu0
      %v1109 = vadd.f32 0.0, %v1108
      %v1110 = vpop.f32.mrf.mxu0
      %v1111 = vpop.f32.mrf.mxu0
      %v1112 = vadd.f32 0.0, %v1111
      %v1113 = vpop.f32.mrf.mxu0
      %1114 = vmatprep.mubr.bf16.mxu0 0
      %1115 = vmatmul.mubr.bf16.gmra.mxu0 %v741
      %v1116 = vpop.f32.mrf.mxu0
      %v1117 = vadd.f32 0.0, %v1116
      %v1118 = vpop.f32.mrf.mxu0
      %v1119 = vpop.f32.mrf.mxu0
      %v1120 = vadd.f32 0.0, %v1119
      %v1121 = vpop.f32.mrf.mxu0
      %1122 = vmatprep.mubr.bf16.mxu0 0
      %1123 = vmatmul.mubr.bf16.gmra.mxu0 %v744
      %v1124 = vpop.f32.mrf.mxu0
      %v1125 = vadd.f32 0.0, %v1124
      %v1126 = vpop.f32.mrf.mxu0
      %v1127 = vpop.f32.mrf.mxu0
      %v1128 = vadd.f32 0.0, %v1127
      %v1129 = vpop.f32.mrf.mxu0
      %1130 = vmatprep.mubr.bf16.mxu0 0
      %1131 = vmatmul.mubr.bf16.gmra.mxu0 %v747
      %v1132 = vpop.f32.mrf.mxu0
      %v1133 = vadd.f32 0.0, %v1132
      %v1134 = vpop.f32.mrf.mxu0
      %v1135 = vpop.f32.mrf.mxu0
      %v1136 = vadd.f32 0.0, %v1135
      %v1137 = vpop.f32.mrf.mxu0
      %1138 = vmatprep.mubr.bf16.mxu0 0
      %1139 = vmatmul.mubr.bf16.gmra.mxu0 %v750
      %v1140 = vpop.f32.mrf.mxu0
      %v1141 = vadd.f32 0.0, %v1140
      %v1142 = vpop.f32.mrf.mxu0
      %v1143 = vpop.f32.mrf.mxu0
      %v1144 = vadd.f32 0.0, %v1143
      %v1145 = vpop.f32.mrf.mxu0
      %1146 = vmatprep.mubr.bf16.mxu0 0
      %1147 = vmatmul.mubr.bf16.gmra.mxu0 %v753
      %v1148 = vpop.f32.mrf.mxu0
      %v1149 = vadd.f32 0.0, %v1148
      %v1150 = vpop.f32.mrf.mxu0
      %v1151 = vpop.f32.mrf.mxu0
      %v1152 = vadd.f32 0.0, %v1151
      %v1153 = vpop.f32.mrf.mxu0
      %1154 = vmatprep.mubr.bf16.mxu0 0
      %1155 = vmatmul.mubr.bf16.gmra.mxu0 %v756
      %v1156 = vpop.f32.mrf.mxu0
      %v1157 = vadd.f32 0.0, %v1156
      %v1158 = vpop.f32.mrf.mxu0
      %v1159 = vpop.f32.mrf.mxu0
      %v1160 = vadd.f32 0.0, %v1159
      %v1161 = vpop.f32.mrf.mxu0
      %1162 = vmatprep.mubr.bf16.mxu0 0
      %1163 = vmatmul.mubr.bf16.gmra.mxu0 %v759
      %v1164 = vpop.f32.mrf.mxu0
      %v1165 = vadd.f32 0.0, %v1164
      %v1166 = vpop.f32.mrf.mxu0
      %v1167 = vpop.f32.mrf.mxu0
      %v1168 = vadd.f32 0.0, %v1167
      %v1169 = vpop.f32.mrf.mxu0
      %1170 = vmatprep.mubr.bf16.mxu0 0
      %1171 = vmatmul.mubr.bf16.gmra.mxu0 %v762
      %v1172 = vpop.f32.mrf.mxu0
      %v1173 = vadd.f32 0.0, %v1172
      %v1174 = vpop.f32.mrf.mxu0
      %v1175 = vpop.f32.mrf.mxu0
      %v1176 = vadd.f32 0.0, %v1175
      %v1177 = vpop.f32.mrf.mxu0
      %1178 = vmatprep.mubr.bf16.mxu0 0
      %1179 = vmatmul.mubr.bf16.gmra.mxu0 %v765
      %v1180 = vpop.f32.mrf.mxu0
      %v1181 = vadd.f32 0.0, %v1180
      %v1182 = vpop.f32.mrf.mxu0
      %v1183 = vpop.f32.mrf.mxu0
      %v1184 = vadd.f32 0.0, %v1183
      %v1185 = vpop.f32.mrf.mxu0
      %1186 = vmatprep.mubr.bf16.mxu0 0
      %1187 = vmatmul.mubr.bf16.gmra.mxu0 %v768
      %v1188 = vpop.f32.mrf.mxu0
      %v1189 = vadd.f32 0.0, %v1188
      %v1190 = vpop.f32.mrf.mxu0
      %v1191 = vpop.f32.mrf.mxu0
      %v1192 = vadd.f32 0.0, %v1191
      %v1193 = vpop.f32.mrf.mxu0
      %1194 = vmatprep.mubr.bf16.mxu0 0
      %1195 = vmatmul.mubr.bf16.gmra.mxu0 %v771
      %v1196 = vpop.f32.mrf.mxu0
      %v1197 = vadd.f32 0.0, %v1196
      %v1198 = vpop.f32.mrf.mxu0
      %v1199 = vpop.f32.mrf.mxu0
      %v1200 = vadd.f32 0.0, %v1199
      %v1201 = vpop.f32.mrf.mxu0
      %1202 = vmatprep.mubr.bf16.mxu0 0
      %1203 = vmatmul.mubr.bf16.gmra.mxu0 %v774
      %v1204 = vpop.f32.mrf.mxu0
      %v1205 = vadd.f32 0.0, %v1204
      %v1206 = vpop.f32.mrf.mxu0
      %v1207 = vpop.f32.mrf.mxu0
      %v1208 = vadd.f32 0.0, %v1207
      %v1209 = vpop.f32.mrf.mxu0
      %1210 = vmatprep.mubr.bf16.mxu0 0
      %1211 = vmatmul.mubr.bf16.gmra.mxu0 %v777
      %v1212 = vpop.f32.mrf.mxu0
      %v1213 = vadd.f32 0.0, %v1212
      %v1214 = vpop.f32.mrf.mxu0
      %v1215 = vpop.f32.mrf.mxu0
      %v1216 = vadd.f32 0.0, %v1215
      %v1217 = vpop.f32.mrf.mxu0
      %1218 = vmatprep.mubr.bf16.mxu0 0
      %1219 = vmatmul.mubr.bf16.gmra.mxu0 %v780
      %v1220 = vpop.f32.mrf.mxu0
      %v1221 = vadd.f32 0.0, %v1220
      %v1222 = vpop.f32.mrf.mxu0
      %v1223 = vpop.f32.mrf.mxu0
      %v1224 = vadd.f32 0.0, %v1223
      %v1225 = vpop.f32.mrf.mxu0
      %1226 = vmatprep.mubr.bf16.mxu0 0
      %1227 = vmatmul.mubr.bf16.gmra.mxu0 %v783
      %v1228 = vpop.f32.mrf.mxu0
      %v1229 = vadd.f32 0.0, %v1228
      %v1230 = vpop.f32.mrf.mxu0
      %v1231 = vpop.f32.mrf.mxu0
      %v1232 = vadd.f32 0.0, %v1231
      %v1233 = vpop.f32.mrf.mxu0
      %1234 = vmatprep.mubr.bf16.mxu0 0
      %1235 = vmatmul.mubr.bf16.gmra.mxu0 %v786
      %v1236 = vpop.f32.mrf.mxu0
      %v1237 = vadd.f32 0.0, %v1236
      %v1238 = vpop.f32.mrf.mxu0
      %v1239 = vpop.f32.mrf.mxu0
      %v1240 = vadd.f32 0.0, %v1239
      %v1241 = vpop.f32.mrf.mxu0
      %1242 = vmatprep.mubr.bf16.mxu0 0
      %1243 = vmatmul.mubr.bf16.gmra.mxu0 %v789
      %v1244 = vpop.f32.mrf.mxu0
      %v1245 = vadd.f32 0.0, %v1244
      %v1246 = vpop.f32.mrf.mxu0
      %v1247 = vpop.f32.mrf.mxu0
      %v1248 = vadd.f32 0.0, %v1247
      %v1249 = vpop.f32.mrf.mxu0
      %1250 = vmatprep.mubr.bf16.mxu0 0
      %1251 = vmatmul.mubr.bf16.gmra.mxu0 %v792
      %v1252 = vpop.f32.mrf.mxu0
      %v1253 = vadd.f32 0.0, %v1252
      %v1254 = vpop.f32.mrf.mxu0
      %v1255 = vpop.f32.mrf.mxu0
      %v1256 = vadd.f32 0.0, %v1255
      %v1257 = vpop.f32.mrf.mxu0
      %1258 = vmatprep.mubr.bf16.mxu0 0
      %1259 = vmatmul.mubr.bf16.gmra.mxu0 %v795
      %v1260 = vpop.f32.mrf.mxu0
      %v1261 = vadd.f32 0.0, %v1260
      %v1262 = vpop.f32.mrf.mxu0
      %v1263 = vpop.f32.mrf.mxu0
      %v1264 = vadd.f32 0.0, %v1263
      %v1265 = vpop.f32.mrf.mxu0
      %1266 = vmatprep.mubr.bf16.mxu0 0
      %1267 = vmatmul.mubr.bf16.gmra.mxu0 %v798
      %v1268 = vpop.f32.mrf.mxu0
      %v1269 = vadd.f32 0.0, %v1268
      %v1270 = vpop.f32.mrf.mxu0
      %v1271 = vpop.f32.mrf.mxu0
      %v1272 = vadd.f32 0.0, %v1271
      %v1273 = vpop.f32.mrf.mxu0
      %1274 = vmatprep.mubr.bf16.mxu0 0
      %1275 = vmatmul.mubr.bf16.gmra.mxu0 %v801
      %v1276 = vpop.f32.mrf.mxu0
      %v1277 = vadd.f32 0.0, %v1276
      %v1278 = vpop.f32.mrf.mxu0
      %v1279 = vpop.f32.mrf.mxu0
      %v1280 = vadd.f32 0.0, %v1279
      %v1281 = vpop.f32.mrf.mxu0
      %1282 = vmatprep.mubr.bf16.mxu0 0
      %1283 = vmatmul.mubr.bf16.gmra.mxu0 %v804
      %v1284 = vpop.f32.mrf.mxu0
      %v1285 = vadd.f32 0.0, %v1284
      %v1286 = vpop.f32.mrf.mxu0
      %v1287 = vpop.f32.mrf.mxu0
      %v1288 = vadd.f32 0.0, %v1287
      %v1289 = vpop.f32.mrf.mxu0
      %1290 = vmatprep.mubr.bf16.mxu0 0
      %1291 = vmatmul.mubr.bf16.gmra.mxu0 %v807
      %v1292 = vpop.f32.mrf.mxu0
      %v1293 = vadd.f32 0.0, %v1292
      %v1294 = vpop.f32.mrf.mxu0
      %v1295 = vpop.f32.mrf.mxu0
      %v1296 = vadd.f32 0.0, %v1295
      %v1297 = vpop.f32.mrf.mxu0
      %1298 = vmatprep.mubr.bf16.mxu0 0
      %1299 = vmatmul.mubr.bf16.gmra.mxu0 %v810
      %v1300 = vpop.f32.mrf.mxu0
      %v1301 = vadd.f32 0.0, %v1300
      %v1302 = vpop.f32.mrf.mxu0
      %v1303 = vpop.f32.mrf.mxu0
      %v1304 = vadd.f32 0.0, %v1303
      %v1305 = vpop.f32.mrf.mxu0
      %1306 = vmatprep.mubr.bf16.mxu0 0
      %1307 = vmatmul.mubr.bf16.gmra.mxu0 %v813
      %v1308 = vpop.f32.mrf.mxu0
      %v1309 = vadd.f32 0.0, %v1308
      %v1310 = vpop.f32.mrf.mxu0
      %v1311 = vpop.f32.mrf.mxu0
      %v1312 = vadd.f32 0.0, %v1311
      %v1313 = vpop.f32.mrf.mxu0
      %1314 = vmatprep.mubr.bf16.mxu0 0
      %1315 = vmatmul.mubr.bf16.gmra.mxu0 %v816
      %v1316 = vpop.f32.mrf.mxu0
      %v1317 = vadd.f32 0.0, %v1316
      %v1318 = vpop.f32.mrf.mxu0
      %v1319 = vpop.f32.mrf.mxu0
      %v1320 = vadd.f32 0.0, %v1319
      %v1321 = vpop.f32.mrf.mxu0
      %1322 = vmatprep.mubr.bf16.mxu0 0
      %1323 = vmatmul.mubr.bf16.gmra.mxu0 %v819
      %v1324 = vpop.f32.mrf.mxu0
      %v1325 = vadd.f32 0.0, %v1324
      %v1326 = vpop.f32.mrf.mxu0
      %v1327 = vpop.f32.mrf.mxu0
      %v1328 = vadd.f32 0.0, %v1327
      %v1329 = vpop.f32.mrf.mxu0
      %1330 = vmatprep.mubr.bf16.mxu0 0
      %1331 = vmatmul.mubr.bf16.gmra.mxu0 %v822
      %v1332 = vpop.f32.mrf.mxu0
      %v1333 = vadd.f32 0.0, %v1332
      %v1334 = vpop.f32.mrf.mxu0
      %v1335 = vpop.f32.mrf.mxu0
      %v1336 = vadd.f32 0.0, %v1335
      %v1337 = vpop.f32.mrf.mxu0
      %1338 = vmatprep.mubr.bf16.mxu0 0
      %1339 = vmatmul.mubr.bf16.gmra.mxu0 %v825
      %v1340 = vpop.f32.mrf.mxu0
      %v1341 = vadd.f32 0.0, %v1340
      %v1342 = vpop.f32.mrf.mxu0
      %v1343 = vpop.f32.mrf.mxu0
      %v1344 = vadd.f32 0.0, %v1343
      %v1345 = vpop.f32.mrf.mxu0
      %1346 = vmatprep.mubr.bf16.mxu0 0
      %1347 = vmatmul.mubr.bf16.gmra.mxu0 %v828
      %v1348 = vpop.f32.mrf.mxu0
      %v1349 = vadd.f32 0.0, %v1348
      %v1350 = vpop.f32.mrf.mxu0
      %v1351 = vpop.f32.mrf.mxu0
      %v1352 = vadd.f32 0.0, %v1351
      %v1353 = vpop.f32.mrf.mxu0
      %1354 = vmatprep.mubr.bf16.mxu0 0
      %1355 = vmatmul.mubr.bf16.gmra.mxu0 %v831
      %v1356 = vpop.f32.mrf.mxu0
      %v1357 = vadd.f32 0.0, %v1356
      %v1358 = vpop.f32.mrf.mxu0
      %v1359 = vpop.f32.mrf.mxu0
      %v1360 = vadd.f32 0.0, %v1359
      %v1361 = vpop.f32.mrf.mxu0
      %1362 = vmatprep.mubr.bf16.mxu0 0
      %1363 = vmatmul.mubr.bf16.gmra.mxu0 %v834
      %v1364 = vpop.f32.mrf.mxu0
      %v1365 = vadd.f32 0.0, %v1364
      %v1366 = vpop.f32.mrf.mxu0
      %v1367 = vpop.f32.mrf.mxu0
      %v1368 = vadd.f32 0.0, %v1367
      %v1369 = vpop.f32.mrf.mxu0
      %1370 = vmatprep.mubr.bf16.mxu0 0
      %1371 = vmatmul.mubr.bf16.gmra.mxu0 %v837
      %v1372 = vpop.f32.mrf.mxu0
      %v1373 = vadd.f32 0.0, %v1372
      %v1374 = vpop.f32.mrf.mxu0
      %v1375 = vpop.f32.mrf.mxu0
      %v1376 = vadd.f32 0.0, %v1375
      %v1377 = vpop.f32.mrf.mxu0
      %1378 = vmatprep.mubr.bf16.mxu0 0
      %1379 = vmatmul.mubr.bf16.gmra.mxu0 %v840
      %v1380 = vpop.f32.mrf.mxu0
      %v1381 = vadd.f32 0.0, %v1380
      %v1382 = vpop.f32.mrf.mxu0
      %v1383 = vpop.f32.mrf.mxu0
      %v1384 = vadd.f32 0.0, %v1383
      %v1385 = vpop.f32.mrf.mxu0
      %1386 = vdwg.mxu0
      %1387 = vst [vmem:[%s182] sm:$0xff] %v877
      %1388 = vst [vmem:[%s182 + $0x8] sm:$0xff] %v880
      %1389 = vst [vmem:[%s182 + $0x10] sm:$0xff] %v885
      %1390 = vst [vmem:[%s182 + $0x18] sm:$0xff] %v888
      %1391 = vst [vmem:[%s182 + $0x20] sm:$0xff] %v893
      %1392 = vst [vmem:[%s182 + $0x28] sm:$0xff] %v896
      %1393 = vst [vmem:[%s182 + $0x30] sm:$0xff] %v901
      %1394 = vst [vmem:[%s182 + $0x38] sm:$0xff] %v904
      %1395 = vst [vmem:[%s182 + $0x40] sm:$0xff] %v909
      %1396 = vst [vmem:[%s182 + $0x48] sm:$0xff] %v912
      %1397 = vst [vmem:[%s182 + $0x50] sm:$0xff] %v917
      %1398 = vst [vmem:[%s182 + $0x58] sm:$0xff] %v920
      %1399 = vst [vmem:[%s182 + $0x60] sm:$0xff] %v925
      %1400 = vst [vmem:[%s182 + $0x68] sm:$0xff] %v928
      %1401 = vst [vmem:[%s182 + $0x70] sm:$0xff] %v933
      %1402 = vst [vmem:[%s182 + $0x78] sm:$0xff] %v936
      %1403 = vst [vmem:[%s182 + $0x80] sm:$0xff] %v941
      %1404 = vst [vmem:[%s182 + $0x88] sm:$0xff] %v944
      %1405 = vst [vmem:[%s182 + $0x90] sm:$0xff] %v949
      %1406 = vst [vmem:[%s182 + $0x98] sm:$0xff] %v952
      %1407 = vst [vmem:[%s182 + $0xa0] sm:$0xff] %v957
      %1408 = vst [vmem:[%s182 + $0xa8] sm:$0xff] %v960
      %1409 = vst [vmem:[%s182 + $0xb0] sm:$0xff] %v965
      %1410 = vst [vmem:[%s182 + $0xb8] sm:$0xff] %v968
      %1411 = vst [vmem:[%s182 + $0xc0] sm:$0xff] %v973
      %1412 = vst [vmem:[%s182 + $0xc8] sm:$0xff] %v976
      %1413 = vst [vmem:[%s182 + $0xd0] sm:$0xff] %v981
      %1414 = vst [vmem:[%s182 + $0xd8] sm:$0xff] %v984
      %1415 = vst [vmem:[%s182 + $0xe0] sm:$0xff] %v989
      %1416 = vst [vmem:[%s182 + $0xe8] sm:$0xff] %v992
      %1417 = vst [vmem:[%s182 + $0xf0] sm:$0xff] %v997
      %1418 = vst [vmem:[%s182 + $0xf8] sm:$0xff] %v1000
      %1419 = vst [vmem:[%s182 + $0x100] sm:$0xff] %v1005
      %1420 = vst [vmem:[%s182 + $0x108] sm:$0xff] %v1008
      %1421 = vst [vmem:[%s182 + $0x110] sm:$0xff] %v1013
      %1422 = vst [vmem:[%s182 + $0x118] sm:$0xff] %v1016
      %1423 = vst [vmem:[%s182 + $0x120] sm:$0xff] %v1021
      %1424 = vst [vmem:[%s182 + $0x128] sm:$0xff] %v1024
      %1425 = vst [vmem:[%s182 + $0x130] sm:$0xff] %v1029
      %1426 = vst [vmem:[%s182 + $0x138] sm:$0xff] %v1032
      %1427 = vst [vmem:[%s182 + $0x140] sm:$0xff] %v1037
      %1428 = vst [vmem:[%s182 + $0x148] sm:$0xff] %v1040
      %1429 = vst [vmem:[%s182 + $0x150] sm:$0xff] %v1045
      %1430 = vst [vmem:[%s182 + $0x158] sm:$0xff] %v1048
      %1431 = vst [vmem:[%s182 + $0x160] sm:$0xff] %v1053
      %1432 = vst [vmem:[%s182 + $0x168] sm:$0xff] %v1056
      %1433 = vst [vmem:[%s182 + $0x170] sm:$0xff] %v1061
      %1434 = vst [vmem:[%s182 + $0x178] sm:$0xff] %v1064
      %1435 = vst [vmem:[%s182 + $0x180] sm:$0xff] %v1069
      %1436 = vst [vmem:[%s182 + $0x188] sm:$0xff] %v1072
      %1437 = vst [vmem:[%s182 + $0x190] sm:$0xff] %v1077
      %1438 = vst [vmem:[%s182 + $0x198] sm:$0xff] %v1080
      %1439 = vst [vmem:[%s182 + $0x1a0] sm:$0xff] %v1085
      %1440 = vst [vmem:[%s182 + $0x1a8] sm:$0xff] %v1088
      %1441 = vst [vmem:[%s182 + $0x1b0] sm:$0xff] %v1093
      %1442 = vst [vmem:[%s182 + $0x1b8] sm:$0xff] %v1096
      %1443 = vst [vmem:[%s182 + $0x1c0] sm:$0xff] %v1101
      %1444 = vst [vmem:[%s182 + $0x1c8] sm:$0xff] %v1104
      %1445 = vst [vmem:[%s182 + $0x1d0] sm:$0xff] %v1109
      %1446 = vst [vmem:[%s182 + $0x1d8] sm:$0xff] %v1112
      %1447 = vst [vmem:[%s182 + $0x1e0] sm:$0xff] %v1117
      %1448 = vst [vmem:[%s182 + $0x1e8] sm:$0xff] %v1120
      %1449 = vst [vmem:[%s182 + $0x1f0] sm:$0xff] %v1125
      %1450 = vst [vmem:[%s182 + $0x1f8] sm:$0xff] %v1128
      %1451 = vst [vmem:[%s182 + $0x200] sm:$0xff] %v1133
      %1452 = vst [vmem:[%s182 + $0x208] sm:$0xff] %v1136
      %1453 = vst [vmem:[%s182 + $0x210] sm:$0xff] %v1141
      %1454 = vst [vmem:[%s182 + $0x218] sm:$0xff] %v1144
      %1455 = vst [vmem:[%s182 + $0x220] sm:$0xff] %v1149
      %1456 = vst [vmem:[%s182 + $0x228] sm:$0xff] %v1152
      %1457 = vst [vmem:[%s182 + $0x230] sm:$0xff] %v1157
      %1458 = vst [vmem:[%s182 + $0x238] sm:$0xff] %v1160
      %1459 = vst [vmem:[%s182 + $0x240] sm:$0xff] %v1165
      %1460 = vst [vmem:[%s182 + $0x248] sm:$0xff] %v1168
      %1461 = vst [vmem:[%s182 + $0x250] sm:$0xff] %v1173
      %1462 = vst [vmem:[%s182 + $0x258] sm:$0xff] %v1176
      %1463 = vst [vmem:[%s182 + $0x260] sm:$0xff] %v1181
      %1464 = vst [vmem:[%s182 + $0x268] sm:$0xff] %v1184
      %1465 = vst [vmem:[%s182 + $0x270] sm:$0xff] %v1189
      %1466 = vst [vmem:[%s182 + $0x278] sm:$0xff] %v1192
      %1467 = vst [vmem:[%s182 + $0x280] sm:$0xff] %v1197
      %1468 = vst [vmem:[%s182 + $0x288] sm:$0xff] %v1200
      %1469 = vst [vmem:[%s182 + $0x290] sm:$0xff] %v1205
      %1470 = vst [vmem:[%s182 + $0x298] sm:$0xff] %v1208
      %1471 = vst [vmem:[%s182 + $0x2a0] sm:$0xff] %v1213
      %1472 = vst [vmem:[%s182 + $0x2a8] sm:$0xff] %v1216
      %1473 = vst [vmem:[%s182 + $0x2b0] sm:$0xff] %v1221
      %1474 = vst [vmem:[%s182 + $0x2b8] sm:$0xff] %v1224
      %1475 = vst [vmem:[%s182 + $0x2c0] sm:$0xff] %v1229
      %1476 = vst [vmem:[%s182 + $0x2c8] sm:$0xff] %v1232
      %1477 = vst [vmem:[%s182 + $0x2d0] sm:$0xff] %v1237
      %1478 = vst [vmem:[%s182 + $0x2d8] sm:$0xff] %v1240
      %1479 = vst [vmem:[%s182 + $0x2e0] sm:$0xff] %v1245
      %1480 = vst [vmem:[%s182 + $0x2e8] sm:$0xff] %v1248
      %1481 = vst [vmem:[%s182 + $0x2f0] sm:$0xff] %v1253
      %1482 = vst [vmem:[%s182 + $0x2f8] sm:$0xff] %v1256
      %1483 = vst [vmem:[%s182 + $0x300] sm:$0xff] %v1261
      %1484 = vst [vmem:[%s182 + $0x308] sm:$0xff] %v1264
      %1485 = vst [vmem:[%s182 + $0x310] sm:$0xff] %v1269
      %1486 = vst [vmem:[%s182 + $0x318] sm:$0xff] %v1272
      %1487 = vst [vmem:[%s182 + $0x320] sm:$0xff] %v1277
      %1488 = vst [vmem:[%s182 + $0x328] sm:$0xff] %v1280
      %1489 = vst [vmem:[%s182 + $0x330] sm:$0xff] %v1285
      %1490 = vst [vmem:[%s182 + $0x338] sm:$0xff] %v1288
      %1491 = vst [vmem:[%s182 + $0x340] sm:$0xff] %v1293
      %1492 = vst [vmem:[%s182 + $0x348] sm:$0xff] %v1296
      %1493 = vst [vmem:[%s182 + $0x350] sm:$0xff] %v1301
      %1494 = vst [vmem:[%s182 + $0x358] sm:$0xff] %v1304
      %1495 = vst [vmem:[%s182 + $0x360] sm:$0xff] %v1309
      %1496 = vst [vmem:[%s182 + $0x368] sm:$0xff] %v1312
      %1497 = vst [vmem:[%s182 + $0x370] sm:$0xff] %v1317
      %1498 = vst [vmem:[%s182 + $0x378] sm:$0xff] %v1320
      %1499 = vst [vmem:[%s182 + $0x380] sm:$0xff] %v1325
      %1500 = vst [vmem:[%s182 + $0x388] sm:$0xff] %v1328
      %1501 = vst [vmem:[%s182 + $0x390] sm:$0xff] %v1333
      %1502 = vst [vmem:[%s182 + $0x398] sm:$0xff] %v1336
      %1503 = vst [vmem:[%s182 + $0x3a0] sm:$0xff] %v1341
      %1504 = vst [vmem:[%s182 + $0x3a8] sm:$0xff] %v1344
      %1505 = vst [vmem:[%s182 + $0x3b0] sm:$0xff] %v1349
      %1506 = vst [vmem:[%s182 + $0x3b8] sm:$0xff] %v1352
      %1507 = vst [vmem:[%s182 + $0x3c0] sm:$0xff] %v1357
      %1508 = vst [vmem:[%s182 + $0x3c8] sm:$0xff] %v1360
      %1509 = vst [vmem:[%s182 + $0x3d0] sm:$0xff] %v1365
      %1510 = vst [vmem:[%s182 + $0x3d8] sm:$0xff] %v1368
      %1511 = vst [vmem:[%s182 + $0x3e0] sm:$0xff] %v1373
      %1512 = vst [vmem:[%s182 + $0x3e8] sm:$0xff] %v1376
      %1513 = vst [vmem:[%s182 + $0x3f0] sm:$0xff] %v1381
      %1514 = vst [vmem:[%s182 + $0x3f8] sm:$0xff] %v1384
      %s1515 = smul.u32 128, %s17
      %p1516 = scmp.lt.s32.totalorder %s1515, 1023
      %s1517 = scalar_select %p1516, %s1515, 1023
      %p1518 = scmp.lt.s32.totalorder %s18, 0
      %s1519 = scalar_select %p1518, %s18, 0
      %s1520 = sadd.s32 %s1519, %s1517
      %s1521 = smul.addr %s1520, 8
      %s1522 = scalar_lea.vmem %s2, %s1521
      // Predicated region
      $region29: #{generator_forward.11} parent=27 // pred_check
        %p1523 = pneg %p97
      $region30: #{generator_forward.11} parent=27 // pred_check_branch
        %1525 = sbr.rel (%p1523) target = $region32
      $region31: #{generator_forward.11} parent=27 // pred_region
        %s1526 = smul.u32 128, %s17
      $region32: #{generator_forward.11} parent=27 // pred_fallthru
        _
    $region28: #{generator_forward.11} parent=5 // pred_fallthru
      _
    %p1527 = scmp.le.s32.totalorder 2, %s8
    // Predicated region
    $region33: #{generator_forward.11} parent=5 // pred_check
      %p1528 = pneg %p1527
    $region34: #{generator_forward.11} parent=5 // pred_check_branch
      %1530 = sbr.rel (%p1528) target = $region36
    $region35: #{generator_forward.11} parent=5 // pred_region
      %s1531 = ssub.s32 %s8, 2
      // Predicated region
      $region37: #{generator_forward.11} parent=35 // pred_check
        %p1532 = pneg %p103
      $region38: #{generator_forward.11} parent=35 // pred_check_branch
        %1534 = sbr.rel (%p1532) target = $region40
      $region39: #{generator_forward.11} parent=35 // pred_region
        %s1535 = smul.u32 128, %s19
        %p1536 = scmp.lt.s32.totalorder %s1535, 1023
        %s1537 = scalar_select %p1536, %s1535, 1023
        %p1538 = scmp.lt.s32.totalorder %s20, 0
        %s1539 = scalar_select %p1538, %s20, 0
        %s1540 = sadd.s32 %s1539, %s1537
        %s1541 = smul.addr %s1540, 8
        %s1542 = scalar_lea.vmem %s2, %s1541
      $region40: #{generator_forward.11} parent=35 // pred_fallthru
        _
    $region36: #{generator_forward.11} parent=5 // pred_fallthru
      _
  $region6: #{generator_forward.11} parent=0 // loop_footer
    %s12 = sadd.s32 1, %s8
  $region7: #{generator_forward.11} parent=0 // loop_footer_branch
    %7 = sbr.rel target = $region3
  $region8: #{generator_forward.11} parent=0 // loop_exit
    _

</llo_original>
